<compile_context>
chip_gen: v7x
topology: tpu7x:2x2x1
jax: 0.10.0
libtpu: 0.0.40
codegen_flags: <defaults>
</compile_context>

<pallas_src>
import functools
import math

import jax
import jax.numpy as jnp
from jax import lax
from jax.experimental import pallas as pl
from jax.experimental.pallas import tpu as pltpu


# ------------------------------ encoder kernel ------------------------------
def _encoder_kernel(L, Hd, T_unroll, emb_ref, len_ref, wih_ref, bih_ref,
                    whf_ref, whb_ref, mem_ref, h_ref, c_ref, xbuf, gbuf):
    T, B, H = emb_ref.shape
    G = 4 * Hd                                               # gate width per direction
    lens = len_ref[...]                                      # (B, 1) int32

    def gates(g):
        i = jax.nn.sigmoid(g[:, 0 * Hd:1 * Hd])
        f = jax.nn.sigmoid(g[:, 1 * Hd:2 * Hd])
        gg = jnp.tanh(g[:, 2 * Hd:3 * Hd])
        o = jax.nn.sigmoid(g[:, 3 * Hd:4 * Hd])
        return i, f, gg, o

    src = emb_ref
    for l in range(L):
        # Layer 0 must not overwrite the embedding input; afterwards the recurrence
        # only reads gbuf, so intermediate layers can write IN PLACE over the single
        # scratch buffer; the last layer writes straight into the memory bank.
        if l == L - 1:
            dst = mem_ref
        elif l == 0:
            dst = xbuf
        else:
            dst = src                                        # in-place (== xbuf)

        # Batched input projection for the whole sequence, fwd & bwd fused
        # (lane-dense 8*Hd gate buffer) -> one big MXU matmul per layer.
        x2d = src[...].reshape(T * B, H)
        gbuf[...] = (jnp.dot(x2d, wih_ref[l], preferred_element_type=jnp.float32)
                     + bih_ref[l]).reshape(T, B, 2 * G)

        z = jnp.zeros((B, Hd), jnp.float32)

        def step(s, carry, l=l, dst=dst):
            # fwd step at time s and bwd step at time T-1-s are independent chains;
            # interleaving them keeps MXU/EUP/VPU busy while the other chain drains.
            h_f, c_f, h_b, c_b = carry
            tb = T - 1 - s
            g_f = gbuf[s, :, pl.ds(0, G)] + jnp.dot(
                h_f, whf_ref[l], preferred_element_type=jnp.float32)
            g_b = gbuf[tb, :, pl.ds(G, G)] + jnp.dot(
                h_b, whb_ref[l], preferred_element_type=jnp.float32)
            i_f, f_f, gg_f, o_f = gates(g_f)
            i_b, f_b, gg_b, o_b = gates(g_b)
            c_fn = f_f * c_f + i_f * gg_f
            h_fn = o_f * jnp.tanh(c_fn)
            c_bn = f_b * c_b + i_b * gg_b
            h_bn = o_b * jnp.tanh(c_bn)
            v_f = s < lens                                   # (B, 1) bool
            v_b = tb < lens
            # TODO(synk): with Hd < 128 these half-writes lower to masked vst's; make
            # Hd a multiple of 128 in production configs for lane-dense stores.
            dst[s, :, pl.ds(0, Hd)] = jnp.where(v_f, h_fn, jnp.zeros_like(h_fn))
            dst[tb, :, pl.ds(Hd, Hd)] = jnp.where(v_b, h_bn, jnp.zeros_like(h_bn))
            return (jnp.where(v_f, h_fn, h_f), jnp.where(v_f, c_fn, c_f),
                    jnp.where(v_b, h_bn, h_b), jnp.where(v_b, c_bn, c_b))

        h_f, c_f, h_b, c_b = lax.fori_loop(0, T, step, (z, z, z, z),
                                           unroll=T_unroll)

        # final per-layer state = [h_fwd ; h_bwd] (matches torch reshape/transpose)
        h_ref[l, :, pl.ds(0, Hd)] = h_f
        h_ref[l, :, pl.ds(Hd, Hd)] = h_b
        c_ref[l, :, pl.ds(0, Hd)] = c_f
        c_ref[l, :, pl.ds(Hd, Hd)] = c_b

        src = dst


# ------------------------------ decoder kernel ------------------------------
def _decoder_kernel(L, H, T_unroll, emb_ref, mem_ref, bias_ref, h0_ref, c0_ref,
                    wstk_ref, bd_ref, dec_ref, ctx_ref, gemb):
    Ttgt, B, _ = emb_ref.shape
    Tsrc = mem_ref.shape[0]

    # Batched non-recurrent part of the layer-0 input projection (embeddings + bias).
    w_ih0 = wstk_ref[0][:H, :]                               # top half of [W_ih; W_hh]
    emb2d = emb_ref[...].reshape(Ttgt * B, H)
    gemb[...] = (jnp.dot(emb2d, w_ih0, preferred_element_type=jnp.float32)
                 + bd_ref[0]).reshape(Ttgt, B, 4 * H)

    # Hoisted loop invariants (JAX does not CSE these across unrolled iterations).
    bias = bias_ref[...]                                     # (Tsrc, B) additive mask
    hoist_mem = Tsrc * B * H * 4 <= (128 * 1024)             # keep in vregs only if small
    mem_hoisted = mem_ref[...] if hoist_mem else None

    h0 = tuple(h0_ref[l] for l in range(L))
    c0 = tuple(c0_ref[l] for l in range(L))
    ctx0 = jnp.zeros((B, H), jnp.float32)                    # prev_context is None at t=0

    def step(t, carry):
        hs, cs, ctx_prev = carry
        x = ctx_prev
        new_h, new_c = [], []
        for l in range(L):
            h, c = hs[l], cs[l]
            # One fused [x, h] @ [W_ih; W_hh] matmul per layer (halves MXU pushes on
            # the strictly serial decoder critical path).
            if l == 0:
                g = gemb[t] + jnp.dot(
                    jnp.concatenate([ctx_prev, h], axis=-1), wstk_ref[0],
                    preferred_element_type=jnp.float32)
            else:
                g = (jnp.dot(jnp.concatenate([x, h], axis=-1), wstk_ref[l],
                             preferred_element_type=jnp.float32) + bd_ref[l])
            i = jax.nn.sigmoid(g[:, 0 * H:1 * H])
            f = jax.nn.sigmoid(g[:, 1 * H:2 * H])
            gg = jnp.tanh(g[:, 2 * H:3 * H])
            o = jax.nn.sigmoid(g[:, 3 * H:4 * H])
            c_new = f * c + i * gg
            h_new = o * jnp.tanh(c_new)
            new_h.append(h_new)
            new_c.append(c_new)
            x = h_new
        dec_out = x                                          # (B, H) top-layer output

        # Dot-product attention over the TIME-MAJOR memory bank on the VPU/XLU
        # (broadcast-multiply + reductions) instead of B tiny M=1 MXU matmuls.
        mem = mem_hoisted if hoist_mem else mem_ref[...]     # (Tsrc, B, H)
        scores = jnp.sum(dec_out[None, :, :] * mem, axis=-1) + bias   # (Tsrc, B)
        scores = scores - jnp.max(scores, axis=0, keepdims=True)
        e = jnp.exp(scores)
        p = e / jnp.sum(e, axis=0, keepdims=True)            # exact softmax (parity)
        ctx = jnp.sum(p[:, :, None] * mem, axis=0)           # (B, H)

        dec_ref[t] = dec_out
        ctx_ref[t] = ctx
        return (tuple(new_h), tuple(new_c), ctx)

    lax.fori_loop(0, Ttgt, step, (h0, c0, ctx0), unroll=T_unroll)


# ----------------------- deferred output projection -------------------------
def _proj_kernel(dec_ref, ctx_ref, wt_ref, wb_ref, b_ref, out_ref):
    out_ref[...] = (jnp.dot(dec_ref[...], wt_ref[...], preferred_element_type=jnp.float32)
                    + jnp.dot(ctx_ref[...], wb_ref[...], preferred_element_type=jnp.float32)
                    + b_ref[...])


# --------------------------------- wrapper ----------------------------------
def _vmem_limit_bytes(resident_bytes):
    # Default scoped-VMEM limit is 16 MiB (v5e) / 32 MiB (v6e, v7x); size the limit
    # to the real resident footprint with headroom, staying modest for v7x (64 MiB
    # physical VMEM) at small/medium shapes.
    return int(min(max(resident_bytes * 3 // 2 + (2 << 20), 32 << 20), 100 << 20))


def init_params(key, V_src, V_tgt, H, L):
    Hd = H // 2
    keys = jax.random.split(key, 13)
    s_enc = 1.0 / math.sqrt(Hd)
    s_dec = 1.0 / math.sqrt(H)

    def u(k, shape, scale):
        return jax.random.uniform(k, shape, jnp.float32, -scale, scale)

    return dict(
        emb_src=u(keys[0], (V_src, H), 0.1),
        emb_tgt=u(keys[1], (V_tgt, H), 0.1),
        # encoder BiLSTM: hidden = H//2 per direction, input = H for every layer
        enc_w_ih_f=u(keys[2], (L, H, 4 * Hd), s_enc),
        enc_w_hh_f=u(keys[3], (L, Hd, 4 * Hd), s_enc),
        enc_b_f=u(keys[4], (L, 1, 4 * Hd), s_enc),
        enc_w_ih_b=u(keys[5], (L, H, 4 * Hd), s_enc),
        enc_w_hh_b=u(keys[6], (L, Hd, 4 * Hd), s_enc),
        enc_b_b=u(keys[7], (L, 1, 4 * Hd), s_enc),
        # decoder LSTM: hidden = H, input = H
        dec_w_ih=u(keys[8], (L, H, 4 * H), s_dec),
        dec_w_hh=u(keys[9], (L, H, 4 * H), s_dec),
        dec_b=u(keys[10], (L, 1, 4 * H), s_dec),
        # hidden2output: Linear(2H -> V_tgt), stored transposed
        w_out=u(keys[11], (2 * H, V_tgt), s_dec),
        b_out=u(keys[12], (1, V_tgt), s_dec),
    )


def attn_encoder_decoder2_forward(params, src, src_lengths, tgt_in, pad_id_src, H, L):
    B, T_src = src.shape
    T_tgt = tgt_in.shape[1]
    Hd = H // 2
    V_tgt = params["w_out"].shape[1]
    f32 = jnp.float32

    B_pad = ((B + 7) // 8) * 8                 # sublane-pad the batch
    TV = 256                                   # lane-dense vocab tile (MXU-friendly)
    V_pad = ((V_tgt + TV - 1) // TV) * TV

    # --- batch padding (padded rows are fully masked and discarded at the end) ---
    src_p = jnp.pad(src, ((0, B_pad - B), (0, 0)), constant_values=pad_id_src)
    tgt_p = jnp.pad(tgt_in, ((0, B_pad - B), (0, 0)), constant_values=0)
    lens_p = jnp.pad(src_lengths.astype(jnp.int32), (0, B_pad - B))

    # time-major additive attention mask: 0 at valid positions, -1e30 at pads
    src_mask_t = (src_p != pad_id_src).astype(f32).T                 # (T_src, B_pad)
    mask_bias_t = (src_mask_t - 1.0) * 1e30

    emb_src_t = jnp.transpose(params["emb_src"][src_p], (1, 0, 2))   # (T_src, B_pad, H)
    emb_tgt_t = jnp.transpose(params["emb_tgt"][tgt_p], (1, 0, 2))   # (T_tgt, B_pad, H)
    lens = lens_p.reshape(B_pad, 1)

    # fuse fwd/bwd input projections (lane-dense 8*Hd gate matmul output)
    enc_w_ih = jnp.concatenate([params["enc_w_ih_f"], params["enc_w_ih_b"]], axis=-1)
    enc_b = jnp.concatenate([params["enc_b_f"], params["enc_b_b"]], axis=-1)

    vmem = pl.BlockSpec(memory_space=pltpu.MemorySpace.VMEM)
    unroll_enc = True if T_src <= 16 else 2
    unroll_dec = True if T_tgt <= 16 else 2

    enc_bytes = 4 * (3 * T_src * B_pad * H               # emb + mem out + layer buffer
                     + T_src * B_pad * 8 * Hd            # gbuf
                     + 2 * L * B_pad * H                 # h, c outs
                     + L * (H * 8 * Hd + 8 * Hd + 2 * Hd * 4 * Hd)
                     + B_pad)

    mem_t, h0, c0 = pl.pallas_call(
        functools.partial(_encoder_kernel, L, Hd, unroll_enc),
        out_shape=(
            jax.ShapeDtypeStruct((T_src, B_pad, H), f32),   # memory bank (time-major)
            jax.ShapeDtypeStruct((L, B_pad, H), f32),       # final h [fwd;bwd]
            jax.ShapeDtypeStruct((L, B_pad, H), f32),       # final c [fwd;bwd]
        ),
        in_specs=[vmem] * 6,
        out_specs=(vmem, vmem, vmem),
        scratch_shapes=[
            pltpu.VMEM((T_src, B_pad, H), f32),             # single layer buffer (in-place reuse)
            pltpu.VMEM((T_src, B_pad, 8 * Hd), f32),        # precomputed gates
        ],
        compiler_params=pltpu.CompilerParams(
            vmem_limit_bytes=_vmem_limit_bytes(enc_bytes)),
    )(emb_src_t, lens, enc_w_ih, enc_b,
      params["enc_w_hh_f"], params["enc_w_hh_b"])

    # fused decoder weights: [W_ih ; W_hh] stacked on the input dim -> (L, 2H, 4H)
    dec_w_stacked = jnp.concatenate([params["dec_w_ih"], params["dec_w_hh"]], axis=1)

    dec_bytes = 4 * (3 * T_tgt * B_pad * H               # emb + dec/ctx outs
                     + T_src * B_pad * (H + 1)           # mem + bias
                     + 2 * L * B_pad * H                 # h0, c0
                     + L * (2 * H * 4 * H + 4 * H)       # stacked weights + bias
                     + T_tgt * B_pad * 4 * H)            # gemb

    # memory bank stays time-major: no wrapper transpose between the two kernels
    dec_all, ctx_all = pl.pallas_call(
        functools.partial(_decoder_kernel, L, H, unroll_dec),
        out_shape=(
            jax.ShapeDtypeStruct((T_tgt, B_pad, H), f32),   # decoder outputs
            jax.ShapeDtypeStruct((T_tgt, B_pad, H), f32),   # attention contexts
        ),
        in_specs=[vmem] * 7,
        out_specs=(vmem, vmem),
        scratch_shapes=[pltpu.VMEM((T_tgt, B_pad, 4 * H), f32)],   # precomputed emb gates
        compiler_params=pltpu.CompilerParams(
            vmem_limit_bytes=_vmem_limit_bytes(dec_bytes)),
    )(emb_tgt_t, mem_t, mask_bias_t, h0, c0, dec_w_stacked, params["dec_b"])

    # --- deferred, lane-dense output projection: tiled over rows (TN) and vocab (TV) ---
    N = T_tgt * B_pad
    TN = N if N <= 512 else 512
    N_pad = ((N + TN - 1) // TN) * TN
    dec2d = jnp.pad(dec_all.reshape(N, H), ((0, N_pad - N), (0, 0)))
    ctx2d = jnp.pad(ctx_all.reshape(N, H), ((0, N_pad - N), (0, 0)))
    w_out_p = jnp.pad(params["w_out"], ((0, 0), (0, V_pad - V_tgt)))
    b_out_p = jnp.pad(params["b_out"], ((0, 0), (0, V_pad - V_tgt)))
    w_top = w_out_p[:H]                                             # decoder-output half
    w_bot = w_out_p[H:]                                             # context half

    proj_bytes = 4 * 2 * (2 * TN * H + 2 * H * TV + TV + TN * TV)   # double-buffered tiles
    logits2d = pl.pallas_call(
        _proj_kernel,
        out_shape=jax.ShapeDtypeStruct((N_pad, V_pad), f32),
        grid=(N_pad // TN, V_pad // TV),
        in_specs=[
            pl.BlockSpec((TN, H), lambda i, j: (i, 0)),
            pl.BlockSpec((TN, H), lambda i, j: (i, 0)),
            pl.BlockSpec((H, TV), lambda i, j: (0, j)),
            pl.BlockSpec((H, TV), lambda i, j: (0, j)),
            pl.BlockSpec((1, TV), lambda i, j: (0, j)),
        ],
        out_specs=pl.BlockSpec((TN, TV), lambda i, j: (i, j)),
        compiler_params=pltpu.CompilerParams(
            dimension_semantics=("parallel", "parallel"),
            vmem_limit_bytes=_vmem_limit_bytes(proj_bytes)),
    )(dec2d, ctx2d, w_top, w_bot, b_out_p)

    logits_t = logits2d[:N].reshape(T_tgt, B_pad, V_pad)[:, :B, :V_tgt]
    logits = jnp.transpose(logits_t, (1, 0, 2))                     # (B, T_tgt, V)
    # PyTorch forward stacks (B,1,V) slices along dim=1 -> (B, T_tgt, 1, V)
    return logits.reshape(B, T_tgt, 1, V_tgt)


if __name__ == "__main__":
    B, T_src, T_tgt = 2, 8, 7
    H, L = 32, 3                      # hidden_size=32, layers=3 (module defaults scaled down)
    V_src, V_tgt = 37, 41
    pad_id_src = 0

    key = jax.random.PRNGKey(0)
    kp, ks, kt = jax.random.split(key, 3)
    params = init_params(kp, V_src, V_tgt, H, L)

    src_lengths = jnp.array([8, 5], dtype=jnp.int32)
    src_tok = jax.random.randint(ks, (B, T_src), 1, V_src, dtype=jnp.int32)
    pos = jnp.arange(T_src)[None, :]
    src = jnp.where(pos < src_lengths[:, None], src_tok, pad_id_src)  # pad after length
    tgt_in = jax.random.randint(kt, (B, T_tgt), 1, V_tgt, dtype=jnp.int32)

    logits = attn_encoder_decoder2_forward(params, src, src_lengths, tgt_in,
                                           pad_id_src, H, L)
    jax.block_until_ready(logits)
    assert logits.shape == (B, T_tgt, 1, V_tgt), logits.shape
    assert bool(jnp.all(jnp.isfinite(logits)))
    print("KERNEL_OK")
</pallas_src>

<mosaic_0001>
module attributes {stable_mosaic.version = 11 : i64} {
  func.func @_encoder_kernel(%arg0: memref<8x8x32xf32, #tpu.memory_space<vmem>>, %arg1: memref<8x1xi32, #tpu.memory_space<vmem>>, %arg2: memref<3x32x128xf32, #tpu.memory_space<vmem>>, %arg3: memref<3x1x128xf32, #tpu.memory_space<vmem>>, %arg4: memref<3x16x64xf32, #tpu.memory_space<vmem>>, %arg5: memref<3x16x64xf32, #tpu.memory_space<vmem>>, %arg6: memref<8x8x32xf32, #tpu.memory_space<vmem>>, %arg7: memref<3x8x32xf32, #tpu.memory_space<vmem>>, %arg8: memref<3x8x32xf32, #tpu.memory_space<vmem>>, %arg9: memref<8x8x32xf32, #tpu.memory_space<vmem>>, %arg10: memref<8x8x128xf32, #tpu.memory_space<vmem>>) attributes {dimension_semantics = [], scalar_prefetch = 0 : i64, scratch_operands = 2 : i64, tpu.core_type = #tpu.core_type<tc>} {
    %c0 = arith.constant 0 : index
    %c0_0 = arith.constant 0 : index
    %0 = vector.load %arg1[%c0, %c0_0] : memref<8x1xi32, #tpu.memory_space<vmem>>, vector<8x1xi32>
    %c0_1 = arith.constant 0 : index
    %c0_2 = arith.constant 0 : index
    %c0_3 = arith.constant 0 : index
    %1 = vector.load %arg0[%c0_1, %c0_2, %c0_3] : memref<8x8x32xf32, #tpu.memory_space<vmem>>, vector<8x8x32xf32>
    %2 = vector.shape_cast %1 : vector<8x8x32xf32> to vector<64x32xf32>
    %c0_4 = arith.constant 0 : index
    %c0_5 = arith.constant 0 : index
    %c0_6 = arith.constant 0 : index
    %3 = vector.load %arg2[%c0_4, %c0_5, %c0_6] : memref<3x32x128xf32, #tpu.memory_space<vmem>>, vector<1x32x128xf32>
    %4 = vector.shape_cast %3 : vector<1x32x128xf32> to vector<32x128xf32>
    %cst = arith.constant dense<0.000000e+00> : vector<64x128xf32>
    %5 = tpu.matmul %2, %4, %cst {dimension_numbers = #tpu.dot_dimension_numbers<[1], [0], [0], [1], [0, 0, 1, 1], [], []>} : vector<64x32xf32>, vector<32x128xf32>, vector<64x128xf32> -> vector<64x128xf32>
    %c0_7 = arith.constant 0 : index
    %c0_8 = arith.constant 0 : index
    %c0_9 = arith.constant 0 : index
    %6 = vector.load %arg3[%c0_7, %c0_8, %c0_9] : memref<3x1x128xf32, #tpu.memory_space<vmem>>, vector<1x1x128xf32>
    %7 = vector.shape_cast %6 : vector<1x1x128xf32> to vector<1x128xf32>
    %8 = vector.broadcast %7 : vector<1x128xf32> to vector<64x128xf32>
    %9 = arith.addf %5, %8 : vector<64x128xf32>
    %10 = vector.shape_cast %9 : vector<64x128xf32> to vector<8x8x128xf32>
    %c0_10 = arith.constant 0 : index
    %c0_11 = arith.constant 0 : index
    %c0_12 = arith.constant 0 : index
    %11 = vector.load %arg10[%c0_10, %c0_11, %c0_12] : memref<8x8x128xf32, #tpu.memory_space<vmem>>, vector<8x8x128xf32>
    tpu.vector_store %arg10[%c0_10, %c0_11, %c0_12], %10 {strides = array<i32>} : memref<8x8x128xf32, #tpu.memory_space<vmem>>, vector<8x8x128xf32>,
    %cst_13 = arith.constant 0.000000e+00 : f32
    %12 = vector.broadcast %cst_13 : f32 to vector<8x16xf32>
    %c0_i32 = arith.constant 0 : i32
    %c7_i32 = arith.constant 7 : i32
    %13 = arith.subi %c7_i32, %c0_i32 : i32
    %14 = arith.index_cast %c0_i32 : i32 to index
    %c0_14 = arith.constant 0 : index
    %c0_15 = arith.constant 0 : index
    %15 = vector.load %arg10[%14, %c0_14, %c0_15] : memref<8x8x128xf32, #tpu.memory_space<vmem>>, vector<1x8x64xf32>
    %16 = vector.shape_cast %15 : vector<1x8x64xf32> to vector<8x64xf32>
    %c0_16 = arith.constant 0 : index
    %c0_17 = arith.constant 0 : index
    %c0_18 = arith.constant 0 : index
    %17 = vector.load %arg4[%c0_16, %c0_17, %c0_18] : memref<3x16x64xf32, #tpu.memory_space<vmem>>, vector<1x16x64xf32>
    %18 = vector.shape_cast %17 : vector<1x16x64xf32> to vector<16x64xf32>
    %cst_19 = arith.constant dense<0.000000e+00> : vector<8x64xf32>
    %19 = tpu.matmul %12, %18, %cst_19 {dimension_numbers = #tpu.dot_dimension_numbers<[1], [0], [0], [1], [0, 0, 1, 1], [], []>} : vector<8x16xf32>, vector<16x64xf32>, vector<8x64xf32> -> vector<8x64xf32>
    %20 = arith.addf %16, %19 : vector<8x64xf32>
    %21 = arith.index_cast %13 : i32 to index
    %c0_20 = arith.constant 0 : index
    %c64 = arith.constant 64 : index
    %22 = vector.load %arg10[%21, %c0_20, %c64] : memref<8x8x128xf32, #tpu.memory_space<vmem>>, vector<1x8x64xf32>
    %23 = vector.shape_cast %22 : vector<1x8x64xf32> to vector<8x64xf32>
    %c0_21 = arith.constant 0 : index
    %c0_22 = arith.constant 0 : index
    %c0_23 = arith.constant 0 : index
    %24 = vector.load %arg5[%c0_21, %c0_22, %c0_23] : memref<3x16x64xf32, #tpu.memory_space<vmem>>, vector<1x16x64xf32>
    %25 = vector.shape_cast %24 : vector<1x16x64xf32> to vector<16x64xf32>
    %cst_24 = arith.constant dense<0.000000e+00> : vector<8x64xf32>
    %26 = tpu.matmul %12, %25, %cst_24 {dimension_numbers = #tpu.dot_dimension_numbers<[1], [0], [0], [1], [0, 0, 1, 1], [], []>} : vector<8x16xf32>, vector<16x64xf32>, vector<8x64xf32> -> vector<8x64xf32>
    %27 = arith.addf %23, %26 : vector<8x64xf32>
    %28 = vector.extract_strided_slice %20 {offsets = [0, 0], sizes = [8, 16], strides = [1, 1]} : vector<8x64xf32> to vector<8x16xf32>
    %29 = arith.negf %28 : vector<8x16xf32>
    %30 = math.exp %29 : vector<8x16xf32>
    %cst_25 = arith.constant 1.000000e+00 : f32
    %31 = vector.broadcast %cst_25 : f32 to vector<8x16xf32>
    %32 = arith.addf %31, %30 : vector<8x16xf32>
    %33 = arith.divf %31, %32 : vector<8x16xf32>
    %34 = vector.extract_strided_slice %20 {offsets = [0, 16], sizes = [8, 16], strides = [1, 1]} : vector<8x64xf32> to vector<8x16xf32>
    %35 = arith.negf %34 : vector<8x16xf32>
    %36 = math.exp %35 : vector<8x16xf32>
    %cst_26 = arith.constant 1.000000e+00 : f32
    %37 = vector.broadcast %cst_26 : f32 to vector<8x16xf32>
    %38 = arith.addf %37, %36 : vector<8x16xf32>
    %39 = arith.divf %37, %38 : vector<8x16xf32>
    %40 = vector.extract_strided_slice %20 {offsets = [0, 32], sizes = [8, 16], strides = [1, 1]} : vector<8x64xf32> to vector<8x16xf32>
    %41 = math.tanh %40 : vector<8x16xf32>
    %42 = vector.extract_strided_slice %20 {offsets = [0, 48], sizes = [8, 16], strides = [1, 1]} : vector<8x64xf32> to vector<8x16xf32>
    %43 = arith.negf %42 : vector<8x16xf32>
    %44 = math.exp %43 : vector<8x16xf32>
    %cst_27 = arith.constant 1.000000e+00 : f32
    %45 = vector.broadcast %cst_27 : f32 to vector<8x16xf32>
    %46 = arith.addf %45, %44 : vector<8x16xf32>
    %47 = arith.divf %45, %46 : vector<8x16xf32>
    %48 = vector.extract_strided_slice %27 {offsets = [0, 0], sizes = [8, 16], strides = [1, 1]} : vector<8x64xf32> to vector<8x16xf32>
    %49 = arith.negf %48 : vector<8x16xf32>
    %50 = math.exp %49 : vector<8x16xf32>
    %cst_28 = arith.constant 1.000000e+00 : f32
    %51 = vector.broadcast %cst_28 : f32 to vector<8x16xf32>
    %52 = arith.addf %51, %50 : vector<8x16xf32>
    %53 = arith.divf %51, %52 : vector<8x16xf32>
    %54 = vector.extract_strided_slice %27 {offsets = [0, 16], sizes = [8, 16], strides = [1, 1]} : vector<8x64xf32> to vector<8x16xf32>
    %55 = arith.negf %54 : vector<8x16xf32>
    %56 = math.exp %55 : vector<8x16xf32>
    %cst_29 = arith.constant 1.000000e+00 : f32
    %57 = vector.broadcast %cst_29 : f32 to vector<8x16xf32>
    %58 = arith.addf %57, %56 : vector<8x16xf32>
    %59 = arith.divf %57, %58 : vector<8x16xf32>
    %60 = vector.extract_strided_slice %27 {offsets = [0, 32], sizes = [8, 16], strides = [1, 1]} : vector<8x64xf32> to vector<8x16xf32>
    %61 = math.tanh %60 : vector<8x16xf32>
    %62 = vector.extract_strided_slice %27 {offsets = [0, 48], sizes = [8, 16], strides = [1, 1]} : vector<8x64xf32> to vector<8x16xf32>
    %63 = arith.negf %62 : vector<8x16xf32>
    %64 = math.exp %63 : vector<8x16xf32>
    %cst_30 = arith.constant 1.000000e+00 : f32
    %65 = vector.broadcast %cst_30 : f32 to vector<8x16xf32>
    %66 = arith.addf %65, %64 : vector<8x16xf32>
    %67 = arith.divf %65, %66 : vector<8x16xf32>
    %68 = arith.mulf %39, %12 : vector<8x16xf32>
    %69 = arith.mulf %33, %41 : vector<8x16xf32>
    %70 = arith.addf %68, %69 : vector<8x16xf32>
    %71 = math.tanh %70 : vector<8x16xf32>
    %72 = arith.mulf %47, %71 : vector<8x16xf32>
    %73 = arith.mulf %59, %12 : vector<8x16xf32>
    %74 = arith.mulf %53, %61 : vector<8x16xf32>
    %75 = arith.addf %73, %74 : vector<8x16xf32>
    %76 = math.tanh %75 : vector<8x16xf32>
    %77 = arith.mulf %67, %76 : vector<8x16xf32>
    %78 = vector.broadcast %c0_i32 : i32 to vector<8x1xi32>
    %79 = arith.cmpi slt, %78, %0 : vector<8x1xi32>
    %80 = vector.broadcast %13 : i32 to vector<8x1xi32>
    %81 = arith.cmpi slt, %80, %0 : vector<8x1xi32>
    %cst_31 = arith.constant 0.000000e+00 : f32
    %82 = vector.broadcast %cst_31 : f32 to vector<8x16xf32>
    %83 = vector.shape_cast %79 : vector<8x1xi1> to vector<8x1xi1>
    %84 = vector.broadcast %83 : vector<8x1xi1> to vector<8x16xi1>
    %85 = arith.select %84, %72, %82 : vector<8x16xi1>, vector<8x16xf32>
    %86 = arith.index_cast %c0_i32 : i32 to index
    %c0_32 = arith.constant 0 : index
    %c0_33 = arith.constant 0 : index
    %87 = vector.load %arg9[%86, %c0_32, %c0_33] : memref<8x8x32xf32, #tpu.memory_space<vmem>>, vector<1x8x16xf32>
    %88 = vector.shape_cast %87 : vector<1x8x16xf32> to vector<8x16xf32>
    %89 = vector.shape_cast %85 : vector<8x16xf32> to vector<1x8x16xf32>
    tpu.vector_store %arg9[%86, %c0_32, %c0_33], %89 {strides = array<i32>} : memref<8x8x32xf32, #tpu.memory_space<vmem>>, vector<1x8x16xf32>,
    %cst_34 = arith.constant 0.000000e+00 : f32
    %90 = vector.broadcast %cst_34 : f32 to vector<8x16xf32>
    %91 = vector.shape_cast %81 : vector<8x1xi1> to vector<8x1xi1>
    %92 = vector.broadcast %91 : vector<8x1xi1> to vector<8x16xi1>
    %93 = arith.select %92, %77, %90 : vector<8x16xi1>, vector<8x16xf32>
    %94 = arith.index_cast %13 : i32 to index
    %c0_35 = arith.constant 0 : index
    %c16 = arith.constant 16 : index
    %95 = vector.load %arg9[%94, %c0_35, %c16] : memref<8x8x32xf32, #tpu.memory_space<vmem>>, vector<1x8x16xf32>
    %96 = vector.shape_cast %95 : vector<1x8x16xf32> to vector<8x16xf32>
    %97 = vector.shape_cast %93 : vector<8x16xf32> to vector<1x8x16xf32>
    tpu.vector_store %arg9[%94, %c0_35, %c16], %97 {strides = array<i32>} : memref<8x8x32xf32, #tpu.memory_space<vmem>>, vector<1x8x16xf32>,
    %98 = vector.shape_cast %79 : vector<8x1xi1> to vector<8x1xi1>
    %99 = vector.broadcast %98 : vector<8x1xi1> to vector<8x16xi1>
    %100 = arith.select %99, %72, %12 : vector<8x16xi1>, vector<8x16xf32>
    %101 = vector.shape_cast %79 : vector<8x1xi1> to vector<8x1xi1>
    %102 = vector.broadcast %101 : vector<8x1xi1> to vector<8x16xi1>
    %103 = arith.select %102, %70, %12 : vector<8x16xi1>, vector<8x16xf32>
    %104 = vector.shape_cast %81 : vector<8x1xi1> to vector<8x1xi1>
    %105 = vector.broadcast %104 : vector<8x1xi1> to vector<8x16xi1>
    %106 = arith.select %105, %77, %12 : vector<8x16xi1>, vector<8x16xf32>
    %107 = vector.shape_cast %81 : vector<8x1xi1> to vector<8x1xi1>
    %108 = vector.broadcast %107 : vector<8x1xi1> to vector<8x16xi1>
    %109 = arith.select %108, %75, %12 : vector<8x16xi1>, vector<8x16xf32>
    %c1_i32 = arith.constant 1 : i32
    %c7_i32_36 = arith.constant 7 : i32
    %110 = arith.subi %c7_i32_36, %c1_i32 : i32
    %111 = arith.index_cast %c1_i32 : i32 to index
    %c0_37 = arith.constant 0 : index
    %c0_38 = arith.constant 0 : index
    %112 = vector.load %arg10[%111, %c0_37, %c0_38] : memref<8x8x128xf32, #tpu.memory_space<vmem>>, vector<1x8x64xf32>
    %113 = vector.shape_cast %112 : vector<1x8x64xf32> to vector<8x64xf32>
    %c0_39 = arith.constant 0 : index
    %c0_40 = arith.constant 0 : index
    %c0_41 = arith.constant 0 : index
    %114 = vector.load %arg4[%c0_39, %c0_40, %c0_41] : memref<3x16x64xf32, #tpu.memory_space<vmem>>, vector<1x16x64xf32>
    %115 = vector.shape_cast %114 : vector<1x16x64xf32> to vector<16x64xf32>
    %cst_42 = arith.constant dense<0.000000e+00> : vector<8x64xf32>
    %116 = tpu.matmul %100, %115, %cst_42 {dimension_numbers = #tpu.dot_dimension_numbers<[1], [0], [0], [1], [0, 0, 1, 1], [], []>} : vector<8x16xf32>, vector<16x64xf32>, vector<8x64xf32> -> vector<8x64xf32>
    %117 = arith.addf %113, %116 : vector<8x64xf32>
    %118 = arith.index_cast %110 : i32 to index
    %c0_43 = arith.constant 0 : index
    %c64_44 = arith.constant 64 : index
    %119 = vector.load %arg10[%118, %c0_43, %c64_44] : memref<8x8x128xf32, #tpu.memory_space<vmem>>, vector<1x8x64xf32>
    %120 = vector.shape_cast %119 : vector<1x8x64xf32> to vector<8x64xf32>
    %c0_45 = arith.constant 0 : index
    %c0_46 = arith.constant 0 : index
    %c0_47 = arith.constant 0 : index
    %121 = vector.load %arg5[%c0_45, %c0_46, %c0_47] : memref<3x16x64xf32, #tpu.memory_space<vmem>>, vector<1x16x64xf32>
    %122 = vector.shape_cast %121 : vector<1x16x64xf32> to vector<16x64xf32>
    %cst_48 = arith.constant dense<0.000000e+00> : vector<8x64xf32>
    %123 = tpu.matmul %106, %122, %cst_48 {dimension_numbers = #tpu.dot_dimension_numbers<[1], [0], [0], [1], [0, 0, 1, 1], [], []>} : vector<8x16xf32>, vector<16x64xf32>, vector<8x64xf32> -> vector<8x64xf32>
    %124 = arith.addf %120, %123 : vector<8x64xf32>
    %125 = vector.extract_strided_slice %117 {offsets = [0, 0], sizes = [8, 16], strides = [1, 1]} : vector<8x64xf32> to vector<8x16xf32>
    %126 = arith.negf %125 : vector<8x16xf32>
    %127 = math.exp %126 : vector<8x16xf32>
    %cst_49 = arith.constant 1.000000e+00 : f32
    %128 = vector.broadcast %cst_49 : f32 to vector<8x16xf32>
    %129 = arith.addf %128, %127 : vector<8x16xf32>
    %130 = arith.divf %128, %129 : vector<8x16xf32>
    %131 = vector.extract_strided_slice %117 {offsets = [0, 16], sizes = [8, 16], strides = [1, 1]} : vector<8x64xf32> to vector<8x16xf32>
    %132 = arith.negf %131 : vector<8x16xf32>
    %133 = math.exp %132 : vector<8x16xf32>
    %cst_50 = arith.constant 1.000000e+00 : f32
    %134 = vector.broadcast %cst_50 : f32 to vector<8x16xf32>
    %135 = arith.addf %134, %133 : vector<8x16xf32>
    %136 = arith.divf %134, %135 : vector<8x16xf32>
    %137 = vector.extract_strided_slice %117 {offsets = [0, 32], sizes = [8, 16], strides = [1, 1]} : vector<8x64xf32> to vector<8x16xf32>
    %138 = math.tanh %137 : vector<8x16xf32>
    %139 = vector.extract_strided_slice %117 {offsets = [0, 48], sizes = [8, 16], strides = [1, 1]} : vector<8x64xf32> to vector<8x16xf32>
    %140 = arith.negf %139 : vector<8x16xf32>
    %141 = math.exp %140 : vector<8x16xf32>
    %cst_51 = arith.constant 1.000000e+00 : f32
    %142 = vector.broadcast %cst_51 : f32 to vector<8x16xf32>
    %143 = arith.addf %142, %141 : vector<8x16xf32>
    %144 = arith.divf %142, %143 : vector<8x16xf32>
    %145 = vector.extract_strided_slice %124 {offsets = [0, 0], sizes = [8, 16], strides = [1, 1]} : vector<8x64xf32> to vector<8x16xf32>
    %146 = arith.negf %145 : vector<8x16xf32>
    %147 = math.exp %146 : vector<8x16xf32>
    %cst_52 = arith.constant 1.000000e+00 : f32
    %148 = vector.broadcast %cst_52 : f32 to vector<8x16xf32>
    %149 = arith.addf %148, %147 : vector<8x16xf32>
    %150 = arith.divf %148, %149 : vector<8x16xf32>
    %151 = vector.extract_strided_slice %124 {offsets = [0, 16], sizes = [8, 16], strides = [1, 1]} : vector<8x64xf32> to vector<8x16xf32>
    %152 = arith.negf %151 : vector<8x16xf32>
    %153 = math.exp %152 : vector<8x16xf32>
    %cst_53 = arith.constant 1.000000e+00 : f32
    %154 = vector.broadcast %cst_53 : f32 to vector<8x16xf32>
    %155 = arith.addf %154, %153 : vector<8x16xf32>
    %156 = arith.divf %154, %155 : vector<8x16xf32>
    %157 = vector.extract_strided_slice %124 {offsets = [0, 32], sizes = [8, 16], strides = [1, 1]} : vector<8x64xf32> to vector<8x16xf32>
    %158 = math.tanh %157 : vector<8x16xf32>
    %159 = vector.extract_strided_slice %124 {offsets = [0, 48], sizes = [8, 16], strides = [1, 1]} : vector<8x64xf32> to vector<8x16xf32>
    %160 = arith.negf %159 : vector<8x16xf32>
    %161 = math.exp %160 : vector<8x16xf32>
    %cst_54 = arith.constant 1.000000e+00 : f32
    %162 = vector.broadcast %cst_54 : f32 to vector<8x16xf32>
    %163 = arith.addf %162, %161 : vector<8x16xf32>
    %164 = arith.divf %162, %163 : vector<8x16xf32>
    %165 = arith.mulf %136, %103 : vector<8x16xf32>
    %166 = arith.mulf %130, %138 : vector<8x16xf32>
    %167 = arith.addf %165, %166 : vector<8x16xf32>
    %168 = math.tanh %167 : vector<8x16xf32>
    %169 = arith.mulf %144, %168 : vector<8x16xf32>
    %170 = arith.mulf %156, %109 : vector<8x16xf32>
    %171 = arith.mulf %150, %158 : vector<8x16xf32>
    %172 = arith.addf %170, %171 : vector<8x16xf32>
    %173 = math.tanh %172 : vector<8x16xf32>
    %174 = arith.mulf %164, %173 : vector<8x16xf32>
    %175 = vector.broadcast %c1_i32 : i32 to vector<8x1xi32>
    %176 = arith.cmpi slt, %175, %0 : vector<8x1xi32>
    %177 = vector.broadcast %110 : i32 to vector<8x1xi32>
    %178 = arith.cmpi slt, %177, %0 : vector<8x1xi32>
    %cst_55 = arith.constant 0.000000e+00 : f32
    %179 = vector.broadcast %cst_55 : f32 to vector<8x16xf32>
    %180 = vector.shape_cast %176 : vector<8x1xi1> to vector<8x1xi1>
    %181 = vector.broadcast %180 : vector<8x1xi1> to vector<8x16xi1>
    %182 = arith.select %181, %169, %179 : vector<8x16xi1>, vector<8x16xf32>
    %183 = arith.index_cast %c1_i32 : i32 to index
    %c0_56 = arith.constant 0 : index
    %c0_57 = arith.constant 0 : index
    %184 = vector.load %arg9[%183, %c0_56, %c0_57] : memref<8x8x32xf32, #tpu.memory_space<vmem>>, vector<1x8x16xf32>
    %185 = vector.shape_cast %184 : vector<1x8x16xf32> to vector<8x16xf32>
    %186 = vector.shape_cast %182 : vector<8x16xf32> to vector<1x8x16xf32>
    tpu.vector_store %arg9[%183, %c0_56, %c0_57], %186 {strides = array<i32>} : memref<8x8x32xf32, #tpu.memory_space<vmem>>, vector<1x8x16xf32>,
    %cst_58 = arith.constant 0.000000e+00 : f32
    %187 = vector.broadcast %cst_58 : f32 to vector<8x16xf32>
    %188 = vector.shape_cast %178 : vector<8x1xi1> to vector<8x1xi1>
    %189 = vector.broadcast %188 : vector<8x1xi1> to vector<8x16xi1>
    %190 = arith.select %189, %174, %187 : vector<8x16xi1>, vector<8x16xf32>
    %191 = arith.index_cast %110 : i32 to index
    %c0_59 = arith.constant 0 : index
    %c16_60 = arith.constant 16 : index
    %192 = vector.load %arg9[%191, %c0_59, %c16_60] : memref<8x8x32xf32, #tpu.memory_space<vmem>>, vector<1x8x16xf32>
    %193 = vector.shape_cast %192 : vector<1x8x16xf32> to vector<8x16xf32>
    %194 = vector.shape_cast %190 : vector<8x16xf32> to vector<1x8x16xf32>
    tpu.vector_store %arg9[%191, %c0_59, %c16_60], %194 {strides = array<i32>} : memref<8x8x32xf32, #tpu.memory_space<vmem>>, vector<1x8x16xf32>,
    %195 = vector.shape_cast %176 : vector<8x1xi1> to vector<8x1xi1>
    %196 = vector.broadcast %195 : vector<8x1xi1> to vector<8x16xi1>
    %197 = arith.select %196, %169, %100 : vector<8x16xi1>, vector<8x16xf32>
    %198 = vector.shape_cast %176 : vector<8x1xi1> to vector<8x1xi1>
    %199 = vector.broadcast %198 : vector<8x1xi1> to vector<8x16xi1>
    %200 = arith.select %199, %167, %103 : vector<8x16xi1>, vector<8x16xf32>
    %201 = vector.shape_cast %178 : vector<8x1xi1> to vector<8x1xi1>
    %202 = vector.broadcast %201 : vector<8x1xi1> to vector<8x16xi1>
    %203 = arith.select %202, %174, %106 : vector<8x16xi1>, vector<8x16xf32>
    %204 = vector.shape_cast %178 : vector<8x1xi1> to vector<8x1xi1>
    %205 = vector.broadcast %204 : vector<8x1xi1> to vector<8x16xi1>
    %206 = arith.select %205, %172, %109 : vector<8x16xi1>, vector<8x16xf32>
    %c2_i32 = arith.constant 2 : i32
    %c7_i32_61 = arith.constant 7 : i32
    %207 = arith.subi %c7_i32_61, %c2_i32 : i32
    %208 = arith.index_cast %c2_i32 : i32 to index
    %c0_62 = arith.constant 0 : index
    %c0_63 = arith.constant 0 : index
    %209 = vector.load %arg10[%208, %c0_62, %c0_63] : memref<8x8x128xf32, #tpu.memory_space<vmem>>, vector<1x8x64xf32>
    %210 = vector.shape_cast %209 : vector<1x8x64xf32> to vector<8x64xf32>
    %c0_64 = arith.constant 0 : index
    %c0_65 = arith.constant 0 : index
    %c0_66 = arith.constant 0 : index
    %211 = vector.load %arg4[%c0_64, %c0_65, %c0_66] : memref<3x16x64xf32, #tpu.memory_space<vmem>>, vector<1x16x64xf32>
    %212 = vector.shape_cast %211 : vector<1x16x64xf32> to vector<16x64xf32>
    %cst_67 = arith.constant dense<0.000000e+00> : vector<8x64xf32>
    %213 = tpu.matmul %197, %212, %cst_67 {dimension_numbers = #tpu.dot_dimension_numbers<[1], [0], [0], [1], [0, 0, 1, 1], [], []>} : vector<8x16xf32>, vector<16x64xf32>, vector<8x64xf32> -> vector<8x64xf32>
    %214 = arith.addf %210, %213 : vector<8x64xf32>
    %215 = arith.index_cast %207 : i32 to index
    %c0_68 = arith.constant 0 : index
    %c64_69 = arith.constant 64 : index
    %216 = vector.load %arg10[%215, %c0_68, %c64_69] : memref<8x8x128xf32, #tpu.memory_space<vmem>>, vector<1x8x64xf32>
    %217 = vector.shape_cast %216 : vector<1x8x64xf32> to vector<8x64xf32>
    %c0_70 = arith.constant 0 : index
    %c0_71 = arith.constant 0 : index
    %c0_72 = arith.constant 0 : index
    %218 = vector.load %arg5[%c0_70, %c0_71, %c0_72] : memref<3x16x64xf32, #tpu.memory_space<vmem>>, vector<1x16x64xf32>
    %219 = vector.shape_cast %218 : vector<1x16x64xf32> to vector<16x64xf32>
    %cst_73 = arith.constant dense<0.000000e+00> : vector<8x64xf32>
    %220 = tpu.matmul %203, %219, %cst_73 {dimension_numbers = #tpu.dot_dimension_numbers<[1], [0], [0], [1], [0, 0, 1, 1], [], []>} : vector<8x16xf32>, vector<16x64xf32>, vector<8x64xf32> -> vector<8x64xf32>
    %221 = arith.addf %217, %220 : vector<8x64xf32>
    %222 = vector.extract_strided_slice %214 {offsets = [0, 0], sizes = [8, 16], strides = [1, 1]} : vector<8x64xf32> to vector<8x16xf32>
    %223 = arith.negf %222 : vector<8x16xf32>
    %224 = math.exp %223 : vector<8x16xf32>
    %cst_74 = arith.constant 1.000000e+00 : f32
    %225 = vector.broadcast %cst_74 : f32 to vector<8x16xf32>
    %226 = arith.addf %225, %224 : vector<8x16xf32>
    %227 = arith.divf %225, %226 : vector<8x16xf32>
    %228 = vector.extract_strided_slice %214 {offsets = [0, 16], sizes = [8, 16], strides = [1, 1]} : vector<8x64xf32> to vector<8x16xf32>
    %229 = arith.negf %228 : vector<8x16xf32>
    %230 = math.exp %229 : vector<8x16xf32>
    %cst_75 = arith.constant 1.000000e+00 : f32
    %231 = vector.broadcast %cst_75 : f32 to vector<8x16xf32>
    %232 = arith.addf %231, %230 : vector<8x16xf32>
    %233 = arith.divf %231, %232 : vector<8x16xf32>
    %234 = vector.extract_strided_slice %214 {offsets = [0, 32], sizes = [8, 16], strides = [1, 1]} : vector<8x64xf32> to vector<8x16xf32>
    %235 = math.tanh %234 : vector<8x16xf32>
    %236 = vector.extract_strided_slice %214 {offsets = [0, 48], sizes = [8, 16], strides = [1, 1]} : vector<8x64xf32> to vector<8x16xf32>
    %237 = arith.negf %236 : vector<8x16xf32>
    %238 = math.exp %237 : vector<8x16xf32>
    %cst_76 = arith.constant 1.000000e+00 : f32
    %239 = vector.broadcast %cst_76 : f32 to vector<8x16xf32>
    %240 = arith.addf %239, %238 : vector<8x16xf32>
    %241 = arith.divf %239, %240 : vector<8x16xf32>
    %242 = vector.extract_strided_slice %221 {offsets = [0, 0], sizes = [8, 16], strides = [1, 1]} : vector<8x64xf32> to vector<8x16xf32>
    %243 = arith.negf %242 : vector<8x16xf32>
    %244 = math.exp %243 : vector<8x16xf32>
    %cst_77 = arith.constant 1.000000e+00 : f32
    %245 = vector.broadcast %cst_77 : f32 to vector<8x16xf32>
    %246 = arith.addf %245, %244 : vector<8x16xf32>
    %247 = arith.divf %245, %246 : vector<8x16xf32>
    %248 = vector.extract_strided_slice %221 {offsets = [0, 16], sizes = [8, 16], strides = [1, 1]} : vector<8x64xf32> to vector<8x16xf32>
    %249 = arith.negf %248 : vector<8x16xf32>
    %250 = math.exp %249 : vector<8x16xf32>
    %cst_78 = arith.constant 1.000000e+00 : f32
    %251 = vector.broadcast %cst_78 : f32 to vector<8x16xf32>
    %252 = arith.addf %251, %250 : vector<8x16xf32>
    %253 = arith.divf %251, %252 : vector<8x16xf32>
    %254 = vector.extract_strided_slice %221 {offsets = [0, 32], sizes = [8, 16], strides = [1, 1]} : vector<8x64xf32> to vector<8x16xf32>
    %255 = math.tanh %254 : vector<8x16xf32>
    %256 = vector.extract_strided_slice %221 {offsets = [0, 48], sizes = [8, 16], strides = [1, 1]} : vector<8x64xf32> to vector<8x16xf32>
    %257 = arith.negf %256 : vector<8x16xf32>
    %258 = math.exp %257 : vector<8x16xf32>
    %cst_79 = arith.constant 1.000000e+00 : f32
    %259 = vector.broadcast %cst_79 : f32 to vector<8x16xf32>
    %260 = arith.addf %259, %258 : vector<8x16xf32>
    %261 = arith.divf %259, %260 : vector<8x16xf32>
    %262 = arith.mulf %233, %200 : vector<8x16xf32>
    %263 = arith.mulf %227, %235 : vector<8x16xf32>
    %264 = arith.addf %262, %263 : vector<8x16xf32>
    %265 = math.tanh %264 : vector<8x16xf32>
    %266 = arith.mulf %241, %265 : vector<8x16xf32>
    %267 = arith.mulf %253, %206 : vector<8x16xf32>
    %268 = arith.mulf %247, %255 : vector<8x16xf32>
    %269 = arith.addf %267, %268 : vector<8x16xf32>
    %270 = math.tanh %269 : vector<8x16xf32>
    %271 = arith.mulf %261, %270 : vector<8x16xf32>
    %272 = vector.broadcast %c2_i32 : i32 to vector<8x1xi32>
    %273 = arith.cmpi slt, %272, %0 : vector<8x1xi32>
    %274 = vector.broadcast %207 : i32 to vector<8x1xi32>
    %275 = arith.cmpi slt, %274, %0 : vector<8x1xi32>
    %cst_80 = arith.constant 0.000000e+00 : f32
    %276 = vector.broadcast %cst_80 : f32 to vector<8x16xf32>
    %277 = vector.shape_cast %273 : vector<8x1xi1> to vector<8x1xi1>
    %278 = vector.broadcast %277 : vector<8x1xi1> to vector<8x16xi1>
    %279 = arith.select %278, %266, %276 : vector<8x16xi1>, vector<8x16xf32>
    %280 = arith.index_cast %c2_i32 : i32 to index
    %c0_81 = arith.constant 0 : index
    %c0_82 = arith.constant 0 : index
    %281 = vector.load %arg9[%280, %c0_81, %c0_82] : memref<8x8x32xf32, #tpu.memory_space<vmem>>, vector<1x8x16xf32>
    %282 = vector.shape_cast %281 : vector<1x8x16xf32> to vector<8x16xf32>
    %283 = vector.shape_cast %279 : vector<8x16xf32> to vector<1x8x16xf32>
    tpu.vector_store %arg9[%280, %c0_81, %c0_82], %283 {strides = array<i32>} : memref<8x8x32xf32, #tpu.memory_space<vmem>>, vector<1x8x16xf32>,
    %cst_83 = arith.constant 0.000000e+00 : f32
    %284 = vector.broadcast %cst_83 : f32 to vector<8x16xf32>
    %285 = vector.shape_cast %275 : vector<8x1xi1> to vector<8x1xi1>
    %286 = vector.broadcast %285 : vector<8x1xi1> to vector<8x16xi1>
    %287 = arith.select %286, %271, %284 : vector<8x16xi1>, vector<8x16xf32>
    %288 = arith.index_cast %207 : i32 to index
    %c0_84 = arith.constant 0 : index
    %c16_85 = arith.constant 16 : index
    %289 = vector.load %arg9[%288, %c0_84, %c16_85] : memref<8x8x32xf32, #tpu.memory_space<vmem>>, vector<1x8x16xf32>
    %290 = vector.shape_cast %289 : vector<1x8x16xf32> to vector<8x16xf32>
    %291 = vector.shape_cast %287 : vector<8x16xf32> to vector<1x8x16xf32>
    tpu.vector_store %arg9[%288, %c0_84, %c16_85], %291 {strides = array<i32>} : memref<8x8x32xf32, #tpu.memory_space<vmem>>, vector<1x8x16xf32>,
    %292 = vector.shape_cast %273 : vector<8x1xi1> to vector<8x1xi1>
    %293 = vector.broadcast %292 : vector<8x1xi1> to vector<8x16xi1>
    %294 = arith.select %293, %266, %197 : vector<8x16xi1>, vector<8x16xf32>
    %295 = vector.shape_cast %273 : vector<8x1xi1> to vector<8x1xi1>
    %296 = vector.broadcast %295 : vector<8x1xi1> to vector<8x16xi1>
    %297 = arith.select %296, %264, %200 : vector<8x16xi1>, vector<8x16xf32>
    %298 = vector.shape_cast %275 : vector<8x1xi1> to vector<8x1xi1>
    %299 = vector.broadcast %298 : vector<8x1xi1> to vector<8x16xi1>
    %300 = arith.select %299, %271, %203 : vector<8x16xi1>, vector<8x16xf32>
    %301 = vector.shape_cast %275 : vector<8x1xi1> to vector<8x1xi1>
    %302 = vector.broadcast %301 : vector<8x1xi1> to vector<8x16xi1>
    %303 = arith.select %302, %269, %206 : vector<8x16xi1>, vector<8x16xf32>
    %c3_i32 = arith.constant 3 : i32
    %c7_i32_86 = arith.constant 7 : i32
    %304 = arith.subi %c7_i32_86, %c3_i32 : i32
    %305 = arith.index_cast %c3_i32 : i32 to index
    %c0_87 = arith.constant 0 : index
    %c0_88 = arith.constant 0 : index
    %306 = vector.load %arg10[%305, %c0_87, %c0_88] : memref<8x8x128xf32, #tpu.memory_space<vmem>>, vector<1x8x64xf32>
    %307 = vector.shape_cast %306 : vector<1x8x64xf32> to vector<8x64xf32>
    %c0_89 = arith.constant 0 : index
    %c0_90 = arith.constant 0 : index
    %c0_91 = arith.constant 0 : index
    %308 = vector.load %arg4[%c0_89, %c0_90, %c0_91] : memref<3x16x64xf32, #tpu.memory_space<vmem>>, vector<1x16x64xf32>
    %309 = vector.shape_cast %308 : vector<1x16x64xf32> to vector<16x64xf32>
    %cst_92 = arith.constant dense<0.000000e+00> : vector<8x64xf32>
    %310 = tpu.matmul %294, %309, %cst_92 {dimension_numbers = #tpu.dot_dimension_numbers<[1], [0], [0], [1], [0, 0, 1, 1], [], []>} : vector<8x16xf32>, vector<16x64xf32>, vector<8x64xf32> -> vector<8x64xf32>
    %311 = arith.addf %307, %310 : vector<8x64xf32>
    %312 = arith.index_cast %304 : i32 to index
    %c0_93 = arith.constant 0 : index
    %c64_94 = arith.constant 64 : index
    %313 = vector.load %arg10[%312, %c0_93, %c64_94] : memref<8x8x128xf32, #tpu.memory_space<vmem>>, vector<1x8x64xf32>
    %314 = vector.shape_cast %313 : vector<1x8x64xf32> to vector<8x64xf32>
    %c0_95 = arith.constant 0 : index
    %c0_96 = arith.constant 0 : index
    %c0_97 = arith.constant 0 : index
    %315 = vector.load %arg5[%c0_95, %c0_96, %c0_97] : memref<3x16x64xf32, #tpu.memory_space<vmem>>, vector<1x16x64xf32>
    %316 = vector.shape_cast %315 : vector<1x16x64xf32> to vector<16x64xf32>
    %cst_98 = arith.constant dense<0.000000e+00> : vector<8x64xf32>
    %317 = tpu.matmul %300, %316, %cst_98 {dimension_numbers = #tpu.dot_dimension_numbers<[1], [0], [0], [1], [0, 0, 1, 1], [], []>} : vector<8x16xf32>, vector<16x64xf32>, vector<8x64xf32> -> vector<8x64xf32>
    %318 = arith.addf %314, %317 : vector<8x64xf32>
    %319 = vector.extract_strided_slice %311 {offsets = [0, 0], sizes = [8, 16], strides = [1, 1]} : vector<8x64xf32> to vector<8x16xf32>
    %320 = arith.negf %319 : vector<8x16xf32>
    %321 = math.exp %320 : vector<8x16xf32>
    %cst_99 = arith.constant 1.000000e+00 : f32
    %322 = vector.broadcast %cst_99 : f32 to vector<8x16xf32>
    %323 = arith.addf %322, %321 : vector<8x16xf32>
    %324 = arith.divf %322, %323 : vector<8x16xf32>
    %325 = vector.extract_strided_slice %311 {offsets = [0, 16], sizes = [8, 16], strides = [1, 1]} : vector<8x64xf32> to vector<8x16xf32>
    %326 = arith.negf %325 : vector<8x16xf32>
    %327 = math.exp %326 : vector<8x16xf32>
    %cst_100 = arith.constant 1.000000e+00 : f32
    %328 = vector.broadcast %cst_100 : f32 to vector<8x16xf32>
    %329 = arith.addf %328, %327 : vector<8x16xf32>
    %330 = arith.divf %328, %329 : vector<8x16xf32>
    %331 = vector.extract_strided_slice %311 {offsets = [0, 32], sizes = [8, 16], strides = [1, 1]} : vector<8x64xf32> to vector<8x16xf32>
    %332 = math.tanh %331 : vector<8x16xf32>
    %333 = vector.extract_strided_slice %311 {offsets = [0, 48], sizes = [8, 16], strides = [1, 1]} : vector<8x64xf32> to vector<8x16xf32>
    %334 = arith.negf %333 : vector<8x16xf32>
    %335 = math.exp %334 : vector<8x16xf32>
    %cst_101 = arith.constant 1.000000e+00 : f32
    %336 = vector.broadcast %cst_101 : f32 to vector<8x16xf32>
    %337 = arith.addf %336, %335 : vector<8x16xf32>
    %338 = arith.divf %336, %337 : vector<8x16xf32>
    %339 = vector.extract_strided_slice %318 {offsets = [0, 0], sizes = [8, 16], strides = [1, 1]} : vector<8x64xf32> to vector<8x16xf32>
    %340 = arith.negf %339 : vector<8x16xf32>
    %341 = math.exp %340 : vector<8x16xf32>
    %cst_102 = arith.constant 1.000000e+00 : f32
    %342 = vector.broadcast %cst_102 : f32 to vector<8x16xf32>
    %343 = arith.addf %342, %341 : vector<8x16xf32>
    %344 = arith.divf %342, %343 : vector<8x16xf32>
    %345 = vector.extract_strided_slice %318 {offsets = [0, 16], sizes = [8, 16], strides = [1, 1]} : vector<8x64xf32> to vector<8x16xf32>
    %346 = arith.negf %345 : vector<8x16xf32>
    %347 = math.exp %346 : vector<8x16xf32>
    %cst_103 = arith.constant 1.000000e+00 : f32
    %348 = vector.broadcast %cst_103 : f32 to vector<8x16xf32>
    %349 = arith.addf %348, %347 : vector<8x16xf32>
    %350 = arith.divf %348, %349 : vector<8x16xf32>
    %351 = vector.extract_strided_slice %318 {offsets = [0, 32], sizes = [8, 16], strides = [1, 1]} : vector<8x64xf32> to vector<8x16xf32>
    %352 = math.tanh %351 : vector<8x16xf32>
    %353 = vector.extract_strided_slice %318 {offsets = [0, 48], sizes = [8, 16], strides = [1, 1]} : vector<8x64xf32> to vector<8x16xf32>
    %354 = arith.negf %353 : vector<8x16xf32>
    %355 = math.exp %354 : vector<8x16xf32>
    %cst_104 = arith.constant 1.000000e+00 : f32
    %356 = vector.broadcast %cst_104 : f32 to vector<8x16xf32>
    %357 = arith.addf %356, %355 : vector<8x16xf32>
    %358 = arith.divf %356, %357 : vector<8x16xf32>
    %359 = arith.mulf %330, %297 : vector<8x16xf32>
    %360 = arith.mulf %324, %332 : vector<8x16xf32>
    %361 = arith.addf %359, %360 : vector<8x16xf32>
    %362 = math.tanh %361 : vector<8x16xf32>
    %363 = arith.mulf %338, %362 : vector<8x16xf32>
    %364 = arith.mulf %350, %303 : vector<8x16xf32>
    %365 = arith.mulf %344, %352 : vector<8x16xf32>
    %366 = arith.addf %364, %365 : vector<8x16xf32>
    %367 = math.tanh %366 : vector<8x16xf32>
    %368 = arith.mulf %358, %367 : vector<8x16xf32>
    %369 = vector.broadcast %c3_i32 : i32 to vector<8x1xi32>
    %370 = arith.cmpi slt, %369, %0 : vector<8x1xi32>
    %371 = vector.broadcast %304 : i32 to vector<8x1xi32>
    %372 = arith.cmpi slt, %371, %0 : vector<8x1xi32>
    %cst_105 = arith.constant 0.000000e+00 : f32
    %373 = vector.broadcast %cst_105 : f32 to vector<8x16xf32>
    %374 = vector.shape_cast %370 : vector<8x1xi1> to vector<8x1xi1>
    %375 = vector.broadcast %374 : vector<8x1xi1> to vector<8x16xi1>
    %376 = arith.select %375, %363, %373 : vector<8x16xi1>, vector<8x16xf32>
    %377 = arith.index_cast %c3_i32 : i32 to index
    %c0_106 = arith.constant 0 : index
    %c0_107 = arith.constant 0 : index
    %378 = vector.load %arg9[%377, %c0_106, %c0_107] : memref<8x8x32xf32, #tpu.memory_space<vmem>>, vector<1x8x16xf32>
    %379 = vector.shape_cast %378 : vector<1x8x16xf32> to vector<8x16xf32>
    %380 = vector.shape_cast %376 : vector<8x16xf32> to vector<1x8x16xf32>
    tpu.vector_store %arg9[%377, %c0_106, %c0_107], %380 {strides = array<i32>} : memref<8x8x32xf32, #tpu.memory_space<vmem>>, vector<1x8x16xf32>,
    %cst_108 = arith.constant 0.000000e+00 : f32
    %381 = vector.broadcast %cst_108 : f32 to vector<8x16xf32>
    %382 = vector.shape_cast %372 : vector<8x1xi1> to vector<8x1xi1>
    %383 = vector.broadcast %382 : vector<8x1xi1> to vector<8x16xi1>
    %384 = arith.select %383, %368, %381 : vector<8x16xi1>, vector<8x16xf32>
    %385 = arith.index_cast %304 : i32 to index
    %c0_109 = arith.constant 0 : index
    %c16_110 = arith.constant 16 : index
    %386 = vector.load %arg9[%385, %c0_109, %c16_110] : memref<8x8x32xf32, #tpu.memory_space<vmem>>, vector<1x8x16xf32>
    %387 = vector.shape_cast %386 : vector<1x8x16xf32> to vector<8x16xf32>
    %388 = vector.shape_cast %384 : vector<8x16xf32> to vector<1x8x16xf32>
    tpu.vector_store %arg9[%385, %c0_109, %c16_110], %388 {strides = array<i32>} : memref<8x8x32xf32, #tpu.memory_space<vmem>>, vector<1x8x16xf32>,
    %389 = vector.shape_cast %370 : vector<8x1xi1> to vector<8x1xi1>
    %390 = vector.broadcast %389 : vector<8x1xi1> to vector<8x16xi1>
    %391 = arith.select %390, %363, %294 : vector<8x16xi1>, vector<8x16xf32>
    %392 = vector.shape_cast %370 : vector<8x1xi1> to vector<8x1xi1>
    %393 = vector.broadcast %392 : vector<8x1xi1> to vector<8x16xi1>
    %394 = arith.select %393, %361, %297 : vector<8x16xi1>, vector<8x16xf32>
    %395 = vector.shape_cast %372 : vector<8x1xi1> to vector<8x1xi1>
    %396 = vector.broadcast %395 : vector<8x1xi1> to vector<8x16xi1>
    %397 = arith.select %396, %368, %300 : vector<8x16xi1>, vector<8x16xf32>
    %398 = vector.shape_cast %372 : vector<8x1xi1> to vector<8x1xi1>
    %399 = vector.broadcast %398 : vector<8x1xi1> to vector<8x16xi1>
    %400 = arith.select %399, %366, %303 : vector<8x16xi1>, vector<8x16xf32>
    %c4_i32 = arith.constant 4 : i32
    %c7_i32_111 = arith.constant 7 : i32
    %401 = arith.subi %c7_i32_111, %c4_i32 : i32
    %402 = arith.index_cast %c4_i32 : i32 to index
    %c0_112 = arith.constant 0 : index
    %c0_113 = arith.constant 0 : index
    %403 = vector.load %arg10[%402, %c0_112, %c0_113] : memref<8x8x128xf32, #tpu.memory_space<vmem>>, vector<1x8x64xf32>
    %404 = vector.shape_cast %403 : vector<1x8x64xf32> to vector<8x64xf32>
    %c0_114 = arith.constant 0 : index
    %c0_115 = arith.constant 0 : index
    %c0_116 = arith.constant 0 : index
    %405 = vector.load %arg4[%c0_114, %c0_115, %c0_116] : memref<3x16x64xf32, #tpu.memory_space<vmem>>, vector<1x16x64xf32>
    %406 = vector.shape_cast %405 : vector<1x16x64xf32> to vector<16x64xf32>
    %cst_117 = arith.constant dense<0.000000e+00> : vector<8x64xf32>
    %407 = tpu.matmul %391, %406, %cst_117 {dimension_numbers = #tpu.dot_dimension_numbers<[1], [0], [0], [1], [0, 0, 1, 1], [], []>} : vector<8x16xf32>, vector<16x64xf32>, vector<8x64xf32> -> vector<8x64xf32>
    %408 = arith.addf %404, %407 : vector<8x64xf32>
    %409 = arith.index_cast %401 : i32 to index
    %c0_118 = arith.constant 0 : index
    %c64_119 = arith.constant 64 : index
    %410 = vector.load %arg10[%409, %c0_118, %c64_119] : memref<8x8x128xf32, #tpu.memory_space<vmem>>, vector<1x8x64xf32>
    %411 = vector.shape_cast %410 : vector<1x8x64xf32> to vector<8x64xf32>
    %c0_120 = arith.constant 0 : index
    %c0_121 = arith.constant 0 : index
    %c0_122 = arith.constant 0 : index
    %412 = vector.load %arg5[%c0_120, %c0_121, %c0_122] : memref<3x16x64xf32, #tpu.memory_space<vmem>>, vector<1x16x64xf32>
    %413 = vector.shape_cast %412 : vector<1x16x64xf32> to vector<16x64xf32>
    %cst_123 = arith.constant dense<0.000000e+00> : vector<8x64xf32>
    %414 = tpu.matmul %397, %413, %cst_123 {dimension_numbers = #tpu.dot_dimension_numbers<[1], [0], [0], [1], [0, 0, 1, 1], [], []>} : vector<8x16xf32>, vector<16x64xf32>, vector<8x64xf32> -> vector<8x64xf32>
    %415 = arith.addf %411, %414 : vector<8x64xf32>
    %416 = vector.extract_strided_slice %408 {offsets = [0, 0], sizes = [8, 16], strides = [1, 1]} : vector<8x64xf32> to vector<8x16xf32>
    %417 = arith.negf %416 : vector<8x16xf32>
    %418 = math.exp %417 : vector<8x16xf32>
    %cst_124 = arith.constant 1.000000e+00 : f32
    %419 = vector.broadcast %cst_124 : f32 to vector<8x16xf32>
    %420 = arith.addf %419, %418 : vector<8x16xf32>
    %421 = arith.divf %419, %420 : vector<8x16xf32>
    %422 = vector.extract_strided_slice %408 {offsets = [0, 16], sizes = [8, 16], strides = [1, 1]} : vector<8x64xf32> to vector<8x16xf32>
    %423 = arith.negf %422 : vector<8x16xf32>
    %424 = math.exp %423 : vector<8x16xf32>
    %cst_125 = arith.constant 1.000000e+00 : f32
    %425 = vector.broadcast %cst_125 : f32 to vector<8x16xf32>
    %426 = arith.addf %425, %424 : vector<8x16xf32>
    %427 = arith.divf %425, %426 : vector<8x16xf32>
    %428 = vector.extract_strided_slice %408 {offsets = [0, 32], sizes = [8, 16], strides = [1, 1]} : vector<8x64xf32> to vector<8x16xf32>
    %429 = math.tanh %428 : vector<8x16xf32>
    %430 = vector.extract_strided_slice %408 {offsets = [0, 48], sizes = [8, 16], strides = [1, 1]} : vector<8x64xf32> to vector<8x16xf32>
    %431 = arith.negf %430 : vector<8x16xf32>
    %432 = math.exp %431 : vector<8x16xf32>
    %cst_126 = arith.constant 1.000000e+00 : f32
    %433 = vector.broadcast %cst_126 : f32 to vector<8x16xf32>
    %434 = arith.addf %433, %432 : vector<8x16xf32>
    %435 = arith.divf %433, %434 : vector<8x16xf32>
    %436 = vector.extract_strided_slice %415 {offsets = [0, 0], sizes = [8, 16], strides = [1, 1]} : vector<8x64xf32> to vector<8x16xf32>
    %437 = arith.negf %436 : vector<8x16xf32>
    %438 = math.exp %437 : vector<8x16xf32>
    %cst_127 = arith.constant 1.000000e+00 : f32
    %439 = vector.broadcast %cst_127 : f32 to vector<8x16xf32>
    %440 = arith.addf %439, %438 : vector<8x16xf32>
    %441 = arith.divf %439, %440 : vector<8x16xf32>
    %442 = vector.extract_strided_slice %415 {offsets = [0, 16], sizes = [8, 16], strides = [1, 1]} : vector<8x64xf32> to vector<8x16xf32>
    %443 = arith.negf %442 : vector<8x16xf32>
    %444 = math.exp %443 : vector<8x16xf32>
    %cst_128 = arith.constant 1.000000e+00 : f32
    %445 = vector.broadcast %cst_128 : f32 to vector<8x16xf32>
    %446 = arith.addf %445, %444 : vector<8x16xf32>
    %447 = arith.divf %445, %446 : vector<8x16xf32>
    %448 = vector.extract_strided_slice %415 {offsets = [0, 32], sizes = [8, 16], strides = [1, 1]} : vector<8x64xf32> to vector<8x16xf32>
    %449 = math.tanh %448 : vector<8x16xf32>
    %450 = vector.extract_strided_slice %415 {offsets = [0, 48], sizes = [8, 16], strides = [1, 1]} : vector<8x64xf32> to vector<8x16xf32>
    %451 = arith.negf %450 : vector<8x16xf32>
    %452 = math.exp %451 : vector<8x16xf32>
    %cst_129 = arith.constant 1.000000e+00 : f32
    %453 = vector.broadcast %cst_129 : f32 to vector<8x16xf32>
    %454 = arith.addf %453, %452 : vector<8x16xf32>
    %455 = arith.divf %453, %454 : vector<8x16xf32>
    %456 = arith.mulf %427, %394 : vector<8x16xf32>
    %457 = arith.mulf %421, %429 : vector<8x16xf32>
    %458 = arith.addf %456, %457 : vector<8x16xf32>
    %459 = math.tanh %458 : vector<8x16xf32>
    %460 = arith.mulf %435, %459 : vector<8x16xf32>
    %461 = arith.mulf %447, %400 : vector<8x16xf32>
    %462 = arith.mulf %441, %449 : vector<8x16xf32>
    %463 = arith.addf %461, %462 : vector<8x16xf32>
    %464 = math.tanh %463 : vector<8x16xf32>
    %465 = arith.mulf %455, %464 : vector<8x16xf32>
    %466 = vector.broadcast %c4_i32 : i32 to vector<8x1xi32>
    %467 = arith.cmpi slt, %466, %0 : vector<8x1xi32>
    %468 = vector.broadcast %401 : i32 to vector<8x1xi32>
    %469 = arith.cmpi slt, %468, %0 : vector<8x1xi32>
    %cst_130 = arith.constant 0.000000e+00 : f32
    %470 = vector.broadcast %cst_130 : f32 to vector<8x16xf32>
    %471 = vector.shape_cast %467 : vector<8x1xi1> to vector<8x1xi1>
    %472 = vector.broadcast %471 : vector<8x1xi1> to vector<8x16xi1>
    %473 = arith.select %472, %460, %470 : vector<8x16xi1>, vector<8x16xf32>
    %474 = arith.index_cast %c4_i32 : i32 to index
    %c0_131 = arith.constant 0 : index
    %c0_132 = arith.constant 0 : index
    %475 = vector.load %arg9[%474, %c0_131, %c0_132] : memref<8x8x32xf32, #tpu.memory_space<vmem>>, vector<1x8x16xf32>
    %476 = vector.shape_cast %475 : vector<1x8x16xf32> to vector<8x16xf32>
    %477 = vector.shape_cast %473 : vector<8x16xf32> to vector<1x8x16xf32>
    tpu.vector_store %arg9[%474, %c0_131, %c0_132], %477 {strides = array<i32>} : memref<8x8x32xf32, #tpu.memory_space<vmem>>, vector<1x8x16xf32>,
    %cst_133 = arith.constant 0.000000e+00 : f32
    %478 = vector.broadcast %cst_133 : f32 to vector<8x16xf32>
    %479 = vector.shape_cast %469 : vector<8x1xi1> to vector<8x1xi1>
    %480 = vector.broadcast %479 : vector<8x1xi1> to vector<8x16xi1>
    %481 = arith.select %480, %465, %478 : vector<8x16xi1>, vector<8x16xf32>
    %482 = arith.index_cast %401 : i32 to index
    %c0_134 = arith.constant 0 : index
    %c16_135 = arith.constant 16 : index
    %483 = vector.load %arg9[%482, %c0_134, %c16_135] : memref<8x8x32xf32, #tpu.memory_space<vmem>>, vector<1x8x16xf32>
    %484 = vector.shape_cast %483 : vector<1x8x16xf32> to vector<8x16xf32>
    %485 = vector.shape_cast %481 : vector<8x16xf32> to vector<1x8x16xf32>
    tpu.vector_store %arg9[%482, %c0_134, %c16_135], %485 {strides = array<i32>} : memref<8x8x32xf32, #tpu.memory_space<vmem>>, vector<1x8x16xf32>,
    %486 = vector.shape_cast %467 : vector<8x1xi1> to vector<8x1xi1>
    %487 = vector.broadcast %486 : vector<8x1xi1> to vector<8x16xi1>
    %488 = arith.select %487, %460, %391 : vector<8x16xi1>, vector<8x16xf32>
    %489 = vector.shape_cast %467 : vector<8x1xi1> to vector<8x1xi1>
    %490 = vector.broadcast %489 : vector<8x1xi1> to vector<8x16xi1>
    %491 = arith.select %490, %458, %394 : vector<8x16xi1>, vector<8x16xf32>
    %492 = vector.shape_cast %469 : vector<8x1xi1> to vector<8x1xi1>
    %493 = vector.broadcast %492 : vector<8x1xi1> to vector<8x16xi1>
    %494 = arith.select %493, %465, %397 : vector<8x16xi1>, vector<8x16xf32>
    %495 = vector.shape_cast %469 : vector<8x1xi1> to vector<8x1xi1>
    %496 = vector.broadcast %495 : vector<8x1xi1> to vector<8x16xi1>
    %497 = arith.select %496, %463, %400 : vector<8x16xi1>, vector<8x16xf32>
    %c5_i32 = arith.constant 5 : i32
    %c7_i32_136 = arith.constant 7 : i32
    %498 = arith.subi %c7_i32_136, %c5_i32 : i32
    %499 = arith.index_cast %c5_i32 : i32 to index
    %c0_137 = arith.constant 0 : index
    %c0_138 = arith.constant 0 : index
    %500 = vector.load %arg10[%499, %c0_137, %c0_138] : memref<8x8x128xf32, #tpu.memory_space<vmem>>, vector<1x8x64xf32>
    %501 = vector.shape_cast %500 : vector<1x8x64xf32> to vector<8x64xf32>
    %c0_139 = arith.constant 0 : index
    %c0_140 = arith.constant 0 : index
    %c0_141 = arith.constant 0 : index
    %502 = vector.load %arg4[%c0_139, %c0_140, %c0_141] : memref<3x16x64xf32, #tpu.memory_space<vmem>>, vector<1x16x64xf32>
    %503 = vector.shape_cast %502 : vector<1x16x64xf32> to vector<16x64xf32>
    %cst_142 = arith.constant dense<0.000000e+00> : vector<8x64xf32>
    %504 = tpu.matmul %488, %503, %cst_142 {dimension_numbers = #tpu.dot_dimension_numbers<[1], [0], [0], [1], [0, 0, 1, 1], [], []>} : vector<8x16xf32>, vector<16x64xf32>, vector<8x64xf32> -> vector<8x64xf32>
    %505 = arith.addf %501, %504 : vector<8x64xf32>
    %506 = arith.index_cast %498 : i32 to index
    %c0_143 = arith.constant 0 : index
    %c64_144 = arith.constant 64 : index
    %507 = vector.load %arg10[%506, %c0_143, %c64_144] : memref<8x8x128xf32, #tpu.memory_space<vmem>>, vector<1x8x64xf32>
    %508 = vector.shape_cast %507 : vector<1x8x64xf32> to vector<8x64xf32>
    %c0_145 = arith.constant 0 : index
    %c0_146 = arith.constant 0 : index
    %c0_147 = arith.constant 0 : index
    %509 = vector.load %arg5[%c0_145, %c0_146, %c0_147] : memref<3x16x64xf32, #tpu.memory_space<vmem>>, vector<1x16x64xf32>
    %510 = vector.shape_cast %509 : vector<1x16x64xf32> to vector<16x64xf32>
    %cst_148 = arith.constant dense<0.000000e+00> : vector<8x64xf32>
    %511 = tpu.matmul %494, %510, %cst_148 {dimension_numbers = #tpu.dot_dimension_numbers<[1], [0], [0], [1], [0, 0, 1, 1], [], []>} : vector<8x16xf32>, vector<16x64xf32>, vector<8x64xf32> -> vector<8x64xf32>
    %512 = arith.addf %508, %511 : vector<8x64xf32>
    %513 = vector.extract_strided_slice %505 {offsets = [0, 0], sizes = [8, 16], strides = [1, 1]} : vector<8x64xf32> to vector<8x16xf32>
    %514 = arith.negf %513 : vector<8x16xf32>
    %515 = math.exp %514 : vector<8x16xf32>
    %cst_149 = arith.constant 1.000000e+00 : f32
    %516 = vector.broadcast %cst_149 : f32 to vector<8x16xf32>
    %517 = arith.addf %516, %515 : vector<8x16xf32>
    %518 = arith.divf %516, %517 : vector<8x16xf32>
    %519 = vector.extract_strided_slice %505 {offsets = [0, 16], sizes = [8, 16], strides = [1, 1]} : vector<8x64xf32> to vector<8x16xf32>
    %520 = arith.negf %519 : vector<8x16xf32>
    %521 = math.exp %520 : vector<8x16xf32>
    %cst_150 = arith.constant 1.000000e+00 : f32
    %522 = vector.broadcast %cst_150 : f32 to vector<8x16xf32>
    %523 = arith.addf %522, %521 : vector<8x16xf32>
    %524 = arith.divf %522, %523 : vector<8x16xf32>
    %525 = vector.extract_strided_slice %505 {offsets = [0, 32], sizes = [8, 16], strides = [1, 1]} : vector<8x64xf32> to vector<8x16xf32>
    %526 = math.tanh %525 : vector<8x16xf32>
    %527 = vector.extract_strided_slice %505 {offsets = [0, 48], sizes = [8, 16], strides = [1, 1]} : vector<8x64xf32> to vector<8x16xf32>
    %528 = arith.negf %527 : vector<8x16xf32>
    %529 = math.exp %528 : vector<8x16xf32>
    %cst_151 = arith.constant 1.000000e+00 : f32
    %530 = vector.broadcast %cst_151 : f32 to vector<8x16xf32>
    %531 = arith.addf %530, %529 : vector<8x16xf32>
    %532 = arith.divf %530, %531 : vector<8x16xf32>
    %533 = vector.extract_strided_slice %512 {offsets = [0, 0], sizes = [8, 16], strides = [1, 1]} : vector<8x64xf32> to vector<8x16xf32>
    %534 = arith.negf %533 : vector<8x16xf32>
    %535 = math.exp %534 : vector<8x16xf32>
    %cst_152 = arith.constant 1.000000e+00 : f32
    %536 = vector.broadcast %cst_152 : f32 to vector<8x16xf32>
    %537 = arith.addf %536, %535 : vector<8x16xf32>
    %538 = arith.divf %536, %537 : vector<8x16xf32>
    %539 = vector.extract_strided_slice %512 {offsets = [0, 16], sizes = [8, 16], strides = [1, 1]} : vector<8x64xf32> to vector<8x16xf32>
    %540 = arith.negf %539 : vector<8x16xf32>
    %541 = math.exp %540 : vector<8x16xf32>
    %cst_153 = arith.constant 1.000000e+00 : f32
    %542 = vector.broadcast %cst_153 : f32 to vector<8x16xf32>
    %543 = arith.addf %542, %541 : vector<8x16xf32>
    %544 = arith.divf %542, %543 : vector<8x16xf32>
    %545 = vector.extract_strided_slice %512 {offsets = [0, 32], sizes = [8, 16], strides = [1, 1]} : vector<8x64xf32> to vector<8x16xf32>
    %546 = math.tanh %545 : vector<8x16xf32>
    %547 = vector.extract_strided_slice %512 {offsets = [0, 48], sizes = [8, 16], strides = [1, 1]} : vector<8x64xf32> to vector<8x16xf32>
    %548 = arith.negf %547 : vector<8x16xf32>
    %549 = math.exp %548 : vector<8x16xf32>
    %cst_154 = arith.constant 1.000000e+00 : f32
    %550 = vector.broadcast %cst_154 : f32 to vector<8x16xf32>
    %551 = arith.addf %550, %549 : vector<8x16xf32>
    %552 = arith.divf %550, %551 : vector<8x16xf32>
    %553 = arith.mulf %524, %491 : vector<8x16xf32>
    %554 = arith.mulf %518, %526 : vector<8x16xf32>
    %555 = arith.addf %553, %554 : vector<8x16xf32>
    %556 = math.tanh %555 : vector<8x16xf32>
    %557 = arith.mulf %532, %556 : vector<8x16xf32>
    %558 = arith.mulf %544, %497 : vector<8x16xf32>
    %559 = arith.mulf %538, %546 : vector<8x16xf32>
    %560 = arith.addf %558, %559 : vector<8x16xf32>
    %561 = math.tanh %560 : vector<8x16xf32>
    %562 = arith.mulf %552, %561 : vector<8x16xf32>
    %563 = vector.broadcast %c5_i32 : i32 to vector<8x1xi32>
    %564 = arith.cmpi slt, %563, %0 : vector<8x1xi32>
    %565 = vector.broadcast %498 : i32 to vector<8x1xi32>
    %566 = arith.cmpi slt, %565, %0 : vector<8x1xi32>
    %cst_155 = arith.constant 0.000000e+00 : f32
    %567 = vector.broadcast %cst_155 : f32 to vector<8x16xf32>
    %568 = vector.shape_cast %564 : vector<8x1xi1> to vector<8x1xi1>
    %569 = vector.broadcast %568 : vector<8x1xi1> to vector<8x16xi1>
    %570 = arith.select %569, %557, %567 : vector<8x16xi1>, vector<8x16xf32>
    %571 = arith.index_cast %c5_i32 : i32 to index
    %c0_156 = arith.constant 0 : index
    %c0_157 = arith.constant 0 : index
    %572 = vector.load %arg9[%571, %c0_156, %c0_157] : memref<8x8x32xf32, #tpu.memory_space<vmem>>, vector<1x8x16xf32>
    %573 = vector.shape_cast %572 : vector<1x8x16xf32> to vector<8x16xf32>
    %574 = vector.shape_cast %570 : vector<8x16xf32> to vector<1x8x16xf32>
    tpu.vector_store %arg9[%571, %c0_156, %c0_157], %574 {strides = array<i32>} : memref<8x8x32xf32, #tpu.memory_space<vmem>>, vector<1x8x16xf32>,
    %cst_158 = arith.constant 0.000000e+00 : f32
    %575 = vector.broadcast %cst_158 : f32 to vector<8x16xf32>
    %576 = vector.shape_cast %566 : vector<8x1xi1> to vector<8x1xi1>
    %577 = vector.broadcast %576 : vector<8x1xi1> to vector<8x16xi1>
    %578 = arith.select %577, %562, %575 : vector<8x16xi1>, vector<8x16xf32>
    %579 = arith.index_cast %498 : i32 to index
    %c0_159 = arith.constant 0 : index
    %c16_160 = arith.constant 16 : index
    %580 = vector.load %arg9[%579, %c0_159, %c16_160] : memref<8x8x32xf32, #tpu.memory_space<vmem>>, vector<1x8x16xf32>
    %581 = vector.shape_cast %580 : vector<1x8x16xf32> to vector<8x16xf32>
    %582 = vector.shape_cast %578 : vector<8x16xf32> to vector<1x8x16xf32>
    tpu.vector_store %arg9[%579, %c0_159, %c16_160], %582 {strides = array<i32>} : memref<8x8x32xf32, #tpu.memory_space<vmem>>, vector<1x8x16xf32>,
    %583 = vector.shape_cast %564 : vector<8x1xi1> to vector<8x1xi1>
    %584 = vector.broadcast %583 : vector<8x1xi1> to vector<8x16xi1>
    %585 = arith.select %584, %557, %488 : vector<8x16xi1>, vector<8x16xf32>
    %586 = vector.shape_cast %564 : vector<8x1xi1> to vector<8x1xi1>
    %587 = vector.broadcast %586 : vector<8x1xi1> to vector<8x16xi1>
    %588 = arith.select %587, %555, %491 : vector<8x16xi1>, vector<8x16xf32>
    %589 = vector.shape_cast %566 : vector<8x1xi1> to vector<8x1xi1>
    %590 = vector.broadcast %589 : vector<8x1xi1> to vector<8x16xi1>
    %591 = arith.select %590, %562, %494 : vector<8x16xi1>, vector<8x16xf32>
    %592 = vector.shape_cast %566 : vector<8x1xi1> to vector<8x1xi1>
    %593 = vector.broadcast %592 : vector<8x1xi1> to vector<8x16xi1>
    %594 = arith.select %593, %560, %497 : vector<8x16xi1>, vector<8x16xf32>
    %c6_i32 = arith.constant 6 : i32
    %c7_i32_161 = arith.constant 7 : i32
    %595 = arith.subi %c7_i32_161, %c6_i32 : i32
    %596 = arith.index_cast %c6_i32 : i32 to index
    %c0_162 = arith.constant 0 : index
    %c0_163 = arith.constant 0 : index
    %597 = vector.load %arg10[%596, %c0_162, %c0_163] : memref<8x8x128xf32, #tpu.memory_space<vmem>>, vector<1x8x64xf32>
    %598 = vector.shape_cast %597 : vector<1x8x64xf32> to vector<8x64xf32>
    %c0_164 = arith.constant 0 : index
    %c0_165 = arith.constant 0 : index
    %c0_166 = arith.constant 0 : index
    %599 = vector.load %arg4[%c0_164, %c0_165, %c0_166] : memref<3x16x64xf32, #tpu.memory_space<vmem>>, vector<1x16x64xf32>
    %600 = vector.shape_cast %599 : vector<1x16x64xf32> to vector<16x64xf32>
    %cst_167 = arith.constant dense<0.000000e+00> : vector<8x64xf32>
    %601 = tpu.matmul %585, %600, %cst_167 {dimension_numbers = #tpu.dot_dimension_numbers<[1], [0], [0], [1], [0, 0, 1, 1], [], []>} : vector<8x16xf32>, vector<16x64xf32>, vector<8x64xf32> -> vector<8x64xf32>
    %602 = arith.addf %598, %601 : vector<8x64xf32>
    %603 = arith.index_cast %595 : i32 to index
    %c0_168 = arith.constant 0 : index
    %c64_169 = arith.constant 64 : index
    %604 = vector.load %arg10[%603, %c0_168, %c64_169] : memref<8x8x128xf32, #tpu.memory_space<vmem>>, vector<1x8x64xf32>
    %605 = vector.shape_cast %604 : vector<1x8x64xf32> to vector<8x64xf32>
    %c0_170 = arith.constant 0 : index
    %c0_171 = arith.constant 0 : index
    %c0_172 = arith.constant 0 : index
    %606 = vector.load %arg5[%c0_170, %c0_171, %c0_172] : memref<3x16x64xf32, #tpu.memory_space<vmem>>, vector<1x16x64xf32>
    %607 = vector.shape_cast %606 : vector<1x16x64xf32> to vector<16x64xf32>
    %cst_173 = arith.constant dense<0.000000e+00> : vector<8x64xf32>
    %608 = tpu.matmul %591, %607, %cst_173 {dimension_numbers = #tpu.dot_dimension_numbers<[1], [0], [0], [1], [0, 0, 1, 1], [], []>} : vector<8x16xf32>, vector<16x64xf32>, vector<8x64xf32> -> vector<8x64xf32>
    %609 = arith.addf %605, %608 : vector<8x64xf32>
    %610 = vector.extract_strided_slice %602 {offsets = [0, 0], sizes = [8, 16], strides = [1, 1]} : vector<8x64xf32> to vector<8x16xf32>
    %611 = arith.negf %610 : vector<8x16xf32>
    %612 = math.exp %611 : vector<8x16xf32>
    %cst_174 = arith.constant 1.000000e+00 : f32
    %613 = vector.broadcast %cst_174 : f32 to vector<8x16xf32>
    %614 = arith.addf %613, %612 : vector<8x16xf32>
    %615 = arith.divf %613, %614 : vector<8x16xf32>
    %616 = vector.extract_strided_slice %602 {offsets = [0, 16], sizes = [8, 16], strides = [1, 1]} : vector<8x64xf32> to vector<8x16xf32>
    %617 = arith.negf %616 : vector<8x16xf32>
    %618 = math.exp %617 : vector<8x16xf32>
    %cst_175 = arith.constant 1.000000e+00 : f32
    %619 = vector.broadcast %cst_175 : f32 to vector<8x16xf32>
    %620 = arith.addf %619, %618 : vector<8x16xf32>
    %621 = arith.divf %619, %620 : vector<8x16xf32>
    %622 = vector.extract_strided_slice %602 {offsets = [0, 32], sizes = [8, 16], strides = [1, 1]} : vector<8x64xf32> to vector<8x16xf32>
    %623 = math.tanh %622 : vector<8x16xf32>
    %624 = vector.extract_strided_slice %602 {offsets = [0, 48], sizes = [8, 16], strides = [1, 1]} : vector<8x64xf32> to vector<8x16xf32>
    %625 = arith.negf %624 : vector<8x16xf32>
    %626 = math.exp %625 : vector<8x16xf32>
    %cst_176 = arith.constant 1.000000e+00 : f32
    %627 = vector.broadcast %cst_176 : f32 to vector<8x16xf32>
    %628 = arith.addf %627, %626 : vector<8x16xf32>
    %629 = arith.divf %627, %628 : vector<8x16xf32>
    %630 = vector.extract_strided_slice %609 {offsets = [0, 0], sizes = [8, 16], strides = [1, 1]} : vector<8x64xf32> to vector<8x16xf32>
    %631 = arith.negf %630 : vector<8x16xf32>
    %632 = math.exp %631 : vector<8x16xf32>
    %cst_177 = arith.constant 1.000000e+00 : f32
    %633 = vector.broadcast %cst_177 : f32 to vector<8x16xf32>
    %634 = arith.addf %633, %632 : vector<8x16xf32>
    %635 = arith.divf %633, %634 : vector<8x16xf32>
    %636 = vector.extract_strided_slice %609 {offsets = [0, 16], sizes = [8, 16], strides = [1, 1]} : vector<8x64xf32> to vector<8x16xf32>
    %637 = arith.negf %636 : vector<8x16xf32>
    %638 = math.exp %637 : vector<8x16xf32>
    %cst_178 = arith.constant 1.000000e+00 : f32
    %639 = vector.broadcast %cst_178 : f32 to vector<8x16xf32>
    %640 = arith.addf %639, %638 : vector<8x16xf32>
    %641 = arith.divf %639, %640 : vector<8x16xf32>
    %642 = vector.extract_strided_slice %609 {offsets = [0, 32], sizes = [8, 16], strides = [1, 1]} : vector<8x64xf32> to vector<8x16xf32>
    %643 = math.tanh %642 : vector<8x16xf32>
    %644 = vector.extract_strided_slice %609 {offsets = [0, 48], sizes = [8, 16], strides = [1, 1]} : vector<8x64xf32> to vector<8x16xf32>
    %645 = arith.negf %644 : vector<8x16xf32>
    %646 = math.exp %645 : vector<8x16xf32>
    %cst_179 = arith.constant 1.000000e+00 : f32
    %647 = vector.broadcast %cst_179 : f32 to vector<8x16xf32>
    %648 = arith.addf %647, %646 : vector<8x16xf32>
    %649 = arith.divf %647, %648 : vector<8x16xf32>
    %650 = arith.mulf %621, %588 : vector<8x16xf32>
    %651 = arith.mulf %615, %623 : vector<8x16xf32>
    %652 = arith.addf %650, %651 : vector<8x16xf32>
    %653 = math.tanh %652 : vector<8x16xf32>
    %654 = arith.mulf %629, %653 : vector<8x16xf32>
    %655 = arith.mulf %641, %594 : vector<8x16xf32>
    %656 = arith.mulf %635, %643 : vector<8x16xf32>
    %657 = arith.addf %655, %656 : vector<8x16xf32>
    %658 = math.tanh %657 : vector<8x16xf32>
    %659 = arith.mulf %649, %658 : vector<8x16xf32>
    %660 = vector.broadcast %c6_i32 : i32 to vector<8x1xi32>
    %661 = arith.cmpi slt, %660, %0 : vector<8x1xi32>
    %662 = vector.broadcast %595 : i32 to vector<8x1xi32>
    %663 = arith.cmpi slt, %662, %0 : vector<8x1xi32>
    %cst_180 = arith.constant 0.000000e+00 : f32
    %664 = vector.broadcast %cst_180 : f32 to vector<8x16xf32>
    %665 = vector.shape_cast %661 : vector<8x1xi1> to vector<8x1xi1>
    %666 = vector.broadcast %665 : vector<8x1xi1> to vector<8x16xi1>
    %667 = arith.select %666, %654, %664 : vector<8x16xi1>, vector<8x16xf32>
    %668 = arith.index_cast %c6_i32 : i32 to index
    %c0_181 = arith.constant 0 : index
    %c0_182 = arith.constant 0 : index
    %669 = vector.load %arg9[%668, %c0_181, %c0_182] : memref<8x8x32xf32, #tpu.memory_space<vmem>>, vector<1x8x16xf32>
    %670 = vector.shape_cast %669 : vector<1x8x16xf32> to vector<8x16xf32>
    %671 = vector.shape_cast %667 : vector<8x16xf32> to vector<1x8x16xf32>
    tpu.vector_store %arg9[%668, %c0_181, %c0_182], %671 {strides = array<i32>} : memref<8x8x32xf32, #tpu.memory_space<vmem>>, vector<1x8x16xf32>,
    %cst_183 = arith.constant 0.000000e+00 : f32
    %672 = vector.broadcast %cst_183 : f32 to vector<8x16xf32>
    %673 = vector.shape_cast %663 : vector<8x1xi1> to vector<8x1xi1>
    %674 = vector.broadcast %673 : vector<8x1xi1> to vector<8x16xi1>
    %675 = arith.select %674, %659, %672 : vector<8x16xi1>, vector<8x16xf32>
    %676 = arith.index_cast %595 : i32 to index
    %c0_184 = arith.constant 0 : index
    %c16_185 = arith.constant 16 : index
    %677 = vector.load %arg9[%676, %c0_184, %c16_185] : memref<8x8x32xf32, #tpu.memory_space<vmem>>, vector<1x8x16xf32>
    %678 = vector.shape_cast %677 : vector<1x8x16xf32> to vector<8x16xf32>
    %679 = vector.shape_cast %675 : vector<8x16xf32> to vector<1x8x16xf32>
    tpu.vector_store %arg9[%676, %c0_184, %c16_185], %679 {strides = array<i32>} : memref<8x8x32xf32, #tpu.memory_space<vmem>>, vector<1x8x16xf32>,
    %680 = vector.shape_cast %661 : vector<8x1xi1> to vector<8x1xi1>
    %681 = vector.broadcast %680 : vector<8x1xi1> to vector<8x16xi1>
    %682 = arith.select %681, %654, %585 : vector<8x16xi1>, vector<8x16xf32>
    %683 = vector.shape_cast %661 : vector<8x1xi1> to vector<8x1xi1>
    %684 = vector.broadcast %683 : vector<8x1xi1> to vector<8x16xi1>
    %685 = arith.select %684, %652, %588 : vector<8x16xi1>, vector<8x16xf32>
    %686 = vector.shape_cast %663 : vector<8x1xi1> to vector<8x1xi1>
    %687 = vector.broadcast %686 : vector<8x1xi1> to vector<8x16xi1>
    %688 = arith.select %687, %659, %591 : vector<8x16xi1>, vector<8x16xf32>
    %689 = vector.shape_cast %663 : vector<8x1xi1> to vector<8x1xi1>
    %690 = vector.broadcast %689 : vector<8x1xi1> to vector<8x16xi1>
    %691 = arith.select %690, %657, %594 : vector<8x16xi1>, vector<8x16xf32>
    %c7_i32_186 = arith.constant 7 : i32
    %c7_i32_187 = arith.constant 7 : i32
    %692 = arith.subi %c7_i32_187, %c7_i32_186 : i32
    %693 = arith.index_cast %c7_i32_186 : i32 to index
    %c0_188 = arith.constant 0 : index
    %c0_189 = arith.constant 0 : index
    %694 = vector.load %arg10[%693, %c0_188, %c0_189] : memref<8x8x128xf32, #tpu.memory_space<vmem>>, vector<1x8x64xf32>
    %695 = vector.shape_cast %694 : vector<1x8x64xf32> to vector<8x64xf32>
    %c0_190 = arith.constant 0 : index
    %c0_191 = arith.constant 0 : index
    %c0_192 = arith.constant 0 : index
    %696 = vector.load %arg4[%c0_190, %c0_191, %c0_192] : memref<3x16x64xf32, #tpu.memory_space<vmem>>, vector<1x16x64xf32>
    %697 = vector.shape_cast %696 : vector<1x16x64xf32> to vector<16x64xf32>
    %cst_193 = arith.constant dense<0.000000e+00> : vector<8x64xf32>
    %698 = tpu.matmul %682, %697, %cst_193 {dimension_numbers = #tpu.dot_dimension_numbers<[1], [0], [0], [1], [0, 0, 1, 1], [], []>} : vector<8x16xf32>, vector<16x64xf32>, vector<8x64xf32> -> vector<8x64xf32>
    %699 = arith.addf %695, %698 : vector<8x64xf32>
    %700 = arith.index_cast %692 : i32 to index
    %c0_194 = arith.constant 0 : index
    %c64_195 = arith.constant 64 : index
    %701 = vector.load %arg10[%700, %c0_194, %c64_195] : memref<8x8x128xf32, #tpu.memory_space<vmem>>, vector<1x8x64xf32>
    %702 = vector.shape_cast %701 : vector<1x8x64xf32> to vector<8x64xf32>
    %c0_196 = arith.constant 0 : index
    %c0_197 = arith.constant 0 : index
    %c0_198 = arith.constant 0 : index
    %703 = vector.load %arg5[%c0_196, %c0_197, %c0_198] : memref<3x16x64xf32, #tpu.memory_space<vmem>>, vector<1x16x64xf32>
    %704 = vector.shape_cast %703 : vector<1x16x64xf32> to vector<16x64xf32>
    %cst_199 = arith.constant dense<0.000000e+00> : vector<8x64xf32>
    %705 = tpu.matmul %688, %704, %cst_199 {dimension_numbers = #tpu.dot_dimension_numbers<[1], [0], [0], [1], [0, 0, 1, 1], [], []>} : vector<8x16xf32>, vector<16x64xf32>, vector<8x64xf32> -> vector<8x64xf32>
    %706 = arith.addf %702, %705 : vector<8x64xf32>
    %707 = vector.extract_strided_slice %699 {offsets = [0, 0], sizes = [8, 16], strides = [1, 1]} : vector<8x64xf32> to vector<8x16xf32>
    %708 = arith.negf %707 : vector<8x16xf32>
    %709 = math.exp %708 : vector<8x16xf32>
    %cst_200 = arith.constant 1.000000e+00 : f32
    %710 = vector.broadcast %cst_200 : f32 to vector<8x16xf32>
    %711 = arith.addf %710, %709 : vector<8x16xf32>
    %712 = arith.divf %710, %711 : vector<8x16xf32>
    %713 = vector.extract_strided_slice %699 {offsets = [0, 16], sizes = [8, 16], strides = [1, 1]} : vector<8x64xf32> to vector<8x16xf32>
    %714 = arith.negf %713 : vector<8x16xf32>
    %715 = math.exp %714 : vector<8x16xf32>
    %cst_201 = arith.constant 1.000000e+00 : f32
    %716 = vector.broadcast %cst_201 : f32 to vector<8x16xf32>
    %717 = arith.addf %716, %715 : vector<8x16xf32>
    %718 = arith.divf %716, %717 : vector<8x16xf32>
    %719 = vector.extract_strided_slice %699 {offsets = [0, 32], sizes = [8, 16], strides = [1, 1]} : vector<8x64xf32> to vector<8x16xf32>
    %720 = math.tanh %719 : vector<8x16xf32>
    %721 = vector.extract_strided_slice %699 {offsets = [0, 48], sizes = [8, 16], strides = [1, 1]} : vector<8x64xf32> to vector<8x16xf32>
    %722 = arith.negf %721 : vector<8x16xf32>
    %723 = math.exp %722 : vector<8x16xf32>
    %cst_202 = arith.constant 1.000000e+00 : f32
    %724 = vector.broadcast %cst_202 : f32 to vector<8x16xf32>
    %725 = arith.addf %724, %723 : vector<8x16xf32>
    %726 = arith.divf %724, %725 : vector<8x16xf32>
    %727 = vector.extract_strided_slice %706 {offsets = [0, 0], sizes = [8, 16], strides = [1, 1]} : vector<8x64xf32> to vector<8x16xf32>
    %728 = arith.negf %727 : vector<8x16xf32>
    %729 = math.exp %728 : vector<8x16xf32>
    %cst_203 = arith.constant 1.000000e+00 : f32
    %730 = vector.broadcast %cst_203 : f32 to vector<8x16xf32>
    %731 = arith.addf %730, %729 : vector<8x16xf32>
    %732 = arith.divf %730, %731 : vector<8x16xf32>
    %733 = vector.extract_strided_slice %706 {offsets = [0, 16], sizes = [8, 16], strides = [1, 1]} : vector<8x64xf32> to vector<8x16xf32>
    %734 = arith.negf %733 : vector<8x16xf32>
    %735 = math.exp %734 : vector<8x16xf32>
    %cst_204 = arith.constant 1.000000e+00 : f32
    %736 = vector.broadcast %cst_204 : f32 to vector<8x16xf32>
    %737 = arith.addf %736, %735 : vector<8x16xf32>
    %738 = arith.divf %736, %737 : vector<8x16xf32>
    %739 = vector.extract_strided_slice %706 {offsets = [0, 32], sizes = [8, 16], strides = [1, 1]} : vector<8x64xf32> to vector<8x16xf32>
    %740 = math.tanh %739 : vector<8x16xf32>
    %741 = vector.extract_strided_slice %706 {offsets = [0, 48], sizes = [8, 16], strides = [1, 1]} : vector<8x64xf32> to vector<8x16xf32>
    %742 = arith.negf %741 : vector<8x16xf32>
    %743 = math.exp %742 : vector<8x16xf32>
    %cst_205 = arith.constant 1.000000e+00 : f32
    %744 = vector.broadcast %cst_205 : f32 to vector<8x16xf32>
    %745 = arith.addf %744, %743 : vector<8x16xf32>
    %746 = arith.divf %744, %745 : vector<8x16xf32>
    %747 = arith.mulf %718, %685 : vector<8x16xf32>
    %748 = arith.mulf %712, %720 : vector<8x16xf32>
    %749 = arith.addf %747, %748 : vector<8x16xf32>
    %750 = math.tanh %749 : vector<8x16xf32>
    %751 = arith.mulf %726, %750 : vector<8x16xf32>
    %752 = arith.mulf %738, %691 : vector<8x16xf32>
    %753 = arith.mulf %732, %740 : vector<8x16xf32>
    %754 = arith.addf %752, %753 : vector<8x16xf32>
    %755 = math.tanh %754 : vector<8x16xf32>
    %756 = arith.mulf %746, %755 : vector<8x16xf32>
    %757 = vector.broadcast %c7_i32_186 : i32 to vector<8x1xi32>
    %758 = arith.cmpi slt, %757, %0 : vector<8x1xi32>
    %759 = vector.broadcast %692 : i32 to vector<8x1xi32>
    %760 = arith.cmpi slt, %759, %0 : vector<8x1xi32>
    %cst_206 = arith.constant 0.000000e+00 : f32
    %761 = vector.broadcast %cst_206 : f32 to vector<8x16xf32>
    %762 = vector.shape_cast %758 : vector<8x1xi1> to vector<8x1xi1>
    %763 = vector.broadcast %762 : vector<8x1xi1> to vector<8x16xi1>
    %764 = arith.select %763, %751, %761 : vector<8x16xi1>, vector<8x16xf32>
    %765 = arith.index_cast %c7_i32_186 : i32 to index
    %c0_207 = arith.constant 0 : index
    %c0_208 = arith.constant 0 : index
    %766 = vector.load %arg9[%765, %c0_207, %c0_208] : memref<8x8x32xf32, #tpu.memory_space<vmem>>, vector<1x8x16xf32>
    %767 = vector.shape_cast %766 : vector<1x8x16xf32> to vector<8x16xf32>
    %768 = vector.shape_cast %764 : vector<8x16xf32> to vector<1x8x16xf32>
    tpu.vector_store %arg9[%765, %c0_207, %c0_208], %768 {strides = array<i32>} : memref<8x8x32xf32, #tpu.memory_space<vmem>>, vector<1x8x16xf32>,
    %cst_209 = arith.constant 0.000000e+00 : f32
    %769 = vector.broadcast %cst_209 : f32 to vector<8x16xf32>
    %770 = vector.shape_cast %760 : vector<8x1xi1> to vector<8x1xi1>
    %771 = vector.broadcast %770 : vector<8x1xi1> to vector<8x16xi1>
    %772 = arith.select %771, %756, %769 : vector<8x16xi1>, vector<8x16xf32>
    %773 = arith.index_cast %692 : i32 to index
    %c0_210 = arith.constant 0 : index
    %c16_211 = arith.constant 16 : index
    %774 = vector.load %arg9[%773, %c0_210, %c16_211] : memref<8x8x32xf32, #tpu.memory_space<vmem>>, vector<1x8x16xf32>
    %775 = vector.shape_cast %774 : vector<1x8x16xf32> to vector<8x16xf32>
    %776 = vector.shape_cast %772 : vector<8x16xf32> to vector<1x8x16xf32>
    tpu.vector_store %arg9[%773, %c0_210, %c16_211], %776 {strides = array<i32>} : memref<8x8x32xf32, #tpu.memory_space<vmem>>, vector<1x8x16xf32>,
    %777 = vector.shape_cast %758 : vector<8x1xi1> to vector<8x1xi1>
    %778 = vector.broadcast %777 : vector<8x1xi1> to vector<8x16xi1>
    %779 = arith.select %778, %751, %682 : vector<8x16xi1>, vector<8x16xf32>
    %780 = vector.shape_cast %758 : vector<8x1xi1> to vector<8x1xi1>
    %781 = vector.broadcast %780 : vector<8x1xi1> to vector<8x16xi1>
    %782 = arith.select %781, %749, %685 : vector<8x16xi1>, vector<8x16xf32>
    %783 = vector.shape_cast %760 : vector<8x1xi1> to vector<8x1xi1>
    %784 = vector.broadcast %783 : vector<8x1xi1> to vector<8x16xi1>
    %785 = arith.select %784, %756, %688 : vector<8x16xi1>, vector<8x16xf32>
    %786 = vector.shape_cast %760 : vector<8x1xi1> to vector<8x1xi1>
    %787 = vector.broadcast %786 : vector<8x1xi1> to vector<8x16xi1>
    %788 = arith.select %787, %754, %691 : vector<8x16xi1>, vector<8x16xf32>
    %c8_i32 = arith.constant 8 : i32
    %c0_212 = arith.constant 0 : index
    %c0_213 = arith.constant 0 : index
    %c0_214 = arith.constant 0 : index
    %789 = vector.load %arg7[%c0_212, %c0_213, %c0_214] : memref<3x8x32xf32, #tpu.memory_space<vmem>>, vector<1x8x16xf32>
    %790 = vector.shape_cast %789 : vector<1x8x16xf32> to vector<8x16xf32>
    %791 = vector.shape_cast %779 : vector<8x16xf32> to vector<1x8x16xf32>
    tpu.vector_store %arg7[%c0_212, %c0_213, %c0_214], %791 {strides = array<i32>} : memref<3x8x32xf32, #tpu.memory_space<vmem>>, vector<1x8x16xf32>,
    %c0_215 = arith.constant 0 : index
    %c0_216 = arith.constant 0 : index
    %c16_217 = arith.constant 16 : index
    %792 = vector.load %arg7[%c0_215, %c0_216, %c16_217] : memref<3x8x32xf32, #tpu.memory_space<vmem>>, vector<1x8x16xf32>
    %793 = vector.shape_cast %792 : vector<1x8x16xf32> to vector<8x16xf32>
    %794 = vector.shape_cast %785 : vector<8x16xf32> to vector<1x8x16xf32>
    tpu.vector_store %arg7[%c0_215, %c0_216, %c16_217], %794 {strides = array<i32>} : memref<3x8x32xf32, #tpu.memory_space<vmem>>, vector<1x8x16xf32>,
    %c0_218 = arith.constant 0 : index
    %c0_219 = arith.constant 0 : index
    %c0_220 = arith.constant 0 : index
    %795 = vector.load %arg8[%c0_218, %c0_219, %c0_220] : memref<3x8x32xf32, #tpu.memory_space<vmem>>, vector<1x8x16xf32>
    %796 = vector.shape_cast %795 : vector<1x8x16xf32> to vector<8x16xf32>
    %797 = vector.shape_cast %782 : vector<8x16xf32> to vector<1x8x16xf32>
    tpu.vector_store %arg8[%c0_218, %c0_219, %c0_220], %797 {strides = array<i32>} : memref<3x8x32xf32, #tpu.memory_space<vmem>>, vector<1x8x16xf32>,
    %c0_221 = arith.constant 0 : index
    %c0_222 = arith.constant 0 : index
    %c16_223 = arith.constant 16 : index
    %798 = vector.load %arg8[%c0_221, %c0_222, %c16_223] : memref<3x8x32xf32, #tpu.memory_space<vmem>>, vector<1x8x16xf32>
    %799 = vector.shape_cast %798 : vector<1x8x16xf32> to vector<8x16xf32>
    %800 = vector.shape_cast %788 : vector<8x16xf32> to vector<1x8x16xf32>
    tpu.vector_store %arg8[%c0_221, %c0_222, %c16_223], %800 {strides = array<i32>} : memref<3x8x32xf32, #tpu.memory_space<vmem>>, vector<1x8x16xf32>,
    %c0_224 = arith.constant 0 : index
    %c0_225 = arith.constant 0 : index
    %c0_226 = arith.constant 0 : index
    %801 = vector.load %arg9[%c0_224, %c0_225, %c0_226] : memref<8x8x32xf32, #tpu.memory_space<vmem>>, vector<8x8x32xf32>
    %802 = vector.shape_cast %801 : vector<8x8x32xf32> to vector<64x32xf32>
    %c1 = arith.constant 1 : index
    %c0_227 = arith.constant 0 : index
    %c0_228 = arith.constant 0 : index
    %803 = vector.load %arg2[%c1, %c0_227, %c0_228] : memref<3x32x128xf32, #tpu.memory_space<vmem>>, vector<1x32x128xf32>
    %804 = vector.shape_cast %803 : vector<1x32x128xf32> to vector<32x128xf32>
    %cst_229 = arith.constant dense<0.000000e+00> : vector<64x128xf32>
    %805 = tpu.matmul %802, %804, %cst_229 {dimension_numbers = #tpu.dot_dimension_numbers<[1], [0], [0], [1], [0, 0, 1, 1], [], []>} : vector<64x32xf32>, vector<32x128xf32>, vector<64x128xf32> -> vector<64x128xf32>
    %c1_230 = arith.constant 1 : index
    %c0_231 = arith.constant 0 : index
    %c0_232 = arith.constant 0 : index
    %806 = vector.load %arg3[%c1_230, %c0_231, %c0_232] : memref<3x1x128xf32, #tpu.memory_space<vmem>>, vector<1x1x128xf32>
    %807 = vector.shape_cast %806 : vector<1x1x128xf32> to vector<1x128xf32>
    %808 = vector.broadcast %807 : vector<1x128xf32> to vector<64x128xf32>
    %809 = arith.addf %805, %808 : vector<64x128xf32>
    %810 = vector.shape_cast %809 : vector<64x128xf32> to vector<8x8x128xf32>
    %c0_233 = arith.constant 0 : index
    %c0_234 = arith.constant 0 : index
    %c0_235 = arith.constant 0 : index
    %811 = vector.load %arg10[%c0_233, %c0_234, %c0_235] : memref<8x8x128xf32, #tpu.memory_space<vmem>>, vector<8x8x128xf32>
    tpu.vector_store %arg10[%c0_233, %c0_234, %c0_235], %810 {strides = array<i32>} : memref<8x8x128xf32, #tpu.memory_space<vmem>>, vector<8x8x128xf32>,
    %cst_236 = arith.constant 0.000000e+00 : f32
    %812 = vector.broadcast %cst_236 : f32 to vector<8x16xf32>
    %c0_i32_237 = arith.constant 0 : i32
    %c7_i32_238 = arith.constant 7 : i32
    %813 = arith.subi %c7_i32_238, %c0_i32_237 : i32
    %814 = arith.index_cast %c0_i32_237 : i32 to index
    %c0_239 = arith.constant 0 : index
    %c0_240 = arith.constant 0 : index
    %815 = vector.load %arg10[%814, %c0_239, %c0_240] : memref<8x8x128xf32, #tpu.memory_space<vmem>>, vector<1x8x64xf32>
    %816 = vector.shape_cast %815 : vector<1x8x64xf32> to vector<8x64xf32>
    %c1_241 = arith.constant 1 : index
    %c0_242 = arith.constant 0 : index
    %c0_243 = arith.constant 0 : index
    %817 = vector.load %arg4[%c1_241, %c0_242, %c0_243] : memref<3x16x64xf32, #tpu.memory_space<vmem>>, vector<1x16x64xf32>
    %818 = vector.shape_cast %817 : vector<1x16x64xf32> to vector<16x64xf32>
    %cst_244 = arith.constant dense<0.000000e+00> : vector<8x64xf32>
    %819 = tpu.matmul %812, %818, %cst_244 {dimension_numbers = #tpu.dot_dimension_numbers<[1], [0], [0], [1], [0, 0, 1, 1], [], []>} : vector<8x16xf32>, vector<16x64xf32>, vector<8x64xf32> -> vector<8x64xf32>
    %820 = arith.addf %816, %819 : vector<8x64xf32>
    %821 = arith.index_cast %813 : i32 to index
    %c0_245 = arith.constant 0 : index
    %c64_246 = arith.constant 64 : index
    %822 = vector.load %arg10[%821, %c0_245, %c64_246] : memref<8x8x128xf32, #tpu.memory_space<vmem>>, vector<1x8x64xf32>
    %823 = vector.shape_cast %822 : vector<1x8x64xf32> to vector<8x64xf32>
    %c1_247 = arith.constant 1 : index
    %c0_248 = arith.constant 0 : index
    %c0_249 = arith.constant 0 : index
    %824 = vector.load %arg5[%c1_247, %c0_248, %c0_249] : memref<3x16x64xf32, #tpu.memory_space<vmem>>, vector<1x16x64xf32>
    %825 = vector.shape_cast %824 : vector<1x16x64xf32> to vector<16x64xf32>
    %cst_250 = arith.constant dense<0.000000e+00> : vector<8x64xf32>
    %826 = tpu.matmul %812, %825, %cst_250 {dimension_numbers = #tpu.dot_dimension_numbers<[1], [0], [0], [1], [0, 0, 1, 1], [], []>} : vector<8x16xf32>, vector<16x64xf32>, vector<8x64xf32> -> vector<8x64xf32>
    %827 = arith.addf %823, %826 : vector<8x64xf32>
    %828 = vector.extract_strided_slice %820 {offsets = [0, 0], sizes = [8, 16], strides = [1, 1]} : vector<8x64xf32> to vector<8x16xf32>
    %829 = arith.negf %828 : vector<8x16xf32>
    %830 = math.exp %829 : vector<8x16xf32>
    %cst_251 = arith.constant 1.000000e+00 : f32
    %831 = vector.broadcast %cst_251 : f32 to vector<8x16xf32>
    %832 = arith.addf %831, %830 : vector<8x16xf32>
    %833 = arith.divf %831, %832 : vector<8x16xf32>
    %834 = vector.extract_strided_slice %820 {offsets = [0, 16], sizes = [8, 16], strides = [1, 1]} : vector<8x64xf32> to vector<8x16xf32>
    %835 = arith.negf %834 : vector<8x16xf32>
    %836 = math.exp %835 : vector<8x16xf32>
    %cst_252 = arith.constant 1.000000e+00 : f32
    %837 = vector.broadcast %cst_252 : f32 to vector<8x16xf32>
    %838 = arith.addf %837, %836 : vector<8x16xf32>
    %839 = arith.divf %837, %838 : vector<8x16xf32>
    %840 = vector.extract_strided_slice %820 {offsets = [0, 32], sizes = [8, 16], strides = [1, 1]} : vector<8x64xf32> to vector<8x16xf32>
    %841 = math.tanh %840 : vector<8x16xf32>
    %842 = vector.extract_strided_slice %820 {offsets = [0, 48], sizes = [8, 16], strides = [1, 1]} : vector<8x64xf32> to vector<8x16xf32>
    %843 = arith.negf %842 : vector<8x16xf32>
    %844 = math.exp %843 : vector<8x16xf32>
    %cst_253 = arith.constant 1.000000e+00 : f32
    %845 = vector.broadcast %cst_253 : f32 to vector<8x16xf32>
    %846 = arith.addf %845, %844 : vector<8x16xf32>
    %847 = arith.divf %845, %846 : vector<8x16xf32>
    %848 = vector.extract_strided_slice %827 {offsets = [0, 0], sizes = [8, 16], strides = [1, 1]} : vector<8x64xf32> to vector<8x16xf32>
    %849 = arith.negf %848 : vector<8x16xf32>
    %850 = math.exp %849 : vector<8x16xf32>
    %cst_254 = arith.constant 1.000000e+00 : f32
    %851 = vector.broadcast %cst_254 : f32 to vector<8x16xf32>
    %852 = arith.addf %851, %850 : vector<8x16xf32>
    %853 = arith.divf %851, %852 : vector<8x16xf32>
    %854 = vector.extract_strided_slice %827 {offsets = [0, 16], sizes = [8, 16], strides = [1, 1]} : vector<8x64xf32> to vector<8x16xf32>
    %855 = arith.negf %854 : vector<8x16xf32>
    %856 = math.exp %855 : vector<8x16xf32>
    %cst_255 = arith.constant 1.000000e+00 : f32
    %857 = vector.broadcast %cst_255 : f32 to vector<8x16xf32>
    %858 = arith.addf %857, %856 : vector<8x16xf32>
    %859 = arith.divf %857, %858 : vector<8x16xf32>
    %860 = vector.extract_strided_slice %827 {offsets = [0, 32], sizes = [8, 16], strides = [1, 1]} : vector<8x64xf32> to vector<8x16xf32>
    %861 = math.tanh %860 : vector<8x16xf32>
    %862 = vector.extract_strided_slice %827 {offsets = [0, 48], sizes = [8, 16], strides = [1, 1]} : vector<8x64xf32> to vector<8x16xf32>
    %863 = arith.negf %862 : vector<8x16xf32>
    %864 = math.exp %863 : vector<8x16xf32>
    %cst_256 = arith.constant 1.000000e+00 : f32
    %865 = vector.broadcast %cst_256 : f32 to vector<8x16xf32>
    %866 = arith.addf %865, %864 : vector<8x16xf32>
    %867 = arith.divf %865, %866 : vector<8x16xf32>
    %868 = arith.mulf %839, %812 : vector<8x16xf32>
    %869 = arith.mulf %833, %841 : vector<8x16xf32>
    %870 = arith.addf %868, %869 : vector<8x16xf32>
    %871 = math.tanh %870 : vector<8x16xf32>
    %872 = arith.mulf %847, %871 : vector<8x16xf32>
    %873 = arith.mulf %859, %812 : vector<8x16xf32>
    %874 = arith.mulf %853, %861 : vector<8x16xf32>
    %875 = arith.addf %873, %874 : vector<8x16xf32>
    %876 = math.tanh %875 : vector<8x16xf32>
    %877 = arith.mulf %867, %876 : vector<8x16xf32>
    %878 = vector.broadcast %c0_i32_237 : i32 to vector<8x1xi32>
    %879 = arith.cmpi slt, %878, %0 : vector<8x1xi32>
    %880 = vector.broadcast %813 : i32 to vector<8x1xi32>
    %881 = arith.cmpi slt, %880, %0 : vector<8x1xi32>
    %cst_257 = arith.constant 0.000000e+00 : f32
    %882 = vector.broadcast %cst_257 : f32 to vector<8x16xf32>
    %883 = vector.shape_cast %879 : vector<8x1xi1> to vector<8x1xi1>
    %884 = vector.broadcast %883 : vector<8x1xi1> to vector<8x16xi1>
    %885 = arith.select %884, %872, %882 : vector<8x16xi1>, vector<8x16xf32>
    %886 = arith.index_cast %c0_i32_237 : i32 to index
    %c0_258 = arith.constant 0 : index
    %c0_259 = arith.constant 0 : index
    %887 = vector.load %arg9[%886, %c0_258, %c0_259] : memref<8x8x32xf32, #tpu.memory_space<vmem>>, vector<1x8x16xf32>
    %888 = vector.shape_cast %887 : vector<1x8x16xf32> to vector<8x16xf32>
    %889 = vector.shape_cast %885 : vector<8x16xf32> to vector<1x8x16xf32>
    tpu.vector_store %arg9[%886, %c0_258, %c0_259], %889 {strides = array<i32>} : memref<8x8x32xf32, #tpu.memory_space<vmem>>, vector<1x8x16xf32>,
    %cst_260 = arith.constant 0.000000e+00 : f32
    %890 = vector.broadcast %cst_260 : f32 to vector<8x16xf32>
    %891 = vector.shape_cast %881 : vector<8x1xi1> to vector<8x1xi1>
    %892 = vector.broadcast %891 : vector<8x1xi1> to vector<8x16xi1>
    %893 = arith.select %892, %877, %890 : vector<8x16xi1>, vector<8x16xf32>
    %894 = arith.index_cast %813 : i32 to index
    %c0_261 = arith.constant 0 : index
    %c16_262 = arith.constant 16 : index
    %895 = vector.load %arg9[%894, %c0_261, %c16_262] : memref<8x8x32xf32, #tpu.memory_space<vmem>>, vector<1x8x16xf32>
    %896 = vector.shape_cast %895 : vector<1x8x16xf32> to vector<8x16xf32>
    %897 = vector.shape_cast %893 : vector<8x16xf32> to vector<1x8x16xf32>
    tpu.vector_store %arg9[%894, %c0_261, %c16_262], %897 {strides = array<i32>} : memref<8x8x32xf32, #tpu.memory_space<vmem>>, vector<1x8x16xf32>,
    %898 = vector.shape_cast %879 : vector<8x1xi1> to vector<8x1xi1>
    %899 = vector.broadcast %898 : vector<8x1xi1> to vector<8x16xi1>
    %900 = arith.select %899, %872, %812 : vector<8x16xi1>, vector<8x16xf32>
    %901 = vector.shape_cast %879 : vector<8x1xi1> to vector<8x1xi1>
    %902 = vector.broadcast %901 : vector<8x1xi1> to vector<8x16xi1>
    %903 = arith.select %902, %870, %812 : vector<8x16xi1>, vector<8x16xf32>
    %904 = vector.shape_cast %881 : vector<8x1xi1> to vector<8x1xi1>
    %905 = vector.broadcast %904 : vector<8x1xi1> to vector<8x16xi1>
    %906 = arith.select %905, %877, %812 : vector<8x16xi1>, vector<8x16xf32>
    %907 = vector.shape_cast %881 : vector<8x1xi1> to vector<8x1xi1>
    %908 = vector.broadcast %907 : vector<8x1xi1> to vector<8x16xi1>
    %909 = arith.select %908, %875, %812 : vector<8x16xi1>, vector<8x16xf32>
    %c1_i32_263 = arith.constant 1 : i32
    %c7_i32_264 = arith.constant 7 : i32
    %910 = arith.subi %c7_i32_264, %c1_i32_263 : i32
    %911 = arith.index_cast %c1_i32_263 : i32 to index
    %c0_265 = arith.constant 0 : index
    %c0_266 = arith.constant 0 : index
    %912 = vector.load %arg10[%911, %c0_265, %c0_266] : memref<8x8x128xf32, #tpu.memory_space<vmem>>, vector<1x8x64xf32>
    %913 = vector.shape_cast %912 : vector<1x8x64xf32> to vector<8x64xf32>
    %c1_267 = arith.constant 1 : index
    %c0_268 = arith.constant 0 : index
    %c0_269 = arith.constant 0 : index
    %914 = vector.load %arg4[%c1_267, %c0_268, %c0_269] : memref<3x16x64xf32, #tpu.memory_space<vmem>>, vector<1x16x64xf32>
    %915 = vector.shape_cast %914 : vector<1x16x64xf32> to vector<16x64xf32>
    %cst_270 = arith.constant dense<0.000000e+00> : vector<8x64xf32>
    %916 = tpu.matmul %900, %915, %cst_270 {dimension_numbers = #tpu.dot_dimension_numbers<[1], [0], [0], [1], [0, 0, 1, 1], [], []>} : vector<8x16xf32>, vector<16x64xf32>, vector<8x64xf32> -> vector<8x64xf32>
    %917 = arith.addf %913, %916 : vector<8x64xf32>
    %918 = arith.index_cast %910 : i32 to index
    %c0_271 = arith.constant 0 : index
    %c64_272 = arith.constant 64 : index
    %919 = vector.load %arg10[%918, %c0_271, %c64_272] : memref<8x8x128xf32, #tpu.memory_space<vmem>>, vector<1x8x64xf32>
    %920 = vector.shape_cast %919 : vector<1x8x64xf32> to vector<8x64xf32>
    %c1_273 = arith.constant 1 : index
    %c0_274 = arith.constant 0 : index
    %c0_275 = arith.constant 0 : index
    %921 = vector.load %arg5[%c1_273, %c0_274, %c0_275] : memref<3x16x64xf32, #tpu.memory_space<vmem>>, vector<1x16x64xf32>
    %922 = vector.shape_cast %921 : vector<1x16x64xf32> to vector<16x64xf32>
    %cst_276 = arith.constant dense<0.000000e+00> : vector<8x64xf32>
    %923 = tpu.matmul %906, %922, %cst_276 {dimension_numbers = #tpu.dot_dimension_numbers<[1], [0], [0], [1], [0, 0, 1, 1], [], []>} : vector<8x16xf32>, vector<16x64xf32>, vector<8x64xf32> -> vector<8x64xf32>
    %924 = arith.addf %920, %923 : vector<8x64xf32>
    %925 = vector.extract_strided_slice %917 {offsets = [0, 0], sizes = [8, 16], strides = [1, 1]} : vector<8x64xf32> to vector<8x16xf32>
    %926 = arith.negf %925 : vector<8x16xf32>
    %927 = math.exp %926 : vector<8x16xf32>
    %cst_277 = arith.constant 1.000000e+00 : f32
    %928 = vector.broadcast %cst_277 : f32 to vector<8x16xf32>
    %929 = arith.addf %928, %927 : vector<8x16xf32>
    %930 = arith.divf %928, %929 : vector<8x16xf32>
    %931 = vector.extract_strided_slice %917 {offsets = [0, 16], sizes = [8, 16], strides = [1, 1]} : vector<8x64xf32> to vector<8x16xf32>
    %932 = arith.negf %931 : vector<8x16xf32>
    %933 = math.exp %932 : vector<8x16xf32>
    %cst_278 = arith.constant 1.000000e+00 : f32
    %934 = vector.broadcast %cst_278 : f32 to vector<8x16xf32>
    %935 = arith.addf %934, %933 : vector<8x16xf32>
    %936 = arith.divf %934, %935 : vector<8x16xf32>
    %937 = vector.extract_strided_slice %917 {offsets = [0, 32], sizes = [8, 16], strides = [1, 1]} : vector<8x64xf32> to vector<8x16xf32>
    %938 = math.tanh %937 : vector<8x16xf32>
    %939 = vector.extract_strided_slice %917 {offsets = [0, 48], sizes = [8, 16], strides = [1, 1]} : vector<8x64xf32> to vector<8x16xf32>
    %940 = arith.negf %939 : vector<8x16xf32>
    %941 = math.exp %940 : vector<8x16xf32>
    %cst_279 = arith.constant 1.000000e+00 : f32
    %942 = vector.broadcast %cst_279 : f32 to vector<8x16xf32>
    %943 = arith.addf %942, %941 : vector<8x16xf32>
    %944 = arith.divf %942, %943 : vector<8x16xf32>
    %945 = vector.extract_strided_slice %924 {offsets = [0, 0], sizes = [8, 16], strides = [1, 1]} : vector<8x64xf32> to vector<8x16xf32>
    %946 = arith.negf %945 : vector<8x16xf32>
    %947 = math.exp %946 : vector<8x16xf32>
    %cst_280 = arith.constant 1.000000e+00 : f32
    %948 = vector.broadcast %cst_280 : f32 to vector<8x16xf32>
    %949 = arith.addf %948, %947 : vector<8x16xf32>
    %950 = arith.divf %948, %949 : vector<8x16xf32>
    %951 = vector.extract_strided_slice %924 {offsets = [0, 16], sizes = [8, 16], strides = [1, 1]} : vector<8x64xf32> to vector<8x16xf32>
    %952 = arith.negf %951 : vector<8x16xf32>
    %953 = math.exp %952 : vector<8x16xf32>
    %cst_281 = arith.constant 1.000000e+00 : f32
    %954 = vector.broadcast %cst_281 : f32 to vector<8x16xf32>
    %955 = arith.addf %954, %953 : vector<8x16xf32>
    %956 = arith.divf %954, %955 : vector<8x16xf32>
    %957 = vector.extract_strided_slice %924 {offsets = [0, 32], sizes = [8, 16], strides = [1, 1]} : vector<8x64xf32> to vector<8x16xf32>
    %958 = math.tanh %957 : vector<8x16xf32>
    %959 = vector.extract_strided_slice %924 {offsets = [0, 48], sizes = [8, 16], strides = [1, 1]} : vector<8x64xf32> to vector<8x16xf32>
    %960 = arith.negf %959 : vector<8x16xf32>
    %961 = math.exp %960 : vector<8x16xf32>
    %cst_282 = arith.constant 1.000000e+00 : f32
    %962 = vector.broadcast %cst_282 : f32 to vector<8x16xf32>
    %963 = arith.addf %962, %961 : vector<8x16xf32>
    %964 = arith.divf %962, %963 : vector<8x16xf32>
    %965 = arith.mulf %936, %903 : vector<8x16xf32>
    %966 = arith.mulf %930, %938 : vector<8x16xf32>
    %967 = arith.addf %965, %966 : vector<8x16xf32>
    %968 = math.tanh %967 : vector<8x16xf32>
    %969 = arith.mulf %944, %968 : vector<8x16xf32>
    %970 = arith.mulf %956, %909 : vector<8x16xf32>
    %971 = arith.mulf %950, %958 : vector<8x16xf32>
    %972 = arith.addf %970, %971 : vector<8x16xf32>
    %973 = math.tanh %972 : vector<8x16xf32>
    %974 = arith.mulf %964, %973 : vector<8x16xf32>
    %975 = vector.broadcast %c1_i32_263 : i32 to vector<8x1xi32>
    %976 = arith.cmpi slt, %975, %0 : vector<8x1xi32>
    %977 = vector.broadcast %910 : i32 to vector<8x1xi32>
    %978 = arith.cmpi slt, %977, %0 : vector<8x1xi32>
    %cst_283 = arith.constant 0.000000e+00 : f32
    %979 = vector.broadcast %cst_283 : f32 to vector<8x16xf32>
    %980 = vector.shape_cast %976 : vector<8x1xi1> to vector<8x1xi1>
    %981 = vector.broadcast %980 : vector<8x1xi1> to vector<8x16xi1>
    %982 = arith.select %981, %969, %979 : vector<8x16xi1>, vector<8x16xf32>
    %983 = arith.index_cast %c1_i32_263 : i32 to index
    %c0_284 = arith.constant 0 : index
    %c0_285 = arith.constant 0 : index
    %984 = vector.load %arg9[%983, %c0_284, %c0_285] : memref<8x8x32xf32, #tpu.memory_space<vmem>>, vector<1x8x16xf32>
    %985 = vector.shape_cast %984 : vector<1x8x16xf32> to vector<8x16xf32>
    %986 = vector.shape_cast %982 : vector<8x16xf32> to vector<1x8x16xf32>
    tpu.vector_store %arg9[%983, %c0_284, %c0_285], %986 {strides = array<i32>} : memref<8x8x32xf32, #tpu.memory_space<vmem>>, vector<1x8x16xf32>,
    %cst_286 = arith.constant 0.000000e+00 : f32
    %987 = vector.broadcast %cst_286 : f32 to vector<8x16xf32>
    %988 = vector.shape_cast %978 : vector<8x1xi1> to vector<8x1xi1>
    %989 = vector.broadcast %988 : vector<8x1xi1> to vector<8x16xi1>
    %990 = arith.select %989, %974, %987 : vector<8x16xi1>, vector<8x16xf32>
    %991 = arith.index_cast %910 : i32 to index
    %c0_287 = arith.constant 0 : index
    %c16_288 = arith.constant 16 : index
    %992 = vector.load %arg9[%991, %c0_287, %c16_288] : memref<8x8x32xf32, #tpu.memory_space<vmem>>, vector<1x8x16xf32>
    %993 = vector.shape_cast %992 : vector<1x8x16xf32> to vector<8x16xf32>
    %994 = vector.shape_cast %990 : vector<8x16xf32> to vector<1x8x16xf32>
    tpu.vector_store %arg9[%991, %c0_287, %c16_288], %994 {strides = array<i32>} : memref<8x8x32xf32, #tpu.memory_space<vmem>>, vector<1x8x16xf32>,
    %995 = vector.shape_cast %976 : vector<8x1xi1> to vector<8x1xi1>
    %996 = vector.broadcast %995 : vector<8x1xi1> to vector<8x16xi1>
    %997 = arith.select %996, %969, %900 : vector<8x16xi1>, vector<8x16xf32>
    %998 = vector.shape_cast %976 : vector<8x1xi1> to vector<8x1xi1>
    %999 = vector.broadcast %998 : vector<8x1xi1> to vector<8x16xi1>
    %1000 = arith.select %999, %967, %903 : vector<8x16xi1>, vector<8x16xf32>
    %1001 = vector.shape_cast %978 : vector<8x1xi1> to vector<8x1xi1>
    %1002 = vector.broadcast %1001 : vector<8x1xi1> to vector<8x16xi1>
    %1003 = arith.select %1002, %974, %906 : vector<8x16xi1>, vector<8x16xf32>
    %1004 = vector.shape_cast %978 : vector<8x1xi1> to vector<8x1xi1>
    %1005 = vector.broadcast %1004 : vector<8x1xi1> to vector<8x16xi1>
    %1006 = arith.select %1005, %972, %909 : vector<8x16xi1>, vector<8x16xf32>
    %c2_i32_289 = arith.constant 2 : i32
    %c7_i32_290 = arith.constant 7 : i32
    %1007 = arith.subi %c7_i32_290, %c2_i32_289 : i32
    %1008 = arith.index_cast %c2_i32_289 : i32 to index
    %c0_291 = arith.constant 0 : index
    %c0_292 = arith.constant 0 : index
    %1009 = vector.load %arg10[%1008, %c0_291, %c0_292] : memref<8x8x128xf32, #tpu.memory_space<vmem>>, vector<1x8x64xf32>
    %1010 = vector.shape_cast %1009 : vector<1x8x64xf32> to vector<8x64xf32>
    %c1_293 = arith.constant 1 : index
    %c0_294 = arith.constant 0 : index
    %c0_295 = arith.constant 0 : index
    %1011 = vector.load %arg4[%c1_293, %c0_294, %c0_295] : memref<3x16x64xf32, #tpu.memory_space<vmem>>, vector<1x16x64xf32>
    %1012 = vector.shape_cast %1011 : vector<1x16x64xf32> to vector<16x64xf32>
    %cst_296 = arith.constant dense<0.000000e+00> : vector<8x64xf32>
    %1013 = tpu.matmul %997, %1012, %cst_296 {dimension_numbers = #tpu.dot_dimension_numbers<[1], [0], [0], [1], [0, 0, 1, 1], [], []>} : vector<8x16xf32>, vector<16x64xf32>, vector<8x64xf32> -> vector<8x64xf32>
    %1014 = arith.addf %1010, %1013 : vector<8x64xf32>
    %1015 = arith.index_cast %1007 : i32 to index
    %c0_297 = arith.constant 0 : index
    %c64_298 = arith.constant 64 : index
    %1016 = vector.load %arg10[%1015, %c0_297, %c64_298] : memref<8x8x128xf32, #tpu.memory_space<vmem>>, vector<1x8x64xf32>
    %1017 = vector.shape_cast %1016 : vector<1x8x64xf32> to vector<8x64xf32>
    %c1_299 = arith.constant 1 : index
    %c0_300 = arith.constant 0 : index
    %c0_301 = arith.constant 0 : index
    %1018 = vector.load %arg5[%c1_299, %c0_300, %c0_301] : memref<3x16x64xf32, #tpu.memory_space<vmem>>, vector<1x16x64xf32>
    %1019 = vector.shape_cast %1018 : vector<1x16x64xf32> to vector<16x64xf32>
    %cst_302 = arith.constant dense<0.000000e+00> : vector<8x64xf32>
    %1020 = tpu.matmul %1003, %1019, %cst_302 {dimension_numbers = #tpu.dot_dimension_numbers<[1], [0], [0], [1], [0, 0, 1, 1], [], []>} : vector<8x16xf32>, vector<16x64xf32>, vector<8x64xf32> -> vector<8x64xf32>
    %1021 = arith.addf %1017, %1020 : vector<8x64xf32>
    %1022 = vector.extract_strided_slice %1014 {offsets = [0, 0], sizes = [8, 16], strides = [1, 1]} : vector<8x64xf32> to vector<8x16xf32>
    %1023 = arith.negf %1022 : vector<8x16xf32>
    %1024 = math.exp %1023 : vector<8x16xf32>
    %cst_303 = arith.constant 1.000000e+00 : f32
    %1025 = vector.broadcast %cst_303 : f32 to vector<8x16xf32>
    %1026 = arith.addf %1025, %1024 : vector<8x16xf32>
    %1027 = arith.divf %1025, %1026 : vector<8x16xf32>
    %1028 = vector.extract_strided_slice %1014 {offsets = [0, 16], sizes = [8, 16], strides = [1, 1]} : vector<8x64xf32> to vector<8x16xf32>
    %1029 = arith.negf %1028 : vector<8x16xf32>
    %1030 = math.exp %1029 : vector<8x16xf32>
    %cst_304 = arith.constant 1.000000e+00 : f32
    %1031 = vector.broadcast %cst_304 : f32 to vector<8x16xf32>
    %1032 = arith.addf %1031, %1030 : vector<8x16xf32>
    %1033 = arith.divf %1031, %1032 : vector<8x16xf32>
    %1034 = vector.extract_strided_slice %1014 {offsets = [0, 32], sizes = [8, 16], strides = [1, 1]} : vector<8x64xf32> to vector<8x16xf32>
    %1035 = math.tanh %1034 : vector<8x16xf32>
    %1036 = vector.extract_strided_slice %1014 {offsets = [0, 48], sizes = [8, 16], strides = [1, 1]} : vector<8x64xf32> to vector<8x16xf32>
    %1037 = arith.negf %1036 : vector<8x16xf32>
    %1038 = math.exp %1037 : vector<8x16xf32>
    %cst_305 = arith.constant 1.000000e+00 : f32
    %1039 = vector.broadcast %cst_305 : f32 to vector<8x16xf32>
    %1040 = arith.addf %1039, %1038 : vector<8x16xf32>
    %1041 = arith.divf %1039, %1040 : vector<8x16xf32>
    %1042 = vector.extract_strided_slice %1021 {offsets = [0, 0], sizes = [8, 16], strides = [1, 1]} : vector<8x64xf32> to vector<8x16xf32>
    %1043 = arith.negf %1042 : vector<8x16xf32>
    %1044 = math.exp %1043 : vector<8x16xf32>
    %cst_306 = arith.constant 1.000000e+00 : f32
    %1045 = vector.broadcast %cst_306 : f32 to vector<8x16xf32>
    %1046 = arith.addf %1045, %1044 : vector<8x16xf32>
    %1047 = arith.divf %1045, %1046 : vector<8x16xf32>
    %1048 = vector.extract_strided_slice %1021 {offsets = [0, 16], sizes = [8, 16], strides = [1, 1]} : vector<8x64xf32> to vector<8x16xf32>
    %1049 = arith.negf %1048 : vector<8x16xf32>
    %1050 = math.exp %1049 : vector<8x16xf32>
    %cst_307 = arith.constant 1.000000e+00 : f32
    %1051 = vector.broadcast %cst_307 : f32 to vector<8x16xf32>
    %1052 = arith.addf %1051, %1050 : vector<8x16xf32>
    %1053 = arith.divf %1051, %1052 : vector<8x16xf32>
    %1054 = vector.extract_strided_slice %1021 {offsets = [0, 32], sizes = [8, 16], strides = [1, 1]} : vector<8x64xf32> to vector<8x16xf32>
    %1055 = math.tanh %1054 : vector<8x16xf32>
    %1056 = vector.extract_strided_slice %1021 {offsets = [0, 48], sizes = [8, 16], strides = [1, 1]} : vector<8x64xf32> to vector<8x16xf32>
    %1057 = arith.negf %1056 : vector<8x16xf32>
    %1058 = math.exp %1057 : vector<8x16xf32>
    %cst_308 = arith.constant 1.000000e+00 : f32
    %1059 = vector.broadcast %cst_308 : f32 to vector<8x16xf32>
    %1060 = arith.addf %1059, %1058 : vector<8x16xf32>
    %1061 = arith.divf %1059, %1060 : vector<8x16xf32>
    %1062 = arith.mulf %1033, %1000 : vector<8x16xf32>
    %1063 = arith.mulf %1027, %1035 : vector<8x16xf32>
    %1064 = arith.addf %1062, %1063 : vector<8x16xf32>
    %1065 = math.tanh %1064 : vector<8x16xf32>
    %1066 = arith.mulf %1041, %1065 : vector<8x16xf32>
    %1067 = arith.mulf %1053, %1006 : vector<8x16xf32>
    %1068 = arith.mulf %1047, %1055 : vector<8x16xf32>
    %1069 = arith.addf %1067, %1068 : vector<8x16xf32>
    %1070 = math.tanh %1069 : vector<8x16xf32>
    %1071 = arith.mulf %1061, %1070 : vector<8x16xf32>
    %1072 = vector.broadcast %c2_i32_289 : i32 to vector<8x1xi32>
    %1073 = arith.cmpi slt, %1072, %0 : vector<8x1xi32>
    %1074 = vector.broadcast %1007 : i32 to vector<8x1xi32>
    %1075 = arith.cmpi slt, %1074, %0 : vector<8x1xi32>
    %cst_309 = arith.constant 0.000000e+00 : f32
    %1076 = vector.broadcast %cst_309 : f32 to vector<8x16xf32>
    %1077 = vector.shape_cast %1073 : vector<8x1xi1> to vector<8x1xi1>
    %1078 = vector.broadcast %1077 : vector<8x1xi1> to vector<8x16xi1>
    %1079 = arith.select %1078, %1066, %1076 : vector<8x16xi1>, vector<8x16xf32>
    %1080 = arith.index_cast %c2_i32_289 : i32 to index
    %c0_310 = arith.constant 0 : index
    %c0_311 = arith.constant 0 : index
    %1081 = vector.load %arg9[%1080, %c0_310, %c0_311] : memref<8x8x32xf32, #tpu.memory_space<vmem>>, vector<1x8x16xf32>
    %1082 = vector.shape_cast %1081 : vector<1x8x16xf32> to vector<8x16xf32>
    %1083 = vector.shape_cast %1079 : vector<8x16xf32> to vector<1x8x16xf32>
    tpu.vector_store %arg9[%1080, %c0_310, %c0_311], %1083 {strides = array<i32>} : memref<8x8x32xf32, #tpu.memory_space<vmem>>, vector<1x8x16xf32>,
    %cst_312 = arith.constant 0.000000e+00 : f32
    %1084 = vector.broadcast %cst_312 : f32 to vector<8x16xf32>
    %1085 = vector.shape_cast %1075 : vector<8x1xi1> to vector<8x1xi1>
    %1086 = vector.broadcast %1085 : vector<8x1xi1> to vector<8x16xi1>
    %1087 = arith.select %1086, %1071, %1084 : vector<8x16xi1>, vector<8x16xf32>
    %1088 = arith.index_cast %1007 : i32 to index
    %c0_313 = arith.constant 0 : index
    %c16_314 = arith.constant 16 : index
    %1089 = vector.load %arg9[%1088, %c0_313, %c16_314] : memref<8x8x32xf32, #tpu.memory_space<vmem>>, vector<1x8x16xf32>
    %1090 = vector.shape_cast %1089 : vector<1x8x16xf32> to vector<8x16xf32>
    %1091 = vector.shape_cast %1087 : vector<8x16xf32> to vector<1x8x16xf32>
    tpu.vector_store %arg9[%1088, %c0_313, %c16_314], %1091 {strides = array<i32>} : memref<8x8x32xf32, #tpu.memory_space<vmem>>, vector<1x8x16xf32>,
    %1092 = vector.shape_cast %1073 : vector<8x1xi1> to vector<8x1xi1>
    %1093 = vector.broadcast %1092 : vector<8x1xi1> to vector<8x16xi1>
    %1094 = arith.select %1093, %1066, %997 : vector<8x16xi1>, vector<8x16xf32>
    %1095 = vector.shape_cast %1073 : vector<8x1xi1> to vector<8x1xi1>
    %1096 = vector.broadcast %1095 : vector<8x1xi1> to vector<8x16xi1>
    %1097 = arith.select %1096, %1064, %1000 : vector<8x16xi1>, vector<8x16xf32>
    %1098 = vector.shape_cast %1075 : vector<8x1xi1> to vector<8x1xi1>
    %1099 = vector.broadcast %1098 : vector<8x1xi1> to vector<8x16xi1>
    %1100 = arith.select %1099, %1071, %1003 : vector<8x16xi1>, vector<8x16xf32>
    %1101 = vector.shape_cast %1075 : vector<8x1xi1> to vector<8x1xi1>
    %1102 = vector.broadcast %1101 : vector<8x1xi1> to vector<8x16xi1>
    %1103 = arith.select %1102, %1069, %1006 : vector<8x16xi1>, vector<8x16xf32>
    %c3_i32_315 = arith.constant 3 : i32
    %c7_i32_316 = arith.constant 7 : i32
    %1104 = arith.subi %c7_i32_316, %c3_i32_315 : i32
    %1105 = arith.index_cast %c3_i32_315 : i32 to index
    %c0_317 = arith.constant 0 : index
    %c0_318 = arith.constant 0 : index
    %1106 = vector.load %arg10[%1105, %c0_317, %c0_318] : memref<8x8x128xf32, #tpu.memory_space<vmem>>, vector<1x8x64xf32>
    %1107 = vector.shape_cast %1106 : vector<1x8x64xf32> to vector<8x64xf32>
    %c1_319 = arith.constant 1 : index
    %c0_320 = arith.constant 0 : index
    %c0_321 = arith.constant 0 : index
    %1108 = vector.load %arg4[%c1_319, %c0_320, %c0_321] : memref<3x16x64xf32, #tpu.memory_space<vmem>>, vector<1x16x64xf32>
    %1109 = vector.shape_cast %1108 : vector<1x16x64xf32> to vector<16x64xf32>
    %cst_322 = arith.constant dense<0.000000e+00> : vector<8x64xf32>
    %1110 = tpu.matmul %1094, %1109, %cst_322 {dimension_numbers = #tpu.dot_dimension_numbers<[1], [0], [0], [1], [0, 0, 1, 1], [], []>} : vector<8x16xf32>, vector<16x64xf32>, vector<8x64xf32> -> vector<8x64xf32>
    %1111 = arith.addf %1107, %1110 : vector<8x64xf32>
    %1112 = arith.index_cast %1104 : i32 to index
    %c0_323 = arith.constant 0 : index
    %c64_324 = arith.constant 64 : index
    %1113 = vector.load %arg10[%1112, %c0_323, %c64_324] : memref<8x8x128xf32, #tpu.memory_space<vmem>>, vector<1x8x64xf32>
    %1114 = vector.shape_cast %1113 : vector<1x8x64xf32> to vector<8x64xf32>
    %c1_325 = arith.constant 1 : index
    %c0_326 = arith.constant 0 : index
    %c0_327 = arith.constant 0 : index
    %1115 = vector.load %arg5[%c1_325, %c0_326, %c0_327] : memref<3x16x64xf32, #tpu.memory_space<vmem>>, vector<1x16x64xf32>
    %1116 = vector.shape_cast %1115 : vector<1x16x64xf32> to vector<16x64xf32>
    %cst_328 = arith.constant dense<0.000000e+00> : vector<8x64xf32>
    %1117 = tpu.matmul %1100, %1116, %cst_328 {dimension_numbers = #tpu.dot_dimension_numbers<[1], [0], [0], [1], [0, 0, 1, 1], [], []>} : vector<8x16xf32>, vector<16x64xf32>, vector<8x64xf32> -> vector<8x64xf32>
    %1118 = arith.addf %1114, %1117 : vector<8x64xf32>
    %1119 = vector.extract_strided_slice %1111 {offsets = [0, 0], sizes = [8, 16], strides = [1, 1]} : vector<8x64xf32> to vector<8x16xf32>
    %1120 = arith.negf %1119 : vector<8x16xf32>
    %1121 = math.exp %1120 : vector<8x16xf32>
    %cst_329 = arith.constant 1.000000e+00 : f32
    %1122 = vector.broadcast %cst_329 : f32 to vector<8x16xf32>
    %1123 = arith.addf %1122, %1121 : vector<8x16xf32>
    %1124 = arith.divf %1122, %1123 : vector<8x16xf32>
    %1125 = vector.extract_strided_slice %1111 {offsets = [0, 16], sizes = [8, 16], strides = [1, 1]} : vector<8x64xf32> to vector<8x16xf32>
    %1126 = arith.negf %1125 : vector<8x16xf32>
    %1127 = math.exp %1126 : vector<8x16xf32>
    %cst_330 = arith.constant 1.000000e+00 : f32
    %1128 = vector.broadcast %cst_330 : f32 to vector<8x16xf32>
    %1129 = arith.addf %1128, %1127 : vector<8x16xf32>
    %1130 = arith.divf %1128, %1129 : vector<8x16xf32>
    %1131 = vector.extract_strided_slice %1111 {offsets = [0, 32], sizes = [8, 16], strides = [1, 1]} : vector<8x64xf32> to vector<8x16xf32>
    %1132 = math.tanh %1131 : vector<8x16xf32>
    %1133 = vector.extract_strided_slice %1111 {offsets = [0, 48], sizes = [8, 16], strides = [1, 1]} : vector<8x64xf32> to vector<8x16xf32>
    %1134 = arith.negf %1133 : vector<8x16xf32>
    %1135 = math.exp %1134 : vector<8x16xf32>
    %cst_331 = arith.constant 1.000000e+00 : f32
    %1136 = vector.broadcast %cst_331 : f32 to vector<8x16xf32>
    %1137 = arith.addf %1136, %1135 : vector<8x16xf32>
    %1138 = arith.divf %1136, %1137 : vector<8x16xf32>
    %1139 = vector.extract_strided_slice %1118 {offsets = [0, 0], sizes = [8, 16], strides = [1, 1]} : vector<8x64xf32> to vector<8x16xf32>
    %1140 = arith.negf %1139 : vector<8x16xf32>
    %1141 = math.exp %1140 : vector<8x16xf32>
    %cst_332 = arith.constant 1.000000e+00 : f32
    %1142 = vector.broadcast %cst_332 : f32 to vector<8x16xf32>
    %1143 = arith.addf %1142, %1141 : vector<8x16xf32>
    %1144 = arith.divf %1142, %1143 : vector<8x16xf32>
    %1145 = vector.extract_strided_slice %1118 {offsets = [0, 16], sizes = [8, 16], strides = [1, 1]} : vector<8x64xf32> to vector<8x16xf32>
    %1146 = arith.negf %1145 : vector<8x16xf32>
    %1147 = math.exp %1146 : vector<8x16xf32>
    %cst_333 = arith.constant 1.000000e+00 : f32
    %1148 = vector.broadcast %cst_333 : f32 to vector<8x16xf32>
    %1149 = arith.addf %1148, %1147 : vector<8x16xf32>
    %1150 = arith.divf %1148, %1149 : vector<8x16xf32>
    %1151 = vector.extract_strided_slice %1118 {offsets = [0, 32], sizes = [8, 16], strides = [1, 1]} : vector<8x64xf32> to vector<8x16xf32>
    %1152 = math.tanh %1151 : vector<8x16xf32>
    %1153 = vector.extract_strided_slice %1118 {offsets = [0, 48], sizes = [8, 16], strides = [1, 1]} : vector<8x64xf32> to vector<8x16xf32>
    %1154 = arith.negf %1153 : vector<8x16xf32>
    %1155 = math.exp %1154 : vector<8x16xf32>
    %cst_334 = arith.constant 1.000000e+00 : f32
    %1156 = vector.broadcast %cst_334 : f32 to vector<8x16xf32>
    %1157 = arith.addf %1156, %1155 : vector<8x16xf32>
    %1158 = arith.divf %1156, %1157 : vector<8x16xf32>
    %1159 = arith.mulf %1130, %1097 : vector<8x16xf32>
    %1160 = arith.mulf %1124, %1132 : vector<8x16xf32>
    %1161 = arith.addf %1159, %1160 : vector<8x16xf32>
    %1162 = math.tanh %1161 : vector<8x16xf32>
    %1163 = arith.mulf %1138, %1162 : vector<8x16xf32>
    %1164 = arith.mulf %1150, %1103 : vector<8x16xf32>
    %1165 = arith.mulf %1144, %1152 : vector<8x16xf32>
    %1166 = arith.addf %1164, %1165 : vector<8x16xf32>
    %1167 = math.tanh %1166 : vector<8x16xf32>
    %1168 = arith.mulf %1158, %1167 : vector<8x16xf32>
    %1169 = vector.broadcast %c3_i32_315 : i32 to vector<8x1xi32>
    %1170 = arith.cmpi slt, %1169, %0 : vector<8x1xi32>
    %1171 = vector.broadcast %1104 : i32 to vector<8x1xi32>
    %1172 = arith.cmpi slt, %1171, %0 : vector<8x1xi32>
    %cst_335 = arith.constant 0.000000e+00 : f32
    %1173 = vector.broadcast %cst_335 : f32 to vector<8x16xf32>
    %1174 = vector.shape_cast %1170 : vector<8x1xi1> to vector<8x1xi1>
    %1175 = vector.broadcast %1174 : vector<8x1xi1> to vector<8x16xi1>
    %1176 = arith.select %1175, %1163, %1173 : vector<8x16xi1>, vector<8x16xf32>
    %1177 = arith.index_cast %c3_i32_315 : i32 to index
    %c0_336 = arith.constant 0 : index
    %c0_337 = arith.constant 0 : index
    %1178 = vector.load %arg9[%1177, %c0_336, %c0_337] : memref<8x8x32xf32, #tpu.memory_space<vmem>>, vector<1x8x16xf32>
    %1179 = vector.shape_cast %1178 : vector<1x8x16xf32> to vector<8x16xf32>
    %1180 = vector.shape_cast %1176 : vector<8x16xf32> to vector<1x8x16xf32>
    tpu.vector_store %arg9[%1177, %c0_336, %c0_337], %1180 {strides = array<i32>} : memref<8x8x32xf32, #tpu.memory_space<vmem>>, vector<1x8x16xf32>,
    %cst_338 = arith.constant 0.000000e+00 : f32
    %1181 = vector.broadcast %cst_338 : f32 to vector<8x16xf32>
    %1182 = vector.shape_cast %1172 : vector<8x1xi1> to vector<8x1xi1>
    %1183 = vector.broadcast %1182 : vector<8x1xi1> to vector<8x16xi1>
    %1184 = arith.select %1183, %1168, %1181 : vector<8x16xi1>, vector<8x16xf32>
    %1185 = arith.index_cast %1104 : i32 to index
    %c0_339 = arith.constant 0 : index
    %c16_340 = arith.constant 16 : index
    %1186 = vector.load %arg9[%1185, %c0_339, %c16_340] : memref<8x8x32xf32, #tpu.memory_space<vmem>>, vector<1x8x16xf32>
    %1187 = vector.shape_cast %1186 : vector<1x8x16xf32> to vector<8x16xf32>
    %1188 = vector.shape_cast %1184 : vector<8x16xf32> to vector<1x8x16xf32>
    tpu.vector_store %arg9[%1185, %c0_339, %c16_340], %1188 {strides = array<i32>} : memref<8x8x32xf32, #tpu.memory_space<vmem>>, vector<1x8x16xf32>,
    %1189 = vector.shape_cast %1170 : vector<8x1xi1> to vector<8x1xi1>
    %1190 = vector.broadcast %1189 : vector<8x1xi1> to vector<8x16xi1>
    %1191 = arith.select %1190, %1163, %1094 : vector<8x16xi1>, vector<8x16xf32>
    %1192 = vector.shape_cast %1170 : vector<8x1xi1> to vector<8x1xi1>
    %1193 = vector.broadcast %1192 : vector<8x1xi1> to vector<8x16xi1>
    %1194 = arith.select %1193, %1161, %1097 : vector<8x16xi1>, vector<8x16xf32>
    %1195 = vector.shape_cast %1172 : vector<8x1xi1> to vector<8x1xi1>
    %1196 = vector.broadcast %1195 : vector<8x1xi1> to vector<8x16xi1>
    %1197 = arith.select %1196, %1168, %1100 : vector<8x16xi1>, vector<8x16xf32>
    %1198 = vector.shape_cast %1172 : vector<8x1xi1> to vector<8x1xi1>
    %1199 = vector.broadcast %1198 : vector<8x1xi1> to vector<8x16xi1>
    %1200 = arith.select %1199, %1166, %1103 : vector<8x16xi1>, vector<8x16xf32>
    %c4_i32_341 = arith.constant 4 : i32
    %c7_i32_342 = arith.constant 7 : i32
    %1201 = arith.subi %c7_i32_342, %c4_i32_341 : i32
    %1202 = arith.index_cast %c4_i32_341 : i32 to index
    %c0_343 = arith.constant 0 : index
    %c0_344 = arith.constant 0 : index
    %1203 = vector.load %arg10[%1202, %c0_343, %c0_344] : memref<8x8x128xf32, #tpu.memory_space<vmem>>, vector<1x8x64xf32>
    %1204 = vector.shape_cast %1203 : vector<1x8x64xf32> to vector<8x64xf32>
    %c1_345 = arith.constant 1 : index
    %c0_346 = arith.constant 0 : index
    %c0_347 = arith.constant 0 : index
    %1205 = vector.load %arg4[%c1_345, %c0_346, %c0_347] : memref<3x16x64xf32, #tpu.memory_space<vmem>>, vector<1x16x64xf32>
    %1206 = vector.shape_cast %1205 : vector<1x16x64xf32> to vector<16x64xf32>
    %cst_348 = arith.constant dense<0.000000e+00> : vector<8x64xf32>
    %1207 = tpu.matmul %1191, %1206, %cst_348 {dimension_numbers = #tpu.dot_dimension_numbers<[1], [0], [0], [1], [0, 0, 1, 1], [], []>} : vector<8x16xf32>, vector<16x64xf32>, vector<8x64xf32> -> vector<8x64xf32>
    %1208 = arith.addf %1204, %1207 : vector<8x64xf32>
    %1209 = arith.index_cast %1201 : i32 to index
    %c0_349 = arith.constant 0 : index
    %c64_350 = arith.constant 64 : index
    %1210 = vector.load %arg10[%1209, %c0_349, %c64_350] : memref<8x8x128xf32, #tpu.memory_space<vmem>>, vector<1x8x64xf32>
    %1211 = vector.shape_cast %1210 : vector<1x8x64xf32> to vector<8x64xf32>
    %c1_351 = arith.constant 1 : index
    %c0_352 = arith.constant 0 : index
    %c0_353 = arith.constant 0 : index
    %1212 = vector.load %arg5[%c1_351, %c0_352, %c0_353] : memref<3x16x64xf32, #tpu.memory_space<vmem>>, vector<1x16x64xf32>
    %1213 = vector.shape_cast %1212 : vector<1x16x64xf32> to vector<16x64xf32>
    %cst_354 = arith.constant dense<0.000000e+00> : vector<8x64xf32>
    %1214 = tpu.matmul %1197, %1213, %cst_354 {dimension_numbers = #tpu.dot_dimension_numbers<[1], [0], [0], [1], [0, 0, 1, 1], [], []>} : vector<8x16xf32>, vector<16x64xf32>, vector<8x64xf32> -> vector<8x64xf32>
    %1215 = arith.addf %1211, %1214 : vector<8x64xf32>
    %1216 = vector.extract_strided_slice %1208 {offsets = [0, 0], sizes = [8, 16], strides = [1, 1]} : vector<8x64xf32> to vector<8x16xf32>
    %1217 = arith.negf %1216 : vector<8x16xf32>
    %1218 = math.exp %1217 : vector<8x16xf32>
    %cst_355 = arith.constant 1.000000e+00 : f32
    %1219 = vector.broadcast %cst_355 : f32 to vector<8x16xf32>
    %1220 = arith.addf %1219, %1218 : vector<8x16xf32>
    %1221 = arith.divf %1219, %1220 : vector<8x16xf32>
    %1222 = vector.extract_strided_slice %1208 {offsets = [0, 16], sizes = [8, 16], strides = [1, 1]} : vector<8x64xf32> to vector<8x16xf32>
    %1223 = arith.negf %1222 : vector<8x16xf32>
    %1224 = math.exp %1223 : vector<8x16xf32>
    %cst_356 = arith.constant 1.000000e+00 : f32
    %1225 = vector.broadcast %cst_356 : f32 to vector<8x16xf32>
    %1226 = arith.addf %1225, %1224 : vector<8x16xf32>
    %1227 = arith.divf %1225, %1226 : vector<8x16xf32>
    %1228 = vector.extract_strided_slice %1208 {offsets = [0, 32], sizes = [8, 16], strides = [1, 1]} : vector<8x64xf32> to vector<8x16xf32>
    %1229 = math.tanh %1228 : vector<8x16xf32>
    %1230 = vector.extract_strided_slice %1208 {offsets = [0, 48], sizes = [8, 16], strides = [1, 1]} : vector<8x64xf32> to vector<8x16xf32>
    %1231 = arith.negf %1230 : vector<8x16xf32>
    %1232 = math.exp %1231 : vector<8x16xf32>
    %cst_357 = arith.constant 1.000000e+00 : f32
    %1233 = vector.broadcast %cst_357 : f32 to vector<8x16xf32>
    %1234 = arith.addf %1233, %1232 : vector<8x16xf32>
    %1235 = arith.divf %1233, %1234 : vector<8x16xf32>
    %1236 = vector.extract_strided_slice %1215 {offsets = [0, 0], sizes = [8, 16], strides = [1, 1]} : vector<8x64xf32> to vector<8x16xf32>
    %1237 = arith.negf %1236 : vector<8x16xf32>
    %1238 = math.exp %1237 : vector<8x16xf32>
    %cst_358 = arith.constant 1.000000e+00 : f32
    %1239 = vector.broadcast %cst_358 : f32 to vector<8x16xf32>
    %1240 = arith.addf %1239, %1238 : vector<8x16xf32>
    %1241 = arith.divf %1239, %1240 : vector<8x16xf32>
    %1242 = vector.extract_strided_slice %1215 {offsets = [0, 16], sizes = [8, 16], strides = [1, 1]} : vector<8x64xf32> to vector<8x16xf32>
    %1243 = arith.negf %1242 : vector<8x16xf32>
    %1244 = math.exp %1243 : vector<8x16xf32>
    %cst_359 = arith.constant 1.000000e+00 : f32
    %1245 = vector.broadcast %cst_359 : f32 to vector<8x16xf32>
    %1246 = arith.addf %1245, %1244 : vector<8x16xf32>
    %1247 = arith.divf %1245, %1246 : vector<8x16xf32>
    %1248 = vector.extract_strided_slice %1215 {offsets = [0, 32], sizes = [8, 16], strides = [1, 1]} : vector<8x64xf32> to vector<8x16xf32>
    %1249 = math.tanh %1248 : vector<8x16xf32>
    %1250 = vector.extract_strided_slice %1215 {offsets = [0, 48], sizes = [8, 16], strides = [1, 1]} : vector<8x64xf32> to vector<8x16xf32>
    %1251 = arith.negf %1250 : vector<8x16xf32>
    %1252 = math.exp %1251 : vector<8x16xf32>
    %cst_360 = arith.constant 1.000000e+00 : f32
    %1253 = vector.broadcast %cst_360 : f32 to vector<8x16xf32>
    %1254 = arith.addf %1253, %1252 : vector<8x16xf32>
    %1255 = arith.divf %1253, %1254 : vector<8x16xf32>
    %1256 = arith.mulf %1227, %1194 : vector<8x16xf32>
    %1257 = arith.mulf %1221, %1229 : vector<8x16xf32>
    %1258 = arith.addf %1256, %1257 : vector<8x16xf32>
    %1259 = math.tanh %1258 : vector<8x16xf32>
    %1260 = arith.mulf %1235, %1259 : vector<8x16xf32>
    %1261 = arith.mulf %1247, %1200 : vector<8x16xf32>
    %1262 = arith.mulf %1241, %1249 : vector<8x16xf32>
    %1263 = arith.addf %1261, %1262 : vector<8x16xf32>
    %1264 = math.tanh %1263 : vector<8x16xf32>
    %1265 = arith.mulf %1255, %1264 : vector<8x16xf32>
    %1266 = vector.broadcast %c4_i32_341 : i32 to vector<8x1xi32>
    %1267 = arith.cmpi slt, %1266, %0 : vector<8x1xi32>
    %1268 = vector.broadcast %1201 : i32 to vector<8x1xi32>
    %1269 = arith.cmpi slt, %1268, %0 : vector<8x1xi32>
    %cst_361 = arith.constant 0.000000e+00 : f32
    %1270 = vector.broadcast %cst_361 : f32 to vector<8x16xf32>
    %1271 = vector.shape_cast %1267 : vector<8x1xi1> to vector<8x1xi1>
    %1272 = vector.broadcast %1271 : vector<8x1xi1> to vector<8x16xi1>
    %1273 = arith.select %1272, %1260, %1270 : vector<8x16xi1>, vector<8x16xf32>
    %1274 = arith.index_cast %c4_i32_341 : i32 to index
    %c0_362 = arith.constant 0 : index
    %c0_363 = arith.constant 0 : index
    %1275 = vector.load %arg9[%1274, %c0_362, %c0_363] : memref<8x8x32xf32, #tpu.memory_space<vmem>>, vector<1x8x16xf32>
    %1276 = vector.shape_cast %1275 : vector<1x8x16xf32> to vector<8x16xf32>
    %1277 = vector.shape_cast %1273 : vector<8x16xf32> to vector<1x8x16xf32>
    tpu.vector_store %arg9[%1274, %c0_362, %c0_363], %1277 {strides = array<i32>} : memref<8x8x32xf32, #tpu.memory_space<vmem>>, vector<1x8x16xf32>,
    %cst_364 = arith.constant 0.000000e+00 : f32
    %1278 = vector.broadcast %cst_364 : f32 to vector<8x16xf32>
    %1279 = vector.shape_cast %1269 : vector<8x1xi1> to vector<8x1xi1>
    %1280 = vector.broadcast %1279 : vector<8x1xi1> to vector<8x16xi1>
    %1281 = arith.select %1280, %1265, %1278 : vector<8x16xi1>, vector<8x16xf32>
    %1282 = arith.index_cast %1201 : i32 to index
    %c0_365 = arith.constant 0 : index
    %c16_366 = arith.constant 16 : index
    %1283 = vector.load %arg9[%1282, %c0_365, %c16_366] : memref<8x8x32xf32, #tpu.memory_space<vmem>>, vector<1x8x16xf32>
    %1284 = vector.shape_cast %1283 : vector<1x8x16xf32> to vector<8x16xf32>
    %1285 = vector.shape_cast %1281 : vector<8x16xf32> to vector<1x8x16xf32>
    tpu.vector_store %arg9[%1282, %c0_365, %c16_366], %1285 {strides = array<i32>} : memref<8x8x32xf32, #tpu.memory_space<vmem>>, vector<1x8x16xf32>,
    %1286 = vector.shape_cast %1267 : vector<8x1xi1> to vector<8x1xi1>
    %1287 = vector.broadcast %1286 : vector<8x1xi1> to vector<8x16xi1>
    %1288 = arith.select %1287, %1260, %1191 : vector<8x16xi1>, vector<8x16xf32>
    %1289 = vector.shape_cast %1267 : vector<8x1xi1> to vector<8x1xi1>
    %1290 = vector.broadcast %1289 : vector<8x1xi1> to vector<8x16xi1>
    %1291 = arith.select %1290, %1258, %1194 : vector<8x16xi1>, vector<8x16xf32>
    %1292 = vector.shape_cast %1269 : vector<8x1xi1> to vector<8x1xi1>
    %1293 = vector.broadcast %1292 : vector<8x1xi1> to vector<8x16xi1>
    %1294 = arith.select %1293, %1265, %1197 : vector<8x16xi1>, vector<8x16xf32>
    %1295 = vector.shape_cast %1269 : vector<8x1xi1> to vector<8x1xi1>
    %1296 = vector.broadcast %1295 : vector<8x1xi1> to vector<8x16xi1>
    %1297 = arith.select %1296, %1263, %1200 : vector<8x16xi1>, vector<8x16xf32>
    %c5_i32_367 = arith.constant 5 : i32
    %c7_i32_368 = arith.constant 7 : i32
    %1298 = arith.subi %c7_i32_368, %c5_i32_367 : i32
    %1299 = arith.index_cast %c5_i32_367 : i32 to index
    %c0_369 = arith.constant 0 : index
    %c0_370 = arith.constant 0 : index
    %1300 = vector.load %arg10[%1299, %c0_369, %c0_370] : memref<8x8x128xf32, #tpu.memory_space<vmem>>, vector<1x8x64xf32>
    %1301 = vector.shape_cast %1300 : vector<1x8x64xf32> to vector<8x64xf32>
    %c1_371 = arith.constant 1 : index
    %c0_372 = arith.constant 0 : index
    %c0_373 = arith.constant 0 : index
    %1302 = vector.load %arg4[%c1_371, %c0_372, %c0_373] : memref<3x16x64xf32, #tpu.memory_space<vmem>>, vector<1x16x64xf32>
    %1303 = vector.shape_cast %1302 : vector<1x16x64xf32> to vector<16x64xf32>
    %cst_374 = arith.constant dense<0.000000e+00> : vector<8x64xf32>
    %1304 = tpu.matmul %1288, %1303, %cst_374 {dimension_numbers = #tpu.dot_dimension_numbers<[1], [0], [0], [1], [0, 0, 1, 1], [], []>} : vector<8x16xf32>, vector<16x64xf32>, vector<8x64xf32> -> vector<8x64xf32>
    %1305 = arith.addf %1301, %1304 : vector<8x64xf32>
    %1306 = arith.index_cast %1298 : i32 to index
    %c0_375 = arith.constant 0 : index
    %c64_376 = arith.constant 64 : index
    %1307 = vector.load %arg10[%1306, %c0_375, %c64_376] : memref<8x8x128xf32, #tpu.memory_space<vmem>>, vector<1x8x64xf32>
    %1308 = vector.shape_cast %1307 : vector<1x8x64xf32> to vector<8x64xf32>
    %c1_377 = arith.constant 1 : index
    %c0_378 = arith.constant 0 : index
    %c0_379 = arith.constant 0 : index
    %1309 = vector.load %arg5[%c1_377, %c0_378, %c0_379] : memref<3x16x64xf32, #tpu.memory_space<vmem>>, vector<1x16x64xf32>
    %1310 = vector.shape_cast %1309 : vector<1x16x64xf32> to vector<16x64xf32>
    %cst_380 = arith.constant dense<0.000000e+00> : vector<8x64xf32>
    %1311 = tpu.matmul %1294, %1310, %cst_380 {dimension_numbers = #tpu.dot_dimension_numbers<[1], [0], [0], [1], [0, 0, 1, 1], [], []>} : vector<8x16xf32>, vector<16x64xf32>, vector<8x64xf32> -> vector<8x64xf32>
    %1312 = arith.addf %1308, %1311 : vector<8x64xf32>
    %1313 = vector.extract_strided_slice %1305 {offsets = [0, 0], sizes = [8, 16], strides = [1, 1]} : vector<8x64xf32> to vector<8x16xf32>
    %1314 = arith.negf %1313 : vector<8x16xf32>
    %1315 = math.exp %1314 : vector<8x16xf32>
    %cst_381 = arith.constant 1.000000e+00 : f32
    %1316 = vector.broadcast %cst_381 : f32 to vector<8x16xf32>
    %1317 = arith.addf %1316, %1315 : vector<8x16xf32>
    %1318 = arith.divf %1316, %1317 : vector<8x16xf32>
    %1319 = vector.extract_strided_slice %1305 {offsets = [0, 16], sizes = [8, 16], strides = [1, 1]} : vector<8x64xf32> to vector<8x16xf32>
    %1320 = arith.negf %1319 : vector<8x16xf32>
    %1321 = math.exp %1320 : vector<8x16xf32>
    %cst_382 = arith.constant 1.000000e+00 : f32
    %1322 = vector.broadcast %cst_382 : f32 to vector<8x16xf32>
    %1323 = arith.addf %1322, %1321 : vector<8x16xf32>
    %1324 = arith.divf %1322, %1323 : vector<8x16xf32>
    %1325 = vector.extract_strided_slice %1305 {offsets = [0, 32], sizes = [8, 16], strides = [1, 1]} : vector<8x64xf32> to vector<8x16xf32>
    %1326 = math.tanh %1325 : vector<8x16xf32>
    %1327 = vector.extract_strided_slice %1305 {offsets = [0, 48], sizes = [8, 16], strides = [1, 1]} : vector<8x64xf32> to vector<8x16xf32>
    %1328 = arith.negf %1327 : vector<8x16xf32>
    %1329 = math.exp %1328 : vector<8x16xf32>
    %cst_383 = arith.constant 1.000000e+00 : f32
    %1330 = vector.broadcast %cst_383 : f32 to vector<8x16xf32>
    %1331 = arith.addf %1330, %1329 : vector<8x16xf32>
    %1332 = arith.divf %1330, %1331 : vector<8x16xf32>
    %1333 = vector.extract_strided_slice %1312 {offsets = [0, 0], sizes = [8, 16], strides = [1, 1]} : vector<8x64xf32> to vector<8x16xf32>
    %1334 = arith.negf %1333 : vector<8x16xf32>
    %1335 = math.exp %1334 : vector<8x16xf32>
    %cst_384 = arith.constant 1.000000e+00 : f32
    %1336 = vector.broadcast %cst_384 : f32 to vector<8x16xf32>
    %1337 = arith.addf %1336, %1335 : vector<8x16xf32>
    %1338 = arith.divf %1336, %1337 : vector<8x16xf32>
    %1339 = vector.extract_strided_slice %1312 {offsets = [0, 16], sizes = [8, 16], strides = [1, 1]} : vector<8x64xf32> to vector<8x16xf32>
    %1340 = arith.negf %1339 : vector<8x16xf32>
    %1341 = math.exp %1340 : vector<8x16xf32>
    %cst_385 = arith.constant 1.000000e+00 : f32
    %1342 = vector.broadcast %cst_385 : f32 to vector<8x16xf32>
    %1343 = arith.addf %1342, %1341 : vector<8x16xf32>
    %1344 = arith.divf %1342, %1343 : vector<8x16xf32>
    %1345 = vector.extract_strided_slice %1312 {offsets = [0, 32], sizes = [8, 16], strides = [1, 1]} : vector<8x64xf32> to vector<8x16xf32>
    %1346 = math.tanh %1345 : vector<8x16xf32>
    %1347 = vector.extract_strided_slice %1312 {offsets = [0, 48], sizes = [8, 16], strides = [1, 1]} : vector<8x64xf32> to vector<8x16xf32>
    %1348 = arith.negf %1347 : vector<8x16xf32>
    %1349 = math.exp %1348 : vector<8x16xf32>
    %cst_386 = arith.constant 1.000000e+00 : f32
    %1350 = vector.broadcast %cst_386 : f32 to vector<8x16xf32>
    %1351 = arith.addf %1350, %1349 : vector<8x16xf32>
    %1352 = arith.divf %1350, %1351 : vector<8x16xf32>
    %1353 = arith.mulf %1324, %1291 : vector<8x16xf32>
    %1354 = arith.mulf %1318, %1326 : vector<8x16xf32>
    %1355 = arith.addf %1353, %1354 : vector<8x16xf32>
    %1356 = math.tanh %1355 : vector<8x16xf32>
    %1357 = arith.mulf %1332, %1356 : vector<8x16xf32>
    %1358 = arith.mulf %1344, %1297 : vector<8x16xf32>
    %1359 = arith.mulf %1338, %1346 : vector<8x16xf32>
    %1360 = arith.addf %1358, %1359 : vector<8x16xf32>
    %1361 = math.tanh %1360 : vector<8x16xf32>
    %1362 = arith.mulf %1352, %1361 : vector<8x16xf32>
    %1363 = vector.broadcast %c5_i32_367 : i32 to vector<8x1xi32>
    %1364 = arith.cmpi slt, %1363, %0 : vector<8x1xi32>
    %1365 = vector.broadcast %1298 : i32 to vector<8x1xi32>
    %1366 = arith.cmpi slt, %1365, %0 : vector<8x1xi32>
    %cst_387 = arith.constant 0.000000e+00 : f32
    %1367 = vector.broadcast %cst_387 : f32 to vector<8x16xf32>
    %1368 = vector.shape_cast %1364 : vector<8x1xi1> to vector<8x1xi1>
    %1369 = vector.broadcast %1368 : vector<8x1xi1> to vector<8x16xi1>
    %1370 = arith.select %1369, %1357, %1367 : vector<8x16xi1>, vector<8x16xf32>
    %1371 = arith.index_cast %c5_i32_367 : i32 to index
    %c0_388 = arith.constant 0 : index
    %c0_389 = arith.constant 0 : index
    %1372 = vector.load %arg9[%1371, %c0_388, %c0_389] : memref<8x8x32xf32, #tpu.memory_space<vmem>>, vector<1x8x16xf32>
    %1373 = vector.shape_cast %1372 : vector<1x8x16xf32> to vector<8x16xf32>
    %1374 = vector.shape_cast %1370 : vector<8x16xf32> to vector<1x8x16xf32>
    tpu.vector_store %arg9[%1371, %c0_388, %c0_389], %1374 {strides = array<i32>} : memref<8x8x32xf32, #tpu.memory_space<vmem>>, vector<1x8x16xf32>,
    %cst_390 = arith.constant 0.000000e+00 : f32
    %1375 = vector.broadcast %cst_390 : f32 to vector<8x16xf32>
    %1376 = vector.shape_cast %1366 : vector<8x1xi1> to vector<8x1xi1>
    %1377 = vector.broadcast %1376 : vector<8x1xi1> to vector<8x16xi1>
    %1378 = arith.select %1377, %1362, %1375 : vector<8x16xi1>, vector<8x16xf32>
    %1379 = arith.index_cast %1298 : i32 to index
    %c0_391 = arith.constant 0 : index
    %c16_392 = arith.constant 16 : index
    %1380 = vector.load %arg9[%1379, %c0_391, %c16_392] : memref<8x8x32xf32, #tpu.memory_space<vmem>>, vector<1x8x16xf32>
    %1381 = vector.shape_cast %1380 : vector<1x8x16xf32> to vector<8x16xf32>
    %1382 = vector.shape_cast %1378 : vector<8x16xf32> to vector<1x8x16xf32>
    tpu.vector_store %arg9[%1379, %c0_391, %c16_392], %1382 {strides = array<i32>} : memref<8x8x32xf32, #tpu.memory_space<vmem>>, vector<1x8x16xf32>,
    %1383 = vector.shape_cast %1364 : vector<8x1xi1> to vector<8x1xi1>
    %1384 = vector.broadcast %1383 : vector<8x1xi1> to vector<8x16xi1>
    %1385 = arith.select %1384, %1357, %1288 : vector<8x16xi1>, vector<8x16xf32>
    %1386 = vector.shape_cast %1364 : vector<8x1xi1> to vector<8x1xi1>
    %1387 = vector.broadcast %1386 : vector<8x1xi1> to vector<8x16xi1>
    %1388 = arith.select %1387, %1355, %1291 : vector<8x16xi1>, vector<8x16xf32>
    %1389 = vector.shape_cast %1366 : vector<8x1xi1> to vector<8x1xi1>
    %1390 = vector.broadcast %1389 : vector<8x1xi1> to vector<8x16xi1>
    %1391 = arith.select %1390, %1362, %1294 : vector<8x16xi1>, vector<8x16xf32>
    %1392 = vector.shape_cast %1366 : vector<8x1xi1> to vector<8x1xi1>
    %1393 = vector.broadcast %1392 : vector<8x1xi1> to vector<8x16xi1>
    %1394 = arith.select %1393, %1360, %1297 : vector<8x16xi1>, vector<8x16xf32>
    %c6_i32_393 = arith.constant 6 : i32
    %c7_i32_394 = arith.constant 7 : i32
    %1395 = arith.subi %c7_i32_394, %c6_i32_393 : i32
    %1396 = arith.index_cast %c6_i32_393 : i32 to index
    %c0_395 = arith.constant 0 : index
    %c0_396 = arith.constant 0 : index
    %1397 = vector.load %arg10[%1396, %c0_395, %c0_396] : memref<8x8x128xf32, #tpu.memory_space<vmem>>, vector<1x8x64xf32>
    %1398 = vector.shape_cast %1397 : vector<1x8x64xf32> to vector<8x64xf32>
    %c1_397 = arith.constant 1 : index
    %c0_398 = arith.constant 0 : index
    %c0_399 = arith.constant 0 : index
    %1399 = vector.load %arg4[%c1_397, %c0_398, %c0_399] : memref<3x16x64xf32, #tpu.memory_space<vmem>>, vector<1x16x64xf32>
    %1400 = vector.shape_cast %1399 : vector<1x16x64xf32> to vector<16x64xf32>
    %cst_400 = arith.constant dense<0.000000e+00> : vector<8x64xf32>
    %1401 = tpu.matmul %1385, %1400, %cst_400 {dimension_numbers = #tpu.dot_dimension_numbers<[1], [0], [0], [1], [0, 0, 1, 1], [], []>} : vector<8x16xf32>, vector<16x64xf32>, vector<8x64xf32> -> vector<8x64xf32>
    %1402 = arith.addf %1398, %1401 : vector<8x64xf32>
    %1403 = arith.index_cast %1395 : i32 to index
    %c0_401 = arith.constant 0 : index
    %c64_402 = arith.constant 64 : index
    %1404 = vector.load %arg10[%1403, %c0_401, %c64_402] : memref<8x8x128xf32, #tpu.memory_space<vmem>>, vector<1x8x64xf32>
    %1405 = vector.shape_cast %1404 : vector<1x8x64xf32> to vector<8x64xf32>
    %c1_403 = arith.constant 1 : index
    %c0_404 = arith.constant 0 : index
    %c0_405 = arith.constant 0 : index
    %1406 = vector.load %arg5[%c1_403, %c0_404, %c0_405] : memref<3x16x64xf32, #tpu.memory_space<vmem>>, vector<1x16x64xf32>
    %1407 = vector.shape_cast %1406 : vector<1x16x64xf32> to vector<16x64xf32>
    %cst_406 = arith.constant dense<0.000000e+00> : vector<8x64xf32>
    %1408 = tpu.matmul %1391, %1407, %cst_406 {dimension_numbers = #tpu.dot_dimension_numbers<[1], [0], [0], [1], [0, 0, 1, 1], [], []>} : vector<8x16xf32>, vector<16x64xf32>, vector<8x64xf32> -> vector<8x64xf32>
    %1409 = arith.addf %1405, %1408 : vector<8x64xf32>
    %1410 = vector.extract_strided_slice %1402 {offsets = [0, 0], sizes = [8, 16], strides = [1, 1]} : vector<8x64xf32> to vector<8x16xf32>
    %1411 = arith.negf %1410 : vector<8x16xf32>
    %1412 = math.exp %1411 : vector<8x16xf32>
    %cst_407 = arith.constant 1.000000e+00 : f32
    %1413 = vector.broadcast %cst_407 : f32 to vector<8x16xf32>
    %1414 = arith.addf %1413, %1412 : vector<8x16xf32>
    %1415 = arith.divf %1413, %1414 : vector<8x16xf32>
    %1416 = vector.extract_strided_slice %1402 {offsets = [0, 16], sizes = [8, 16], strides = [1, 1]} : vector<8x64xf32> to vector<8x16xf32>
    %1417 = arith.negf %1416 : vector<8x16xf32>
    %1418 = math.exp %1417 : vector<8x16xf32>
    %cst_408 = arith.constant 1.000000e+00 : f32
    %1419 = vector.broadcast %cst_408 : f32 to vector<8x16xf32>
    %1420 = arith.addf %1419, %1418 : vector<8x16xf32>
    %1421 = arith.divf %1419, %1420 : vector<8x16xf32>
    %1422 = vector.extract_strided_slice %1402 {offsets = [0, 32], sizes = [8, 16], strides = [1, 1]} : vector<8x64xf32> to vector<8x16xf32>
    %1423 = math.tanh %1422 : vector<8x16xf32>
    %1424 = vector.extract_strided_slice %1402 {offsets = [0, 48], sizes = [8, 16], strides = [1, 1]} : vector<8x64xf32> to vector<8x16xf32>
    %1425 = arith.negf %1424 : vector<8x16xf32>
    %1426 = math.exp %1425 : vector<8x16xf32>
    %cst_409 = arith.constant 1.000000e+00 : f32
    %1427 = vector.broadcast %cst_409 : f32 to vector<8x16xf32>
    %1428 = arith.addf %1427, %1426 : vector<8x16xf32>
    %1429 = arith.divf %1427, %1428 : vector<8x16xf32>
    %1430 = vector.extract_strided_slice %1409 {offsets = [0, 0], sizes = [8, 16], strides = [1, 1]} : vector<8x64xf32> to vector<8x16xf32>
    %1431 = arith.negf %1430 : vector<8x16xf32>
    %1432 = math.exp %1431 : vector<8x16xf32>
    %cst_410 = arith.constant 1.000000e+00 : f32
    %1433 = vector.broadcast %cst_410 : f32 to vector<8x16xf32>
    %1434 = arith.addf %1433, %1432 : vector<8x16xf32>
    %1435 = arith.divf %1433, %1434 : vector<8x16xf32>
    %1436 = vector.extract_strided_slice %1409 {offsets = [0, 16], sizes = [8, 16], strides = [1, 1]} : vector<8x64xf32> to vector<8x16xf32>
    %1437 = arith.negf %1436 : vector<8x16xf32>
    %1438 = math.exp %1437 : vector<8x16xf32>
    %cst_411 = arith.constant 1.000000e+00 : f32
    %1439 = vector.broadcast %cst_411 : f32 to vector<8x16xf32>
    %1440 = arith.addf %1439, %1438 : vector<8x16xf32>
    %1441 = arith.divf %1439, %1440 : vector<8x16xf32>
    %1442 = vector.extract_strided_slice %1409 {offsets = [0, 32], sizes = [8, 16], strides = [1, 1]} : vector<8x64xf32> to vector<8x16xf32>
    %1443 = math.tanh %1442 : vector<8x16xf32>
    %1444 = vector.extract_strided_slice %1409 {offsets = [0, 48], sizes = [8, 16], strides = [1, 1]} : vector<8x64xf32> to vector<8x16xf32>
    %1445 = arith.negf %1444 : vector<8x16xf32>
    %1446 = math.exp %1445 : vector<8x16xf32>
    %cst_412 = arith.constant 1.000000e+00 : f32
    %1447 = vector.broadcast %cst_412 : f32 to vector<8x16xf32>
    %1448 = arith.addf %1447, %1446 : vector<8x16xf32>
    %1449 = arith.divf %1447, %1448 : vector<8x16xf32>
    %1450 = arith.mulf %1421, %1388 : vector<8x16xf32>
    %1451 = arith.mulf %1415, %1423 : vector<8x16xf32>
    %1452 = arith.addf %1450, %1451 : vector<8x16xf32>
    %1453 = math.tanh %1452 : vector<8x16xf32>
    %1454 = arith.mulf %1429, %1453 : vector<8x16xf32>
    %1455 = arith.mulf %1441, %1394 : vector<8x16xf32>
    %1456 = arith.mulf %1435, %1443 : vector<8x16xf32>
    %1457 = arith.addf %1455, %1456 : vector<8x16xf32>
    %1458 = math.tanh %1457 : vector<8x16xf32>
    %1459 = arith.mulf %1449, %1458 : vector<8x16xf32>
    %1460 = vector.broadcast %c6_i32_393 : i32 to vector<8x1xi32>
    %1461 = arith.cmpi slt, %1460, %0 : vector<8x1xi32>
    %1462 = vector.broadcast %1395 : i32 to vector<8x1xi32>
    %1463 = arith.cmpi slt, %1462, %0 : vector<8x1xi32>
    %cst_413 = arith.constant 0.000000e+00 : f32
    %1464 = vector.broadcast %cst_413 : f32 to vector<8x16xf32>
    %1465 = vector.shape_cast %1461 : vector<8x1xi1> to vector<8x1xi1>
    %1466 = vector.broadcast %1465 : vector<8x1xi1> to vector<8x16xi1>
    %1467 = arith.select %1466, %1454, %1464 : vector<8x16xi1>, vector<8x16xf32>
    %1468 = arith.index_cast %c6_i32_393 : i32 to index
    %c0_414 = arith.constant 0 : index
    %c0_415 = arith.constant 0 : index
    %1469 = vector.load %arg9[%1468, %c0_414, %c0_415] : memref<8x8x32xf32, #tpu.memory_space<vmem>>, vector<1x8x16xf32>
    %1470 = vector.shape_cast %1469 : vector<1x8x16xf32> to vector<8x16xf32>
    %1471 = vector.shape_cast %1467 : vector<8x16xf32> to vector<1x8x16xf32>
    tpu.vector_store %arg9[%1468, %c0_414, %c0_415], %1471 {strides = array<i32>} : memref<8x8x32xf32, #tpu.memory_space<vmem>>, vector<1x8x16xf32>,
    %cst_416 = arith.constant 0.000000e+00 : f32
    %1472 = vector.broadcast %cst_416 : f32 to vector<8x16xf32>
    %1473 = vector.shape_cast %1463 : vector<8x1xi1> to vector<8x1xi1>
    %1474 = vector.broadcast %1473 : vector<8x1xi1> to vector<8x16xi1>
    %1475 = arith.select %1474, %1459, %1472 : vector<8x16xi1>, vector<8x16xf32>
    %1476 = arith.index_cast %1395 : i32 to index
    %c0_417 = arith.constant 0 : index
    %c16_418 = arith.constant 16 : index
    %1477 = vector.load %arg9[%1476, %c0_417, %c16_418] : memref<8x8x32xf32, #tpu.memory_space<vmem>>, vector<1x8x16xf32>
    %1478 = vector.shape_cast %1477 : vector<1x8x16xf32> to vector<8x16xf32>
    %1479 = vector.shape_cast %1475 : vector<8x16xf32> to vector<1x8x16xf32>
    tpu.vector_store %arg9[%1476, %c0_417, %c16_418], %1479 {strides = array<i32>} : memref<8x8x32xf32, #tpu.memory_space<vmem>>, vector<1x8x16xf32>,
    %1480 = vector.shape_cast %1461 : vector<8x1xi1> to vector<8x1xi1>
    %1481 = vector.broadcast %1480 : vector<8x1xi1> to vector<8x16xi1>
    %1482 = arith.select %1481, %1454, %1385 : vector<8x16xi1>, vector<8x16xf32>
    %1483 = vector.shape_cast %1461 : vector<8x1xi1> to vector<8x1xi1>
    %1484 = vector.broadcast %1483 : vector<8x1xi1> to vector<8x16xi1>
    %1485 = arith.select %1484, %1452, %1388 : vector<8x16xi1>, vector<8x16xf32>
    %1486 = vector.shape_cast %1463 : vector<8x1xi1> to vector<8x1xi1>
    %1487 = vector.broadcast %1486 : vector<8x1xi1> to vector<8x16xi1>
    %1488 = arith.select %1487, %1459, %1391 : vector<8x16xi1>, vector<8x16xf32>
    %1489 = vector.shape_cast %1463 : vector<8x1xi1> to vector<8x1xi1>
    %1490 = vector.broadcast %1489 : vector<8x1xi1> to vector<8x16xi1>
    %1491 = arith.select %1490, %1457, %1394 : vector<8x16xi1>, vector<8x16xf32>
    %c7_i32_419 = arith.constant 7 : i32
    %c7_i32_420 = arith.constant 7 : i32
    %1492 = arith.subi %c7_i32_420, %c7_i32_419 : i32
    %1493 = arith.index_cast %c7_i32_419 : i32 to index
    %c0_421 = arith.constant 0 : index
    %c0_422 = arith.constant 0 : index
    %1494 = vector.load %arg10[%1493, %c0_421, %c0_422] : memref<8x8x128xf32, #tpu.memory_space<vmem>>, vector<1x8x64xf32>
    %1495 = vector.shape_cast %1494 : vector<1x8x64xf32> to vector<8x64xf32>
    %c1_423 = arith.constant 1 : index
    %c0_424 = arith.constant 0 : index
    %c0_425 = arith.constant 0 : index
    %1496 = vector.load %arg4[%c1_423, %c0_424, %c0_425] : memref<3x16x64xf32, #tpu.memory_space<vmem>>, vector<1x16x64xf32>
    %1497 = vector.shape_cast %1496 : vector<1x16x64xf32> to vector<16x64xf32>
    %cst_426 = arith.constant dense<0.000000e+00> : vector<8x64xf32>
    %1498 = tpu.matmul %1482, %1497, %cst_426 {dimension_numbers = #tpu.dot_dimension_numbers<[1], [0], [0], [1], [0, 0, 1, 1], [], []>} : vector<8x16xf32>, vector<16x64xf32>, vector<8x64xf32> -> vector<8x64xf32>
    %1499 = arith.addf %1495, %1498 : vector<8x64xf32>
    %1500 = arith.index_cast %1492 : i32 to index
    %c0_427 = arith.constant 0 : index
    %c64_428 = arith.constant 64 : index
    %1501 = vector.load %arg10[%1500, %c0_427, %c64_428] : memref<8x8x128xf32, #tpu.memory_space<vmem>>, vector<1x8x64xf32>
    %1502 = vector.shape_cast %1501 : vector<1x8x64xf32> to vector<8x64xf32>
    %c1_429 = arith.constant 1 : index
    %c0_430 = arith.constant 0 : index
    %c0_431 = arith.constant 0 : index
    %1503 = vector.load %arg5[%c1_429, %c0_430, %c0_431] : memref<3x16x64xf32, #tpu.memory_space<vmem>>, vector<1x16x64xf32>
    %1504 = vector.shape_cast %1503 : vector<1x16x64xf32> to vector<16x64xf32>
    %cst_432 = arith.constant dense<0.000000e+00> : vector<8x64xf32>
    %1505 = tpu.matmul %1488, %1504, %cst_432 {dimension_numbers = #tpu.dot_dimension_numbers<[1], [0], [0], [1], [0, 0, 1, 1], [], []>} : vector<8x16xf32>, vector<16x64xf32>, vector<8x64xf32> -> vector<8x64xf32>
    %1506 = arith.addf %1502, %1505 : vector<8x64xf32>
    %1507 = vector.extract_strided_slice %1499 {offsets = [0, 0], sizes = [8, 16], strides = [1, 1]} : vector<8x64xf32> to vector<8x16xf32>
    %1508 = arith.negf %1507 : vector<8x16xf32>
    %1509 = math.exp %1508 : vector<8x16xf32>
    %cst_433 = arith.constant 1.000000e+00 : f32
    %1510 = vector.broadcast %cst_433 : f32 to vector<8x16xf32>
    %1511 = arith.addf %1510, %1509 : vector<8x16xf32>
    %1512 = arith.divf %1510, %1511 : vector<8x16xf32>
    %1513 = vector.extract_strided_slice %1499 {offsets = [0, 16], sizes = [8, 16], strides = [1, 1]} : vector<8x64xf32> to vector<8x16xf32>
    %1514 = arith.negf %1513 : vector<8x16xf32>
    %1515 = math.exp %1514 : vector<8x16xf32>
    %cst_434 = arith.constant 1.000000e+00 : f32
    %1516 = vector.broadcast %cst_434 : f32 to vector<8x16xf32>
    %1517 = arith.addf %1516, %1515 : vector<8x16xf32>
    %1518 = arith.divf %1516, %1517 : vector<8x16xf32>
    %1519 = vector.extract_strided_slice %1499 {offsets = [0, 32], sizes = [8, 16], strides = [1, 1]} : vector<8x64xf32> to vector<8x16xf32>
    %1520 = math.tanh %1519 : vector<8x16xf32>
    %1521 = vector.extract_strided_slice %1499 {offsets = [0, 48], sizes = [8, 16], strides = [1, 1]} : vector<8x64xf32> to vector<8x16xf32>
    %1522 = arith.negf %1521 : vector<8x16xf32>
    %1523 = math.exp %1522 : vector<8x16xf32>
    %cst_435 = arith.constant 1.000000e+00 : f32
    %1524 = vector.broadcast %cst_435 : f32 to vector<8x16xf32>
    %1525 = arith.addf %1524, %1523 : vector<8x16xf32>
    %1526 = arith.divf %1524, %1525 : vector<8x16xf32>
    %1527 = vector.extract_strided_slice %1506 {offsets = [0, 0], sizes = [8, 16], strides = [1, 1]} : vector<8x64xf32> to vector<8x16xf32>
    %1528 = arith.negf %1527 : vector<8x16xf32>
    %1529 = math.exp %1528 : vector<8x16xf32>
    %cst_436 = arith.constant 1.000000e+00 : f32
    %1530 = vector.broadcast %cst_436 : f32 to vector<8x16xf32>
    %1531 = arith.addf %1530, %1529 : vector<8x16xf32>
    %1532 = arith.divf %1530, %1531 : vector<8x16xf32>
    %1533 = vector.extract_strided_slice %1506 {offsets = [0, 16], sizes = [8, 16], strides = [1, 1]} : vector<8x64xf32> to vector<8x16xf32>
    %1534 = arith.negf %1533 : vector<8x16xf32>
    %1535 = math.exp %1534 : vector<8x16xf32>
    %cst_437 = arith.constant 1.000000e+00 : f32
    %1536 = vector.broadcast %cst_437 : f32 to vector<8x16xf32>
    %1537 = arith.addf %1536, %1535 : vector<8x16xf32>
    %1538 = arith.divf %1536, %1537 : vector<8x16xf32>
    %1539 = vector.extract_strided_slice %1506 {offsets = [0, 32], sizes = [8, 16], strides = [1, 1]} : vector<8x64xf32> to vector<8x16xf32>
    %1540 = math.tanh %1539 : vector<8x16xf32>
    %1541 = vector.extract_strided_slice %1506 {offsets = [0, 48], sizes = [8, 16], strides = [1, 1]} : vector<8x64xf32> to vector<8x16xf32>
    %1542 = arith.negf %1541 : vector<8x16xf32>
    %1543 = math.exp %1542 : vector<8x16xf32>
    %cst_438 = arith.constant 1.000000e+00 : f32
    %1544 = vector.broadcast %cst_438 : f32 to vector<8x16xf32>
    %1545 = arith.addf %1544, %1543 : vector<8x16xf32>
    %1546 = arith.divf %1544, %1545 : vector<8x16xf32>
    %1547 = arith.mulf %1518, %1485 : vector<8x16xf32>
    %1548 = arith.mulf %1512, %1520 : vector<8x16xf32>
    %1549 = arith.addf %1547, %1548 : vector<8x16xf32>
    %1550 = math.tanh %1549 : vector<8x16xf32>
    %1551 = arith.mulf %1526, %1550 : vector<8x16xf32>
    %1552 = arith.mulf %1538, %1491 : vector<8x16xf32>
    %1553 = arith.mulf %1532, %1540 : vector<8x16xf32>
    %1554 = arith.addf %1552, %1553 : vector<8x16xf32>
    %1555 = math.tanh %1554 : vector<8x16xf32>
    %1556 = arith.mulf %1546, %1555 : vector<8x16xf32>
    %1557 = vector.broadcast %c7_i32_419 : i32 to vector<8x1xi32>
    %1558 = arith.cmpi slt, %1557, %0 : vector<8x1xi32>
    %1559 = vector.broadcast %1492 : i32 to vector<8x1xi32>
    %1560 = arith.cmpi slt, %1559, %0 : vector<8x1xi32>
    %cst_439 = arith.constant 0.000000e+00 : f32
    %1561 = vector.broadcast %cst_439 : f32 to vector<8x16xf32>
    %1562 = vector.shape_cast %1558 : vector<8x1xi1> to vector<8x1xi1>
    %1563 = vector.broadcast %1562 : vector<8x1xi1> to vector<8x16xi1>
    %1564 = arith.select %1563, %1551, %1561 : vector<8x16xi1>, vector<8x16xf32>
    %1565 = arith.index_cast %c7_i32_419 : i32 to index
    %c0_440 = arith.constant 0 : index
    %c0_441 = arith.constant 0 : index
    %1566 = vector.load %arg9[%1565, %c0_440, %c0_441] : memref<8x8x32xf32, #tpu.memory_space<vmem>>, vector<1x8x16xf32>
    %1567 = vector.shape_cast %1566 : vector<1x8x16xf32> to vector<8x16xf32>
    %1568 = vector.shape_cast %1564 : vector<8x16xf32> to vector<1x8x16xf32>
    tpu.vector_store %arg9[%1565, %c0_440, %c0_441], %1568 {strides = array<i32>} : memref<8x8x32xf32, #tpu.memory_space<vmem>>, vector<1x8x16xf32>,
    %cst_442 = arith.constant 0.000000e+00 : f32
    %1569 = vector.broadcast %cst_442 : f32 to vector<8x16xf32>
    %1570 = vector.shape_cast %1560 : vector<8x1xi1> to vector<8x1xi1>
    %1571 = vector.broadcast %1570 : vector<8x1xi1> to vector<8x16xi1>
    %1572 = arith.select %1571, %1556, %1569 : vector<8x16xi1>, vector<8x16xf32>
    %1573 = arith.index_cast %1492 : i32 to index
    %c0_443 = arith.constant 0 : index
    %c16_444 = arith.constant 16 : index
    %1574 = vector.load %arg9[%1573, %c0_443, %c16_444] : memref<8x8x32xf32, #tpu.memory_space<vmem>>, vector<1x8x16xf32>
    %1575 = vector.shape_cast %1574 : vector<1x8x16xf32> to vector<8x16xf32>
    %1576 = vector.shape_cast %1572 : vector<8x16xf32> to vector<1x8x16xf32>
    tpu.vector_store %arg9[%1573, %c0_443, %c16_444], %1576 {strides = array<i32>} : memref<8x8x32xf32, #tpu.memory_space<vmem>>, vector<1x8x16xf32>,
    %1577 = vector.shape_cast %1558 : vector<8x1xi1> to vector<8x1xi1>
    %1578 = vector.broadcast %1577 : vector<8x1xi1> to vector<8x16xi1>
    %1579 = arith.select %1578, %1551, %1482 : vector<8x16xi1>, vector<8x16xf32>
    %1580 = vector.shape_cast %1558 : vector<8x1xi1> to vector<8x1xi1>
    %1581 = vector.broadcast %1580 : vector<8x1xi1> to vector<8x16xi1>
    %1582 = arith.select %1581, %1549, %1485 : vector<8x16xi1>, vector<8x16xf32>
    %1583 = vector.shape_cast %1560 : vector<8x1xi1> to vector<8x1xi1>
    %1584 = vector.broadcast %1583 : vector<8x1xi1> to vector<8x16xi1>
    %1585 = arith.select %1584, %1556, %1488 : vector<8x16xi1>, vector<8x16xf32>
    %1586 = vector.shape_cast %1560 : vector<8x1xi1> to vector<8x1xi1>
    %1587 = vector.broadcast %1586 : vector<8x1xi1> to vector<8x16xi1>
    %1588 = arith.select %1587, %1554, %1491 : vector<8x16xi1>, vector<8x16xf32>
    %c8_i32_445 = arith.constant 8 : i32
    %c1_446 = arith.constant 1 : index
    %c0_447 = arith.constant 0 : index
    %c0_448 = arith.constant 0 : index
    %1589 = vector.load %arg7[%c1_446, %c0_447, %c0_448] : memref<3x8x32xf32, #tpu.memory_space<vmem>>, vector<1x8x16xf32>
    %1590 = vector.shape_cast %1589 : vector<1x8x16xf32> to vector<8x16xf32>
    %1591 = vector.shape_cast %1579 : vector<8x16xf32> to vector<1x8x16xf32>
    tpu.vector_store %arg7[%c1_446, %c0_447, %c0_448], %1591 {strides = array<i32>} : memref<3x8x32xf32, #tpu.memory_space<vmem>>, vector<1x8x16xf32>,
    %c1_449 = arith.constant 1 : index
    %c0_450 = arith.constant 0 : index
    %c16_451 = arith.constant 16 : index
    %1592 = vector.load %arg7[%c1_449, %c0_450, %c16_451] : memref<3x8x32xf32, #tpu.memory_space<vmem>>, vector<1x8x16xf32>
    %1593 = vector.shape_cast %1592 : vector<1x8x16xf32> to vector<8x16xf32>
    %1594 = vector.shape_cast %1585 : vector<8x16xf32> to vector<1x8x16xf32>
    tpu.vector_store %arg7[%c1_449, %c0_450, %c16_451], %1594 {strides = array<i32>} : memref<3x8x32xf32, #tpu.memory_space<vmem>>, vector<1x8x16xf32>,
    %c1_452 = arith.constant 1 : index
    %c0_453 = arith.constant 0 : index
    %c0_454 = arith.constant 0 : index
    %1595 = vector.load %arg8[%c1_452, %c0_453, %c0_454] : memref<3x8x32xf32, #tpu.memory_space<vmem>>, vector<1x8x16xf32>
    %1596 = vector.shape_cast %1595 : vector<1x8x16xf32> to vector<8x16xf32>
    %1597 = vector.shape_cast %1582 : vector<8x16xf32> to vector<1x8x16xf32>
    tpu.vector_store %arg8[%c1_452, %c0_453, %c0_454], %1597 {strides = array<i32>} : memref<3x8x32xf32, #tpu.memory_space<vmem>>, vector<1x8x16xf32>,
    %c1_455 = arith.constant 1 : index
    %c0_456 = arith.constant 0 : index
    %c16_457 = arith.constant 16 : index
    %1598 = vector.load %arg8[%c1_455, %c0_456, %c16_457] : memref<3x8x32xf32, #tpu.memory_space<vmem>>, vector<1x8x16xf32>
    %1599 = vector.shape_cast %1598 : vector<1x8x16xf32> to vector<8x16xf32>
    %1600 = vector.shape_cast %1588 : vector<8x16xf32> to vector<1x8x16xf32>
    tpu.vector_store %arg8[%c1_455, %c0_456, %c16_457], %1600 {strides = array<i32>} : memref<3x8x32xf32, #tpu.memory_space<vmem>>, vector<1x8x16xf32>,
    %c0_458 = arith.constant 0 : index
    %c0_459 = arith.constant 0 : index
    %c0_460 = arith.constant 0 : index
    %1601 = vector.load %arg9[%c0_458, %c0_459, %c0_460] : memref<8x8x32xf32, #tpu.memory_space<vmem>>, vector<8x8x32xf32>
    %1602 = vector.shape_cast %1601 : vector<8x8x32xf32> to vector<64x32xf32>
    %c2 = arith.constant 2 : index
    %c0_461 = arith.constant 0 : index
    %c0_462 = arith.constant 0 : index
    %1603 = vector.load %arg2[%c2, %c0_461, %c0_462] : memref<3x32x128xf32, #tpu.memory_space<vmem>>, vector<1x32x128xf32>
    %1604 = vector.shape_cast %1603 : vector<1x32x128xf32> to vector<32x128xf32>
    %cst_463 = arith.constant dense<0.000000e+00> : vector<64x128xf32>
    %1605 = tpu.matmul %1602, %1604, %cst_463 {dimension_numbers = #tpu.dot_dimension_numbers<[1], [0], [0], [1], [0, 0, 1, 1], [], []>} : vector<64x32xf32>, vector<32x128xf32>, vector<64x128xf32> -> vector<64x128xf32>
    %c2_464 = arith.constant 2 : index
    %c0_465 = arith.constant 0 : index
    %c0_466 = arith.constant 0 : index
    %1606 = vector.load %arg3[%c2_464, %c0_465, %c0_466] : memref<3x1x128xf32, #tpu.memory_space<vmem>>, vector<1x1x128xf32>
    %1607 = vector.shape_cast %1606 : vector<1x1x128xf32> to vector<1x128xf32>
    %1608 = vector.broadcast %1607 : vector<1x128xf32> to vector<64x128xf32>
    %1609 = arith.addf %1605, %1608 : vector<64x128xf32>
    %1610 = vector.shape_cast %1609 : vector<64x128xf32> to vector<8x8x128xf32>
    %c0_467 = arith.constant 0 : index
    %c0_468 = arith.constant 0 : index
    %c0_469 = arith.constant 0 : index
    %1611 = vector.load %arg10[%c0_467, %c0_468, %c0_469] : memref<8x8x128xf32, #tpu.memory_space<vmem>>, vector<8x8x128xf32>
    tpu.vector_store %arg10[%c0_467, %c0_468, %c0_469], %1610 {strides = array<i32>} : memref<8x8x128xf32, #tpu.memory_space<vmem>>, vector<8x8x128xf32>,
    %cst_470 = arith.constant 0.000000e+00 : f32
    %1612 = vector.broadcast %cst_470 : f32 to vector<8x16xf32>
    %c0_i32_471 = arith.constant 0 : i32
    %c7_i32_472 = arith.constant 7 : i32
    %1613 = arith.subi %c7_i32_472, %c0_i32_471 : i32
    %1614 = arith.index_cast %c0_i32_471 : i32 to index
    %c0_473 = arith.constant 0 : index
    %c0_474 = arith.constant 0 : index
    %1615 = vector.load %arg10[%1614, %c0_473, %c0_474] : memref<8x8x128xf32, #tpu.memory_space<vmem>>, vector<1x8x64xf32>
    %1616 = vector.shape_cast %1615 : vector<1x8x64xf32> to vector<8x64xf32>
    %c2_475 = arith.constant 2 : index
    %c0_476 = arith.constant 0 : index
    %c0_477 = arith.constant 0 : index
    %1617 = vector.load %arg4[%c2_475, %c0_476, %c0_477] : memref<3x16x64xf32, #tpu.memory_space<vmem>>, vector<1x16x64xf32>
    %1618 = vector.shape_cast %1617 : vector<1x16x64xf32> to vector<16x64xf32>
    %cst_478 = arith.constant dense<0.000000e+00> : vector<8x64xf32>
    %1619 = tpu.matmul %1612, %1618, %cst_478 {dimension_numbers = #tpu.dot_dimension_numbers<[1], [0], [0], [1], [0, 0, 1, 1], [], []>} : vector<8x16xf32>, vector<16x64xf32>, vector<8x64xf32> -> vector<8x64xf32>
    %1620 = arith.addf %1616, %1619 : vector<8x64xf32>
    %1621 = arith.index_cast %1613 : i32 to index
    %c0_479 = arith.constant 0 : index
    %c64_480 = arith.constant 64 : index
    %1622 = vector.load %arg10[%1621, %c0_479, %c64_480] : memref<8x8x128xf32, #tpu.memory_space<vmem>>, vector<1x8x64xf32>
    %1623 = vector.shape_cast %1622 : vector<1x8x64xf32> to vector<8x64xf32>
    %c2_481 = arith.constant 2 : index
    %c0_482 = arith.constant 0 : index
    %c0_483 = arith.constant 0 : index
    %1624 = vector.load %arg5[%c2_481, %c0_482, %c0_483] : memref<3x16x64xf32, #tpu.memory_space<vmem>>, vector<1x16x64xf32>
    %1625 = vector.shape_cast %1624 : vector<1x16x64xf32> to vector<16x64xf32>
    %cst_484 = arith.constant dense<0.000000e+00> : vector<8x64xf32>
    %1626 = tpu.matmul %1612, %1625, %cst_484 {dimension_numbers = #tpu.dot_dimension_numbers<[1], [0], [0], [1], [0, 0, 1, 1], [], []>} : vector<8x16xf32>, vector<16x64xf32>, vector<8x64xf32> -> vector<8x64xf32>
    %1627 = arith.addf %1623, %1626 : vector<8x64xf32>
    %1628 = vector.extract_strided_slice %1620 {offsets = [0, 0], sizes = [8, 16], strides = [1, 1]} : vector<8x64xf32> to vector<8x16xf32>
    %1629 = arith.negf %1628 : vector<8x16xf32>
    %1630 = math.exp %1629 : vector<8x16xf32>
    %cst_485 = arith.constant 1.000000e+00 : f32
    %1631 = vector.broadcast %cst_485 : f32 to vector<8x16xf32>
    %1632 = arith.addf %1631, %1630 : vector<8x16xf32>
    %1633 = arith.divf %1631, %1632 : vector<8x16xf32>
    %1634 = vector.extract_strided_slice %1620 {offsets = [0, 16], sizes = [8, 16], strides = [1, 1]} : vector<8x64xf32> to vector<8x16xf32>
    %1635 = arith.negf %1634 : vector<8x16xf32>
    %1636 = math.exp %1635 : vector<8x16xf32>
    %cst_486 = arith.constant 1.000000e+00 : f32
    %1637 = vector.broadcast %cst_486 : f32 to vector<8x16xf32>
    %1638 = arith.addf %1637, %1636 : vector<8x16xf32>
    %1639 = arith.divf %1637, %1638 : vector<8x16xf32>
    %1640 = vector.extract_strided_slice %1620 {offsets = [0, 32], sizes = [8, 16], strides = [1, 1]} : vector<8x64xf32> to vector<8x16xf32>
    %1641 = math.tanh %1640 : vector<8x16xf32>
    %1642 = vector.extract_strided_slice %1620 {offsets = [0, 48], sizes = [8, 16], strides = [1, 1]} : vector<8x64xf32> to vector<8x16xf32>
    %1643 = arith.negf %1642 : vector<8x16xf32>
    %1644 = math.exp %1643 : vector<8x16xf32>
    %cst_487 = arith.constant 1.000000e+00 : f32
    %1645 = vector.broadcast %cst_487 : f32 to vector<8x16xf32>
    %1646 = arith.addf %1645, %1644 : vector<8x16xf32>
    %1647 = arith.divf %1645, %1646 : vector<8x16xf32>
    %1648 = vector.extract_strided_slice %1627 {offsets = [0, 0], sizes = [8, 16], strides = [1, 1]} : vector<8x64xf32> to vector<8x16xf32>
    %1649 = arith.negf %1648 : vector<8x16xf32>
    %1650 = math.exp %1649 : vector<8x16xf32>
    %cst_488 = arith.constant 1.000000e+00 : f32
    %1651 = vector.broadcast %cst_488 : f32 to vector<8x16xf32>
    %1652 = arith.addf %1651, %1650 : vector<8x16xf32>
    %1653 = arith.divf %1651, %1652 : vector<8x16xf32>
    %1654 = vector.extract_strided_slice %1627 {offsets = [0, 16], sizes = [8, 16], strides = [1, 1]} : vector<8x64xf32> to vector<8x16xf32>
    %1655 = arith.negf %1654 : vector<8x16xf32>
    %1656 = math.exp %1655 : vector<8x16xf32>
    %cst_489 = arith.constant 1.000000e+00 : f32
    %1657 = vector.broadcast %cst_489 : f32 to vector<8x16xf32>
    %1658 = arith.addf %1657, %1656 : vector<8x16xf32>
    %1659 = arith.divf %1657, %1658 : vector<8x16xf32>
    %1660 = vector.extract_strided_slice %1627 {offsets = [0, 32], sizes = [8, 16], strides = [1, 1]} : vector<8x64xf32> to vector<8x16xf32>
    %1661 = math.tanh %1660 : vector<8x16xf32>
    %1662 = vector.extract_strided_slice %1627 {offsets = [0, 48], sizes = [8, 16], strides = [1, 1]} : vector<8x64xf32> to vector<8x16xf32>
    %1663 = arith.negf %1662 : vector<8x16xf32>
    %1664 = math.exp %1663 : vector<8x16xf32>
    %cst_490 = arith.constant 1.000000e+00 : f32
    %1665 = vector.broadcast %cst_490 : f32 to vector<8x16xf32>
    %1666 = arith.addf %1665, %1664 : vector<8x16xf32>
    %1667 = arith.divf %1665, %1666 : vector<8x16xf32>
    %1668 = arith.mulf %1639, %1612 : vector<8x16xf32>
    %1669 = arith.mulf %1633, %1641 : vector<8x16xf32>
    %1670 = arith.addf %1668, %1669 : vector<8x16xf32>
    %1671 = math.tanh %1670 : vector<8x16xf32>
    %1672 = arith.mulf %1647, %1671 : vector<8x16xf32>
    %1673 = arith.mulf %1659, %1612 : vector<8x16xf32>
    %1674 = arith.mulf %1653, %1661 : vector<8x16xf32>
    %1675 = arith.addf %1673, %1674 : vector<8x16xf32>
    %1676 = math.tanh %1675 : vector<8x16xf32>
    %1677 = arith.mulf %1667, %1676 : vector<8x16xf32>
    %1678 = vector.broadcast %c0_i32_471 : i32 to vector<8x1xi32>
    %1679 = arith.cmpi slt, %1678, %0 : vector<8x1xi32>
    %1680 = vector.broadcast %1613 : i32 to vector<8x1xi32>
    %1681 = arith.cmpi slt, %1680, %0 : vector<8x1xi32>
    %cst_491 = arith.constant 0.000000e+00 : f32
    %1682 = vector.broadcast %cst_491 : f32 to vector<8x16xf32>
    %1683 = vector.shape_cast %1679 : vector<8x1xi1> to vector<8x1xi1>
    %1684 = vector.broadcast %1683 : vector<8x1xi1> to vector<8x16xi1>
    %1685 = arith.select %1684, %1672, %1682 : vector<8x16xi1>, vector<8x16xf32>
    %1686 = arith.index_cast %c0_i32_471 : i32 to index
    %c0_492 = arith.constant 0 : index
    %c0_493 = arith.constant 0 : index
    %1687 = vector.load %arg6[%1686, %c0_492, %c0_493] : memref<8x8x32xf32, #tpu.memory_space<vmem>>, vector<1x8x16xf32>
    %1688 = vector.shape_cast %1687 : vector<1x8x16xf32> to vector<8x16xf32>
    %1689 = vector.shape_cast %1685 : vector<8x16xf32> to vector<1x8x16xf32>
    tpu.vector_store %arg6[%1686, %c0_492, %c0_493], %1689 {strides = array<i32>} : memref<8x8x32xf32, #tpu.memory_space<vmem>>, vector<1x8x16xf32>,
    %cst_494 = arith.constant 0.000000e+00 : f32
    %1690 = vector.broadcast %cst_494 : f32 to vector<8x16xf32>
    %1691 = vector.shape_cast %1681 : vector<8x1xi1> to vector<8x1xi1>
    %1692 = vector.broadcast %1691 : vector<8x1xi1> to vector<8x16xi1>
    %1693 = arith.select %1692, %1677, %1690 : vector<8x16xi1>, vector<8x16xf32>
    %1694 = arith.index_cast %1613 : i32 to index
    %c0_495 = arith.constant 0 : index
    %c16_496 = arith.constant 16 : index
    %1695 = vector.load %arg6[%1694, %c0_495, %c16_496] : memref<8x8x32xf32, #tpu.memory_space<vmem>>, vector<1x8x16xf32>
    %1696 = vector.shape_cast %1695 : vector<1x8x16xf32> to vector<8x16xf32>
    %1697 = vector.shape_cast %1693 : vector<8x16xf32> to vector<1x8x16xf32>
    tpu.vector_store %arg6[%1694, %c0_495, %c16_496], %1697 {strides = array<i32>} : memref<8x8x32xf32, #tpu.memory_space<vmem>>, vector<1x8x16xf32>,
    %1698 = vector.shape_cast %1679 : vector<8x1xi1> to vector<8x1xi1>
    %1699 = vector.broadcast %1698 : vector<8x1xi1> to vector<8x16xi1>
    %1700 = arith.select %1699, %1672, %1612 : vector<8x16xi1>, vector<8x16xf32>
    %1701 = vector.shape_cast %1679 : vector<8x1xi1> to vector<8x1xi1>
    %1702 = vector.broadcast %1701 : vector<8x1xi1> to vector<8x16xi1>
    %1703 = arith.select %1702, %1670, %1612 : vector<8x16xi1>, vector<8x16xf32>
    %1704 = vector.shape_cast %1681 : vector<8x1xi1> to vector<8x1xi1>
    %1705 = vector.broadcast %1704 : vector<8x1xi1> to vector<8x16xi1>
    %1706 = arith.select %1705, %1677, %1612 : vector<8x16xi1>, vector<8x16xf32>
    %1707 = vector.shape_cast %1681 : vector<8x1xi1> to vector<8x1xi1>
    %1708 = vector.broadcast %1707 : vector<8x1xi1> to vector<8x16xi1>
    %1709 = arith.select %1708, %1675, %1612 : vector<8x16xi1>, vector<8x16xf32>
    %c1_i32_497 = arith.constant 1 : i32
    %c7_i32_498 = arith.constant 7 : i32
    %1710 = arith.subi %c7_i32_498, %c1_i32_497 : i32
    %1711 = arith.index_cast %c1_i32_497 : i32 to index
    %c0_499 = arith.constant 0 : index
    %c0_500 = arith.constant 0 : index
    %1712 = vector.load %arg10[%1711, %c0_499, %c0_500] : memref<8x8x128xf32, #tpu.memory_space<vmem>>, vector<1x8x64xf32>
    %1713 = vector.shape_cast %1712 : vector<1x8x64xf32> to vector<8x64xf32>
    %c2_501 = arith.constant 2 : index
    %c0_502 = arith.constant 0 : index
    %c0_503 = arith.constant 0 : index
    %1714 = vector.load %arg4[%c2_501, %c0_502, %c0_503] : memref<3x16x64xf32, #tpu.memory_space<vmem>>, vector<1x16x64xf32>
    %1715 = vector.shape_cast %1714 : vector<1x16x64xf32> to vector<16x64xf32>
    %cst_504 = arith.constant dense<0.000000e+00> : vector<8x64xf32>
    %1716 = tpu.matmul %1700, %1715, %cst_504 {dimension_numbers = #tpu.dot_dimension_numbers<[1], [0], [0], [1], [0, 0, 1, 1], [], []>} : vector<8x16xf32>, vector<16x64xf32>, vector<8x64xf32> -> vector<8x64xf32>
    %1717 = arith.addf %1713, %1716 : vector<8x64xf32>
    %1718 = arith.index_cast %1710 : i32 to index
    %c0_505 = arith.constant 0 : index
    %c64_506 = arith.constant 64 : index
    %1719 = vector.load %arg10[%1718, %c0_505, %c64_506] : memref<8x8x128xf32, #tpu.memory_space<vmem>>, vector<1x8x64xf32>
    %1720 = vector.shape_cast %1719 : vector<1x8x64xf32> to vector<8x64xf32>
    %c2_507 = arith.constant 2 : index
    %c0_508 = arith.constant 0 : index
    %c0_509 = arith.constant 0 : index
    %1721 = vector.load %arg5[%c2_507, %c0_508, %c0_509] : memref<3x16x64xf32, #tpu.memory_space<vmem>>, vector<1x16x64xf32>
    %1722 = vector.shape_cast %1721 : vector<1x16x64xf32> to vector<16x64xf32>
    %cst_510 = arith.constant dense<0.000000e+00> : vector<8x64xf32>
    %1723 = tpu.matmul %1706, %1722, %cst_510 {dimension_numbers = #tpu.dot_dimension_numbers<[1], [0], [0], [1], [0, 0, 1, 1], [], []>} : vector<8x16xf32>, vector<16x64xf32>, vector<8x64xf32> -> vector<8x64xf32>
    %1724 = arith.addf %1720, %1723 : vector<8x64xf32>
    %1725 = vector.extract_strided_slice %1717 {offsets = [0, 0], sizes = [8, 16], strides = [1, 1]} : vector<8x64xf32> to vector<8x16xf32>
    %1726 = arith.negf %1725 : vector<8x16xf32>
    %1727 = math.exp %1726 : vector<8x16xf32>
    %cst_511 = arith.constant 1.000000e+00 : f32
    %1728 = vector.broadcast %cst_511 : f32 to vector<8x16xf32>
    %1729 = arith.addf %1728, %1727 : vector<8x16xf32>
    %1730 = arith.divf %1728, %1729 : vector<8x16xf32>
    %1731 = vector.extract_strided_slice %1717 {offsets = [0, 16], sizes = [8, 16], strides = [1, 1]} : vector<8x64xf32> to vector<8x16xf32>
    %1732 = arith.negf %1731 : vector<8x16xf32>
    %1733 = math.exp %1732 : vector<8x16xf32>
    %cst_512 = arith.constant 1.000000e+00 : f32
    %1734 = vector.broadcast %cst_512 : f32 to vector<8x16xf32>
    %1735 = arith.addf %1734, %1733 : vector<8x16xf32>
    %1736 = arith.divf %1734, %1735 : vector<8x16xf32>
    %1737 = vector.extract_strided_slice %1717 {offsets = [0, 32], sizes = [8, 16], strides = [1, 1]} : vector<8x64xf32> to vector<8x16xf32>
    %1738 = math.tanh %1737 : vector<8x16xf32>
    %1739 = vector.extract_strided_slice %1717 {offsets = [0, 48], sizes = [8, 16], strides = [1, 1]} : vector<8x64xf32> to vector<8x16xf32>
    %1740 = arith.negf %1739 : vector<8x16xf32>
    %1741 = math.exp %1740 : vector<8x16xf32>
    %cst_513 = arith.constant 1.000000e+00 : f32
    %1742 = vector.broadcast %cst_513 : f32 to vector<8x16xf32>
    %1743 = arith.addf %1742, %1741 : vector<8x16xf32>
    %1744 = arith.divf %1742, %1743 : vector<8x16xf32>
    %1745 = vector.extract_strided_slice %1724 {offsets = [0, 0], sizes = [8, 16], strides = [1, 1]} : vector<8x64xf32> to vector<8x16xf32>
    %1746 = arith.negf %1745 : vector<8x16xf32>
    %1747 = math.exp %1746 : vector<8x16xf32>
    %cst_514 = arith.constant 1.000000e+00 : f32
    %1748 = vector.broadcast %cst_514 : f32 to vector<8x16xf32>
    %1749 = arith.addf %1748, %1747 : vector<8x16xf32>
    %1750 = arith.divf %1748, %1749 : vector<8x16xf32>
    %1751 = vector.extract_strided_slice %1724 {offsets = [0, 16], sizes = [8, 16], strides = [1, 1]} : vector<8x64xf32> to vector<8x16xf32>
    %1752 = arith.negf %1751 : vector<8x16xf32>
    %1753 = math.exp %1752 : vector<8x16xf32>
    %cst_515 = arith.constant 1.000000e+00 : f32
    %1754 = vector.broadcast %cst_515 : f32 to vector<8x16xf32>
    %1755 = arith.addf %1754, %1753 : vector<8x16xf32>
    %1756 = arith.divf %1754, %1755 : vector<8x16xf32>
    %1757 = vector.extract_strided_slice %1724 {offsets = [0, 32], sizes = [8, 16], strides = [1, 1]} : vector<8x64xf32> to vector<8x16xf32>
    %1758 = math.tanh %1757 : vector<8x16xf32>
    %1759 = vector.extract_strided_slice %1724 {offsets = [0, 48], sizes = [8, 16], strides = [1, 1]} : vector<8x64xf32> to vector<8x16xf32>
    %1760 = arith.negf %1759 : vector<8x16xf32>
    %1761 = math.exp %1760 : vector<8x16xf32>
    %cst_516 = arith.constant 1.000000e+00 : f32
    %1762 = vector.broadcast %cst_516 : f32 to vector<8x16xf32>
    %1763 = arith.addf %1762, %1761 : vector<8x16xf32>
    %1764 = arith.divf %1762, %1763 : vector<8x16xf32>
    %1765 = arith.mulf %1736, %1703 : vector<8x16xf32>
    %1766 = arith.mulf %1730, %1738 : vector<8x16xf32>
    %1767 = arith.addf %1765, %1766 : vector<8x16xf32>
    %1768 = math.tanh %1767 : vector<8x16xf32>
    %1769 = arith.mulf %1744, %1768 : vector<8x16xf32>
    %1770 = arith.mulf %1756, %1709 : vector<8x16xf32>
    %1771 = arith.mulf %1750, %1758 : vector<8x16xf32>
    %1772 = arith.addf %1770, %1771 : vector<8x16xf32>
    %1773 = math.tanh %1772 : vector<8x16xf32>
    %1774 = arith.mulf %1764, %1773 : vector<8x16xf32>
    %1775 = vector.broadcast %c1_i32_497 : i32 to vector<8x1xi32>
    %1776 = arith.cmpi slt, %1775, %0 : vector<8x1xi32>
    %1777 = vector.broadcast %1710 : i32 to vector<8x1xi32>
    %1778 = arith.cmpi slt, %1777, %0 : vector<8x1xi32>
    %cst_517 = arith.constant 0.000000e+00 : f32
    %1779 = vector.broadcast %cst_517 : f32 to vector<8x16xf32>
    %1780 = vector.shape_cast %1776 : vector<8x1xi1> to vector<8x1xi1>
    %1781 = vector.broadcast %1780 : vector<8x1xi1> to vector<8x16xi1>
    %1782 = arith.select %1781, %1769, %1779 : vector<8x16xi1>, vector<8x16xf32>
    %1783 = arith.index_cast %c1_i32_497 : i32 to index
    %c0_518 = arith.constant 0 : index
    %c0_519 = arith.constant 0 : index
    %1784 = vector.load %arg6[%1783, %c0_518, %c0_519] : memref<8x8x32xf32, #tpu.memory_space<vmem>>, vector<1x8x16xf32>
    %1785 = vector.shape_cast %1784 : vector<1x8x16xf32> to vector<8x16xf32>
    %1786 = vector.shape_cast %1782 : vector<8x16xf32> to vector<1x8x16xf32>
    tpu.vector_store %arg6[%1783, %c0_518, %c0_519], %1786 {strides = array<i32>} : memref<8x8x32xf32, #tpu.memory_space<vmem>>, vector<1x8x16xf32>,
    %cst_520 = arith.constant 0.000000e+00 : f32
    %1787 = vector.broadcast %cst_520 : f32 to vector<8x16xf32>
    %1788 = vector.shape_cast %1778 : vector<8x1xi1> to vector<8x1xi1>
    %1789 = vector.broadcast %1788 : vector<8x1xi1> to vector<8x16xi1>
    %1790 = arith.select %1789, %1774, %1787 : vector<8x16xi1>, vector<8x16xf32>
    %1791 = arith.index_cast %1710 : i32 to index
    %c0_521 = arith.constant 0 : index
    %c16_522 = arith.constant 16 : index
    %1792 = vector.load %arg6[%1791, %c0_521, %c16_522] : memref<8x8x32xf32, #tpu.memory_space<vmem>>, vector<1x8x16xf32>
    %1793 = vector.shape_cast %1792 : vector<1x8x16xf32> to vector<8x16xf32>
    %1794 = vector.shape_cast %1790 : vector<8x16xf32> to vector<1x8x16xf32>
    tpu.vector_store %arg6[%1791, %c0_521, %c16_522], %1794 {strides = array<i32>} : memref<8x8x32xf32, #tpu.memory_space<vmem>>, vector<1x8x16xf32>,
    %1795 = vector.shape_cast %1776 : vector<8x1xi1> to vector<8x1xi1>
    %1796 = vector.broadcast %1795 : vector<8x1xi1> to vector<8x16xi1>
    %1797 = arith.select %1796, %1769, %1700 : vector<8x16xi1>, vector<8x16xf32>
    %1798 = vector.shape_cast %1776 : vector<8x1xi1> to vector<8x1xi1>
    %1799 = vector.broadcast %1798 : vector<8x1xi1> to vector<8x16xi1>
    %1800 = arith.select %1799, %1767, %1703 : vector<8x16xi1>, vector<8x16xf32>
    %1801 = vector.shape_cast %1778 : vector<8x1xi1> to vector<8x1xi1>
    %1802 = vector.broadcast %1801 : vector<8x1xi1> to vector<8x16xi1>
    %1803 = arith.select %1802, %1774, %1706 : vector<8x16xi1>, vector<8x16xf32>
    %1804 = vector.shape_cast %1778 : vector<8x1xi1> to vector<8x1xi1>
    %1805 = vector.broadcast %1804 : vector<8x1xi1> to vector<8x16xi1>
    %1806 = arith.select %1805, %1772, %1709 : vector<8x16xi1>, vector<8x16xf32>
    %c2_i32_523 = arith.constant 2 : i32
    %c7_i32_524 = arith.constant 7 : i32
    %1807 = arith.subi %c7_i32_524, %c2_i32_523 : i32
    %1808 = arith.index_cast %c2_i32_523 : i32 to index
    %c0_525 = arith.constant 0 : index
    %c0_526 = arith.constant 0 : index
    %1809 = vector.load %arg10[%1808, %c0_525, %c0_526] : memref<8x8x128xf32, #tpu.memory_space<vmem>>, vector<1x8x64xf32>
    %1810 = vector.shape_cast %1809 : vector<1x8x64xf32> to vector<8x64xf32>
    %c2_527 = arith.constant 2 : index
    %c0_528 = arith.constant 0 : index
    %c0_529 = arith.constant 0 : index
    %1811 = vector.load %arg4[%c2_527, %c0_528, %c0_529] : memref<3x16x64xf32, #tpu.memory_space<vmem>>, vector<1x16x64xf32>
    %1812 = vector.shape_cast %1811 : vector<1x16x64xf32> to vector<16x64xf32>
    %cst_530 = arith.constant dense<0.000000e+00> : vector<8x64xf32>
    %1813 = tpu.matmul %1797, %1812, %cst_530 {dimension_numbers = #tpu.dot_dimension_numbers<[1], [0], [0], [1], [0, 0, 1, 1], [], []>} : vector<8x16xf32>, vector<16x64xf32>, vector<8x64xf32> -> vector<8x64xf32>
    %1814 = arith.addf %1810, %1813 : vector<8x64xf32>
    %1815 = arith.index_cast %1807 : i32 to index
    %c0_531 = arith.constant 0 : index
    %c64_532 = arith.constant 64 : index
    %1816 = vector.load %arg10[%1815, %c0_531, %c64_532] : memref<8x8x128xf32, #tpu.memory_space<vmem>>, vector<1x8x64xf32>
    %1817 = vector.shape_cast %1816 : vector<1x8x64xf32> to vector<8x64xf32>
    %c2_533 = arith.constant 2 : index
    %c0_534 = arith.constant 0 : index
    %c0_535 = arith.constant 0 : index
    %1818 = vector.load %arg5[%c2_533, %c0_534, %c0_535] : memref<3x16x64xf32, #tpu.memory_space<vmem>>, vector<1x16x64xf32>
    %1819 = vector.shape_cast %1818 : vector<1x16x64xf32> to vector<16x64xf32>
    %cst_536 = arith.constant dense<0.000000e+00> : vector<8x64xf32>
    %1820 = tpu.matmul %1803, %1819, %cst_536 {dimension_numbers = #tpu.dot_dimension_numbers<[1], [0], [0], [1], [0, 0, 1, 1], [], []>} : vector<8x16xf32>, vector<16x64xf32>, vector<8x64xf32> -> vector<8x64xf32>
    %1821 = arith.addf %1817, %1820 : vector<8x64xf32>
    %1822 = vector.extract_strided_slice %1814 {offsets = [0, 0], sizes = [8, 16], strides = [1, 1]} : vector<8x64xf32> to vector<8x16xf32>
    %1823 = arith.negf %1822 : vector<8x16xf32>
    %1824 = math.exp %1823 : vector<8x16xf32>
    %cst_537 = arith.constant 1.000000e+00 : f32
    %1825 = vector.broadcast %cst_537 : f32 to vector<8x16xf32>
    %1826 = arith.addf %1825, %1824 : vector<8x16xf32>
    %1827 = arith.divf %1825, %1826 : vector<8x16xf32>
    %1828 = vector.extract_strided_slice %1814 {offsets = [0, 16], sizes = [8, 16], strides = [1, 1]} : vector<8x64xf32> to vector<8x16xf32>
    %1829 = arith.negf %1828 : vector<8x16xf32>
    %1830 = math.exp %1829 : vector<8x16xf32>
    %cst_538 = arith.constant 1.000000e+00 : f32
    %1831 = vector.broadcast %cst_538 : f32 to vector<8x16xf32>
    %1832 = arith.addf %1831, %1830 : vector<8x16xf32>
    %1833 = arith.divf %1831, %1832 : vector<8x16xf32>
    %1834 = vector.extract_strided_slice %1814 {offsets = [0, 32], sizes = [8, 16], strides = [1, 1]} : vector<8x64xf32> to vector<8x16xf32>
    %1835 = math.tanh %1834 : vector<8x16xf32>
    %1836 = vector.extract_strided_slice %1814 {offsets = [0, 48], sizes = [8, 16], strides = [1, 1]} : vector<8x64xf32> to vector<8x16xf32>
    %1837 = arith.negf %1836 : vector<8x16xf32>
    %1838 = math.exp %1837 : vector<8x16xf32>
    %cst_539 = arith.constant 1.000000e+00 : f32
    %1839 = vector.broadcast %cst_539 : f32 to vector<8x16xf32>
    %1840 = arith.addf %1839, %1838 : vector<8x16xf32>
    %1841 = arith.divf %1839, %1840 : vector<8x16xf32>
    %1842 = vector.extract_strided_slice %1821 {offsets = [0, 0], sizes = [8, 16], strides = [1, 1]} : vector<8x64xf32> to vector<8x16xf32>
    %1843 = arith.negf %1842 : vector<8x16xf32>
    %1844 = math.exp %1843 : vector<8x16xf32>
    %cst_540 = arith.constant 1.000000e+00 : f32
    %1845 = vector.broadcast %cst_540 : f32 to vector<8x16xf32>
    %1846 = arith.addf %1845, %1844 : vector<8x16xf32>
    %1847 = arith.divf %1845, %1846 : vector<8x16xf32>
    %1848 = vector.extract_strided_slice %1821 {offsets = [0, 16], sizes = [8, 16], strides = [1, 1]} : vector<8x64xf32> to vector<8x16xf32>
    %1849 = arith.negf %1848 : vector<8x16xf32>
    %1850 = math.exp %1849 : vector<8x16xf32>
    %cst_541 = arith.constant 1.000000e+00 : f32
    %1851 = vector.broadcast %cst_541 : f32 to vector<8x16xf32>
    %1852 = arith.addf %1851, %1850 : vector<8x16xf32>
    %1853 = arith.divf %1851, %1852 : vector<8x16xf32>
    %1854 = vector.extract_strided_slice %1821 {offsets = [0, 32], sizes = [8, 16], strides = [1, 1]} : vector<8x64xf32> to vector<8x16xf32>
    %1855 = math.tanh %1854 : vector<8x16xf32>
    %1856 = vector.extract_strided_slice %1821 {offsets = [0, 48], sizes = [8, 16], strides = [1, 1]} : vector<8x64xf32> to vector<8x16xf32>
    %1857 = arith.negf %1856 : vector<8x16xf32>
    %1858 = math.exp %1857 : vector<8x16xf32>
    %cst_542 = arith.constant 1.000000e+00 : f32
    %1859 = vector.broadcast %cst_542 : f32 to vector<8x16xf32>
    %1860 = arith.addf %1859, %1858 : vector<8x16xf32>
    %1861 = arith.divf %1859, %1860 : vector<8x16xf32>
    %1862 = arith.mulf %1833, %1800 : vector<8x16xf32>
    %1863 = arith.mulf %1827, %1835 : vector<8x16xf32>
    %1864 = arith.addf %1862, %1863 : vector<8x16xf32>
    %1865 = math.tanh %1864 : vector<8x16xf32>
    %1866 = arith.mulf %1841, %1865 : vector<8x16xf32>
    %1867 = arith.mulf %1853, %1806 : vector<8x16xf32>
    %1868 = arith.mulf %1847, %1855 : vector<8x16xf32>
    %1869 = arith.addf %1867, %1868 : vector<8x16xf32>
    %1870 = math.tanh %1869 : vector<8x16xf32>
    %1871 = arith.mulf %1861, %1870 : vector<8x16xf32>
    %1872 = vector.broadcast %c2_i32_523 : i32 to vector<8x1xi32>
    %1873 = arith.cmpi slt, %1872, %0 : vector<8x1xi32>
    %1874 = vector.broadcast %1807 : i32 to vector<8x1xi32>
    %1875 = arith.cmpi slt, %1874, %0 : vector<8x1xi32>
    %cst_543 = arith.constant 0.000000e+00 : f32
    %1876 = vector.broadcast %cst_543 : f32 to vector<8x16xf32>
    %1877 = vector.shape_cast %1873 : vector<8x1xi1> to vector<8x1xi1>
    %1878 = vector.broadcast %1877 : vector<8x1xi1> to vector<8x16xi1>
    %1879 = arith.select %1878, %1866, %1876 : vector<8x16xi1>, vector<8x16xf32>
    %1880 = arith.index_cast %c2_i32_523 : i32 to index
    %c0_544 = arith.constant 0 : index
    %c0_545 = arith.constant 0 : index
    %1881 = vector.load %arg6[%1880, %c0_544, %c0_545] : memref<8x8x32xf32, #tpu.memory_space<vmem>>, vector<1x8x16xf32>
    %1882 = vector.shape_cast %1881 : vector<1x8x16xf32> to vector<8x16xf32>
    %1883 = vector.shape_cast %1879 : vector<8x16xf32> to vector<1x8x16xf32>
    tpu.vector_store %arg6[%1880, %c0_544, %c0_545], %1883 {strides = array<i32>} : memref<8x8x32xf32, #tpu.memory_space<vmem>>, vector<1x8x16xf32>,
    %cst_546 = arith.constant 0.000000e+00 : f32
    %1884 = vector.broadcast %cst_546 : f32 to vector<8x16xf32>
    %1885 = vector.shape_cast %1875 : vector<8x1xi1> to vector<8x1xi1>
    %1886 = vector.broadcast %1885 : vector<8x1xi1> to vector<8x16xi1>
    %1887 = arith.select %1886, %1871, %1884 : vector<8x16xi1>, vector<8x16xf32>
    %1888 = arith.index_cast %1807 : i32 to index
    %c0_547 = arith.constant 0 : index
    %c16_548 = arith.constant 16 : index
    %1889 = vector.load %arg6[%1888, %c0_547, %c16_548] : memref<8x8x32xf32, #tpu.memory_space<vmem>>, vector<1x8x16xf32>
    %1890 = vector.shape_cast %1889 : vector<1x8x16xf32> to vector<8x16xf32>
    %1891 = vector.shape_cast %1887 : vector<8x16xf32> to vector<1x8x16xf32>
    tpu.vector_store %arg6[%1888, %c0_547, %c16_548], %1891 {strides = array<i32>} : memref<8x8x32xf32, #tpu.memory_space<vmem>>, vector<1x8x16xf32>,
    %1892 = vector.shape_cast %1873 : vector<8x1xi1> to vector<8x1xi1>
    %1893 = vector.broadcast %1892 : vector<8x1xi1> to vector<8x16xi1>
    %1894 = arith.select %1893, %1866, %1797 : vector<8x16xi1>, vector<8x16xf32>
    %1895 = vector.shape_cast %1873 : vector<8x1xi1> to vector<8x1xi1>
    %1896 = vector.broadcast %1895 : vector<8x1xi1> to vector<8x16xi1>
    %1897 = arith.select %1896, %1864, %1800 : vector<8x16xi1>, vector<8x16xf32>
    %1898 = vector.shape_cast %1875 : vector<8x1xi1> to vector<8x1xi1>
    %1899 = vector.broadcast %1898 : vector<8x1xi1> to vector<8x16xi1>
    %1900 = arith.select %1899, %1871, %1803 : vector<8x16xi1>, vector<8x16xf32>
    %1901 = vector.shape_cast %1875 : vector<8x1xi1> to vector<8x1xi1>
    %1902 = vector.broadcast %1901 : vector<8x1xi1> to vector<8x16xi1>
    %1903 = arith.select %1902, %1869, %1806 : vector<8x16xi1>, vector<8x16xf32>
    %c3_i32_549 = arith.constant 3 : i32
    %c7_i32_550 = arith.constant 7 : i32
    %1904 = arith.subi %c7_i32_550, %c3_i32_549 : i32
    %1905 = arith.index_cast %c3_i32_549 : i32 to index
    %c0_551 = arith.constant 0 : index
    %c0_552 = arith.constant 0 : index
    %1906 = vector.load %arg10[%1905, %c0_551, %c0_552] : memref<8x8x128xf32, #tpu.memory_space<vmem>>, vector<1x8x64xf32>
    %1907 = vector.shape_cast %1906 : vector<1x8x64xf32> to vector<8x64xf32>
    %c2_553 = arith.constant 2 : index
    %c0_554 = arith.constant 0 : index
    %c0_555 = arith.constant 0 : index
    %1908 = vector.load %arg4[%c2_553, %c0_554, %c0_555] : memref<3x16x64xf32, #tpu.memory_space<vmem>>, vector<1x16x64xf32>
    %1909 = vector.shape_cast %1908 : vector<1x16x64xf32> to vector<16x64xf32>
    %cst_556 = arith.constant dense<0.000000e+00> : vector<8x64xf32>
    %1910 = tpu.matmul %1894, %1909, %cst_556 {dimension_numbers = #tpu.dot_dimension_numbers<[1], [0], [0], [1], [0, 0, 1, 1], [], []>} : vector<8x16xf32>, vector<16x64xf32>, vector<8x64xf32> -> vector<8x64xf32>
    %1911 = arith.addf %1907, %1910 : vector<8x64xf32>
    %1912 = arith.index_cast %1904 : i32 to index
    %c0_557 = arith.constant 0 : index
    %c64_558 = arith.constant 64 : index
    %1913 = vector.load %arg10[%1912, %c0_557, %c64_558] : memref<8x8x128xf32, #tpu.memory_space<vmem>>, vector<1x8x64xf32>
    %1914 = vector.shape_cast %1913 : vector<1x8x64xf32> to vector<8x64xf32>
    %c2_559 = arith.constant 2 : index
    %c0_560 = arith.constant 0 : index
    %c0_561 = arith.constant 0 : index
    %1915 = vector.load %arg5[%c2_559, %c0_560, %c0_561] : memref<3x16x64xf32, #tpu.memory_space<vmem>>, vector<1x16x64xf32>
    %1916 = vector.shape_cast %1915 : vector<1x16x64xf32> to vector<16x64xf32>
    %cst_562 = arith.constant dense<0.000000e+00> : vector<8x64xf32>
    %1917 = tpu.matmul %1900, %1916, %cst_562 {dimension_numbers = #tpu.dot_dimension_numbers<[1], [0], [0], [1], [0, 0, 1, 1], [], []>} : vector<8x16xf32>, vector<16x64xf32>, vector<8x64xf32> -> vector<8x64xf32>
    %1918 = arith.addf %1914, %1917 : vector<8x64xf32>
    %1919 = vector.extract_strided_slice %1911 {offsets = [0, 0], sizes = [8, 16], strides = [1, 1]} : vector<8x64xf32> to vector<8x16xf32>
    %1920 = arith.negf %1919 : vector<8x16xf32>
    %1921 = math.exp %1920 : vector<8x16xf32>
    %cst_563 = arith.constant 1.000000e+00 : f32
    %1922 = vector.broadcast %cst_563 : f32 to vector<8x16xf32>
    %1923 = arith.addf %1922, %1921 : vector<8x16xf32>
    %1924 = arith.divf %1922, %1923 : vector<8x16xf32>
    %1925 = vector.extract_strided_slice %1911 {offsets = [0, 16], sizes = [8, 16], strides = [1, 1]} : vector<8x64xf32> to vector<8x16xf32>
    %1926 = arith.negf %1925 : vector<8x16xf32>
    %1927 = math.exp %1926 : vector<8x16xf32>
    %cst_564 = arith.constant 1.000000e+00 : f32
    %1928 = vector.broadcast %cst_564 : f32 to vector<8x16xf32>
    %1929 = arith.addf %1928, %1927 : vector<8x16xf32>
    %1930 = arith.divf %1928, %1929 : vector<8x16xf32>
    %1931 = vector.extract_strided_slice %1911 {offsets = [0, 32], sizes = [8, 16], strides = [1, 1]} : vector<8x64xf32> to vector<8x16xf32>
    %1932 = math.tanh %1931 : vector<8x16xf32>
    %1933 = vector.extract_strided_slice %1911 {offsets = [0, 48], sizes = [8, 16], strides = [1, 1]} : vector<8x64xf32> to vector<8x16xf32>
    %1934 = arith.negf %1933 : vector<8x16xf32>
    %1935 = math.exp %1934 : vector<8x16xf32>
    %cst_565 = arith.constant 1.000000e+00 : f32
    %1936 = vector.broadcast %cst_565 : f32 to vector<8x16xf32>
    %1937 = arith.addf %1936, %1935 : vector<8x16xf32>
    %1938 = arith.divf %1936, %1937 : vector<8x16xf32>
    %1939 = vector.extract_strided_slice %1918 {offsets = [0, 0], sizes = [8, 16], strides = [1, 1]} : vector<8x64xf32> to vector<8x16xf32>
    %1940 = arith.negf %1939 : vector<8x16xf32>
    %1941 = math.exp %1940 : vector<8x16xf32>
    %cst_566 = arith.constant 1.000000e+00 : f32
    %1942 = vector.broadcast %cst_566 : f32 to vector<8x16xf32>
    %1943 = arith.addf %1942, %1941 : vector<8x16xf32>
    %1944 = arith.divf %1942, %1943 : vector<8x16xf32>
    %1945 = vector.extract_strided_slice %1918 {offsets = [0, 16], sizes = [8, 16], strides = [1, 1]} : vector<8x64xf32> to vector<8x16xf32>
    %1946 = arith.negf %1945 : vector<8x16xf32>
    %1947 = math.exp %1946 : vector<8x16xf32>
    %cst_567 = arith.constant 1.000000e+00 : f32
    %1948 = vector.broadcast %cst_567 : f32 to vector<8x16xf32>
    %1949 = arith.addf %1948, %1947 : vector<8x16xf32>
    %1950 = arith.divf %1948, %1949 : vector<8x16xf32>
    %1951 = vector.extract_strided_slice %1918 {offsets = [0, 32], sizes = [8, 16], strides = [1, 1]} : vector<8x64xf32> to vector<8x16xf32>
    %1952 = math.tanh %1951 : vector<8x16xf32>
    %1953 = vector.extract_strided_slice %1918 {offsets = [0, 48], sizes = [8, 16], strides = [1, 1]} : vector<8x64xf32> to vector<8x16xf32>
    %1954 = arith.negf %1953 : vector<8x16xf32>
    %1955 = math.exp %1954 : vector<8x16xf32>
    %cst_568 = arith.constant 1.000000e+00 : f32
    %1956 = vector.broadcast %cst_568 : f32 to vector<8x16xf32>
    %1957 = arith.addf %1956, %1955 : vector<8x16xf32>
    %1958 = arith.divf %1956, %1957 : vector<8x16xf32>
    %1959 = arith.mulf %1930, %1897 : vector<8x16xf32>
    %1960 = arith.mulf %1924, %1932 : vector<8x16xf32>
    %1961 = arith.addf %1959, %1960 : vector<8x16xf32>
    %1962 = math.tanh %1961 : vector<8x16xf32>
    %1963 = arith.mulf %1938, %1962 : vector<8x16xf32>
    %1964 = arith.mulf %1950, %1903 : vector<8x16xf32>
    %1965 = arith.mulf %1944, %1952 : vector<8x16xf32>
    %1966 = arith.addf %1964, %1965 : vector<8x16xf32>
    %1967 = math.tanh %1966 : vector<8x16xf32>
    %1968 = arith.mulf %1958, %1967 : vector<8x16xf32>
    %1969 = vector.broadcast %c3_i32_549 : i32 to vector<8x1xi32>
    %1970 = arith.cmpi slt, %1969, %0 : vector<8x1xi32>
    %1971 = vector.broadcast %1904 : i32 to vector<8x1xi32>
    %1972 = arith.cmpi slt, %1971, %0 : vector<8x1xi32>
    %cst_569 = arith.constant 0.000000e+00 : f32
    %1973 = vector.broadcast %cst_569 : f32 to vector<8x16xf32>
    %1974 = vector.shape_cast %1970 : vector<8x1xi1> to vector<8x1xi1>
    %1975 = vector.broadcast %1974 : vector<8x1xi1> to vector<8x16xi1>
    %1976 = arith.select %1975, %1963, %1973 : vector<8x16xi1>, vector<8x16xf32>
    %1977 = arith.index_cast %c3_i32_549 : i32 to index
    %c0_570 = arith.constant 0 : index
    %c0_571 = arith.constant 0 : index
    %1978 = vector.load %arg6[%1977, %c0_570, %c0_571] : memref<8x8x32xf32, #tpu.memory_space<vmem>>, vector<1x8x16xf32>
    %1979 = vector.shape_cast %1978 : vector<1x8x16xf32> to vector<8x16xf32>
    %1980 = vector.shape_cast %1976 : vector<8x16xf32> to vector<1x8x16xf32>
    tpu.vector_store %arg6[%1977, %c0_570, %c0_571], %1980 {strides = array<i32>} : memref<8x8x32xf32, #tpu.memory_space<vmem>>, vector<1x8x16xf32>,
    %cst_572 = arith.constant 0.000000e+00 : f32
    %1981 = vector.broadcast %cst_572 : f32 to vector<8x16xf32>
    %1982 = vector.shape_cast %1972 : vector<8x1xi1> to vector<8x1xi1>
    %1983 = vector.broadcast %1982 : vector<8x1xi1> to vector<8x16xi1>
    %1984 = arith.select %1983, %1968, %1981 : vector<8x16xi1>, vector<8x16xf32>
    %1985 = arith.index_cast %1904 : i32 to index
    %c0_573 = arith.constant 0 : index
    %c16_574 = arith.constant 16 : index
    %1986 = vector.load %arg6[%1985, %c0_573, %c16_574] : memref<8x8x32xf32, #tpu.memory_space<vmem>>, vector<1x8x16xf32>
    %1987 = vector.shape_cast %1986 : vector<1x8x16xf32> to vector<8x16xf32>
    %1988 = vector.shape_cast %1984 : vector<8x16xf32> to vector<1x8x16xf32>
    tpu.vector_store %arg6[%1985, %c0_573, %c16_574], %1988 {strides = array<i32>} : memref<8x8x32xf32, #tpu.memory_space<vmem>>, vector<1x8x16xf32>,
    %1989 = vector.shape_cast %1970 : vector<8x1xi1> to vector<8x1xi1>
    %1990 = vector.broadcast %1989 : vector<8x1xi1> to vector<8x16xi1>
    %1991 = arith.select %1990, %1963, %1894 : vector<8x16xi1>, vector<8x16xf32>
    %1992 = vector.shape_cast %1970 : vector<8x1xi1> to vector<8x1xi1>
    %1993 = vector.broadcast %1992 : vector<8x1xi1> to vector<8x16xi1>
    %1994 = arith.select %1993, %1961, %1897 : vector<8x16xi1>, vector<8x16xf32>
    %1995 = vector.shape_cast %1972 : vector<8x1xi1> to vector<8x1xi1>
    %1996 = vector.broadcast %1995 : vector<8x1xi1> to vector<8x16xi1>
    %1997 = arith.select %1996, %1968, %1900 : vector<8x16xi1>, vector<8x16xf32>
    %1998 = vector.shape_cast %1972 : vector<8x1xi1> to vector<8x1xi1>
    %1999 = vector.broadcast %1998 : vector<8x1xi1> to vector<8x16xi1>
    %2000 = arith.select %1999, %1966, %1903 : vector<8x16xi1>, vector<8x16xf32>
    %c4_i32_575 = arith.constant 4 : i32
    %c7_i32_576 = arith.constant 7 : i32
    %2001 = arith.subi %c7_i32_576, %c4_i32_575 : i32
    %2002 = arith.index_cast %c4_i32_575 : i32 to index
    %c0_577 = arith.constant 0 : index
    %c0_578 = arith.constant 0 : index
    %2003 = vector.load %arg10[%2002, %c0_577, %c0_578] : memref<8x8x128xf32, #tpu.memory_space<vmem>>, vector<1x8x64xf32>
    %2004 = vector.shape_cast %2003 : vector<1x8x64xf32> to vector<8x64xf32>
    %c2_579 = arith.constant 2 : index
    %c0_580 = arith.constant 0 : index
    %c0_581 = arith.constant 0 : index
    %2005 = vector.load %arg4[%c2_579, %c0_580, %c0_581] : memref<3x16x64xf32, #tpu.memory_space<vmem>>, vector<1x16x64xf32>
    %2006 = vector.shape_cast %2005 : vector<1x16x64xf32> to vector<16x64xf32>
    %cst_582 = arith.constant dense<0.000000e+00> : vector<8x64xf32>
    %2007 = tpu.matmul %1991, %2006, %cst_582 {dimension_numbers = #tpu.dot_dimension_numbers<[1], [0], [0], [1], [0, 0, 1, 1], [], []>} : vector<8x16xf32>, vector<16x64xf32>, vector<8x64xf32> -> vector<8x64xf32>
    %2008 = arith.addf %2004, %2007 : vector<8x64xf32>
    %2009 = arith.index_cast %2001 : i32 to index
    %c0_583 = arith.constant 0 : index
    %c64_584 = arith.constant 64 : index
    %2010 = vector.load %arg10[%2009, %c0_583, %c64_584] : memref<8x8x128xf32, #tpu.memory_space<vmem>>, vector<1x8x64xf32>
    %2011 = vector.shape_cast %2010 : vector<1x8x64xf32> to vector<8x64xf32>
    %c2_585 = arith.constant 2 : index
    %c0_586 = arith.constant 0 : index
    %c0_587 = arith.constant 0 : index
    %2012 = vector.load %arg5[%c2_585, %c0_586, %c0_587] : memref<3x16x64xf32, #tpu.memory_space<vmem>>, vector<1x16x64xf32>
    %2013 = vector.shape_cast %2012 : vector<1x16x64xf32> to vector<16x64xf32>
    %cst_588 = arith.constant dense<0.000000e+00> : vector<8x64xf32>
    %2014 = tpu.matmul %1997, %2013, %cst_588 {dimension_numbers = #tpu.dot_dimension_numbers<[1], [0], [0], [1], [0, 0, 1, 1], [], []>} : vector<8x16xf32>, vector<16x64xf32>, vector<8x64xf32> -> vector<8x64xf32>
    %2015 = arith.addf %2011, %2014 : vector<8x64xf32>
    %2016 = vector.extract_strided_slice %2008 {offsets = [0, 0], sizes = [8, 16], strides = [1, 1]} : vector<8x64xf32> to vector<8x16xf32>
    %2017 = arith.negf %2016 : vector<8x16xf32>
    %2018 = math.exp %2017 : vector<8x16xf32>
    %cst_589 = arith.constant 1.000000e+00 : f32
    %2019 = vector.broadcast %cst_589 : f32 to vector<8x16xf32>
    %2020 = arith.addf %2019, %2018 : vector<8x16xf32>
    %2021 = arith.divf %2019, %2020 : vector<8x16xf32>
    %2022 = vector.extract_strided_slice %2008 {offsets = [0, 16], sizes = [8, 16], strides = [1, 1]} : vector<8x64xf32> to vector<8x16xf32>
    %2023 = arith.negf %2022 : vector<8x16xf32>
    %2024 = math.exp %2023 : vector<8x16xf32>
    %cst_590 = arith.constant 1.000000e+00 : f32
    %2025 = vector.broadcast %cst_590 : f32 to vector<8x16xf32>
    %2026 = arith.addf %2025, %2024 : vector<8x16xf32>
    %2027 = arith.divf %2025, %2026 : vector<8x16xf32>
    %2028 = vector.extract_strided_slice %2008 {offsets = [0, 32], sizes = [8, 16], strides = [1, 1]} : vector<8x64xf32> to vector<8x16xf32>
    %2029 = math.tanh %2028 : vector<8x16xf32>
    %2030 = vector.extract_strided_slice %2008 {offsets = [0, 48], sizes = [8, 16], strides = [1, 1]} : vector<8x64xf32> to vector<8x16xf32>
    %2031 = arith.negf %2030 : vector<8x16xf32>
    %2032 = math.exp %2031 : vector<8x16xf32>
    %cst_591 = arith.constant 1.000000e+00 : f32
    %2033 = vector.broadcast %cst_591 : f32 to vector<8x16xf32>
    %2034 = arith.addf %2033, %2032 : vector<8x16xf32>
    %2035 = arith.divf %2033, %2034 : vector<8x16xf32>
    %2036 = vector.extract_strided_slice %2015 {offsets = [0, 0], sizes = [8, 16], strides = [1, 1]} : vector<8x64xf32> to vector<8x16xf32>
    %2037 = arith.negf %2036 : vector<8x16xf32>
    %2038 = math.exp %2037 : vector<8x16xf32>
    %cst_592 = arith.constant 1.000000e+00 : f32
    %2039 = vector.broadcast %cst_592 : f32 to vector<8x16xf32>
    %2040 = arith.addf %2039, %2038 : vector<8x16xf32>
    %2041 = arith.divf %2039, %2040 : vector<8x16xf32>
    %2042 = vector.extract_strided_slice %2015 {offsets = [0, 16], sizes = [8, 16], strides = [1, 1]} : vector<8x64xf32> to vector<8x16xf32>
    %2043 = arith.negf %2042 : vector<8x16xf32>
    %2044 = math.exp %2043 : vector<8x16xf32>
    %cst_593 = arith.constant 1.000000e+00 : f32
    %2045 = vector.broadcast %cst_593 : f32 to vector<8x16xf32>
    %2046 = arith.addf %2045, %2044 : vector<8x16xf32>
    %2047 = arith.divf %2045, %2046 : vector<8x16xf32>
    %2048 = vector.extract_strided_slice %2015 {offsets = [0, 32], sizes = [8, 16], strides = [1, 1]} : vector<8x64xf32> to vector<8x16xf32>
    %2049 = math.tanh %2048 : vector<8x16xf32>
    %2050 = vector.extract_strided_slice %2015 {offsets = [0, 48], sizes = [8, 16], strides = [1, 1]} : vector<8x64xf32> to vector<8x16xf32>
    %2051 = arith.negf %2050 : vector<8x16xf32>
    %2052 = math.exp %2051 : vector<8x16xf32>
    %cst_594 = arith.constant 1.000000e+00 : f32
    %2053 = vector.broadcast %cst_594 : f32 to vector<8x16xf32>
    %2054 = arith.addf %2053, %2052 : vector<8x16xf32>
    %2055 = arith.divf %2053, %2054 : vector<8x16xf32>
    %2056 = arith.mulf %2027, %1994 : vector<8x16xf32>
    %2057 = arith.mulf %2021, %2029 : vector<8x16xf32>
    %2058 = arith.addf %2056, %2057 : vector<8x16xf32>
    %2059 = math.tanh %2058 : vector<8x16xf32>
    %2060 = arith.mulf %2035, %2059 : vector<8x16xf32>
    %2061 = arith.mulf %2047, %2000 : vector<8x16xf32>
    %2062 = arith.mulf %2041, %2049 : vector<8x16xf32>
    %2063 = arith.addf %2061, %2062 : vector<8x16xf32>
    %2064 = math.tanh %2063 : vector<8x16xf32>
    %2065 = arith.mulf %2055, %2064 : vector<8x16xf32>
    %2066 = vector.broadcast %c4_i32_575 : i32 to vector<8x1xi32>
    %2067 = arith.cmpi slt, %2066, %0 : vector<8x1xi32>
    %2068 = vector.broadcast %2001 : i32 to vector<8x1xi32>
    %2069 = arith.cmpi slt, %2068, %0 : vector<8x1xi32>
    %cst_595 = arith.constant 0.000000e+00 : f32
    %2070 = vector.broadcast %cst_595 : f32 to vector<8x16xf32>
    %2071 = vector.shape_cast %2067 : vector<8x1xi1> to vector<8x1xi1>
    %2072 = vector.broadcast %2071 : vector<8x1xi1> to vector<8x16xi1>
    %2073 = arith.select %2072, %2060, %2070 : vector<8x16xi1>, vector<8x16xf32>
    %2074 = arith.index_cast %c4_i32_575 : i32 to index
    %c0_596 = arith.constant 0 : index
    %c0_597 = arith.constant 0 : index
    %2075 = vector.load %arg6[%2074, %c0_596, %c0_597] : memref<8x8x32xf32, #tpu.memory_space<vmem>>, vector<1x8x16xf32>
    %2076 = vector.shape_cast %2075 : vector<1x8x16xf32> to vector<8x16xf32>
    %2077 = vector.shape_cast %2073 : vector<8x16xf32> to vector<1x8x16xf32>
    tpu.vector_store %arg6[%2074, %c0_596, %c0_597], %2077 {strides = array<i32>} : memref<8x8x32xf32, #tpu.memory_space<vmem>>, vector<1x8x16xf32>,
    %cst_598 = arith.constant 0.000000e+00 : f32
    %2078 = vector.broadcast %cst_598 : f32 to vector<8x16xf32>
    %2079 = vector.shape_cast %2069 : vector<8x1xi1> to vector<8x1xi1>
    %2080 = vector.broadcast %2079 : vector<8x1xi1> to vector<8x16xi1>
    %2081 = arith.select %2080, %2065, %2078 : vector<8x16xi1>, vector<8x16xf32>
    %2082 = arith.index_cast %2001 : i32 to index
    %c0_599 = arith.constant 0 : index
    %c16_600 = arith.constant 16 : index
    %2083 = vector.load %arg6[%2082, %c0_599, %c16_600] : memref<8x8x32xf32, #tpu.memory_space<vmem>>, vector<1x8x16xf32>
    %2084 = vector.shape_cast %2083 : vector<1x8x16xf32> to vector<8x16xf32>
    %2085 = vector.shape_cast %2081 : vector<8x16xf32> to vector<1x8x16xf32>
    tpu.vector_store %arg6[%2082, %c0_599, %c16_600], %2085 {strides = array<i32>} : memref<8x8x32xf32, #tpu.memory_space<vmem>>, vector<1x8x16xf32>,
    %2086 = vector.shape_cast %2067 : vector<8x1xi1> to vector<8x1xi1>
    %2087 = vector.broadcast %2086 : vector<8x1xi1> to vector<8x16xi1>
    %2088 = arith.select %2087, %2060, %1991 : vector<8x16xi1>, vector<8x16xf32>
    %2089 = vector.shape_cast %2067 : vector<8x1xi1> to vector<8x1xi1>
    %2090 = vector.broadcast %2089 : vector<8x1xi1> to vector<8x16xi1>
    %2091 = arith.select %2090, %2058, %1994 : vector<8x16xi1>, vector<8x16xf32>
    %2092 = vector.shape_cast %2069 : vector<8x1xi1> to vector<8x1xi1>
    %2093 = vector.broadcast %2092 : vector<8x1xi1> to vector<8x16xi1>
    %2094 = arith.select %2093, %2065, %1997 : vector<8x16xi1>, vector<8x16xf32>
    %2095 = vector.shape_cast %2069 : vector<8x1xi1> to vector<8x1xi1>
    %2096 = vector.broadcast %2095 : vector<8x1xi1> to vector<8x16xi1>
    %2097 = arith.select %2096, %2063, %2000 : vector<8x16xi1>, vector<8x16xf32>
    %c5_i32_601 = arith.constant 5 : i32
    %c7_i32_602 = arith.constant 7 : i32
    %2098 = arith.subi %c7_i32_602, %c5_i32_601 : i32
    %2099 = arith.index_cast %c5_i32_601 : i32 to index
    %c0_603 = arith.constant 0 : index
    %c0_604 = arith.constant 0 : index
    %2100 = vector.load %arg10[%2099, %c0_603, %c0_604] : memref<8x8x128xf32, #tpu.memory_space<vmem>>, vector<1x8x64xf32>
    %2101 = vector.shape_cast %2100 : vector<1x8x64xf32> to vector<8x64xf32>
    %c2_605 = arith.constant 2 : index
    %c0_606 = arith.constant 0 : index
    %c0_607 = arith.constant 0 : index
    %2102 = vector.load %arg4[%c2_605, %c0_606, %c0_607] : memref<3x16x64xf32, #tpu.memory_space<vmem>>, vector<1x16x64xf32>
    %2103 = vector.shape_cast %2102 : vector<1x16x64xf32> to vector<16x64xf32>
    %cst_608 = arith.constant dense<0.000000e+00> : vector<8x64xf32>
    %2104 = tpu.matmul %2088, %2103, %cst_608 {dimension_numbers = #tpu.dot_dimension_numbers<[1], [0], [0], [1], [0, 0, 1, 1], [], []>} : vector<8x16xf32>, vector<16x64xf32>, vector<8x64xf32> -> vector<8x64xf32>
    %2105 = arith.addf %2101, %2104 : vector<8x64xf32>
    %2106 = arith.index_cast %2098 : i32 to index
    %c0_609 = arith.constant 0 : index
    %c64_610 = arith.constant 64 : index
    %2107 = vector.load %arg10[%2106, %c0_609, %c64_610] : memref<8x8x128xf32, #tpu.memory_space<vmem>>, vector<1x8x64xf32>
    %2108 = vector.shape_cast %2107 : vector<1x8x64xf32> to vector<8x64xf32>
    %c2_611 = arith.constant 2 : index
    %c0_612 = arith.constant 0 : index
    %c0_613 = arith.constant 0 : index
    %2109 = vector.load %arg5[%c2_611, %c0_612, %c0_613] : memref<3x16x64xf32, #tpu.memory_space<vmem>>, vector<1x16x64xf32>
    %2110 = vector.shape_cast %2109 : vector<1x16x64xf32> to vector<16x64xf32>
    %cst_614 = arith.constant dense<0.000000e+00> : vector<8x64xf32>
    %2111 = tpu.matmul %2094, %2110, %cst_614 {dimension_numbers = #tpu.dot_dimension_numbers<[1], [0], [0], [1], [0, 0, 1, 1], [], []>} : vector<8x16xf32>, vector<16x64xf32>, vector<8x64xf32> -> vector<8x64xf32>
    %2112 = arith.addf %2108, %2111 : vector<8x64xf32>
    %2113 = vector.extract_strided_slice %2105 {offsets = [0, 0], sizes = [8, 16], strides = [1, 1]} : vector<8x64xf32> to vector<8x16xf32>
    %2114 = arith.negf %2113 : vector<8x16xf32>
    %2115 = math.exp %2114 : vector<8x16xf32>
    %cst_615 = arith.constant 1.000000e+00 : f32
    %2116 = vector.broadcast %cst_615 : f32 to vector<8x16xf32>
    %2117 = arith.addf %2116, %2115 : vector<8x16xf32>
    %2118 = arith.divf %2116, %2117 : vector<8x16xf32>
    %2119 = vector.extract_strided_slice %2105 {offsets = [0, 16], sizes = [8, 16], strides = [1, 1]} : vector<8x64xf32> to vector<8x16xf32>
    %2120 = arith.negf %2119 : vector<8x16xf32>
    %2121 = math.exp %2120 : vector<8x16xf32>
    %cst_616 = arith.constant 1.000000e+00 : f32
    %2122 = vector.broadcast %cst_616 : f32 to vector<8x16xf32>
    %2123 = arith.addf %2122, %2121 : vector<8x16xf32>
    %2124 = arith.divf %2122, %2123 : vector<8x16xf32>
    %2125 = vector.extract_strided_slice %2105 {offsets = [0, 32], sizes = [8, 16], strides = [1, 1]} : vector<8x64xf32> to vector<8x16xf32>
    %2126 = math.tanh %2125 : vector<8x16xf32>
    %2127 = vector.extract_strided_slice %2105 {offsets = [0, 48], sizes = [8, 16], strides = [1, 1]} : vector<8x64xf32> to vector<8x16xf32>
    %2128 = arith.negf %2127 : vector<8x16xf32>
    %2129 = math.exp %2128 : vector<8x16xf32>
    %cst_617 = arith.constant 1.000000e+00 : f32
    %2130 = vector.broadcast %cst_617 : f32 to vector<8x16xf32>
    %2131 = arith.addf %2130, %2129 : vector<8x16xf32>
    %2132 = arith.divf %2130, %2131 : vector<8x16xf32>
    %2133 = vector.extract_strided_slice %2112 {offsets = [0, 0], sizes = [8, 16], strides = [1, 1]} : vector<8x64xf32> to vector<8x16xf32>
    %2134 = arith.negf %2133 : vector<8x16xf32>
    %2135 = math.exp %2134 : vector<8x16xf32>
    %cst_618 = arith.constant 1.000000e+00 : f32
    %2136 = vector.broadcast %cst_618 : f32 to vector<8x16xf32>
    %2137 = arith.addf %2136, %2135 : vector<8x16xf32>
    %2138 = arith.divf %2136, %2137 : vector<8x16xf32>
    %2139 = vector.extract_strided_slice %2112 {offsets = [0, 16], sizes = [8, 16], strides = [1, 1]} : vector<8x64xf32> to vector<8x16xf32>
    %2140 = arith.negf %2139 : vector<8x16xf32>
    %2141 = math.exp %2140 : vector<8x16xf32>
    %cst_619 = arith.constant 1.000000e+00 : f32
    %2142 = vector.broadcast %cst_619 : f32 to vector<8x16xf32>
    %2143 = arith.addf %2142, %2141 : vector<8x16xf32>
    %2144 = arith.divf %2142, %2143 : vector<8x16xf32>
    %2145 = vector.extract_strided_slice %2112 {offsets = [0, 32], sizes = [8, 16], strides = [1, 1]} : vector<8x64xf32> to vector<8x16xf32>
    %2146 = math.tanh %2145 : vector<8x16xf32>
    %2147 = vector.extract_strided_slice %2112 {offsets = [0, 48], sizes = [8, 16], strides = [1, 1]} : vector<8x64xf32> to vector<8x16xf32>
    %2148 = arith.negf %2147 : vector<8x16xf32>
    %2149 = math.exp %2148 : vector<8x16xf32>
    %cst_620 = arith.constant 1.000000e+00 : f32
    %2150 = vector.broadcast %cst_620 : f32 to vector<8x16xf32>
    %2151 = arith.addf %2150, %2149 : vector<8x16xf32>
    %2152 = arith.divf %2150, %2151 : vector<8x16xf32>
    %2153 = arith.mulf %2124, %2091 : vector<8x16xf32>
    %2154 = arith.mulf %2118, %2126 : vector<8x16xf32>
    %2155 = arith.addf %2153, %2154 : vector<8x16xf32>
    %2156 = math.tanh %2155 : vector<8x16xf32>
    %2157 = arith.mulf %2132, %2156 : vector<8x16xf32>
    %2158 = arith.mulf %2144, %2097 : vector<8x16xf32>
    %2159 = arith.mulf %2138, %2146 : vector<8x16xf32>
    %2160 = arith.addf %2158, %2159 : vector<8x16xf32>
    %2161 = math.tanh %2160 : vector<8x16xf32>
    %2162 = arith.mulf %2152, %2161 : vector<8x16xf32>
    %2163 = vector.broadcast %c5_i32_601 : i32 to vector<8x1xi32>
    %2164 = arith.cmpi slt, %2163, %0 : vector<8x1xi32>
    %2165 = vector.broadcast %2098 : i32 to vector<8x1xi32>
    %2166 = arith.cmpi slt, %2165, %0 : vector<8x1xi32>
    %cst_621 = arith.constant 0.000000e+00 : f32
    %2167 = vector.broadcast %cst_621 : f32 to vector<8x16xf32>
    %2168 = vector.shape_cast %2164 : vector<8x1xi1> to vector<8x1xi1>
    %2169 = vector.broadcast %2168 : vector<8x1xi1> to vector<8x16xi1>
    %2170 = arith.select %2169, %2157, %2167 : vector<8x16xi1>, vector<8x16xf32>
    %2171 = arith.index_cast %c5_i32_601 : i32 to index
    %c0_622 = arith.constant 0 : index
    %c0_623 = arith.constant 0 : index
    %2172 = vector.load %arg6[%2171, %c0_622, %c0_623] : memref<8x8x32xf32, #tpu.memory_space<vmem>>, vector<1x8x16xf32>
    %2173 = vector.shape_cast %2172 : vector<1x8x16xf32> to vector<8x16xf32>
    %2174 = vector.shape_cast %2170 : vector<8x16xf32> to vector<1x8x16xf32>
    tpu.vector_store %arg6[%2171, %c0_622, %c0_623], %2174 {strides = array<i32>} : memref<8x8x32xf32, #tpu.memory_space<vmem>>, vector<1x8x16xf32>,
    %cst_624 = arith.constant 0.000000e+00 : f32
    %2175 = vector.broadcast %cst_624 : f32 to vector<8x16xf32>
    %2176 = vector.shape_cast %2166 : vector<8x1xi1> to vector<8x1xi1>
    %2177 = vector.broadcast %2176 : vector<8x1xi1> to vector<8x16xi1>
    %2178 = arith.select %2177, %2162, %2175 : vector<8x16xi1>, vector<8x16xf32>
    %2179 = arith.index_cast %2098 : i32 to index
    %c0_625 = arith.constant 0 : index
    %c16_626 = arith.constant 16 : index
    %2180 = vector.load %arg6[%2179, %c0_625, %c16_626] : memref<8x8x32xf32, #tpu.memory_space<vmem>>, vector<1x8x16xf32>
    %2181 = vector.shape_cast %2180 : vector<1x8x16xf32> to vector<8x16xf32>
    %2182 = vector.shape_cast %2178 : vector<8x16xf32> to vector<1x8x16xf32>
    tpu.vector_store %arg6[%2179, %c0_625, %c16_626], %2182 {strides = array<i32>} : memref<8x8x32xf32, #tpu.memory_space<vmem>>, vector<1x8x16xf32>,
    %2183 = vector.shape_cast %2164 : vector<8x1xi1> to vector<8x1xi1>
    %2184 = vector.broadcast %2183 : vector<8x1xi1> to vector<8x16xi1>
    %2185 = arith.select %2184, %2157, %2088 : vector<8x16xi1>, vector<8x16xf32>
    %2186 = vector.shape_cast %2164 : vector<8x1xi1> to vector<8x1xi1>
    %2187 = vector.broadcast %2186 : vector<8x1xi1> to vector<8x16xi1>
    %2188 = arith.select %2187, %2155, %2091 : vector<8x16xi1>, vector<8x16xf32>
    %2189 = vector.shape_cast %2166 : vector<8x1xi1> to vector<8x1xi1>
    %2190 = vector.broadcast %2189 : vector<8x1xi1> to vector<8x16xi1>
    %2191 = arith.select %2190, %2162, %2094 : vector<8x16xi1>, vector<8x16xf32>
    %2192 = vector.shape_cast %2166 : vector<8x1xi1> to vector<8x1xi1>
    %2193 = vector.broadcast %2192 : vector<8x1xi1> to vector<8x16xi1>
    %2194 = arith.select %2193, %2160, %2097 : vector<8x16xi1>, vector<8x16xf32>
    %c6_i32_627 = arith.constant 6 : i32
    %c7_i32_628 = arith.constant 7 : i32
    %2195 = arith.subi %c7_i32_628, %c6_i32_627 : i32
    %2196 = arith.index_cast %c6_i32_627 : i32 to index
    %c0_629 = arith.constant 0 : index
    %c0_630 = arith.constant 0 : index
    %2197 = vector.load %arg10[%2196, %c0_629, %c0_630] : memref<8x8x128xf32, #tpu.memory_space<vmem>>, vector<1x8x64xf32>
    %2198 = vector.shape_cast %2197 : vector<1x8x64xf32> to vector<8x64xf32>
    %c2_631 = arith.constant 2 : index
    %c0_632 = arith.constant 0 : index
    %c0_633 = arith.constant 0 : index
    %2199 = vector.load %arg4[%c2_631, %c0_632, %c0_633] : memref<3x16x64xf32, #tpu.memory_space<vmem>>, vector<1x16x64xf32>
    %2200 = vector.shape_cast %2199 : vector<1x16x64xf32> to vector<16x64xf32>
    %cst_634 = arith.constant dense<0.000000e+00> : vector<8x64xf32>
    %2201 = tpu.matmul %2185, %2200, %cst_634 {dimension_numbers = #tpu.dot_dimension_numbers<[1], [0], [0], [1], [0, 0, 1, 1], [], []>} : vector<8x16xf32>, vector<16x64xf32>, vector<8x64xf32> -> vector<8x64xf32>
    %2202 = arith.addf %2198, %2201 : vector<8x64xf32>
    %2203 = arith.index_cast %2195 : i32 to index
    %c0_635 = arith.constant 0 : index
    %c64_636 = arith.constant 64 : index
    %2204 = vector.load %arg10[%2203, %c0_635, %c64_636] : memref<8x8x128xf32, #tpu.memory_space<vmem>>, vector<1x8x64xf32>
    %2205 = vector.shape_cast %2204 : vector<1x8x64xf32> to vector<8x64xf32>
    %c2_637 = arith.constant 2 : index
    %c0_638 = arith.constant 0 : index
    %c0_639 = arith.constant 0 : index
    %2206 = vector.load %arg5[%c2_637, %c0_638, %c0_639] : memref<3x16x64xf32, #tpu.memory_space<vmem>>, vector<1x16x64xf32>
    %2207 = vector.shape_cast %2206 : vector<1x16x64xf32> to vector<16x64xf32>
    %cst_640 = arith.constant dense<0.000000e+00> : vector<8x64xf32>
    %2208 = tpu.matmul %2191, %2207, %cst_640 {dimension_numbers = #tpu.dot_dimension_numbers<[1], [0], [0], [1], [0, 0, 1, 1], [], []>} : vector<8x16xf32>, vector<16x64xf32>, vector<8x64xf32> -> vector<8x64xf32>
    %2209 = arith.addf %2205, %2208 : vector<8x64xf32>
    %2210 = vector.extract_strided_slice %2202 {offsets = [0, 0], sizes = [8, 16], strides = [1, 1]} : vector<8x64xf32> to vector<8x16xf32>
    %2211 = arith.negf %2210 : vector<8x16xf32>
    %2212 = math.exp %2211 : vector<8x16xf32>
    %cst_641 = arith.constant 1.000000e+00 : f32
    %2213 = vector.broadcast %cst_641 : f32 to vector<8x16xf32>
    %2214 = arith.addf %2213, %2212 : vector<8x16xf32>
    %2215 = arith.divf %2213, %2214 : vector<8x16xf32>
    %2216 = vector.extract_strided_slice %2202 {offsets = [0, 16], sizes = [8, 16], strides = [1, 1]} : vector<8x64xf32> to vector<8x16xf32>
    %2217 = arith.negf %2216 : vector<8x16xf32>
    %2218 = math.exp %2217 : vector<8x16xf32>
    %cst_642 = arith.constant 1.000000e+00 : f32
    %2219 = vector.broadcast %cst_642 : f32 to vector<8x16xf32>
    %2220 = arith.addf %2219, %2218 : vector<8x16xf32>
    %2221 = arith.divf %2219, %2220 : vector<8x16xf32>
    %2222 = vector.extract_strided_slice %2202 {offsets = [0, 32], sizes = [8, 16], strides = [1, 1]} : vector<8x64xf32> to vector<8x16xf32>
    %2223 = math.tanh %2222 : vector<8x16xf32>
    %2224 = vector.extract_strided_slice %2202 {offsets = [0, 48], sizes = [8, 16], strides = [1, 1]} : vector<8x64xf32> to vector<8x16xf32>
    %2225 = arith.negf %2224 : vector<8x16xf32>
    %2226 = math.exp %2225 : vector<8x16xf32>
    %cst_643 = arith.constant 1.000000e+00 : f32
    %2227 = vector.broadcast %cst_643 : f32 to vector<8x16xf32>
    %2228 = arith.addf %2227, %2226 : vector<8x16xf32>
    %2229 = arith.divf %2227, %2228 : vector<8x16xf32>
    %2230 = vector.extract_strided_slice %2209 {offsets = [0, 0], sizes = [8, 16], strides = [1, 1]} : vector<8x64xf32> to vector<8x16xf32>
    %2231 = arith.negf %2230 : vector<8x16xf32>
    %2232 = math.exp %2231 : vector<8x16xf32>
    %cst_644 = arith.constant 1.000000e+00 : f32
    %2233 = vector.broadcast %cst_644 : f32 to vector<8x16xf32>
    %2234 = arith.addf %2233, %2232 : vector<8x16xf32>
    %2235 = arith.divf %2233, %2234 : vector<8x16xf32>
    %2236 = vector.extract_strided_slice %2209 {offsets = [0, 16], sizes = [8, 16], strides = [1, 1]} : vector<8x64xf32> to vector<8x16xf32>
    %2237 = arith.negf %2236 : vector<8x16xf32>
    %2238 = math.exp %2237 : vector<8x16xf32>
    %cst_645 = arith.constant 1.000000e+00 : f32
    %2239 = vector.broadcast %cst_645 : f32 to vector<8x16xf32>
    %2240 = arith.addf %2239, %2238 : vector<8x16xf32>
    %2241 = arith.divf %2239, %2240 : vector<8x16xf32>
    %2242 = vector.extract_strided_slice %2209 {offsets = [0, 32], sizes = [8, 16], strides = [1, 1]} : vector<8x64xf32> to vector<8x16xf32>
    %2243 = math.tanh %2242 : vector<8x16xf32>
    %2244 = vector.extract_strided_slice %2209 {offsets = [0, 48], sizes = [8, 16], strides = [1, 1]} : vector<8x64xf32> to vector<8x16xf32>
    %2245 = arith.negf %2244 : vector<8x16xf32>
    %2246 = math.exp %2245 : vector<8x16xf32>
    %cst_646 = arith.constant 1.000000e+00 : f32
    %2247 = vector.broadcast %cst_646 : f32 to vector<8x16xf32>
    %2248 = arith.addf %2247, %2246 : vector<8x16xf32>
    %2249 = arith.divf %2247, %2248 : vector<8x16xf32>
    %2250 = arith.mulf %2221, %2188 : vector<8x16xf32>
    %2251 = arith.mulf %2215, %2223 : vector<8x16xf32>
    %2252 = arith.addf %2250, %2251 : vector<8x16xf32>
    %2253 = math.tanh %2252 : vector<8x16xf32>
    %2254 = arith.mulf %2229, %2253 : vector<8x16xf32>
    %2255 = arith.mulf %2241, %2194 : vector<8x16xf32>
    %2256 = arith.mulf %2235, %2243 : vector<8x16xf32>
    %2257 = arith.addf %2255, %2256 : vector<8x16xf32>
    %2258 = math.tanh %2257 : vector<8x16xf32>
    %2259 = arith.mulf %2249, %2258 : vector<8x16xf32>
    %2260 = vector.broadcast %c6_i32_627 : i32 to vector<8x1xi32>
    %2261 = arith.cmpi slt, %2260, %0 : vector<8x1xi32>
    %2262 = vector.broadcast %2195 : i32 to vector<8x1xi32>
    %2263 = arith.cmpi slt, %2262, %0 : vector<8x1xi32>
    %cst_647 = arith.constant 0.000000e+00 : f32
    %2264 = vector.broadcast %cst_647 : f32 to vector<8x16xf32>
    %2265 = vector.shape_cast %2261 : vector<8x1xi1> to vector<8x1xi1>
    %2266 = vector.broadcast %2265 : vector<8x1xi1> to vector<8x16xi1>
    %2267 = arith.select %2266, %2254, %2264 : vector<8x16xi1>, vector<8x16xf32>
    %2268 = arith.index_cast %c6_i32_627 : i32 to index
    %c0_648 = arith.constant 0 : index
    %c0_649 = arith.constant 0 : index
    %2269 = vector.load %arg6[%2268, %c0_648, %c0_649] : memref<8x8x32xf32, #tpu.memory_space<vmem>>, vector<1x8x16xf32>
    %2270 = vector.shape_cast %2269 : vector<1x8x16xf32> to vector<8x16xf32>
    %2271 = vector.shape_cast %2267 : vector<8x16xf32> to vector<1x8x16xf32>
    tpu.vector_store %arg6[%2268, %c0_648, %c0_649], %2271 {strides = array<i32>} : memref<8x8x32xf32, #tpu.memory_space<vmem>>, vector<1x8x16xf32>,
    %cst_650 = arith.constant 0.000000e+00 : f32
    %2272 = vector.broadcast %cst_650 : f32 to vector<8x16xf32>
    %2273 = vector.shape_cast %2263 : vector<8x1xi1> to vector<8x1xi1>
    %2274 = vector.broadcast %2273 : vector<8x1xi1> to vector<8x16xi1>
    %2275 = arith.select %2274, %2259, %2272 : vector<8x16xi1>, vector<8x16xf32>
    %2276 = arith.index_cast %2195 : i32 to index
    %c0_651 = arith.constant 0 : index
    %c16_652 = arith.constant 16 : index
    %2277 = vector.load %arg6[%2276, %c0_651, %c16_652] : memref<8x8x32xf32, #tpu.memory_space<vmem>>, vector<1x8x16xf32>
    %2278 = vector.shape_cast %2277 : vector<1x8x16xf32> to vector<8x16xf32>
    %2279 = vector.shape_cast %2275 : vector<8x16xf32> to vector<1x8x16xf32>
    tpu.vector_store %arg6[%2276, %c0_651, %c16_652], %2279 {strides = array<i32>} : memref<8x8x32xf32, #tpu.memory_space<vmem>>, vector<1x8x16xf32>,
    %2280 = vector.shape_cast %2261 : vector<8x1xi1> to vector<8x1xi1>
    %2281 = vector.broadcast %2280 : vector<8x1xi1> to vector<8x16xi1>
    %2282 = arith.select %2281, %2254, %2185 : vector<8x16xi1>, vector<8x16xf32>
    %2283 = vector.shape_cast %2261 : vector<8x1xi1> to vector<8x1xi1>
    %2284 = vector.broadcast %2283 : vector<8x1xi1> to vector<8x16xi1>
    %2285 = arith.select %2284, %2252, %2188 : vector<8x16xi1>, vector<8x16xf32>
    %2286 = vector.shape_cast %2263 : vector<8x1xi1> to vector<8x1xi1>
    %2287 = vector.broadcast %2286 : vector<8x1xi1> to vector<8x16xi1>
    %2288 = arith.select %2287, %2259, %2191 : vector<8x16xi1>, vector<8x16xf32>
    %2289 = vector.shape_cast %2263 : vector<8x1xi1> to vector<8x1xi1>
    %2290 = vector.broadcast %2289 : vector<8x1xi1> to vector<8x16xi1>
    %2291 = arith.select %2290, %2257, %2194 : vector<8x16xi1>, vector<8x16xf32>
    %c7_i32_653 = arith.constant 7 : i32
    %c7_i32_654 = arith.constant 7 : i32
    %2292 = arith.subi %c7_i32_654, %c7_i32_653 : i32
    %2293 = arith.index_cast %c7_i32_653 : i32 to index
    %c0_655 = arith.constant 0 : index
    %c0_656 = arith.constant 0 : index
    %2294 = vector.load %arg10[%2293, %c0_655, %c0_656] : memref<8x8x128xf32, #tpu.memory_space<vmem>>, vector<1x8x64xf32>
    %2295 = vector.shape_cast %2294 : vector<1x8x64xf32> to vector<8x64xf32>
    %c2_657 = arith.constant 2 : index
    %c0_658 = arith.constant 0 : index
    %c0_659 = arith.constant 0 : index
    %2296 = vector.load %arg4[%c2_657, %c0_658, %c0_659] : memref<3x16x64xf32, #tpu.memory_space<vmem>>, vector<1x16x64xf32>
    %2297 = vector.shape_cast %2296 : vector<1x16x64xf32> to vector<16x64xf32>
    %cst_660 = arith.constant dense<0.000000e+00> : vector<8x64xf32>
    %2298 = tpu.matmul %2282, %2297, %cst_660 {dimension_numbers = #tpu.dot_dimension_numbers<[1], [0], [0], [1], [0, 0, 1, 1], [], []>} : vector<8x16xf32>, vector<16x64xf32>, vector<8x64xf32> -> vector<8x64xf32>
    %2299 = arith.addf %2295, %2298 : vector<8x64xf32>
    %2300 = arith.index_cast %2292 : i32 to index
    %c0_661 = arith.constant 0 : index
    %c64_662 = arith.constant 64 : index
    %2301 = vector.load %arg10[%2300, %c0_661, %c64_662] : memref<8x8x128xf32, #tpu.memory_space<vmem>>, vector<1x8x64xf32>
    %2302 = vector.shape_cast %2301 : vector<1x8x64xf32> to vector<8x64xf32>
    %c2_663 = arith.constant 2 : index
    %c0_664 = arith.constant 0 : index
    %c0_665 = arith.constant 0 : index
    %2303 = vector.load %arg5[%c2_663, %c0_664, %c0_665] : memref<3x16x64xf32, #tpu.memory_space<vmem>>, vector<1x16x64xf32>
    %2304 = vector.shape_cast %2303 : vector<1x16x64xf32> to vector<16x64xf32>
    %cst_666 = arith.constant dense<0.000000e+00> : vector<8x64xf32>
    %2305 = tpu.matmul %2288, %2304, %cst_666 {dimension_numbers = #tpu.dot_dimension_numbers<[1], [0], [0], [1], [0, 0, 1, 1], [], []>} : vector<8x16xf32>, vector<16x64xf32>, vector<8x64xf32> -> vector<8x64xf32>
    %2306 = arith.addf %2302, %2305 : vector<8x64xf32>
    %2307 = vector.extract_strided_slice %2299 {offsets = [0, 0], sizes = [8, 16], strides = [1, 1]} : vector<8x64xf32> to vector<8x16xf32>
    %2308 = arith.negf %2307 : vector<8x16xf32>
    %2309 = math.exp %2308 : vector<8x16xf32>
    %cst_667 = arith.constant 1.000000e+00 : f32
    %2310 = vector.broadcast %cst_667 : f32 to vector<8x16xf32>
    %2311 = arith.addf %2310, %2309 : vector<8x16xf32>
    %2312 = arith.divf %2310, %2311 : vector<8x16xf32>
    %2313 = vector.extract_strided_slice %2299 {offsets = [0, 16], sizes = [8, 16], strides = [1, 1]} : vector<8x64xf32> to vector<8x16xf32>
    %2314 = arith.negf %2313 : vector<8x16xf32>
    %2315 = math.exp %2314 : vector<8x16xf32>
    %cst_668 = arith.constant 1.000000e+00 : f32
    %2316 = vector.broadcast %cst_668 : f32 to vector<8x16xf32>
    %2317 = arith.addf %2316, %2315 : vector<8x16xf32>
    %2318 = arith.divf %2316, %2317 : vector<8x16xf32>
    %2319 = vector.extract_strided_slice %2299 {offsets = [0, 32], sizes = [8, 16], strides = [1, 1]} : vector<8x64xf32> to vector<8x16xf32>
    %2320 = math.tanh %2319 : vector<8x16xf32>
    %2321 = vector.extract_strided_slice %2299 {offsets = [0, 48], sizes = [8, 16], strides = [1, 1]} : vector<8x64xf32> to vector<8x16xf32>
    %2322 = arith.negf %2321 : vector<8x16xf32>
    %2323 = math.exp %2322 : vector<8x16xf32>
    %cst_669 = arith.constant 1.000000e+00 : f32
    %2324 = vector.broadcast %cst_669 : f32 to vector<8x16xf32>
    %2325 = arith.addf %2324, %2323 : vector<8x16xf32>
    %2326 = arith.divf %2324, %2325 : vector<8x16xf32>
    %2327 = vector.extract_strided_slice %2306 {offsets = [0, 0], sizes = [8, 16], strides = [1, 1]} : vector<8x64xf32> to vector<8x16xf32>
    %2328 = arith.negf %2327 : vector<8x16xf32>
    %2329 = math.exp %2328 : vector<8x16xf32>
    %cst_670 = arith.constant 1.000000e+00 : f32
    %2330 = vector.broadcast %cst_670 : f32 to vector<8x16xf32>
    %2331 = arith.addf %2330, %2329 : vector<8x16xf32>
    %2332 = arith.divf %2330, %2331 : vector<8x16xf32>
    %2333 = vector.extract_strided_slice %2306 {offsets = [0, 16], sizes = [8, 16], strides = [1, 1]} : vector<8x64xf32> to vector<8x16xf32>
    %2334 = arith.negf %2333 : vector<8x16xf32>
    %2335 = math.exp %2334 : vector<8x16xf32>
    %cst_671 = arith.constant 1.000000e+00 : f32
    %2336 = vector.broadcast %cst_671 : f32 to vector<8x16xf32>
    %2337 = arith.addf %2336, %2335 : vector<8x16xf32>
    %2338 = arith.divf %2336, %2337 : vector<8x16xf32>
    %2339 = vector.extract_strided_slice %2306 {offsets = [0, 32], sizes = [8, 16], strides = [1, 1]} : vector<8x64xf32> to vector<8x16xf32>
    %2340 = math.tanh %2339 : vector<8x16xf32>
    %2341 = vector.extract_strided_slice %2306 {offsets = [0, 48], sizes = [8, 16], strides = [1, 1]} : vector<8x64xf32> to vector<8x16xf32>
    %2342 = arith.negf %2341 : vector<8x16xf32>
    %2343 = math.exp %2342 : vector<8x16xf32>
    %cst_672 = arith.constant 1.000000e+00 : f32
    %2344 = vector.broadcast %cst_672 : f32 to vector<8x16xf32>
    %2345 = arith.addf %2344, %2343 : vector<8x16xf32>
    %2346 = arith.divf %2344, %2345 : vector<8x16xf32>
    %2347 = arith.mulf %2318, %2285 : vector<8x16xf32>
    %2348 = arith.mulf %2312, %2320 : vector<8x16xf32>
    %2349 = arith.addf %2347, %2348 : vector<8x16xf32>
    %2350 = math.tanh %2349 : vector<8x16xf32>
    %2351 = arith.mulf %2326, %2350 : vector<8x16xf32>
    %2352 = arith.mulf %2338, %2291 : vector<8x16xf32>
    %2353 = arith.mulf %2332, %2340 : vector<8x16xf32>
    %2354 = arith.addf %2352, %2353 : vector<8x16xf32>
    %2355 = math.tanh %2354 : vector<8x16xf32>
    %2356 = arith.mulf %2346, %2355 : vector<8x16xf32>
    %2357 = vector.broadcast %c7_i32_653 : i32 to vector<8x1xi32>
    %2358 = arith.cmpi slt, %2357, %0 : vector<8x1xi32>
    %2359 = vector.broadcast %2292 : i32 to vector<8x1xi32>
    %2360 = arith.cmpi slt, %2359, %0 : vector<8x1xi32>
    %cst_673 = arith.constant 0.000000e+00 : f32
    %2361 = vector.broadcast %cst_673 : f32 to vector<8x16xf32>
    %2362 = vector.shape_cast %2358 : vector<8x1xi1> to vector<8x1xi1>
    %2363 = vector.broadcast %2362 : vector<8x1xi1> to vector<8x16xi1>
    %2364 = arith.select %2363, %2351, %2361 : vector<8x16xi1>, vector<8x16xf32>
    %2365 = arith.index_cast %c7_i32_653 : i32 to index
    %c0_674 = arith.constant 0 : index
    %c0_675 = arith.constant 0 : index
    %2366 = vector.load %arg6[%2365, %c0_674, %c0_675] : memref<8x8x32xf32, #tpu.memory_space<vmem>>, vector<1x8x16xf32>
    %2367 = vector.shape_cast %2366 : vector<1x8x16xf32> to vector<8x16xf32>
    %2368 = vector.shape_cast %2364 : vector<8x16xf32> to vector<1x8x16xf32>
    tpu.vector_store %arg6[%2365, %c0_674, %c0_675], %2368 {strides = array<i32>} : memref<8x8x32xf32, #tpu.memory_space<vmem>>, vector<1x8x16xf32>,
    %cst_676 = arith.constant 0.000000e+00 : f32
    %2369 = vector.broadcast %cst_676 : f32 to vector<8x16xf32>
    %2370 = vector.shape_cast %2360 : vector<8x1xi1> to vector<8x1xi1>
    %2371 = vector.broadcast %2370 : vector<8x1xi1> to vector<8x16xi1>
    %2372 = arith.select %2371, %2356, %2369 : vector<8x16xi1>, vector<8x16xf32>
    %2373 = arith.index_cast %2292 : i32 to index
    %c0_677 = arith.constant 0 : index
    %c16_678 = arith.constant 16 : index
    %2374 = vector.load %arg6[%2373, %c0_677, %c16_678] : memref<8x8x32xf32, #tpu.memory_space<vmem>>, vector<1x8x16xf32>
    %2375 = vector.shape_cast %2374 : vector<1x8x16xf32> to vector<8x16xf32>
    %2376 = vector.shape_cast %2372 : vector<8x16xf32> to vector<1x8x16xf32>
    tpu.vector_store %arg6[%2373, %c0_677, %c16_678], %2376 {strides = array<i32>} : memref<8x8x32xf32, #tpu.memory_space<vmem>>, vector<1x8x16xf32>,
    %2377 = vector.shape_cast %2358 : vector<8x1xi1> to vector<8x1xi1>
    %2378 = vector.broadcast %2377 : vector<8x1xi1> to vector<8x16xi1>
    %2379 = arith.select %2378, %2351, %2282 : vector<8x16xi1>, vector<8x16xf32>
    %2380 = vector.shape_cast %2358 : vector<8x1xi1> to vector<8x1xi1>
    %2381 = vector.broadcast %2380 : vector<8x1xi1> to vector<8x16xi1>
    %2382 = arith.select %2381, %2349, %2285 : vector<8x16xi1>, vector<8x16xf32>
    %2383 = vector.shape_cast %2360 : vector<8x1xi1> to vector<8x1xi1>
    %2384 = vector.broadcast %2383 : vector<8x1xi1> to vector<8x16xi1>
    %2385 = arith.select %2384, %2356, %2288 : vector<8x16xi1>, vector<8x16xf32>
    %2386 = vector.shape_cast %2360 : vector<8x1xi1> to vector<8x1xi1>
    %2387 = vector.broadcast %2386 : vector<8x1xi1> to vector<8x16xi1>
    %2388 = arith.select %2387, %2354, %2291 : vector<8x16xi1>, vector<8x16xf32>
    %c8_i32_679 = arith.constant 8 : i32
    %c2_680 = arith.constant 2 : index
    %c0_681 = arith.constant 0 : index
    %c0_682 = arith.constant 0 : index
    %2389 = vector.load %arg7[%c2_680, %c0_681, %c0_682] : memref<3x8x32xf32, #tpu.memory_space<vmem>>, vector<1x8x16xf32>
    %2390 = vector.shape_cast %2389 : vector<1x8x16xf32> to vector<8x16xf32>
    %2391 = vector.shape_cast %2379 : vector<8x16xf32> to vector<1x8x16xf32>
    tpu.vector_store %arg7[%c2_680, %c0_681, %c0_682], %2391 {strides = array<i32>} : memref<3x8x32xf32, #tpu.memory_space<vmem>>, vector<1x8x16xf32>,
    %c2_683 = arith.constant 2 : index
    %c0_684 = arith.constant 0 : index
    %c16_685 = arith.constant 16 : index
    %2392 = vector.load %arg7[%c2_683, %c0_684, %c16_685] : memref<3x8x32xf32, #tpu.memory_space<vmem>>, vector<1x8x16xf32>
    %2393 = vector.shape_cast %2392 : vector<1x8x16xf32> to vector<8x16xf32>
    %2394 = vector.shape_cast %2385 : vector<8x16xf32> to vector<1x8x16xf32>
    tpu.vector_store %arg7[%c2_683, %c0_684, %c16_685], %2394 {strides = array<i32>} : memref<3x8x32xf32, #tpu.memory_space<vmem>>, vector<1x8x16xf32>,
    %c2_686 = arith.constant 2 : index
    %c0_687 = arith.constant 0 : index
    %c0_688 = arith.constant 0 : index
    %2395 = vector.load %arg8[%c2_686, %c0_687, %c0_688] : memref<3x8x32xf32, #tpu.memory_space<vmem>>, vector<1x8x16xf32>
    %2396 = vector.shape_cast %2395 : vector<1x8x16xf32> to vector<8x16xf32>
    %2397 = vector.shape_cast %2382 : vector<8x16xf32> to vector<1x8x16xf32>
    tpu.vector_store %arg8[%c2_686, %c0_687, %c0_688], %2397 {strides = array<i32>} : memref<3x8x32xf32, #tpu.memory_space<vmem>>, vector<1x8x16xf32>,
    %c2_689 = arith.constant 2 : index
    %c0_690 = arith.constant 0 : index
    %c16_691 = arith.constant 16 : index
    %2398 = vector.load %arg8[%c2_689, %c0_690, %c16_691] : memref<3x8x32xf32, #tpu.memory_space<vmem>>, vector<1x8x16xf32>
    %2399 = vector.shape_cast %2398 : vector<1x8x16xf32> to vector<8x16xf32>
    %2400 = vector.shape_cast %2388 : vector<8x16xf32> to vector<1x8x16xf32>
    tpu.vector_store %arg8[%c2_689, %c0_690, %c16_691], %2400 {strides = array<i32>} : memref<3x8x32xf32, #tpu.memory_space<vmem>>, vector<1x8x16xf32>,
    return
  }
}

</mosaic_0001>

<llo_original>
// kernel: tpu_custom_call.1
$region0: #{tpu_custom_call.1}
  #allocation0 [shape = 'u32[]', space=smem, size = 0x4, offset = 0x4, fixed_abs, tag = 'smem constant byte address 0x4 - core index']
  #allocation1 [shape = 'u32[144,128]{1,0:T(1,128)}', space=vmem, size = 0x12000, scoped, tag = 'internal scratch']
  #allocation2 [shape = 'f32[8,8,32]{2,1,0:T(8,128)}', space=vmem, size = 0x8000, scoped, tag = 'scratch operand']
  #allocation3 [shape = 'f32[8,8,128]{2,1,0:T(8,128)}', space=vmem, size = 0x8000, scoped, tag = 'scratch operand']
  %s0 = inlined_call_operand.hbm [shape: f32[8,8,32], index: 0, kind: input, shape index: {}]
  %s1 = inlined_call_operand.vmem [shape: s32[8,1], index: 1, kind: input, shape index: {}]
  %s2 = inlined_call_operand.hbm [shape: f32[3,32,128], index: 2, kind: input, shape index: {}]
  %s3 = inlined_call_operand.vmem [shape: f32[3,1,128], index: 3, kind: input, shape index: {}]
  %s4 = inlined_call_operand.hbm [shape: f32[3,16,64], index: 4, kind: input, shape index: {}]
  %s5 = inlined_call_operand.hbm [shape: f32[3,16,64], index: 5, kind: input, shape index: {}]
  %s6 = inlined_call_operand.hbm [shape: f32[8,8,32], index: 6, kind: output, shape index: {0}]
  %s7 = inlined_call_operand.hbm [shape: f32[3,8,32], index: 7, kind: output, shape index: {1}]
  %s8 = inlined_call_operand.hbm [shape: f32[3,8,32], index: 8, kind: output, shape index: {2}]
  %9 = xla_tuple %s6, %s7, %s8
  %s10 = sld [smem:[#allocation0]]
  $region66: #{tpu_custom_call.1} parent=0
    _
  %s12 = ssub.s32 1, %s10
  %s13 = scalar_select 0, %s12, %s10
  $region1: #{tpu_custom_call.1} parent=0
    #allocation4 [shape = 'u8[32768]{0}', space=vmem, size = 0x8000, scoped, tag = 'input window, operand 0, single buffered']
    #allocation5 [shape = 's32[1]{0}', space=sflag, size = 0x4, scoped, tag = 'scoped memory for tpu_custom_call.1']
    #allocation6 [shape = 's32[1]{0}', space=sflag, size = 0x4, scoped, tag = 'scoped memory for tpu_custom_call.1']
    #allocation7 [shape = 'u8[49152]{0}', space=vmem, size = 0xc000, scoped, tag = 'input window, operand 2, single buffered']
    #allocation8 [shape = 's32[1]{0}', space=sflag, size = 0x4, scoped, tag = 'scoped memory for tpu_custom_call.1']
    #allocation9 [shape = 'u8[24576]{0}', space=vmem, size = 0x6000, scoped, tag = 'input window, operand 4, single buffered']
    #allocation10 [shape = 'u8[24576]{0}', space=vmem, size = 0x6000, scoped, tag = 'input window, operand 5, single buffered']
    #allocation11 [shape = 's32[1]{0}', space=sflag, size = 0x4, scoped, tag = 'scoped memory for tpu_custom_call.1']
    #allocation12 [shape = 'u8[32768]{0}', space=vmem, size = 0x8000, scoped, tag = 'output window, operand 0, single buffered']
    #allocation13 [shape = 'u8[12288]{0}', space=vmem, size = 0x3000, scoped, tag = 'output window, operand 1, single buffered']
    #allocation14 [shape = 's32[1]{0}', space=sflag, size = 0x4, scoped, tag = 'scoped memory for tpu_custom_call.1']
    #allocation15 [shape = 'u8[12288]{0}', space=vmem, size = 0x3000, scoped, tag = 'output window, operand 2, single buffered']
    %14 = vsyncpa [#allocation5], 0
    %15 = vsyncpa [#allocation8], 0
    %16 = vsyncpa [#allocation11], 0
    %17 = vsyncpa [#allocation6], 0
    %18 = vsyncpa [#allocation14], 0
    // Predicated region
    $region2: #{tpu_custom_call.1} parent=1 // pred_check
      _
    $region3: #{tpu_custom_call.1} parent=1 // pred_check_branch
      %20 = sbr.rel (0) target = $region5
    $region4: #{tpu_custom_call.1} parent=1 // pred_region
      %s22 = ssub.s32 1024, 1024
      %23 = vsyncadd [#allocation5], %s22
      %s24 = sshll.u32 [#allocation4], 4
      %s25 = int_to_ptr.vmem [resolvable:$true] %s24
      %30 = dma.hbm_to_vmem [thread:$0]  %s0, 1024, %s25, [#allocation5], 128, 128, 8
    $region5: #{tpu_custom_call.1} parent=1 // pred_fallthru
      _
    // Predicated region
    $region6: #{tpu_custom_call.1} parent=1 // pred_check
      _
    $region7: #{tpu_custom_call.1} parent=1 // pred_check_branch
      %32 = sbr.rel (0) target = $region9
    $region8: #{tpu_custom_call.1} parent=1 // pred_region
      _
    $region9: #{tpu_custom_call.1} parent=1 // pred_fallthru
      _
    // Predicated region
    $region10: #{tpu_custom_call.1} parent=1 // pred_check
      _
    $region11: #{tpu_custom_call.1} parent=1 // pred_check_branch
      %34 = sbr.rel (0) target = $region13
    $region12: #{tpu_custom_call.1} parent=1 // pred_region
      %s36 = ssub.s32 1536, 1536
      %37 = vsyncadd [#allocation8], %s36
      %s38 = sshll.u32 [#allocation7], 4
      %s39 = int_to_ptr.vmem [resolvable:$true] %s38
      %44 = dma.hbm_to_vmem [thread:$0]  %s2, 1536, %s39, [#allocation8], 128, 128, 8
    $region13: #{tpu_custom_call.1} parent=1 // pred_fallthru
      _
    // Predicated region
    $region14: #{tpu_custom_call.1} parent=1 // pred_check
      _
    $region15: #{tpu_custom_call.1} parent=1 // pred_check_branch
      %46 = sbr.rel (0) target = $region17
    $region16: #{tpu_custom_call.1} parent=1 // pred_region
      _
    $region17: #{tpu_custom_call.1} parent=1 // pred_fallthru
      _
    // Predicated region
    $region18: #{tpu_custom_call.1} parent=1 // pred_check
      _
    $region19: #{tpu_custom_call.1} parent=1 // pred_check_branch
      %48 = sbr.rel (0) target = $region21
    $region20: #{tpu_custom_call.1} parent=1 // pred_region
      %s50 = ssub.s32 768, 768
      %51 = vsyncadd [#allocation8], %s50
      %s52 = sshll.u32 [#allocation9], 4
      %s53 = int_to_ptr.vmem [resolvable:$true] %s52
      %58 = dma.hbm_to_vmem [thread:$0]  %s4, 768, %s53, [#allocation8], 128, 128, 8
    $region21: #{tpu_custom_call.1} parent=1 // pred_fallthru
      _
    // Predicated region
    $region22: #{tpu_custom_call.1} parent=1 // pred_check
      _
    $region23: #{tpu_custom_call.1} parent=1 // pred_check_branch
      %60 = sbr.rel (0) target = $region25
    $region24: #{tpu_custom_call.1} parent=1 // pred_region
      %s62 = ssub.s32 768, 768
      %63 = vsyncadd [#allocation11], %s62
      %s64 = sshll.u32 [#allocation10], 4
      %s65 = int_to_ptr.vmem [resolvable:$true] %s64
      %70 = dma.hbm_to_vmem [thread:$0]  %s5, 768, %s65, [#allocation11], 128, 128, 8
    $region25: #{tpu_custom_call.1} parent=1 // pred_fallthru
      _
    // Predicated region
    $region26: #{tpu_custom_call.1} parent=1 // pred_check
      _
    $region27: #{tpu_custom_call.1} parent=1 // pred_check_branch
      %72 = sbr.rel (0) target = $region29
    $region28: #{tpu_custom_call.1} parent=1 // pred_region
      %73 = dma.done [#allocation5], 1024
    $region29: #{tpu_custom_call.1} parent=1 // pred_fallthru
      _
    // Predicated region
    $region30: #{tpu_custom_call.1} parent=1 // pred_check
      _
    $region31: #{tpu_custom_call.1} parent=1 // pred_check_branch
      %75 = sbr.rel (0) target = $region33
    $region32: #{tpu_custom_call.1} parent=1 // pred_region
      %76 = dma.done [#allocation8], 1536
    $region33: #{tpu_custom_call.1} parent=1 // pred_fallthru
      _
    // Predicated region
    $region34: #{tpu_custom_call.1} parent=1 // pred_check
      _
    $region35: #{tpu_custom_call.1} parent=1 // pred_check_branch
      %78 = sbr.rel (0) target = $region37
    $region36: #{tpu_custom_call.1} parent=1 // pred_region
      %79 = dma.done [#allocation8], 768
    $region37: #{tpu_custom_call.1} parent=1 // pred_fallthru
      _
    // Predicated region
    $region38: #{tpu_custom_call.1} parent=1 // pred_check
      _
    $region39: #{tpu_custom_call.1} parent=1 // pred_check_branch
      %81 = sbr.rel (0) target = $region41
    $region40: #{tpu_custom_call.1} parent=1 // pred_region
      %82 = dma.done [#allocation11], 768
    $region41: #{tpu_custom_call.1} parent=1 // pred_fallthru
      _
    %v83 = vld [vmem:[%s1] sm:$0xff]
    %v84 = vld [vmem:[#allocation4] sm:$0xff]
    %v85 = vld [vmem:[#allocation4 + $0x8] sm:$0xff]
    %v86 = vld [vmem:[#allocation4 + $0x10] sm:$0xff]
    %v87 = vld [vmem:[#allocation4 + $0x18] sm:$0xff]
    %v88 = vld [vmem:[#allocation4 + $0x20] sm:$0xff]
    %v89 = vld [vmem:[#allocation4 + $0x28] sm:$0xff]
    %v90 = vld [vmem:[#allocation4 + $0x30] sm:$0xff]
    %v91 = vld [vmem:[#allocation4 + $0x38] sm:$0xff]
    %v92 = vld [vmem:[#allocation7] sm:$0xff]
    %v93 = vld [vmem:[#allocation7 + $0x8] sm:$0xff]
    %v94 = vld [vmem:[#allocation7 + $0x10] sm:$0xff]
    %v95 = vld [vmem:[#allocation7 + $0x18] sm:$0xff]
    %v96 = vld [vmem:[%s3] sm:$0x1]
    %v98 = vlaneseq
    %v99 = vshrl.u32 %v98, 7
    %v100 = vsub.s32 0, %v99
    %v101 = vrot.slane %v96, %v100
    %vm103 = vcmask 261120
    %v105 = vsel %vm103, %v84, 0
    %v108 = vsel %vm103, %v85, 0
    %v111 = vsel %vm103, %v86, 0
    %v114 = vsel %vm103, %v87, 0
    %v117 = vsel %vm103, %v88, 0
    %v120 = vsel %vm103, %v89, 0
    %v123 = vsel %vm103, %v90, 0
    %v126 = vsel %vm103, %v91, 0
    %128 = vmatprep.subr.mxu0 0.0
    %129 = vmatpush1.msra.mxu0 %v92
    %130 = vmatprep.subr.mxu0 0.0
    %131 = vmatpush1.msra.mxu0 %v93
    %132 = vmatprep.subr.mxu0 0.0
    %133 = vmatpush1.msra.mxu0 %v94
    %134 = vmatprep.subr.mxu0 0.0
    %135 = vmatpush1.msra.mxu0 %v95
    %136 = vmatprep.subr.mxu0 0.0
    %137 = vmatpush1.msra.mxu0 0.0
    %138 = vmatprep.subr.mxu0 0.0
    %139 = vmatpush1.msra.mxu0 0.0
    %140 = vmatprep.subr.mxu0 0.0
    %141 = vmatpush1.msra.mxu0 0.0
    %142 = vmatprep.subr.mxu0 0.0
    %143 = vmatpush1.msra.mxu0 0.0
    %144 = vmatprep.subr.mxu0 0.0
    %145 = vmatpush1.msra.mxu0 0.0
    %146 = vmatprep.subr.mxu0 0.0
    %147 = vmatpush1.msra.mxu0 0.0
    %148 = vmatprep.subr.mxu0 0.0
    %149 = vmatpush1.msra.mxu0 0.0
    %150 = vmatprep.subr.mxu0 0.0
    %151 = vmatpush1.msra.mxu0 0.0
    %152 = vmatprep.subr.mxu0 0.0
    %153 = vmatpush1.msra.mxu0 0.0
    %154 = vmatprep.subr.mxu0 0.0
    %155 = vmatpush1.msra.mxu0 0.0
    %156 = vmatprep.subr.mxu0 0.0
    %157 = vmatpush1.msra.mxu0 0.0
    %158 = vmatprep.subr.mxu0 0.0
    %159 = vmatpush1.msra.mxu0 0.0
    %160 = vmatprep.subr.mxu0 0.0
    %161 = vmatpush1.msra.mxu0 0.0
    %162 = vmatprep.subr.mxu0 0.0
    %163 = vmatpush1.msra.mxu0 0.0
    %164 = vmatprep.subr.mxu0 0.0
    %165 = vmatpush1.msra.mxu0 0.0
    %166 = vmatprep.subr.mxu0 0.0
    %167 = vmatpush1.msra.mxu0 0.0
    %168 = vmatprep.subr.mxu0 0.0
    %169 = vmatpush1.msra.mxu0 0.0
    %170 = vmatprep.subr.mxu0 0.0
    %171 = vmatpush1.msra.mxu0 0.0
    %172 = vmatprep.subr.mxu0 0.0
    %173 = vmatpush1.msra.mxu0 0.0
    %174 = vmatprep.subr.mxu0 0.0
    %175 = vmatpush1.msra.mxu0 0.0
    %176 = vmatprep.subr.mxu0 0.0
    %177 = vmatpush1.msra.mxu0 0.0
    %178 = vmatprep.subr.mxu0 0.0
    %179 = vmatpush1.msra.mxu0 0.0
    %180 = vmatprep.subr.mxu0 0.0
    %181 = vmatpush1.msra.mxu0 0.0
    %182 = vmatprep.subr.mxu0 0.0
    %183 = vmatpush1.msra.mxu0 0.0
    %184 = vmatprep.subr.mxu0 0.0
    %185 = vmatpush1.msra.mxu0 0.0
    %186 = vmatprep.subr.mxu0 0.0
    %187 = vmatpush1.msra.mxu0 0.0
    %188 = vmatprep.subr.mxu0 0.0
    %189 = vmatpush1.msra.mxu0 0.0
    %190 = vmatprep.subr.mxu0 0.0
    %191 = vmatpush1.msra.mxu0 0.0
    %192 = vmatprep.mubr.f32.mxu0 0.0
    %193 = vmatmul.mubr.f32.gmra.mrb[0].mxu0 %v105
    %v194 = vpop.f32.mrb[0].mxu0
    %v195 = vadd.f32 %v101, %v194
    %v196 = vpop.f32.mrb[0].mxu0
    %197 = vmatprep.mubr.f32.mxu0 0.0
    %198 = vmatmul.mubr.f32.gmra.mrb[0].mxu0 %v108
    %v199 = vpop.f32.mrb[0].mxu0
    %v200 = vadd.f32 %v101, %v199
    %v201 = vpop.f32.mrb[0].mxu0
    %202 = vmatprep.mubr.f32.mxu0 0.0
    %203 = vmatmul.mubr.f32.gmra.mrb[0].mxu0 %v111
    %v204 = vpop.f32.mrb[0].mxu0
    %v205 = vadd.f32 %v101, %v204
    %v206 = vpop.f32.mrb[0].mxu0
    %207 = vmatprep.mubr.f32.mxu0 0.0
    %208 = vmatmul.mubr.f32.gmra.mrb[0].mxu0 %v114
    %v209 = vpop.f32.mrb[0].mxu0
    %v210 = vadd.f32 %v101, %v209
    %v211 = vpop.f32.mrb[0].mxu0
    %212 = vmatprep.mubr.f32.mxu0 0.0
    %213 = vmatmul.mubr.f32.gmra.mrb[0].mxu0 %v117
    %v214 = vpop.f32.mrb[0].mxu0
    %v215 = vadd.f32 %v101, %v214
    %v216 = vpop.f32.mrb[0].mxu0
    %217 = vmatprep.mubr.f32.mxu0 0.0
    %218 = vmatmul.mubr.f32.gmra.mrb[0].mxu0 %v120
    %v219 = vpop.f32.mrb[0].mxu0
    %v220 = vadd.f32 %v101, %v219
    %v221 = vpop.f32.mrb[0].mxu0
    %222 = vmatprep.mubr.f32.mxu0 0.0
    %223 = vmatmul.mubr.f32.gmra.mrb[0].mxu0 %v123
    %v224 = vpop.f32.mrb[0].mxu0
    %v225 = vadd.f32 %v101, %v224
    %v226 = vpop.f32.mrb[0].mxu0
    %227 = vmatprep.mubr.f32.mxu0 0.0
    %228 = vmatmul.mubr.f32.gmra.mrb[0].mxu0 %v126
    %v229 = vpop.f32.mrb[0].mxu0
    %v230 = vadd.f32 %v101, %v229
    %v231 = vpop.f32.mrb[0].mxu0
    %232 = vdwg.mxu0
    %233 = vst [vmem:[#allocation3] sm:$0xff] %v195
    %234 = vst [vmem:[#allocation3 + $0x8] sm:$0xff] %v200
    %235 = vst [vmem:[#allocation3 + $0x10] sm:$0xff] %v205
    %236 = vst [vmem:[#allocation3 + $0x18] sm:$0xff] %v210
    %237 = vst [vmem:[#allocation3 + $0x20] sm:$0xff] %v215
    %238 = vst [vmem:[#allocation3 + $0x28] sm:$0xff] %v220
    %239 = vst [vmem:[#allocation3 + $0x30] sm:$0xff] %v225
    %240 = vst [vmem:[#allocation3 + $0x38] sm:$0xff] %v230
    %v241 = vld [vmem:[#allocation3] sm:$0xff]
    %v242 = vld [vmem:[#allocation9] sm:$0xff]
    %v243 = vld [vmem:[#allocation9 + $0x8] sm:$0xff]
    %vm244 = vcmask 130048
    %v246 = vsel %vm244, 0.0, 0
    %248 = vmatprep.subr.mxu0 0.0
    %249 = vmatpush1.msra.mxu0 %v242
    %250 = vmatprep.subr.mxu0 0.0
    %251 = vmatpush1.msra.mxu0 %v243
    %252 = vmatprep.subr.mxu0 0.0
    %253 = vmatpush1.msra.mxu0 0.0
    %254 = vmatprep.subr.mxu0 0.0
    %255 = vmatpush1.msra.mxu0 0.0
    %256 = vmatprep.subr.mxu0 0.0
    %257 = vmatpush1.msra.mxu0 0.0
    %258 = vmatprep.subr.mxu0 0.0
    %259 = vmatpush1.msra.mxu0 0.0
    %260 = vmatprep.subr.mxu0 0.0
    %261 = vmatpush1.msra.mxu0 0.0
    %262 = vmatprep.subr.mxu0 0.0
    %263 = vmatpush1.msra.mxu0 0.0
    %264 = vmatprep.subr.mxu0 0.0
    %265 = vmatpush1.msra.mxu0 0.0
    %266 = vmatprep.subr.mxu0 0.0
    %267 = vmatpush1.msra.mxu0 0.0
    %268 = vmatprep.subr.mxu0 0.0
    %269 = vmatpush1.msra.mxu0 0.0
    %270 = vmatprep.subr.mxu0 0.0
    %271 = vmatpush1.msra.mxu0 0.0
    %272 = vmatprep.subr.mxu0 0.0
    %273 = vmatpush1.msra.mxu0 0.0
    %274 = vmatprep.subr.mxu0 0.0
    %275 = vmatpush1.msra.mxu0 0.0
    %276 = vmatprep.subr.mxu0 0.0
    %277 = vmatpush1.msra.mxu0 0.0
    %278 = vmatprep.subr.mxu0 0.0
    %279 = vmatpush1.msra.mxu0 0.0
    %280 = vmatprep.subr.mxu0 0.0
    %281 = vmatpush1.msra.mxu0 0.0
    %282 = vmatprep.subr.mxu0 0.0
    %283 = vmatpush1.msra.mxu0 0.0
    %284 = vmatprep.subr.mxu0 0.0
    %285 = vmatpush1.msra.mxu0 0.0
    %286 = vmatprep.subr.mxu0 0.0
    %287 = vmatpush1.msra.mxu0 0.0
    %288 = vmatprep.subr.mxu0 0.0
    %289 = vmatpush1.msra.mxu0 0.0
    %290 = vmatprep.subr.mxu0 0.0
    %291 = vmatpush1.msra.mxu0 0.0
    %292 = vmatprep.subr.mxu0 0.0
    %293 = vmatpush1.msra.mxu0 0.0
    %294 = vmatprep.subr.mxu0 0.0
    %295 = vmatpush1.msra.mxu0 0.0
    %296 = vmatprep.subr.mxu0 0.0
    %297 = vmatpush1.msra.mxu0 0.0
    %298 = vmatprep.subr.mxu0 0.0
    %299 = vmatpush1.msra.mxu0 0.0
    %300 = vmatprep.subr.mxu0 0.0
    %301 = vmatpush1.msra.mxu0 0.0
    %302 = vmatprep.subr.mxu0 0.0
    %303 = vmatpush1.msra.mxu0 0.0
    %304 = vmatprep.subr.mxu0 0.0
    %305 = vmatpush1.msra.mxu0 0.0
    %306 = vmatprep.subr.mxu0 0.0
    %307 = vmatpush1.msra.mxu0 0.0
    %308 = vmatprep.subr.mxu0 0.0
    %309 = vmatpush1.msra.mxu0 0.0
    %310 = vmatprep.subr.mxu0 0.0
    %311 = vmatpush1.msra.mxu0 0.0
    %312 = vmatprep.mubr.f32.mxu0 0.0
    %313 = vmatmul.mubr.f32.gmra.mrb[0].mxu0 %v246
    %v314 = vpop.f32.mrb[0].mxu0
    %v315 = vadd.f32 0.0, %v314
    %v316 = vpop.f32.mrb[0].mxu0
    %317 = vdwg.mxu0
    %v318 = vadd.f32 %v241, %v315
    %s319 = scalar_lea.vmem [#allocation3], 56
    %v320 = vld [vmem:[%s319] sm:$0xff]
    %v321 = vld [vmem:[#allocation10] sm:$0xff]
    %v322 = vld [vmem:[#allocation10 + $0x8] sm:$0xff]
    %323 = vmatprep.subr.mxu0 0.0
    %324 = vmatpush1.msra.mxu0 %v321
    %325 = vmatprep.subr.mxu0 0.0
    %326 = vmatpush1.msra.mxu0 %v322
    %327 = vmatprep.subr.mxu0 0.0
    %328 = vmatpush1.msra.mxu0 0.0
    %329 = vmatprep.subr.mxu0 0.0
    %330 = vmatpush1.msra.mxu0 0.0
    %331 = vmatprep.subr.mxu0 0.0
    %332 = vmatpush1.msra.mxu0 0.0
    %333 = vmatprep.subr.mxu0 0.0
    %334 = vmatpush1.msra.mxu0 0.0
    %335 = vmatprep.subr.mxu0 0.0
    %336 = vmatpush1.msra.mxu0 0.0
    %337 = vmatprep.subr.mxu0 0.0
    %338 = vmatpush1.msra.mxu0 0.0
    %339 = vmatprep.subr.mxu0 0.0
    %340 = vmatpush1.msra.mxu0 0.0
    %341 = vmatprep.subr.mxu0 0.0
    %342 = vmatpush1.msra.mxu0 0.0
    %343 = vmatprep.subr.mxu0 0.0
    %344 = vmatpush1.msra.mxu0 0.0
    %345 = vmatprep.subr.mxu0 0.0
    %346 = vmatpush1.msra.mxu0 0.0
    %347 = vmatprep.subr.mxu0 0.0
    %348 = vmatpush1.msra.mxu0 0.0
    %349 = vmatprep.subr.mxu0 0.0
    %350 = vmatpush1.msra.mxu0 0.0
    %351 = vmatprep.subr.mxu0 0.0
    %352 = vmatpush1.msra.mxu0 0.0
    %353 = vmatprep.subr.mxu0 0.0
    %354 = vmatpush1.msra.mxu0 0.0
    %355 = vmatprep.subr.mxu0 0.0
    %356 = vmatpush1.msra.mxu0 0.0
    %357 = vmatprep.subr.mxu0 0.0
    %358 = vmatpush1.msra.mxu0 0.0
    %359 = vmatprep.subr.mxu0 0.0
    %360 = vmatpush1.msra.mxu0 0.0
    %361 = vmatprep.subr.mxu0 0.0
    %362 = vmatpush1.msra.mxu0 0.0
    %363 = vmatprep.subr.mxu0 0.0
    %364 = vmatpush1.msra.mxu0 0.0
    %365 = vmatprep.subr.mxu0 0.0
    %366 = vmatpush1.msra.mxu0 0.0
    %367 = vmatprep.subr.mxu0 0.0
    %368 = vmatpush1.msra.mxu0 0.0
    %369 = vmatprep.subr.mxu0 0.0
    %370 = vmatpush1.msra.mxu0 0.0
    %371 = vmatprep.subr.mxu0 0.0
    %372 = vmatpush1.msra.mxu0 0.0
    %373 = vmatprep.subr.mxu0 0.0
    %374 = vmatpush1.msra.mxu0 0.0
    %375 = vmatprep.subr.mxu0 0.0
    %376 = vmatpush1.msra.mxu0 0.0
    %377 = vmatprep.subr.mxu0 0.0
    %378 = vmatpush1.msra.mxu0 0.0
    %379 = vmatprep.subr.mxu0 0.0
    %380 = vmatpush1.msra.mxu0 0.0
    %381 = vmatprep.subr.mxu0 0.0
    %382 = vmatpush1.msra.mxu0 0.0
    %383 = vmatprep.subr.mxu0 0.0
    %384 = vmatpush1.msra.mxu0 0.0
    %385 = vmatprep.subr.mxu0 0.0
    %386 = vmatpush1.msra.mxu0 0.0
    %387 = vmatprep.mubr.f32.mxu0 0.0
    %388 = vmatmul.mubr.f32.gmra.mrb[0].mxu0 %v246
    %v389 = vpop.f32.mrb[0].mxu0
    %v390 = vadd.f32 0.0, %v389
    %v391 = vpop.f32.mrb[0].mxu0
    %392 = vdwg.mxu0
    %394 = vrot.lane.b32.xlu0 %v390, 64
    %v395 = vpop.permute.xlu0 %394
    %v397 = vadd.f32 %v320, %v395
    %v398 = vxor.u32 %v318, 2147483648
    %v399 = vmul.f32 %v398, 1.442695
    %v400 = vpow.pop %v399
    %v401 = vadd.f32 %v400, 1.0
    %v402 = vrcp.pop %v401
    %v403 = vmul.f32 1.0, %v402
    %v404 = vtanh.pop %v318
    %v405 = vxor.u32 %v397, 2147483648
    %v406 = vmul.f32 %v405, 1.442695
    %v407 = vpow.pop %v406
    %v408 = vadd.f32 %v407, 1.0
    %v409 = vrcp.pop %v408
    %v410 = vmul.f32 1.0, %v409
    %v411 = vtanh.pop %v397
    %v412 = vmul.f32 %v403, 0.0
    %414 = vrot.lane.b32.xlu0 %v404, 96
    %v415 = vpop.permute.xlu0 %414
    %v417 = vmul.f32 %v403, %v415
    %419 = vrot.lane.b32.xlu0 %v417, 16
    %v420 = vpop.permute.xlu0 %419
    %v422 = vadd.f32 %v412, %v420
    %v423 = vtanh.pop %v422
    %425 = vrot.lane.b32.xlu0 %v423, 32
    %v426 = vpop.permute.xlu0 %425
    %v428 = vmul.f32 %v403, %v426
    %v429 = vmul.f32 %v410, 0.0
    %431 = vrot.lane.b32.xlu0 %v411, 96
    %v432 = vpop.permute.xlu0 %431
    %v434 = vmul.f32 %v410, %v432
    %436 = vrot.lane.b32.xlu0 %v434, 16
    %v437 = vpop.permute.xlu0 %436
    %v439 = vadd.f32 %v429, %v437
    %v440 = vtanh.pop %v439
    %442 = vrot.lane.b32.xlu0 %v440, 32
    %v443 = vpop.permute.xlu0 %442
    %v445 = vmul.f32 %v410, %v443
    %vm446 = vcmp.gt.s32.totalorder %v83, 0
    %vm447 = vcmp.gt.s32.totalorder %v83, 7
    %v448 = vsel %vm446, 1, 0
    %449 = vset.pattern.permute.xlu0 0
    %450 = vperm.xlu0 %449, %v448
    %v451 = vpop.permute.xlu0 %450
    %vm452 = vcmp.eq.s32.totalorder %v451, 1
    %v453 = vsel %vm452, %v428, 0.0
    %455 = vrot.lane.b32.xlu0 %v453, 80
    %v456 = vpop.permute.xlu0 %455
    %458 = vst.msk [vmem:[#allocation2] sm:$0xff] %vm244, %v456
    %v459 = vsel %vm447, 1, 0
    %460 = vset.pattern.permute.xlu0 0
    %461 = vperm.xlu0 %460, %v459
    %v462 = vpop.permute.xlu0 %461
    %vm463 = vcmp.eq.s32.totalorder %v462, 1
    %v464 = vsel %vm463, %v445, 0.0
    %466 = vrot.lane.b32.xlu0 %v464, 32
    %v467 = vpop.permute.xlu0 %466
    %s469 = scalar_lea.vmem [#allocation2], 56
    %vm470 = vcmask 261248
    %471 = vst.msk [vmem:[%s469] sm:$0xff] %vm470, %v467
    %v472 = vsel %vm452, %v422, 0.0
    %v473 = vsel %vm463, %v439, 0.0
    %s474 = scalar_lea.vmem [#allocation3], 8
    %v475 = vld [vmem:[%s474] sm:$0xff]
    %v476 = vld [vmem:[#allocation9] sm:$0xff]
    %v477 = vld [vmem:[#allocation9 + $0x8] sm:$0xff]
    %v478 = vsel %vm244, %v456, 0
    %480 = vmatprep.subr.mxu0 0.0
    %481 = vmatpush1.msra.mxu0 %v476
    %482 = vmatprep.subr.mxu0 0.0
    %483 = vmatpush1.msra.mxu0 %v477
    %484 = vmatprep.subr.mxu0 0.0
    %485 = vmatpush1.msra.mxu0 0.0
    %486 = vmatprep.subr.mxu0 0.0
    %487 = vmatpush1.msra.mxu0 0.0
    %488 = vmatprep.subr.mxu0 0.0
    %489 = vmatpush1.msra.mxu0 0.0
    %490 = vmatprep.subr.mxu0 0.0
    %491 = vmatpush1.msra.mxu0 0.0
    %492 = vmatprep.subr.mxu0 0.0
    %493 = vmatpush1.msra.mxu0 0.0
    %494 = vmatprep.subr.mxu0 0.0
    %495 = vmatpush1.msra.mxu0 0.0
    %496 = vmatprep.subr.mxu0 0.0
    %497 = vmatpush1.msra.mxu0 0.0
    %498 = vmatprep.subr.mxu0 0.0
    %499 = vmatpush1.msra.mxu0 0.0
    %500 = vmatprep.subr.mxu0 0.0
    %501 = vmatpush1.msra.mxu0 0.0
    %502 = vmatprep.subr.mxu0 0.0
    %503 = vmatpush1.msra.mxu0 0.0
    %504 = vmatprep.subr.mxu0 0.0
    %505 = vmatpush1.msra.mxu0 0.0
    %506 = vmatprep.subr.mxu0 0.0
    %507 = vmatpush1.msra.mxu0 0.0
    %508 = vmatprep.subr.mxu0 0.0
    %509 = vmatpush1.msra.mxu0 0.0
    %510 = vmatprep.subr.mxu0 0.0
    %511 = vmatpush1.msra.mxu0 0.0
    %512 = vmatprep.subr.mxu0 0.0
    %513 = vmatpush1.msra.mxu0 0.0
    %514 = vmatprep.subr.mxu0 0.0
    %515 = vmatpush1.msra.mxu0 0.0
    %516 = vmatprep.subr.mxu0 0.0
    %517 = vmatpush1.msra.mxu0 0.0
    %518 = vmatprep.subr.mxu0 0.0
    %519 = vmatpush1.msra.mxu0 0.0
    %520 = vmatprep.subr.mxu0 0.0
    %521 = vmatpush1.msra.mxu0 0.0
    %522 = vmatprep.subr.mxu0 0.0
    %523 = vmatpush1.msra.mxu0 0.0
    %524 = vmatprep.subr.mxu0 0.0
    %525 = vmatpush1.msra.mxu0 0.0
    %526 = vmatprep.subr.mxu0 0.0
    %527 = vmatpush1.msra.mxu0 0.0
    %528 = vmatprep.subr.mxu0 0.0
    %529 = vmatpush1.msra.mxu0 0.0
    %530 = vmatprep.subr.mxu0 0.0
    %531 = vmatpush1.msra.mxu0 0.0
    %532 = vmatprep.subr.mxu0 0.0
    %533 = vmatpush1.msra.mxu0 0.0
    %534 = vmatprep.subr.mxu0 0.0
    %535 = vmatpush1.msra.mxu0 0.0
    %536 = vmatprep.subr.mxu0 0.0
    %537 = vmatpush1.msra.mxu0 0.0
    %538 = vmatprep.subr.mxu0 0.0
    %539 = vmatpush1.msra.mxu0 0.0
    %540 = vmatprep.subr.mxu0 0.0
    %541 = vmatpush1.msra.mxu0 0.0
    %542 = vmatprep.subr.mxu0 0.0
    %543 = vmatpush1.msra.mxu0 0.0
    %544 = vmatprep.mubr.f32.mxu0 0.0
    %545 = vmatmul.mubr.f32.gmra.mrb[0].mxu0 %v478
    %v546 = vpop.f32.mrb[0].mxu0
    %v547 = vadd.f32 0.0, %v546
    %v548 = vpop.f32.mrb[0].mxu0
    %549 = vdwg.mxu0
    %v550 = vadd.f32 %v475, %v547
    %s551 = scalar_lea.vmem [#allocation3], 48
    %v552 = vld [vmem:[%s551] sm:$0xff]
    %v553 = vld [vmem:[#allocation10] sm:$0xff]
    %v554 = vld [vmem:[#allocation10 + $0x8] sm:$0xff]
    %555 = vrot.lane.b32.xlu0 %v464, 16
    %v556 = vpop.permute.xlu0 %555
    %v557 = vsel %vm244, %v556, 0
    %559 = vmatprep.subr.mxu0 0.0
    %560 = vmatpush1.msra.mxu0 %v553
    %561 = vmatprep.subr.mxu0 0.0
    %562 = vmatpush1.msra.mxu0 %v554
    %563 = vmatprep.subr.mxu0 0.0
    %564 = vmatpush1.msra.mxu0 0.0
    %565 = vmatprep.subr.mxu0 0.0
    %566 = vmatpush1.msra.mxu0 0.0
    %567 = vmatprep.subr.mxu0 0.0
    %568 = vmatpush1.msra.mxu0 0.0
    %569 = vmatprep.subr.mxu0 0.0
    %570 = vmatpush1.msra.mxu0 0.0
    %571 = vmatprep.subr.mxu0 0.0
    %572 = vmatpush1.msra.mxu0 0.0
    %573 = vmatprep.subr.mxu0 0.0
    %574 = vmatpush1.msra.mxu0 0.0
    %575 = vmatprep.subr.mxu0 0.0
    %576 = vmatpush1.msra.mxu0 0.0
    %577 = vmatprep.subr.mxu0 0.0
    %578 = vmatpush1.msra.mxu0 0.0
    %579 = vmatprep.subr.mxu0 0.0
    %580 = vmatpush1.msra.mxu0 0.0
    %581 = vmatprep.subr.mxu0 0.0
    %582 = vmatpush1.msra.mxu0 0.0
    %583 = vmatprep.subr.mxu0 0.0
    %584 = vmatpush1.msra.mxu0 0.0
    %585 = vmatprep.subr.mxu0 0.0
    %586 = vmatpush1.msra.mxu0 0.0
    %587 = vmatprep.subr.mxu0 0.0
    %588 = vmatpush1.msra.mxu0 0.0
    %589 = vmatprep.subr.mxu0 0.0
    %590 = vmatpush1.msra.mxu0 0.0
    %591 = vmatprep.subr.mxu0 0.0
    %592 = vmatpush1.msra.mxu0 0.0
    %593 = vmatprep.subr.mxu0 0.0
    %594 = vmatpush1.msra.mxu0 0.0
    %595 = vmatprep.subr.mxu0 0.0
    %596 = vmatpush1.msra.mxu0 0.0
    %597 = vmatprep.subr.mxu0 0.0
    %598 = vmatpush1.msra.mxu0 0.0
    %599 = vmatprep.subr.mxu0 0.0
    %600 = vmatpush1.msra.mxu0 0.0
    %601 = vmatprep.subr.mxu0 0.0
    %602 = vmatpush1.msra.mxu0 0.0
    %603 = vmatprep.subr.mxu0 0.0
    %604 = vmatpush1.msra.mxu0 0.0
    %605 = vmatprep.subr.mxu0 0.0
    %606 = vmatpush1.msra.mxu0 0.0
    %607 = vmatprep.subr.mxu0 0.0
    %608 = vmatpush1.msra.mxu0 0.0
    %609 = vmatprep.subr.mxu0 0.0
    %610 = vmatpush1.msra.mxu0 0.0
    %611 = vmatprep.subr.mxu0 0.0
    %612 = vmatpush1.msra.mxu0 0.0
    %613 = vmatprep.subr.mxu0 0.0
    %614 = vmatpush1.msra.mxu0 0.0
    %615 = vmatprep.subr.mxu0 0.0
    %616 = vmatpush1.msra.mxu0 0.0
    %617 = vmatprep.subr.mxu0 0.0
    %618 = vmatpush1.msra.mxu0 0.0
    %619 = vmatprep.subr.mxu0 0.0
    %620 = vmatpush1.msra.mxu0 0.0
    %621 = vmatprep.subr.mxu0 0.0
    %622 = vmatpush1.msra.mxu0 0.0
    %623 = vmatprep.mubr.f32.mxu0 0.0
    %624 = vmatmul.mubr.f32.gmra.mrb[0].mxu0 %v557
    %v625 = vpop.f32.mrb[0].mxu0
    %v626 = vadd.f32 0.0, %v625
    %v627 = vpop.f32.mrb[0].mxu0
    %628 = vdwg.mxu0
    %630 = vrot.lane.b32.xlu0 %v626, 64
    %v631 = vpop.permute.xlu0 %630
    %v633 = vadd.f32 %v552, %v631
    %v634 = vxor.u32 %v550, 2147483648
    %v635 = vmul.f32 %v634, 1.442695
    %v636 = vpow.pop %v635
    %v637 = vadd.f32 %v636, 1.0
    %v638 = vrcp.pop %v637
    %v639 = vmul.f32 1.0, %v638
    %v640 = vtanh.pop %v550
    %v641 = vxor.u32 %v633, 2147483648
    %v642 = vmul.f32 %v641, 1.442695
    %v643 = vpow.pop %v642
    %v644 = vadd.f32 %v643, 1.0
    %v645 = vrcp.pop %v644
    %v646 = vmul.f32 1.0, %v645
    %v647 = vtanh.pop %v633
    %v648 = vmul.f32 %v639, %v472
    %650 = vrot.lane.b32.xlu0 %v640, 96
    %v651 = vpop.permute.xlu0 %650
    %v653 = vmul.f32 %v639, %v651
    %655 = vrot.lane.b32.xlu0 %v653, 16
    %v656 = vpop.permute.xlu0 %655
    %v658 = vadd.f32 %v648, %v656
    %v659 = vtanh.pop %v658
    %661 = vrot.lane.b32.xlu0 %v659, 32
    %v662 = vpop.permute.xlu0 %661
    %v664 = vmul.f32 %v639, %v662
    %v665 = vmul.f32 %v646, %v473
    %667 = vrot.lane.b32.xlu0 %v647, 96
    %v668 = vpop.permute.xlu0 %667
    %v670 = vmul.f32 %v646, %v668
    %672 = vrot.lane.b32.xlu0 %v670, 16
    %v673 = vpop.permute.xlu0 %672
    %v675 = vadd.f32 %v665, %v673
    %v676 = vtanh.pop %v675
    %678 = vrot.lane.b32.xlu0 %v676, 32
    %v679 = vpop.permute.xlu0 %678
    %v681 = vmul.f32 %v646, %v679
    %vm682 = vcmp.gt.s32.totalorder %v83, 1
    %vm683 = vcmp.gt.s32.totalorder %v83, 6
    %v684 = vsel %vm682, 1, 0
    %685 = vset.pattern.permute.xlu0 0
    %686 = vperm.xlu0 %685, %v684
    %v687 = vpop.permute.xlu0 %686
    %vm688 = vcmp.eq.s32.totalorder %v687, 1
    %v689 = vsel %vm688, %v664, 0.0
    %691 = vrot.lane.b32.xlu0 %v689, 80
    %v692 = vpop.permute.xlu0 %691
    %s694 = scalar_lea.vmem [#allocation2], 8
    %695 = vst.msk [vmem:[%s694] sm:$0xff] %vm244, %v692
    %v696 = vsel %vm683, 1, 0
    %697 = vset.pattern.permute.xlu0 0
    %698 = vperm.xlu0 %697, %v696
    %v699 = vpop.permute.xlu0 %698
    %vm700 = vcmp.eq.s32.totalorder %v699, 1
    %v701 = vsel %vm700, %v681, 0.0
    %703 = vrot.lane.b32.xlu0 %v701, 32
    %v704 = vpop.permute.xlu0 %703
    %s706 = scalar_lea.vmem [#allocation2], 48
    %707 = vst.msk [vmem:[%s706] sm:$0xff] %vm470, %v704
    %v708 = vsel %vm688, %v664, %v453
    %v709 = vsel %vm688, %v658, %v472
    %v710 = vsel %vm700, %v681, %v464
    %v711 = vsel %vm700, %v675, %v473
    %s712 = scalar_lea.vmem [#allocation3], 16
    %v713 = vld [vmem:[%s712] sm:$0xff]
    %v714 = vld [vmem:[#allocation9] sm:$0xff]
    %v715 = vld [vmem:[#allocation9 + $0x8] sm:$0xff]
    %717 = vrot.lane.b32.xlu0 %v708, 80
    %v718 = vpop.permute.xlu0 %717
    %v719 = vsel %vm244, %v718, 0
    %721 = vmatprep.subr.mxu0 0.0
    %722 = vmatpush1.msra.mxu0 %v714
    %723 = vmatprep.subr.mxu0 0.0
    %724 = vmatpush1.msra.mxu0 %v715
    %725 = vmatprep.subr.mxu0 0.0
    %726 = vmatpush1.msra.mxu0 0.0
    %727 = vmatprep.subr.mxu0 0.0
    %728 = vmatpush1.msra.mxu0 0.0
    %729 = vmatprep.subr.mxu0 0.0
    %730 = vmatpush1.msra.mxu0 0.0
    %731 = vmatprep.subr.mxu0 0.0
    %732 = vmatpush1.msra.mxu0 0.0
    %733 = vmatprep.subr.mxu0 0.0
    %734 = vmatpush1.msra.mxu0 0.0
    %735 = vmatprep.subr.mxu0 0.0
    %736 = vmatpush1.msra.mxu0 0.0
    %737 = vmatprep.subr.mxu0 0.0
    %738 = vmatpush1.msra.mxu0 0.0
    %739 = vmatprep.subr.mxu0 0.0
    %740 = vmatpush1.msra.mxu0 0.0
    %741 = vmatprep.subr.mxu0 0.0
    %742 = vmatpush1.msra.mxu0 0.0
    %743 = vmatprep.subr.mxu0 0.0
    %744 = vmatpush1.msra.mxu0 0.0
    %745 = vmatprep.subr.mxu0 0.0
    %746 = vmatpush1.msra.mxu0 0.0
    %747 = vmatprep.subr.mxu0 0.0
    %748 = vmatpush1.msra.mxu0 0.0
    %749 = vmatprep.subr.mxu0 0.0
    %750 = vmatpush1.msra.mxu0 0.0
    %751 = vmatprep.subr.mxu0 0.0
    %752 = vmatpush1.msra.mxu0 0.0
    %753 = vmatprep.subr.mxu0 0.0
    %754 = vmatpush1.msra.mxu0 0.0
    %755 = vmatprep.subr.mxu0 0.0
    %756 = vmatpush1.msra.mxu0 0.0
    %757 = vmatprep.subr.mxu0 0.0
    %758 = vmatpush1.msra.mxu0 0.0
    %759 = vmatprep.subr.mxu0 0.0
    %760 = vmatpush1.msra.mxu0 0.0
    %761 = vmatprep.subr.mxu0 0.0
    %762 = vmatpush1.msra.mxu0 0.0
    %763 = vmatprep.subr.mxu0 0.0
    %764 = vmatpush1.msra.mxu0 0.0
    %765 = vmatprep.subr.mxu0 0.0
    %766 = vmatpush1.msra.mxu0 0.0
    %767 = vmatprep.subr.mxu0 0.0
    %768 = vmatpush1.msra.mxu0 0.0
    %769 = vmatprep.subr.mxu0 0.0
    %770 = vmatpush1.msra.mxu0 0.0
    %771 = vmatprep.subr.mxu0 0.0
    %772 = vmatpush1.msra.mxu0 0.0
    %773 = vmatprep.subr.mxu0 0.0
    %774 = vmatpush1.msra.mxu0 0.0
    %775 = vmatprep.subr.mxu0 0.0
    %776 = vmatpush1.msra.mxu0 0.0
    %777 = vmatprep.subr.mxu0 0.0
    %778 = vmatpush1.msra.mxu0 0.0
    %779 = vmatprep.subr.mxu0 0.0
    %780 = vmatpush1.msra.mxu0 0.0
    %781 = vmatprep.subr.mxu0 0.0
    %782 = vmatpush1.msra.mxu0 0.0
    %783 = vmatprep.subr.mxu0 0.0
    %784 = vmatpush1.msra.mxu0 0.0
    %785 = vmatprep.mubr.f32.mxu0 0.0
    %786 = vmatmul.mubr.f32.gmra.mrb[0].mxu0 %v719
    %v787 = vpop.f32.mrb[0].mxu0
    %v788 = vadd.f32 0.0, %v787
    %v789 = vpop.f32.mrb[0].mxu0
    %790 = vdwg.mxu0
    %v791 = vadd.f32 %v713, %v788
    %s792 = scalar_lea.vmem [#allocation3], 40
    %v793 = vld [vmem:[%s792] sm:$0xff]
    %v794 = vld [vmem:[#allocation10] sm:$0xff]
    %v795 = vld [vmem:[#allocation10 + $0x8] sm:$0xff]
    %797 = vrot.lane.b32.xlu0 %v710, 16
    %v798 = vpop.permute.xlu0 %797
    %v799 = vsel %vm244, %v798, 0
    %801 = vmatprep.subr.mxu0 0.0
    %802 = vmatpush1.msra.mxu0 %v794
    %803 = vmatprep.subr.mxu0 0.0
    %804 = vmatpush1.msra.mxu0 %v795
    %805 = vmatprep.subr.mxu0 0.0
    %806 = vmatpush1.msra.mxu0 0.0
    %807 = vmatprep.subr.mxu0 0.0
    %808 = vmatpush1.msra.mxu0 0.0
    %809 = vmatprep.subr.mxu0 0.0
    %810 = vmatpush1.msra.mxu0 0.0
    %811 = vmatprep.subr.mxu0 0.0
    %812 = vmatpush1.msra.mxu0 0.0
    %813 = vmatprep.subr.mxu0 0.0
    %814 = vmatpush1.msra.mxu0 0.0
    %815 = vmatprep.subr.mxu0 0.0
    %816 = vmatpush1.msra.mxu0 0.0
    %817 = vmatprep.subr.mxu0 0.0
    %818 = vmatpush1.msra.mxu0 0.0
    %819 = vmatprep.subr.mxu0 0.0
    %820 = vmatpush1.msra.mxu0 0.0
    %821 = vmatprep.subr.mxu0 0.0
    %822 = vmatpush1.msra.mxu0 0.0
    %823 = vmatprep.subr.mxu0 0.0
    %824 = vmatpush1.msra.mxu0 0.0
    %825 = vmatprep.subr.mxu0 0.0
    %826 = vmatpush1.msra.mxu0 0.0
    %827 = vmatprep.subr.mxu0 0.0
    %828 = vmatpush1.msra.mxu0 0.0
    %829 = vmatprep.subr.mxu0 0.0
    %830 = vmatpush1.msra.mxu0 0.0
    %831 = vmatprep.subr.mxu0 0.0
    %832 = vmatpush1.msra.mxu0 0.0
    %833 = vmatprep.subr.mxu0 0.0
    %834 = vmatpush1.msra.mxu0 0.0
    %835 = vmatprep.subr.mxu0 0.0
    %836 = vmatpush1.msra.mxu0 0.0
    %837 = vmatprep.subr.mxu0 0.0
    %838 = vmatpush1.msra.mxu0 0.0
    %839 = vmatprep.subr.mxu0 0.0
    %840 = vmatpush1.msra.mxu0 0.0
    %841 = vmatprep.subr.mxu0 0.0
    %842 = vmatpush1.msra.mxu0 0.0
    %843 = vmatprep.subr.mxu0 0.0
    %844 = vmatpush1.msra.mxu0 0.0
    %845 = vmatprep.subr.mxu0 0.0
    %846 = vmatpush1.msra.mxu0 0.0
    %847 = vmatprep.subr.mxu0 0.0
    %848 = vmatpush1.msra.mxu0 0.0
    %849 = vmatprep.subr.mxu0 0.0
    %850 = vmatpush1.msra.mxu0 0.0
    %851 = vmatprep.subr.mxu0 0.0
    %852 = vmatpush1.msra.mxu0 0.0
    %853 = vmatprep.subr.mxu0 0.0
    %854 = vmatpush1.msra.mxu0 0.0
    %855 = vmatprep.subr.mxu0 0.0
    %856 = vmatpush1.msra.mxu0 0.0
    %857 = vmatprep.subr.mxu0 0.0
    %858 = vmatpush1.msra.mxu0 0.0
    %859 = vmatprep.subr.mxu0 0.0
    %860 = vmatpush1.msra.mxu0 0.0
    %861 = vmatprep.subr.mxu0 0.0
    %862 = vmatpush1.msra.mxu0 0.0
    %863 = vmatprep.subr.mxu0 0.0
    %864 = vmatpush1.msra.mxu0 0.0
    %865 = vmatprep.mubr.f32.mxu0 0.0
    %866 = vmatmul.mubr.f32.gmra.mrb[0].mxu0 %v799
    %v867 = vpop.f32.mrb[0].mxu0
    %v868 = vadd.f32 0.0, %v867
    %v869 = vpop.f32.mrb[0].mxu0
    %870 = vdwg.mxu0
    %872 = vrot.lane.b32.xlu0 %v868, 64
    %v873 = vpop.permute.xlu0 %872
    %v875 = vadd.f32 %v793, %v873
    %v876 = vxor.u32 %v791, 2147483648
    %v877 = vmul.f32 %v876, 1.442695
    %v878 = vpow.pop %v877
    %v879 = vadd.f32 %v878, 1.0
    %v880 = vrcp.pop %v879
    %v881 = vmul.f32 1.0, %v880
    %v882 = vtanh.pop %v791
    %v883 = vxor.u32 %v875, 2147483648
    %v884 = vmul.f32 %v883, 1.442695
    %v885 = vpow.pop %v884
    %v886 = vadd.f32 %v885, 1.0
    %v887 = vrcp.pop %v886
    %v888 = vmul.f32 1.0, %v887
    %v889 = vtanh.pop %v875
    %v890 = vmul.f32 %v881, %v709
    %892 = vrot.lane.b32.xlu0 %v882, 96
    %v893 = vpop.permute.xlu0 %892
    %v895 = vmul.f32 %v881, %v893
    %897 = vrot.lane.b32.xlu0 %v895, 16
    %v898 = vpop.permute.xlu0 %897
    %v900 = vadd.f32 %v890, %v898
    %v901 = vtanh.pop %v900
    %903 = vrot.lane.b32.xlu0 %v901, 32
    %v904 = vpop.permute.xlu0 %903
    %v906 = vmul.f32 %v881, %v904
    %v907 = vmul.f32 %v888, %v711
    %909 = vrot.lane.b32.xlu0 %v889, 96
    %v910 = vpop.permute.xlu0 %909
    %v912 = vmul.f32 %v888, %v910
    %914 = vrot.lane.b32.xlu0 %v912, 16
    %v915 = vpop.permute.xlu0 %914
    %v917 = vadd.f32 %v907, %v915
    %v918 = vtanh.pop %v917
    %920 = vrot.lane.b32.xlu0 %v918, 32
    %v921 = vpop.permute.xlu0 %920
    %v923 = vmul.f32 %v888, %v921
    %vm924 = vcmp.gt.s32.totalorder %v83, 2
    %vm925 = vcmp.gt.s32.totalorder %v83, 5
    %v926 = vsel %vm924, 1, 0
    %927 = vset.pattern.permute.xlu0 0
    %928 = vperm.xlu0 %927, %v926
    %v929 = vpop.permute.xlu0 %928
    %vm930 = vcmp.eq.s32.totalorder %v929, 1
    %v931 = vsel %vm930, %v906, 0.0
    %933 = vrot.lane.b32.xlu0 %v931, 80
    %v934 = vpop.permute.xlu0 %933
    %s936 = scalar_lea.vmem [#allocation2], 16
    %937 = vst.msk [vmem:[%s936] sm:$0xff] %vm244, %v934
    %v938 = vsel %vm925, 1, 0
    %939 = vset.pattern.permute.xlu0 0
    %940 = vperm.xlu0 %939, %v938
    %v941 = vpop.permute.xlu0 %940
    %vm942 = vcmp.eq.s32.totalorder %v941, 1
    %v943 = vsel %vm942, %v923, 0.0
    %945 = vrot.lane.b32.xlu0 %v943, 32
    %v946 = vpop.permute.xlu0 %945
    %s948 = scalar_lea.vmem [#allocation2], 40
    %949 = vst.msk [vmem:[%s948] sm:$0xff] %vm470, %v946
    %v950 = vsel %vm930, %v906, %v708
    %v951 = vsel %vm930, %v900, %v709
    %v952 = vsel %vm942, %v923, %v710
    %v953 = vsel %vm942, %v917, %v711
    %s954 = scalar_lea.vmem [#allocation3], 24
    %v955 = vld [vmem:[%s954] sm:$0xff]
    %v956 = vld [vmem:[#allocation9] sm:$0xff]
    %v957 = vld [vmem:[#allocation9 + $0x8] sm:$0xff]
    %959 = vrot.lane.b32.xlu0 %v950, 80
    %v960 = vpop.permute.xlu0 %959
    %v961 = vsel %vm244, %v960, 0
    %963 = vmatprep.subr.mxu0 0.0
    %964 = vmatpush1.msra.mxu0 %v956
    %965 = vmatprep.subr.mxu0 0.0
    %966 = vmatpush1.msra.mxu0 %v957
    %967 = vmatprep.subr.mxu0 0.0
    %968 = vmatpush1.msra.mxu0 0.0
    %969 = vmatprep.subr.mxu0 0.0
    %970 = vmatpush1.msra.mxu0 0.0
    %971 = vmatprep.subr.mxu0 0.0
    %972 = vmatpush1.msra.mxu0 0.0
    %973 = vmatprep.subr.mxu0 0.0
    %974 = vmatpush1.msra.mxu0 0.0
    %975 = vmatprep.subr.mxu0 0.0
    %976 = vmatpush1.msra.mxu0 0.0
    %977 = vmatprep.subr.mxu0 0.0
    %978 = vmatpush1.msra.mxu0 0.0
    %979 = vmatprep.subr.mxu0 0.0
    %980 = vmatpush1.msra.mxu0 0.0
    %981 = vmatprep.subr.mxu0 0.0
    %982 = vmatpush1.msra.mxu0 0.0
    %983 = vmatprep.subr.mxu0 0.0
    %984 = vmatpush1.msra.mxu0 0.0
    %985 = vmatprep.subr.mxu0 0.0
    %986 = vmatpush1.msra.mxu0 0.0
    %987 = vmatprep.subr.mxu0 0.0
    %988 = vmatpush1.msra.mxu0 0.0
    %989 = vmatprep.subr.mxu0 0.0
    %990 = vmatpush1.msra.mxu0 0.0
    %991 = vmatprep.subr.mxu0 0.0
    %992 = vmatpush1.msra.mxu0 0.0
    %993 = vmatprep.subr.mxu0 0.0
    %994 = vmatpush1.msra.mxu0 0.0
    %995 = vmatprep.subr.mxu0 0.0
    %996 = vmatpush1.msra.mxu0 0.0
    %997 = vmatprep.subr.mxu0 0.0
    %998 = vmatpush1.msra.mxu0 0.0
    %999 = vmatprep.subr.mxu0 0.0
    %1000 = vmatpush1.msra.mxu0 0.0
    %1001 = vmatprep.subr.mxu0 0.0
    %1002 = vmatpush1.msra.mxu0 0.0
    %1003 = vmatprep.subr.mxu0 0.0
    %1004 = vmatpush1.msra.mxu0 0.0
    %1005 = vmatprep.subr.mxu0 0.0
    %1006 = vmatpush1.msra.mxu0 0.0
    %1007 = vmatprep.subr.mxu0 0.0
    %1008 = vmatpush1.msra.mxu0 0.0
    %1009 = vmatprep.subr.mxu0 0.0
    %1010 = vmatpush1.msra.mxu0 0.0
    %1011 = vmatprep.subr.mxu0 0.0
    %1012 = vmatpush1.msra.mxu0 0.0
    %1013 = vmatprep.subr.mxu0 0.0
    %1014 = vmatpush1.msra.mxu0 0.0
    %1015 = vmatprep.subr.mxu0 0.0
    %1016 = vmatpush1.msra.mxu0 0.0
    %1017 = vmatprep.subr.mxu0 0.0
    %1018 = vmatpush1.msra.mxu0 0.0
    %1019 = vmatprep.subr.mxu0 0.0
    %1020 = vmatpush1.msra.mxu0 0.0
    %1021 = vmatprep.subr.mxu0 0.0
    %1022 = vmatpush1.msra.mxu0 0.0
    %1023 = vmatprep.subr.mxu0 0.0
    %1024 = vmatpush1.msra.mxu0 0.0
    %1025 = vmatprep.subr.mxu0 0.0
    %1026 = vmatpush1.msra.mxu0 0.0
    %1027 = vmatprep.mubr.f32.mxu0 0.0
    %1028 = vmatmul.mubr.f32.gmra.mrb[0].mxu0 %v961
    %v1029 = vpop.f32.mrb[0].mxu0
    %v1030 = vadd.f32 0.0, %v1029
    %v1031 = vpop.f32.mrb[0].mxu0
    %1032 = vdwg.mxu0
    %v1033 = vadd.f32 %v955, %v1030
    %s1034 = scalar_lea.vmem [#allocation3], 32
    %v1035 = vld [vmem:[%s1034] sm:$0xff]
    %v1036 = vld [vmem:[#allocation10] sm:$0xff]
    %v1037 = vld [vmem:[#allocation10 + $0x8] sm:$0xff]
    %1039 = vrot.lane.b32.xlu0 %v952, 16
    %v1040 = vpop.permute.xlu0 %1039
    %v1041 = vsel %vm244, %v1040, 0
    %1043 = vmatprep.subr.mxu0 0.0
    %1044 = vmatpush1.msra.mxu0 %v1036
    %1045 = vmatprep.subr.mxu0 0.0
    %1046 = vmatpush1.msra.mxu0 %v1037
    %1047 = vmatprep.subr.mxu0 0.0
    %1048 = vmatpush1.msra.mxu0 0.0
    %1049 = vmatprep.subr.mxu0 0.0
    %1050 = vmatpush1.msra.mxu0 0.0
    %1051 = vmatprep.subr.mxu0 0.0
    %1052 = vmatpush1.msra.mxu0 0.0
    %1053 = vmatprep.subr.mxu0 0.0
    %1054 = vmatpush1.msra.mxu0 0.0
    %1055 = vmatprep.subr.mxu0 0.0
    %1056 = vmatpush1.msra.mxu0 0.0
    %1057 = vmatprep.subr.mxu0 0.0
    %1058 = vmatpush1.msra.mxu0 0.0
    %1059 = vmatprep.subr.mxu0 0.0
    %1060 = vmatpush1.msra.mxu0 0.0
    %1061 = vmatprep.subr.mxu0 0.0
    %1062 = vmatpush1.msra.mxu0 0.0
    %1063 = vmatprep.subr.mxu0 0.0
    %1064 = vmatpush1.msra.mxu0 0.0
    %1065 = vmatprep.subr.mxu0 0.0
    %1066 = vmatpush1.msra.mxu0 0.0
    %1067 = vmatprep.subr.mxu0 0.0
    %1068 = vmatpush1.msra.mxu0 0.0
    %1069 = vmatprep.subr.mxu0 0.0
    %1070 = vmatpush1.msra.mxu0 0.0
    %1071 = vmatprep.subr.mxu0 0.0
    %1072 = vmatpush1.msra.mxu0 0.0
    %1073 = vmatprep.subr.mxu0 0.0
    %1074 = vmatpush1.msra.mxu0 0.0
    %1075 = vmatprep.subr.mxu0 0.0
    %1076 = vmatpush1.msra.mxu0 0.0
    %1077 = vmatprep.subr.mxu0 0.0
    %1078 = vmatpush1.msra.mxu0 0.0
    %1079 = vmatprep.subr.mxu0 0.0
    %1080 = vmatpush1.msra.mxu0 0.0
    %1081 = vmatprep.subr.mxu0 0.0
    %1082 = vmatpush1.msra.mxu0 0.0
    %1083 = vmatprep.subr.mxu0 0.0
    %1084 = vmatpush1.msra.mxu0 0.0
    %1085 = vmatprep.subr.mxu0 0.0
    %1086 = vmatpush1.msra.mxu0 0.0
    %1087 = vmatprep.subr.mxu0 0.0
    %1088 = vmatpush1.msra.mxu0 0.0
    %1089 = vmatprep.subr.mxu0 0.0
    %1090 = vmatpush1.msra.mxu0 0.0
    %1091 = vmatprep.subr.mxu0 0.0
    %1092 = vmatpush1.msra.mxu0 0.0
    %1093 = vmatprep.subr.mxu0 0.0
    %1094 = vmatpush1.msra.mxu0 0.0
    %1095 = vmatprep.subr.mxu0 0.0
    %1096 = vmatpush1.msra.mxu0 0.0
    %1097 = vmatprep.subr.mxu0 0.0
    %1098 = vmatpush1.msra.mxu0 0.0
    %1099 = vmatprep.subr.mxu0 0.0
    %1100 = vmatpush1.msra.mxu0 0.0
    %1101 = vmatprep.subr.mxu0 0.0
    %1102 = vmatpush1.msra.mxu0 0.0
    %1103 = vmatprep.subr.mxu0 0.0
    %1104 = vmatpush1.msra.mxu0 0.0
    %1105 = vmatprep.subr.mxu0 0.0
    %1106 = vmatpush1.msra.mxu0 0.0
    %1107 = vmatprep.mubr.f32.mxu0 0.0
    %1108 = vmatmul.mubr.f32.gmra.mrb[0].mxu0 %v1041
    %v1109 = vpop.f32.mrb[0].mxu0
    %v1110 = vadd.f32 0.0, %v1109
    %v1111 = vpop.f32.mrb[0].mxu0
    %1112 = vdwg.mxu0
    %1114 = vrot.lane.b32.xlu0 %v1110, 64
    %v1115 = vpop.permute.xlu0 %1114
    %v1117 = vadd.f32 %v1035, %v1115
    %v1118 = vxor.u32 %v1033, 2147483648
    %v1119 = vmul.f32 %v1118, 1.442695
    %v1120 = vpow.pop %v1119
    %v1121 = vadd.f32 %v1120, 1.0
    %v1122 = vrcp.pop %v1121
    %v1123 = vmul.f32 1.0, %v1122
    %v1124 = vtanh.pop %v1033
    %v1125 = vxor.u32 %v1117, 2147483648
    %v1126 = vmul.f32 %v1125, 1.442695
    %v1127 = vpow.pop %v1126
    %v1128 = vadd.f32 %v1127, 1.0
    %v1129 = vrcp.pop %v1128
    %v1130 = vmul.f32 1.0, %v1129
    %v1131 = vtanh.pop %v1117
    %v1132 = vmul.f32 %v1123, %v951
    %1134 = vrot.lane.b32.xlu0 %v1124, 96
    %v1135 = vpop.permute.xlu0 %1134
    %v1137 = vmul.f32 %v1123, %v1135
    %1139 = vrot.lane.b32.xlu0 %v1137, 16
    %v1140 = vpop.permute.xlu0 %1139
    %v1142 = vadd.f32 %v1132, %v1140
    %v1143 = vtanh.pop %v1142
    %1145 = vrot.lane.b32.xlu0 %v1143, 32
    %v1146 = vpop.permute.xlu0 %1145
    %v1148 = vmul.f32 %v1123, %v1146
    %v1149 = vmul.f32 %v1130, %v953
    %1151 = vrot.lane.b32.xlu0 %v1131, 96
    %v1152 = vpop.permute.xlu0 %1151
    %v1154 = vmul.f32 %v1130, %v1152
    %1156 = vrot.lane.b32.xlu0 %v1154, 16
    %v1157 = vpop.permute.xlu0 %1156
    %v1159 = vadd.f32 %v1149, %v1157
    %v1160 = vtanh.pop %v1159
    %1162 = vrot.lane.b32.xlu0 %v1160, 32
    %v1163 = vpop.permute.xlu0 %1162
    %v1165 = vmul.f32 %v1130, %v1163
    %vm1166 = vcmp.gt.s32.totalorder %v83, 3
    %vm1167 = vcmp.gt.s32.totalorder %v83, 4
    %v1168 = vsel %vm1166, 1, 0
    %1169 = vset.pattern.permute.xlu0 0
    %1170 = vperm.xlu0 %1169, %v1168
    %v1171 = vpop.permute.xlu0 %1170
    %vm1172 = vcmp.eq.s32.totalorder %v1171, 1
    %v1173 = vsel %vm1172, %v1148, 0.0
    %1175 = vrot.lane.b32.xlu0 %v1173, 80
    %v1176 = vpop.permute.xlu0 %1175
    %s1178 = scalar_lea.vmem [#allocation2], 24
    %1179 = vst.msk [vmem:[%s1178] sm:$0xff] %vm244, %v1176
    %v1180 = vsel %vm1167, 1, 0
    %1181 = vset.pattern.permute.xlu0 0
    %1182 = vperm.xlu0 %1181, %v1180
    %v1183 = vpop.permute.xlu0 %1182
    %vm1184 = vcmp.eq.s32.totalorder %v1183, 1
    %v1185 = vsel %vm1184, %v1165, 0.0
    %1187 = vrot.lane.b32.xlu0 %v1185, 32
    %v1188 = vpop.permute.xlu0 %1187
    %s1190 = scalar_lea.vmem [#allocation2], 32
    %1191 = vst.msk [vmem:[%s1190] sm:$0xff] %vm470, %v1188
    %v1192 = vsel %vm1172, %v1148, %v950
    %v1193 = vsel %vm1172, %v1142, %v951
    %v1194 = vsel %vm1184, %v1165, %v952
    %v1195 = vsel %vm1184, %v1159, %v953
    %v1196 = vld [vmem:[%s1034] sm:$0xff]
    %v1197 = vld [vmem:[#allocation9] sm:$0xff]
    %v1198 = vld [vmem:[#allocation9 + $0x8] sm:$0xff]
    %1200 = vrot.lane.b32.xlu0 %v1192, 80
    %v1201 = vpop.permute.xlu0 %1200
    %v1202 = vsel %vm244, %v1201, 0
    %1204 = vmatprep.subr.mxu0 0.0
    %1205 = vmatpush1.msra.mxu0 %v1197
    %1206 = vmatprep.subr.mxu0 0.0
    %1207 = vmatpush1.msra.mxu0 %v1198
    %1208 = vmatprep.subr.mxu0 0.0
    %1209 = vmatpush1.msra.mxu0 0.0
    %1210 = vmatprep.subr.mxu0 0.0
    %1211 = vmatpush1.msra.mxu0 0.0
    %1212 = vmatprep.subr.mxu0 0.0
    %1213 = vmatpush1.msra.mxu0 0.0
    %1214 = vmatprep.subr.mxu0 0.0
    %1215 = vmatpush1.msra.mxu0 0.0
    %1216 = vmatprep.subr.mxu0 0.0
    %1217 = vmatpush1.msra.mxu0 0.0
    %1218 = vmatprep.subr.mxu0 0.0
    %1219 = vmatpush1.msra.mxu0 0.0
    %1220 = vmatprep.subr.mxu0 0.0
    %1221 = vmatpush1.msra.mxu0 0.0
    %1222 = vmatprep.subr.mxu0 0.0
    %1223 = vmatpush1.msra.mxu0 0.0
    %1224 = vmatprep.subr.mxu0 0.0
    %1225 = vmatpush1.msra.mxu0 0.0
    %1226 = vmatprep.subr.mxu0 0.0
    %1227 = vmatpush1.msra.mxu0 0.0
    %1228 = vmatprep.subr.mxu0 0.0
    %1229 = vmatpush1.msra.mxu0 0.0
    %1230 = vmatprep.subr.mxu0 0.0
    %1231 = vmatpush1.msra.mxu0 0.0
    %1232 = vmatprep.subr.mxu0 0.0
    %1233 = vmatpush1.msra.mxu0 0.0
    %1234 = vmatprep.subr.mxu0 0.0
    %1235 = vmatpush1.msra.mxu0 0.0
    %1236 = vmatprep.subr.mxu0 0.0
    %1237 = vmatpush1.msra.mxu0 0.0
    %1238 = vmatprep.subr.mxu0 0.0
    %1239 = vmatpush1.msra.mxu0 0.0
    %1240 = vmatprep.subr.mxu0 0.0
    %1241 = vmatpush1.msra.mxu0 0.0
    %1242 = vmatprep.subr.mxu0 0.0
    %1243 = vmatpush1.msra.mxu0 0.0
    %1244 = vmatprep.subr.mxu0 0.0
    %1245 = vmatpush1.msra.mxu0 0.0
    %1246 = vmatprep.subr.mxu0 0.0
    %1247 = vmatpush1.msra.mxu0 0.0
    %1248 = vmatprep.subr.mxu0 0.0
    %1249 = vmatpush1.msra.mxu0 0.0
    %1250 = vmatprep.subr.mxu0 0.0
    %1251 = vmatpush1.msra.mxu0 0.0
    %1252 = vmatprep.subr.mxu0 0.0
    %1253 = vmatpush1.msra.mxu0 0.0
    %1254 = vmatprep.subr.mxu0 0.0
    %1255 = vmatpush1.msra.mxu0 0.0
    %1256 = vmatprep.subr.mxu0 0.0
    %1257 = vmatpush1.msra.mxu0 0.0
    %1258 = vmatprep.subr.mxu0 0.0
    %1259 = vmatpush1.msra.mxu0 0.0
    %1260 = vmatprep.subr.mxu0 0.0
    %1261 = vmatpush1.msra.mxu0 0.0
    %1262 = vmatprep.subr.mxu0 0.0
    %1263 = vmatpush1.msra.mxu0 0.0
    %1264 = vmatprep.subr.mxu0 0.0
    %1265 = vmatpush1.msra.mxu0 0.0
    %1266 = vmatprep.subr.mxu0 0.0
    %1267 = vmatpush1.msra.mxu0 0.0
    %1268 = vmatprep.mubr.f32.mxu0 0.0
    %1269 = vmatmul.mubr.f32.gmra.mrb[0].mxu0 %v1202
    %v1270 = vpop.f32.mrb[0].mxu0
    %v1271 = vadd.f32 0.0, %v1270
    %v1272 = vpop.f32.mrb[0].mxu0
    %1273 = vdwg.mxu0
    %v1274 = vadd.f32 %v1196, %v1271
    %v1275 = vld [vmem:[%s954] sm:$0xff]
    %v1276 = vld [vmem:[#allocation10] sm:$0xff]
    %v1277 = vld [vmem:[#allocation10 + $0x8] sm:$0xff]
    %1279 = vrot.lane.b32.xlu0 %v1194, 16
    %v1280 = vpop.permute.xlu0 %1279
    %v1281 = vsel %vm244, %v1280, 0
    %1283 = vmatprep.subr.mxu0 0.0
    %1284 = vmatpush1.msra.mxu0 %v1276
    %1285 = vmatprep.subr.mxu0 0.0
    %1286 = vmatpush1.msra.mxu0 %v1277
    %1287 = vmatprep.subr.mxu0 0.0
    %1288 = vmatpush1.msra.mxu0 0.0
    %1289 = vmatprep.subr.mxu0 0.0
    %1290 = vmatpush1.msra.mxu0 0.0
    %1291 = vmatprep.subr.mxu0 0.0
    %1292 = vmatpush1.msra.mxu0 0.0
    %1293 = vmatprep.subr.mxu0 0.0
    %1294 = vmatpush1.msra.mxu0 0.0
    %1295 = vmatprep.subr.mxu0 0.0
    %1296 = vmatpush1.msra.mxu0 0.0
    %1297 = vmatprep.subr.mxu0 0.0
    %1298 = vmatpush1.msra.mxu0 0.0
    %1299 = vmatprep.subr.mxu0 0.0
    %1300 = vmatpush1.msra.mxu0 0.0
    %1301 = vmatprep.subr.mxu0 0.0
    %1302 = vmatpush1.msra.mxu0 0.0
    %1303 = vmatprep.subr.mxu0 0.0
    %1304 = vmatpush1.msra.mxu0 0.0
    %1305 = vmatprep.subr.mxu0 0.0
    %1306 = vmatpush1.msra.mxu0 0.0
    %1307 = vmatprep.subr.mxu0 0.0
    %1308 = vmatpush1.msra.mxu0 0.0
    %1309 = vmatprep.subr.mxu0 0.0
    %1310 = vmatpush1.msra.mxu0 0.0
    %1311 = vmatprep.subr.mxu0 0.0
    %1312 = vmatpush1.msra.mxu0 0.0
    %1313 = vmatprep.subr.mxu0 0.0
    %1314 = vmatpush1.msra.mxu0 0.0
    %1315 = vmatprep.subr.mxu0 0.0
    %1316 = vmatpush1.msra.mxu0 0.0
    %1317 = vmatprep.subr.mxu0 0.0
    %1318 = vmatpush1.msra.mxu0 0.0
    %1319 = vmatprep.subr.mxu0 0.0
    %1320 = vmatpush1.msra.mxu0 0.0
    %1321 = vmatprep.subr.mxu0 0.0
    %1322 = vmatpush1.msra.mxu0 0.0
    %1323 = vmatprep.subr.mxu0 0.0
    %1324 = vmatpush1.msra.mxu0 0.0
    %1325 = vmatprep.subr.mxu0 0.0
    %1326 = vmatpush1.msra.mxu0 0.0
    %1327 = vmatprep.subr.mxu0 0.0
    %1328 = vmatpush1.msra.mxu0 0.0
    %1329 = vmatprep.subr.mxu0 0.0
    %1330 = vmatpush1.msra.mxu0 0.0
    %1331 = vmatprep.subr.mxu0 0.0
    %1332 = vmatpush1.msra.mxu0 0.0
    %1333 = vmatprep.subr.mxu0 0.0
    %1334 = vmatpush1.msra.mxu0 0.0
    %1335 = vmatprep.subr.mxu0 0.0
    %1336 = vmatpush1.msra.mxu0 0.0
    %1337 = vmatprep.subr.mxu0 0.0
    %1338 = vmatpush1.msra.mxu0 0.0
    %1339 = vmatprep.subr.mxu0 0.0
    %1340 = vmatpush1.msra.mxu0 0.0
    %1341 = vmatprep.subr.mxu0 0.0
    %1342 = vmatpush1.msra.mxu0 0.0
    %1343 = vmatprep.subr.mxu0 0.0
    %1344 = vmatpush1.msra.mxu0 0.0
    %1345 = vmatprep.subr.mxu0 0.0
    %1346 = vmatpush1.msra.mxu0 0.0
    %1347 = vmatprep.mubr.f32.mxu0 0.0
    %1348 = vmatmul.mubr.f32.gmra.mrb[0].mxu0 %v1281
    %v1349 = vpop.f32.mrb[0].mxu0
    %v1350 = vadd.f32 0.0, %v1349
    %v1351 = vpop.f32.mrb[0].mxu0
    %1352 = vdwg.mxu0
    %1354 = vrot.lane.b32.xlu0 %v1350, 64
    %v1355 = vpop.permute.xlu0 %1354
    %v1357 = vadd.f32 %v1275, %v1355
    %v1358 = vxor.u32 %v1274, 2147483648
    %v1359 = vmul.f32 %v1358, 1.442695
    %v1360 = vpow.pop %v1359
    %v1361 = vadd.f32 %v1360, 1.0
    %v1362 = vrcp.pop %v1361
    %v1363 = vmul.f32 1.0, %v1362
    %v1364 = vtanh.pop %v1274
    %v1365 = vxor.u32 %v1357, 2147483648
    %v1366 = vmul.f32 %v1365, 1.442695
    %v1367 = vpow.pop %v1366
    %v1368 = vadd.f32 %v1367, 1.0
    %v1369 = vrcp.pop %v1368
    %v1370 = vmul.f32 1.0, %v1369
    %v1371 = vtanh.pop %v1357
    %v1372 = vmul.f32 %v1363, %v1193
    %1374 = vrot.lane.b32.xlu0 %v1364, 96
    %v1375 = vpop.permute.xlu0 %1374
    %v1377 = vmul.f32 %v1363, %v1375
    %1379 = vrot.lane.b32.xlu0 %v1377, 16
    %v1380 = vpop.permute.xlu0 %1379
    %v1382 = vadd.f32 %v1372, %v1380
    %v1383 = vtanh.pop %v1382
    %1385 = vrot.lane.b32.xlu0 %v1383, 32
    %v1386 = vpop.permute.xlu0 %1385
    %v1388 = vmul.f32 %v1363, %v1386
    %v1389 = vmul.f32 %v1370, %v1195
    %1391 = vrot.lane.b32.xlu0 %v1371, 96
    %v1392 = vpop.permute.xlu0 %1391
    %v1394 = vmul.f32 %v1370, %v1392
    %1396 = vrot.lane.b32.xlu0 %v1394, 16
    %v1397 = vpop.permute.xlu0 %1396
    %v1399 = vadd.f32 %v1389, %v1397
    %v1400 = vtanh.pop %v1399
    %1402 = vrot.lane.b32.xlu0 %v1400, 32
    %v1403 = vpop.permute.xlu0 %1402
    %v1405 = vmul.f32 %v1370, %v1403
    %v1406 = vsel %vm1184, %v1388, 0.0
    %1408 = vrot.lane.b32.xlu0 %v1406, 80
    %v1409 = vpop.permute.xlu0 %1408
    %1411 = vst.msk [vmem:[%s1190] sm:$0xff] %vm244, %v1409
    %v1412 = vsel %vm1172, %v1405, 0.0
    %1414 = vrot.lane.b32.xlu0 %v1412, 32
    %v1415 = vpop.permute.xlu0 %1414
    %1417 = vst.msk [vmem:[%s1178] sm:$0xff] %vm470, %v1415
    %v1418 = vsel %vm1184, %v1388, %v1192
    %v1419 = vsel %vm1184, %v1382, %v1193
    %v1420 = vsel %vm1172, %v1405, %v1194
    %v1421 = vsel %vm1172, %v1399, %v1195
    %v1422 = vld [vmem:[%s792] sm:$0xff]
    %v1423 = vld [vmem:[#allocation9] sm:$0xff]
    %v1424 = vld [vmem:[#allocation9 + $0x8] sm:$0xff]
    %1426 = vrot.lane.b32.xlu0 %v1418, 80
    %v1427 = vpop.permute.xlu0 %1426
    %v1428 = vsel %vm244, %v1427, 0
    %1430 = vmatprep.subr.mxu0 0.0
    %1431 = vmatpush1.msra.mxu0 %v1423
    %1432 = vmatprep.subr.mxu0 0.0
    %1433 = vmatpush1.msra.mxu0 %v1424
    %1434 = vmatprep.subr.mxu0 0.0
    %1435 = vmatpush1.msra.mxu0 0.0
    %1436 = vmatprep.subr.mxu0 0.0
    %1437 = vmatpush1.msra.mxu0 0.0
    %1438 = vmatprep.subr.mxu0 0.0
    %1439 = vmatpush1.msra.mxu0 0.0
    %1440 = vmatprep.subr.mxu0 0.0
    %1441 = vmatpush1.msra.mxu0 0.0
    %1442 = vmatprep.subr.mxu0 0.0
    %1443 = vmatpush1.msra.mxu0 0.0
    %1444 = vmatprep.subr.mxu0 0.0
    %1445 = vmatpush1.msra.mxu0 0.0
    %1446 = vmatprep.subr.mxu0 0.0
    %1447 = vmatpush1.msra.mxu0 0.0
    %1448 = vmatprep.subr.mxu0 0.0
    %1449 = vmatpush1.msra.mxu0 0.0
    %1450 = vmatprep.subr.mxu0 0.0
    %1451 = vmatpush1.msra.mxu0 0.0
    %1452 = vmatprep.subr.mxu0 0.0
    %1453 = vmatpush1.msra.mxu0 0.0
    %1454 = vmatprep.subr.mxu0 0.0
    %1455 = vmatpush1.msra.mxu0 0.0
    %1456 = vmatprep.subr.mxu0 0.0
    %1457 = vmatpush1.msra.mxu0 0.0
    %1458 = vmatprep.subr.mxu0 0.0
    %1459 = vmatpush1.msra.mxu0 0.0
    %1460 = vmatprep.subr.mxu0 0.0
    %1461 = vmatpush1.msra.mxu0 0.0
    %1462 = vmatprep.subr.mxu0 0.0
    %1463 = vmatpush1.msra.mxu0 0.0
    %1464 = vmatprep.subr.mxu0 0.0
    %1465 = vmatpush1.msra.mxu0 0.0
    %1466 = vmatprep.subr.mxu0 0.0
    %1467 = vmatpush1.msra.mxu0 0.0
    %1468 = vmatprep.subr.mxu0 0.0
    %1469 = vmatpush1.msra.mxu0 0.0
    %1470 = vmatprep.subr.mxu0 0.0
    %1471 = vmatpush1.msra.mxu0 0.0
    %1472 = vmatprep.subr.mxu0 0.0
    %1473 = vmatpush1.msra.mxu0 0.0
    %1474 = vmatprep.subr.mxu0 0.0
    %1475 = vmatpush1.msra.mxu0 0.0
    %1476 = vmatprep.subr.mxu0 0.0
    %1477 = vmatpush1.msra.mxu0 0.0
    %1478 = vmatprep.subr.mxu0 0.0
    %1479 = vmatpush1.msra.mxu0 0.0
    %1480 = vmatprep.subr.mxu0 0.0
    %1481 = vmatpush1.msra.mxu0 0.0
    %1482 = vmatprep.subr.mxu0 0.0
    %1483 = vmatpush1.msra.mxu0 0.0
    %1484 = vmatprep.subr.mxu0 0.0
    %1485 = vmatpush1.msra.mxu0 0.0
    %1486 = vmatprep.subr.mxu0 0.0
    %1487 = vmatpush1.msra.mxu0 0.0
    %1488 = vmatprep.subr.mxu0 0.0
    %1489 = vmatpush1.msra.mxu0 0.0
    %1490 = vmatprep.subr.mxu0 0.0
    %1491 = vmatpush1.msra.mxu0 0.0
    %1492 = vmatprep.subr.mxu0 0.0
    %1493 = vmatpush1.msra.mxu0 0.0
    %1494 = vmatprep.mubr.f32.mxu0 0.0
    %1495 = vmatmul.mubr.f32.gmra.mrb[0].mxu0 %v1428
    %v1496 = vpop.f32.mrb[0].mxu0
    %v1497 = vadd.f32 0.0, %v1496
    %v1498 = vpop.f32.mrb[0].mxu0
    %1499 = vdwg.mxu0
    %v1500 = vadd.f32 %v1422, %v1497
    %v1501 = vld [vmem:[%s712] sm:$0xff]
    %v1502 = vld [vmem:[#allocation10] sm:$0xff]
    %v1503 = vld [vmem:[#allocation10 + $0x8] sm:$0xff]
    %1505 = vrot.lane.b32.xlu0 %v1420, 16
    %v1506 = vpop.permute.xlu0 %1505
    %v1507 = vsel %vm244, %v1506, 0
    %1509 = vmatprep.subr.mxu0 0.0
    %1510 = vmatpush1.msra.mxu0 %v1502
    %1511 = vmatprep.subr.mxu0 0.0
    %1512 = vmatpush1.msra.mxu0 %v1503
    %1513 = vmatprep.subr.mxu0 0.0
    %1514 = vmatpush1.msra.mxu0 0.0
    %1515 = vmatprep.subr.mxu0 0.0
    %1516 = vmatpush1.msra.mxu0 0.0
    %1517 = vmatprep.subr.mxu0 0.0
    %1518 = vmatpush1.msra.mxu0 0.0
    %1519 = vmatprep.subr.mxu0 0.0
    %1520 = vmatpush1.msra.mxu0 0.0
    %1521 = vmatprep.subr.mxu0 0.0
    %1522 = vmatpush1.msra.mxu0 0.0
    %1523 = vmatprep.subr.mxu0 0.0
    %1524 = vmatpush1.msra.mxu0 0.0
    %1525 = vmatprep.subr.mxu0 0.0
    %1526 = vmatpush1.msra.mxu0 0.0
    %1527 = vmatprep.subr.mxu0 0.0
    %1528 = vmatpush1.msra.mxu0 0.0
    %1529 = vmatprep.subr.mxu0 0.0
    %1530 = vmatpush1.msra.mxu0 0.0
    %1531 = vmatprep.subr.mxu0 0.0
    %1532 = vmatpush1.msra.mxu0 0.0
    %1533 = vmatprep.subr.mxu0 0.0
    %1534 = vmatpush1.msra.mxu0 0.0
    %1535 = vmatprep.subr.mxu0 0.0
    %1536 = vmatpush1.msra.mxu0 0.0
    %1537 = vmatprep.subr.mxu0 0.0
    %1538 = vmatpush1.msra.mxu0 0.0
    %1539 = vmatprep.subr.mxu0 0.0
    %1540 = vmatpush1.msra.mxu0 0.0
    %1541 = vmatprep.subr.mxu0 0.0
    %1542 = vmatpush1.msra.mxu0 0.0
    %1543 = vmatprep.subr.mxu0 0.0
    %1544 = vmatpush1.msra.mxu0 0.0
    %1545 = vmatprep.subr.mxu0 0.0
    %1546 = vmatpush1.msra.mxu0 0.0
    %1547 = vmatprep.subr.mxu0 0.0
    %1548 = vmatpush1.msra.mxu0 0.0
    %1549 = vmatprep.subr.mxu0 0.0
    %1550 = vmatpush1.msra.mxu0 0.0
    %1551 = vmatprep.subr.mxu0 0.0
    %1552 = vmatpush1.msra.mxu0 0.0
    %1553 = vmatprep.subr.mxu0 0.0
    %1554 = vmatpush1.msra.mxu0 0.0
    %1555 = vmatprep.subr.mxu0 0.0
    %1556 = vmatpush1.msra.mxu0 0.0
    %1557 = vmatprep.subr.mxu0 0.0
    %1558 = vmatpush1.msra.mxu0 0.0
    %1559 = vmatprep.subr.mxu0 0.0
    %1560 = vmatpush1.msra.mxu0 0.0
    %1561 = vmatprep.subr.mxu0 0.0
    %1562 = vmatpush1.msra.mxu0 0.0
    %1563 = vmatprep.subr.mxu0 0.0
    %1564 = vmatpush1.msra.mxu0 0.0
    %1565 = vmatprep.subr.mxu0 0.0
    %1566 = vmatpush1.msra.mxu0 0.0
    %1567 = vmatprep.subr.mxu0 0.0
    %1568 = vmatpush1.msra.mxu0 0.0
    %1569 = vmatprep.subr.mxu0 0.0
    %1570 = vmatpush1.msra.mxu0 0.0
    %1571 = vmatprep.subr.mxu0 0.0
    %1572 = vmatpush1.msra.mxu0 0.0
    %1573 = vmatprep.mubr.f32.mxu0 0.0
    %1574 = vmatmul.mubr.f32.gmra.mrb[0].mxu0 %v1507
    %v1575 = vpop.f32.mrb[0].mxu0
    %v1576 = vadd.f32 0.0, %v1575
    %v1577 = vpop.f32.mrb[0].mxu0
    %1578 = vdwg.mxu0
    %1580 = vrot.lane.b32.xlu0 %v1576, 64
    %v1581 = vpop.permute.xlu0 %1580
    %v1583 = vadd.f32 %v1501, %v1581
    %v1584 = vxor.u32 %v1500, 2147483648
    %v1585 = vmul.f32 %v1584, 1.442695
    %v1586 = vpow.pop %v1585
    %v1587 = vadd.f32 %v1586, 1.0
    %v1588 = vrcp.pop %v1587
    %v1589 = vmul.f32 1.0, %v1588
    %v1590 = vtanh.pop %v1500
    %v1591 = vxor.u32 %v1583, 2147483648
    %v1592 = vmul.f32 %v1591, 1.442695
    %v1593 = vpow.pop %v1592
    %v1594 = vadd.f32 %v1593, 1.0
    %v1595 = vrcp.pop %v1594
    %v1596 = vmul.f32 1.0, %v1595
    %v1597 = vtanh.pop %v1583
    %v1598 = vmul.f32 %v1589, %v1419
    %1600 = vrot.lane.b32.xlu0 %v1590, 96
    %v1601 = vpop.permute.xlu0 %1600
    %v1603 = vmul.f32 %v1589, %v1601
    %1605 = vrot.lane.b32.xlu0 %v1603, 16
    %v1606 = vpop.permute.xlu0 %1605
    %v1608 = vadd.f32 %v1598, %v1606
    %v1609 = vtanh.pop %v1608
    %1611 = vrot.lane.b32.xlu0 %v1609, 32
    %v1612 = vpop.permute.xlu0 %1611
    %v1614 = vmul.f32 %v1589, %v1612
    %v1615 = vmul.f32 %v1596, %v1421
    %1617 = vrot.lane.b32.xlu0 %v1597, 96
    %v1618 = vpop.permute.xlu0 %1617
    %v1620 = vmul.f32 %v1596, %v1618
    %1622 = vrot.lane.b32.xlu0 %v1620, 16
    %v1623 = vpop.permute.xlu0 %1622
    %v1625 = vadd.f32 %v1615, %v1623
    %v1626 = vtanh.pop %v1625
    %1628 = vrot.lane.b32.xlu0 %v1626, 32
    %v1629 = vpop.permute.xlu0 %1628
    %v1631 = vmul.f32 %v1596, %v1629
    %v1632 = vsel %vm942, %v1614, 0.0
    %1634 = vrot.lane.b32.xlu0 %v1632, 80
    %v1635 = vpop.permute.xlu0 %1634
    %1637 = vst.msk [vmem:[%s948] sm:$0xff] %vm244, %v1635
    %v1638 = vsel %vm930, %v1631, 0.0
    %1640 = vrot.lane.b32.xlu0 %v1638, 32
    %v1641 = vpop.permute.xlu0 %1640
    %1643 = vst.msk [vmem:[%s936] sm:$0xff] %vm470, %v1641
    %v1644 = vsel %vm942, %v1614, %v1418
    %v1645 = vsel %vm942, %v1608, %v1419
    %v1646 = vsel %vm930, %v1631, %v1420
    %v1647 = vsel %vm930, %v1625, %v1421
    %v1648 = vld [vmem:[%s551] sm:$0xff]
    %v1649 = vld [vmem:[#allocation9] sm:$0xff]
    %v1650 = vld [vmem:[#allocation9 + $0x8] sm:$0xff]
    %1652 = vrot.lane.b32.xlu0 %v1644, 80
    %v1653 = vpop.permute.xlu0 %1652
    %v1654 = vsel %vm244, %v1653, 0
    %1656 = vmatprep.subr.mxu0 0.0
    %1657 = vmatpush1.msra.mxu0 %v1649
    %1658 = vmatprep.subr.mxu0 0.0
    %1659 = vmatpush1.msra.mxu0 %v1650
    %1660 = vmatprep.subr.mxu0 0.0
    %1661 = vmatpush1.msra.mxu0 0.0
    %1662 = vmatprep.subr.mxu0 0.0
    %1663 = vmatpush1.msra.mxu0 0.0
    %1664 = vmatprep.subr.mxu0 0.0
    %1665 = vmatpush1.msra.mxu0 0.0
    %1666 = vmatprep.subr.mxu0 0.0
    %1667 = vmatpush1.msra.mxu0 0.0
    %1668 = vmatprep.subr.mxu0 0.0
    %1669 = vmatpush1.msra.mxu0 0.0
    %1670 = vmatprep.subr.mxu0 0.0
    %1671 = vmatpush1.msra.mxu0 0.0
    %1672 = vmatprep.subr.mxu0 0.0
    %1673 = vmatpush1.msra.mxu0 0.0
    %1674 = vmatprep.subr.mxu0 0.0
    %1675 = vmatpush1.msra.mxu0 0.0
    %1676 = vmatprep.subr.mxu0 0.0
    %1677 = vmatpush1.msra.mxu0 0.0
    %1678 = vmatprep.subr.mxu0 0.0
    %1679 = vmatpush1.msra.mxu0 0.0
    %1680 = vmatprep.subr.mxu0 0.0
    %1681 = vmatpush1.msra.mxu0 0.0
    %1682 = vmatprep.subr.mxu0 0.0
    %1683 = vmatpush1.msra.mxu0 0.0
    %1684 = vmatprep.subr.mxu0 0.0
    %1685 = vmatpush1.msra.mxu0 0.0
    %1686 = vmatprep.subr.mxu0 0.0
    %1687 = vmatpush1.msra.mxu0 0.0
    %1688 = vmatprep.subr.mxu0 0.0
    %1689 = vmatpush1.msra.mxu0 0.0
    %1690 = vmatprep.subr.mxu0 0.0
    %1691 = vmatpush1.msra.mxu0 0.0
    %1692 = vmatprep.subr.mxu0 0.0
    %1693 = vmatpush1.msra.mxu0 0.0
    %1694 = vmatprep.subr.mxu0 0.0
    %1695 = vmatpush1.msra.mxu0 0.0
    %1696 = vmatprep.subr.mxu0 0.0
    %1697 = vmatpush1.msra.mxu0 0.0
    %1698 = vmatprep.subr.mxu0 0.0
    %1699 = vmatpush1.msra.mxu0 0.0
    %1700 = vmatprep.subr.mxu0 0.0
    %1701 = vmatpush1.msra.mxu0 0.0
    %1702 = vmatprep.subr.mxu0 0.0
    %1703 = vmatpush1.msra.mxu0 0.0
    %1704 = vmatprep.subr.mxu0 0.0
    %1705 = vmatpush1.msra.mxu0 0.0
    %1706 = vmatprep.subr.mxu0 0.0
    %1707 = vmatpush1.msra.mxu0 0.0
    %1708 = vmatprep.subr.mxu0 0.0
    %1709 = vmatpush1.msra.mxu0 0.0
    %1710 = vmatprep.subr.mxu0 0.0
    %1711 = vmatpush1.msra.mxu0 0.0
    %1712 = vmatprep.subr.mxu0 0.0
    %1713 = vmatpush1.msra.mxu0 0.0
    %1714 = vmatprep.subr.mxu0 0.0
    %1715 = vmatpush1.msra.mxu0 0.0
    %1716 = vmatprep.subr.mxu0 0.0
    %1717 = vmatpush1.msra.mxu0 0.0
    %1718 = vmatprep.subr.mxu0 0.0
    %1719 = vmatpush1.msra.mxu0 0.0
    %1720 = vmatprep.mubr.f32.mxu0 0.0
    %1721 = vmatmul.mubr.f32.gmra.mrb[0].mxu0 %v1654
    %v1722 = vpop.f32.mrb[0].mxu0
    %v1723 = vadd.f32 0.0, %v1722
    %v1724 = vpop.f32.mrb[0].mxu0
    %1725 = vdwg.mxu0
    %v1726 = vadd.f32 %v1648, %v1723
    %v1727 = vld [vmem:[%s474] sm:$0xff]
    %v1728 = vld [vmem:[#allocation10] sm:$0xff]
    %v1729 = vld [vmem:[#allocation10 + $0x8] sm:$0xff]
    %1731 = vrot.lane.b32.xlu0 %v1646, 16
    %v1732 = vpop.permute.xlu0 %1731
    %v1733 = vsel %vm244, %v1732, 0
    %1735 = vmatprep.subr.mxu0 0.0
    %1736 = vmatpush1.msra.mxu0 %v1728
    %1737 = vmatprep.subr.mxu0 0.0
    %1738 = vmatpush1.msra.mxu0 %v1729
    %1739 = vmatprep.subr.mxu0 0.0
    %1740 = vmatpush1.msra.mxu0 0.0
    %1741 = vmatprep.subr.mxu0 0.0
    %1742 = vmatpush1.msra.mxu0 0.0
    %1743 = vmatprep.subr.mxu0 0.0
    %1744 = vmatpush1.msra.mxu0 0.0
    %1745 = vmatprep.subr.mxu0 0.0
    %1746 = vmatpush1.msra.mxu0 0.0
    %1747 = vmatprep.subr.mxu0 0.0
    %1748 = vmatpush1.msra.mxu0 0.0
    %1749 = vmatprep.subr.mxu0 0.0
    %1750 = vmatpush1.msra.mxu0 0.0
    %1751 = vmatprep.subr.mxu0 0.0
    %1752 = vmatpush1.msra.mxu0 0.0
    %1753 = vmatprep.subr.mxu0 0.0
    %1754 = vmatpush1.msra.mxu0 0.0
    %1755 = vmatprep.subr.mxu0 0.0
    %1756 = vmatpush1.msra.mxu0 0.0
    %1757 = vmatprep.subr.mxu0 0.0
    %1758 = vmatpush1.msra.mxu0 0.0
    %1759 = vmatprep.subr.mxu0 0.0
    %1760 = vmatpush1.msra.mxu0 0.0
    %1761 = vmatprep.subr.mxu0 0.0
    %1762 = vmatpush1.msra.mxu0 0.0
    %1763 = vmatprep.subr.mxu0 0.0
    %1764 = vmatpush1.msra.mxu0 0.0
    %1765 = vmatprep.subr.mxu0 0.0
    %1766 = vmatpush1.msra.mxu0 0.0
    %1767 = vmatprep.subr.mxu0 0.0
    %1768 = vmatpush1.msra.mxu0 0.0
    %1769 = vmatprep.subr.mxu0 0.0
    %1770 = vmatpush1.msra.mxu0 0.0
    %1771 = vmatprep.subr.mxu0 0.0
    %1772 = vmatpush1.msra.mxu0 0.0
    %1773 = vmatprep.subr.mxu0 0.0
    %1774 = vmatpush1.msra.mxu0 0.0
    %1775 = vmatprep.subr.mxu0 0.0
    %1776 = vmatpush1.msra.mxu0 0.0
    %1777 = vmatprep.subr.mxu0 0.0
    %1778 = vmatpush1.msra.mxu0 0.0
    %1779 = vmatprep.subr.mxu0 0.0
    %1780 = vmatpush1.msra.mxu0 0.0
    %1781 = vmatprep.subr.mxu0 0.0
    %1782 = vmatpush1.msra.mxu0 0.0
    %1783 = vmatprep.subr.mxu0 0.0
    %1784 = vmatpush1.msra.mxu0 0.0
    %1785 = vmatprep.subr.mxu0 0.0
    %1786 = vmatpush1.msra.mxu0 0.0
    %1787 = vmatprep.subr.mxu0 0.0
    %1788 = vmatpush1.msra.mxu0 0.0
    %1789 = vmatprep.subr.mxu0 0.0
    %1790 = vmatpush1.msra.mxu0 0.0
    %1791 = vmatprep.subr.mxu0 0.0
    %1792 = vmatpush1.msra.mxu0 0.0
    %1793 = vmatprep.subr.mxu0 0.0
    %1794 = vmatpush1.msra.mxu0 0.0
    %1795 = vmatprep.subr.mxu0 0.0
    %1796 = vmatpush1.msra.mxu0 0.0
    %1797 = vmatprep.subr.mxu0 0.0
    %1798 = vmatpush1.msra.mxu0 0.0
    %1799 = vmatprep.mubr.f32.mxu0 0.0
    %1800 = vmatmul.mubr.f32.gmra.mrb[0].mxu0 %v1733
    %v1801 = vpop.f32.mrb[0].mxu0
    %v1802 = vadd.f32 0.0, %v1801
    %v1803 = vpop.f32.mrb[0].mxu0
    %1804 = vdwg.mxu0
    %1806 = vrot.lane.b32.xlu0 %v1802, 64
    %v1807 = vpop.permute.xlu0 %1806
    %v1809 = vadd.f32 %v1727, %v1807
    %v1810 = vxor.u32 %v1726, 2147483648
    %v1811 = vmul.f32 %v1810, 1.442695
    %v1812 = vpow.pop %v1811
    %v1813 = vadd.f32 %v1812, 1.0
    %v1814 = vrcp.pop %v1813
    %v1815 = vmul.f32 1.0, %v1814
    %v1816 = vtanh.pop %v1726
    %v1817 = vxor.u32 %v1809, 2147483648
    %v1818 = vmul.f32 %v1817, 1.442695
    %v1819 = vpow.pop %v1818
    %v1820 = vadd.f32 %v1819, 1.0
    %v1821 = vrcp.pop %v1820
    %v1822 = vmul.f32 1.0, %v1821
    %v1823 = vtanh.pop %v1809
    %v1824 = vmul.f32 %v1815, %v1645
    %1826 = vrot.lane.b32.xlu0 %v1816, 96
    %v1827 = vpop.permute.xlu0 %1826
    %v1829 = vmul.f32 %v1815, %v1827
    %1831 = vrot.lane.b32.xlu0 %v1829, 16
    %v1832 = vpop.permute.xlu0 %1831
    %v1834 = vadd.f32 %v1824, %v1832
    %v1835 = vtanh.pop %v1834
    %1837 = vrot.lane.b32.xlu0 %v1835, 32
    %v1838 = vpop.permute.xlu0 %1837
    %v1840 = vmul.f32 %v1815, %v1838
    %v1841 = vmul.f32 %v1822, %v1647
    %1843 = vrot.lane.b32.xlu0 %v1823, 96
    %v1844 = vpop.permute.xlu0 %1843
    %v1846 = vmul.f32 %v1822, %v1844
    %1848 = vrot.lane.b32.xlu0 %v1846, 16
    %v1849 = vpop.permute.xlu0 %1848
    %v1851 = vadd.f32 %v1841, %v1849
    %v1852 = vtanh.pop %v1851
    %1854 = vrot.lane.b32.xlu0 %v1852, 32
    %v1855 = vpop.permute.xlu0 %1854
    %v1857 = vmul.f32 %v1822, %v1855
    %v1858 = vsel %vm700, %v1840, 0.0
    %1860 = vrot.lane.b32.xlu0 %v1858, 80
    %v1861 = vpop.permute.xlu0 %1860
    %1863 = vst.msk [vmem:[%s706] sm:$0xff] %vm244, %v1861
    %v1864 = vsel %vm688, %v1857, 0.0
    %1866 = vrot.lane.b32.xlu0 %v1864, 32
    %v1867 = vpop.permute.xlu0 %1866
    %1869 = vst.msk [vmem:[%s694] sm:$0xff] %vm470, %v1867
    %v1870 = vsel %vm700, %v1840, %v1644
    %v1871 = vsel %vm700, %v1834, %v1645
    %v1872 = vsel %vm688, %v1857, %v1646
    %v1873 = vsel %vm688, %v1851, %v1647
    %v1874 = vld [vmem:[%s319] sm:$0xff]
    %v1875 = vld [vmem:[#allocation9] sm:$0xff]
    %v1876 = vld [vmem:[#allocation9 + $0x8] sm:$0xff]
    %1878 = vrot.lane.b32.xlu0 %v1870, 80
    %v1879 = vpop.permute.xlu0 %1878
    %v1880 = vsel %vm244, %v1879, 0
    %1882 = vmatprep.subr.mxu0 0.0
    %1883 = vmatpush1.msra.mxu0 %v1875
    %1884 = vmatprep.subr.mxu0 0.0
    %1885 = vmatpush1.msra.mxu0 %v1876
    %1886 = vmatprep.subr.mxu0 0.0
    %1887 = vmatpush1.msra.mxu0 0.0
    %1888 = vmatprep.subr.mxu0 0.0
    %1889 = vmatpush1.msra.mxu0 0.0
    %1890 = vmatprep.subr.mxu0 0.0
    %1891 = vmatpush1.msra.mxu0 0.0
    %1892 = vmatprep.subr.mxu0 0.0
    %1893 = vmatpush1.msra.mxu0 0.0
    %1894 = vmatprep.subr.mxu0 0.0
    %1895 = vmatpush1.msra.mxu0 0.0
    %1896 = vmatprep.subr.mxu0 0.0
    %1897 = vmatpush1.msra.mxu0 0.0
    %1898 = vmatprep.subr.mxu0 0.0
    %1899 = vmatpush1.msra.mxu0 0.0
    %1900 = vmatprep.subr.mxu0 0.0
    %1901 = vmatpush1.msra.mxu0 0.0
    %1902 = vmatprep.subr.mxu0 0.0
    %1903 = vmatpush1.msra.mxu0 0.0
    %1904 = vmatprep.subr.mxu0 0.0
    %1905 = vmatpush1.msra.mxu0 0.0
    %1906 = vmatprep.subr.mxu0 0.0
    %1907 = vmatpush1.msra.mxu0 0.0
    %1908 = vmatprep.subr.mxu0 0.0
    %1909 = vmatpush1.msra.mxu0 0.0
    %1910 = vmatprep.subr.mxu0 0.0
    %1911 = vmatpush1.msra.mxu0 0.0
    %1912 = vmatprep.subr.mxu0 0.0
    %1913 = vmatpush1.msra.mxu0 0.0
    %1914 = vmatprep.subr.mxu0 0.0
    %1915 = vmatpush1.msra.mxu0 0.0
    %1916 = vmatprep.subr.mxu0 0.0
    %1917 = vmatpush1.msra.mxu0 0.0
    %1918 = vmatprep.subr.mxu0 0.0
    %1919 = vmatpush1.msra.mxu0 0.0
    %1920 = vmatprep.subr.mxu0 0.0
    %1921 = vmatpush1.msra.mxu0 0.0
    %1922 = vmatprep.subr.mxu0 0.0
    %1923 = vmatpush1.msra.mxu0 0.0
    %1924 = vmatprep.subr.mxu0 0.0
    %1925 = vmatpush1.msra.mxu0 0.0
    %1926 = vmatprep.subr.mxu0 0.0
    %1927 = vmatpush1.msra.mxu0 0.0
    %1928 = vmatprep.subr.mxu0 0.0
    %1929 = vmatpush1.msra.mxu0 0.0
    %1930 = vmatprep.subr.mxu0 0.0
    %1931 = vmatpush1.msra.mxu0 0.0
    %1932 = vmatprep.subr.mxu0 0.0
    %1933 = vmatpush1.msra.mxu0 0.0
    %1934 = vmatprep.subr.mxu0 0.0
    %1935 = vmatpush1.msra.mxu0 0.0
    %1936 = vmatprep.subr.mxu0 0.0
    %1937 = vmatpush1.msra.mxu0 0.0
    %1938 = vmatprep.subr.mxu0 0.0
    %1939 = vmatpush1.msra.mxu0 0.0
    %1940 = vmatprep.subr.mxu0 0.0
    %1941 = vmatpush1.msra.mxu0 0.0
    %1942 = vmatprep.subr.mxu0 0.0
    %1943 = vmatpush1.msra.mxu0 0.0
    %1944 = vmatprep.subr.mxu0 0.0
    %1945 = vmatpush1.msra.mxu0 0.0
    %1946 = vmatprep.mubr.f32.mxu0 0.0
    %1947 = vmatmul.mubr.f32.gmra.mrb[0].mxu0 %v1880
    %v1948 = vpop.f32.mrb[0].mxu0
    %v1949 = vadd.f32 0.0, %v1948
    %v1950 = vpop.f32.mrb[0].mxu0
    %1951 = vdwg.mxu0
    %v1952 = vadd.f32 %v1874, %v1949
    %v1953 = vld [vmem:[#allocation3] sm:$0xff]
    %v1954 = vld [vmem:[#allocation10] sm:$0xff]
    %v1955 = vld [vmem:[#allocation10 + $0x8] sm:$0xff]
    %1957 = vrot.lane.b32.xlu0 %v1872, 16
    %v1958 = vpop.permute.xlu0 %1957
    %v1959 = vsel %vm244, %v1958, 0
    %1961 = vmatprep.subr.mxu0 0.0
    %1962 = vmatpush1.msra.mxu0 %v1954
    %1963 = vmatprep.subr.mxu0 0.0
    %1964 = vmatpush1.msra.mxu0 %v1955
    %1965 = vmatprep.subr.mxu0 0.0
    %1966 = vmatpush1.msra.mxu0 0.0
    %1967 = vmatprep.subr.mxu0 0.0
    %1968 = vmatpush1.msra.mxu0 0.0
    %1969 = vmatprep.subr.mxu0 0.0
    %1970 = vmatpush1.msra.mxu0 0.0
    %1971 = vmatprep.subr.mxu0 0.0
    %1972 = vmatpush1.msra.mxu0 0.0
    %1973 = vmatprep.subr.mxu0 0.0
    %1974 = vmatpush1.msra.mxu0 0.0
    %1975 = vmatprep.subr.mxu0 0.0
    %1976 = vmatpush1.msra.mxu0 0.0
    %1977 = vmatprep.subr.mxu0 0.0
    %1978 = vmatpush1.msra.mxu0 0.0
    %1979 = vmatprep.subr.mxu0 0.0
    %1980 = vmatpush1.msra.mxu0 0.0
    %1981 = vmatprep.subr.mxu0 0.0
    %1982 = vmatpush1.msra.mxu0 0.0
    %1983 = vmatprep.subr.mxu0 0.0
    %1984 = vmatpush1.msra.mxu0 0.0
    %1985 = vmatprep.subr.mxu0 0.0
    %1986 = vmatpush1.msra.mxu0 0.0
    %1987 = vmatprep.subr.mxu0 0.0
    %1988 = vmatpush1.msra.mxu0 0.0
    %1989 = vmatprep.subr.mxu0 0.0
    %1990 = vmatpush1.msra.mxu0 0.0
    %1991 = vmatprep.subr.mxu0 0.0
    %1992 = vmatpush1.msra.mxu0 0.0
    %1993 = vmatprep.subr.mxu0 0.0
    %1994 = vmatpush1.msra.mxu0 0.0
    %1995 = vmatprep.subr.mxu0 0.0
    %1996 = vmatpush1.msra.mxu0 0.0
    %1997 = vmatprep.subr.mxu0 0.0
    %1998 = vmatpush1.msra.mxu0 0.0
    %1999 = vmatprep.subr.mxu0 0.0
    %2000 = vmatpush1.msra.mxu0 0.0
    %2001 = vmatprep.subr.mxu0 0.0
    %2002 = vmatpush1.msra.mxu0 0.0
    %2003 = vmatprep.subr.mxu0 0.0
    %2004 = vmatpush1.msra.mxu0 0.0
    %2005 = vmatprep.subr.mxu0 0.0
    %2006 = vmatpush1.msra.mxu0 0.0
    %2007 = vmatprep.subr.mxu0 0.0
    %2008 = vmatpush1.msra.mxu0 0.0
    %2009 = vmatprep.subr.mxu0 0.0
    %2010 = vmatpush1.msra.mxu0 0.0
    %2011 = vmatprep.subr.mxu0 0.0
    %2012 = vmatpush1.msra.mxu0 0.0
    %2013 = vmatprep.subr.mxu0 0.0
    %2014 = vmatpush1.msra.mxu0 0.0
    %2015 = vmatprep.subr.mxu0 0.0
    %2016 = vmatpush1.msra.mxu0 0.0
    %2017 = vmatprep.subr.mxu0 0.0
    %2018 = vmatpush1.msra.mxu0 0.0
    %2019 = vmatprep.subr.mxu0 0.0
    %2020 = vmatpush1.msra.mxu0 0.0
    %2021 = vmatprep.subr.mxu0 0.0
    %2022 = vmatpush1.msra.mxu0 0.0
    %2023 = vmatprep.subr.mxu0 0.0
    %2024 = vmatpush1.msra.mxu0 0.0
    %2025 = vmatprep.mubr.f32.mxu0 0.0
    %2026 = vmatmul.mubr.f32.gmra.mrb[0].mxu0 %v1959
    %v2027 = vpop.f32.mrb[0].mxu0
    %v2028 = vadd.f32 0.0, %v2027
    %v2029 = vpop.f32.mrb[0].mxu0
    %2030 = vdwg.mxu0
    %2032 = vrot.lane.b32.xlu0 %v2028, 64
    %v2033 = vpop.permute.xlu0 %2032
    %v2035 = vadd.f32 %v1953, %v2033
    %v2036 = vxor.u32 %v1952, 2147483648
    %v2037 = vmul.f32 %v2036, 1.442695
    %v2038 = vpow.pop %v2037
    %v2039 = vadd.f32 %v2038, 1.0
    %v2040 = vrcp.pop %v2039
    %v2041 = vmul.f32 1.0, %v2040
    %v2042 = vtanh.pop %v1952
    %v2043 = vxor.u32 %v2035, 2147483648
    %v2044 = vmul.f32 %v2043, 1.442695
    %v2045 = vpow.pop %v2044
    %v2046 = vadd.f32 %v2045, 1.0
    %v2047 = vrcp.pop %v2046
    %v2048 = vmul.f32 1.0, %v2047
    %v2049 = vtanh.pop %v2035
    %v2050 = vmul.f32 %v2041, %v1871
    %2052 = vrot.lane.b32.xlu0 %v2042, 96
    %v2053 = vpop.permute.xlu0 %2052
    %v2055 = vmul.f32 %v2041, %v2053
    %2057 = vrot.lane.b32.xlu0 %v2055, 16
    %v2058 = vpop.permute.xlu0 %2057
    %v2060 = vadd.f32 %v2050, %v2058
    %v2061 = vtanh.pop %v2060
    %2063 = vrot.lane.b32.xlu0 %v2061, 32
    %v2064 = vpop.permute.xlu0 %2063
    %v2066 = vmul.f32 %v2041, %v2064
    %v2067 = vmul.f32 %v2048, %v1873
    %2069 = vrot.lane.b32.xlu0 %v2049, 96
    %v2070 = vpop.permute.xlu0 %2069
    %v2072 = vmul.f32 %v2048, %v2070
    %2074 = vrot.lane.b32.xlu0 %v2072, 16
    %v2075 = vpop.permute.xlu0 %2074
    %v2077 = vadd.f32 %v2067, %v2075
    %v2078 = vtanh.pop %v2077
    %2080 = vrot.lane.b32.xlu0 %v2078, 32
    %v2081 = vpop.permute.xlu0 %2080
    %v2083 = vmul.f32 %v2048, %v2081
    %v2084 = vsel %vm463, %v2066, 0.0
    %2086 = vrot.lane.b32.xlu0 %v2084, 80
    %v2087 = vpop.permute.xlu0 %2086
    %2089 = vst.msk [vmem:[%s469] sm:$0xff] %vm244, %v2087
    %v2090 = vsel %vm452, %v2083, 0.0
    %2092 = vrot.lane.b32.xlu0 %v2090, 32
    %v2093 = vpop.permute.xlu0 %2092
    %2095 = vst.msk [vmem:[#allocation2] sm:$0xff] %vm470, %v2093
    %v2096 = vsel %vm463, %v2066, %v1870
    %v2097 = vsel %vm463, %v2060, %v1871
    %v2098 = vsel %vm452, %v2083, %v1872
    %v2099 = vsel %vm452, %v2077, %v1873
    %2101 = vrot.lane.b32.xlu0 %v2096, 80
    %v2102 = vpop.permute.xlu0 %2101
    %2104 = vst.msk [vmem:[#allocation13] sm:$0xff] %vm244, %v2102
    %2106 = vrot.lane.b32.xlu0 %v2098, 32
    %v2107 = vpop.permute.xlu0 %2106
    %2109 = vst.msk [vmem:[#allocation13] sm:$0xff] %vm470, %v2107
    %2111 = vrot.lane.b32.xlu0 %v2097, 112
    %v2112 = vpop.permute.xlu0 %2111
    %2114 = vst.msk [vmem:[#allocation15] sm:$0xff] %vm244, %v2112
    %2116 = vrot.lane.b32.xlu0 %v2099, 64
    %v2117 = vpop.permute.xlu0 %2116
    %2119 = vst.msk [vmem:[#allocation15] sm:$0xff] %vm470, %v2117
    %v2120 = vld [vmem:[#allocation2] sm:$0xff]
    %v2121 = vld [vmem:[#allocation2 + $0x8] sm:$0xff]
    %v2122 = vld [vmem:[#allocation2 + $0x10] sm:$0xff]
    %v2123 = vld [vmem:[#allocation2 + $0x18] sm:$0xff]
    %v2124 = vld [vmem:[#allocation2 + $0x20] sm:$0xff]
    %v2125 = vld [vmem:[#allocation2 + $0x28] sm:$0xff]
    %v2126 = vld [vmem:[#allocation2 + $0x30] sm:$0xff]
    %v2127 = vld [vmem:[#allocation2 + $0x38] sm:$0xff]
    %s2128 = scalar_lea.vmem [#allocation7], 32
    %v2129 = vld [vmem:[%s2128] sm:$0xff]
    %v2130 = vld [vmem:[%s2128 + $0x8] sm:$0xff]
    %v2131 = vld [vmem:[%s2128 + $0x10] sm:$0xff]
    %v2132 = vld [vmem:[%s2128 + $0x18] sm:$0xff]
    %s2133 = scalar_lea.vmem %s3, 1
    %v2134 = vld [vmem:[%s2133] sm:$0x1]
    %v2136 = vlaneseq
    %v2137 = vshrl.u32 %v2136, 7
    %v2138 = vsub.s32 0, %v2137
    %v2139 = vrot.slane %v2134, %v2138
    %v2142 = vsel %vm103, %v2120, 0
    %v2145 = vsel %vm103, %v2121, 0
    %v2148 = vsel %vm103, %v2122, 0
    %v2151 = vsel %vm103, %v2123, 0
    %v2154 = vsel %vm103, %v2124, 0
    %v2157 = vsel %vm103, %v2125, 0
    %v2160 = vsel %vm103, %v2126, 0
    %v2163 = vsel %vm103, %v2127, 0
    %2165 = vmatprep.subr.mxu0 0.0
    %2166 = vmatpush1.msra.mxu0 %v2129
    %2167 = vmatprep.subr.mxu0 0.0
    %2168 = vmatpush1.msra.mxu0 %v2130
    %2169 = vmatprep.subr.mxu0 0.0
    %2170 = vmatpush1.msra.mxu0 %v2131
    %2171 = vmatprep.subr.mxu0 0.0
    %2172 = vmatpush1.msra.mxu0 %v2132
    %2173 = vmatprep.subr.mxu0 0.0
    %2174 = vmatpush1.msra.mxu0 0.0
    %2175 = vmatprep.subr.mxu0 0.0
    %2176 = vmatpush1.msra.mxu0 0.0
    %2177 = vmatprep.subr.mxu0 0.0
    %2178 = vmatpush1.msra.mxu0 0.0
    %2179 = vmatprep.subr.mxu0 0.0
    %2180 = vmatpush1.msra.mxu0 0.0
    %2181 = vmatprep.subr.mxu0 0.0
    %2182 = vmatpush1.msra.mxu0 0.0
    %2183 = vmatprep.subr.mxu0 0.0
    %2184 = vmatpush1.msra.mxu0 0.0
    %2185 = vmatprep.subr.mxu0 0.0
    %2186 = vmatpush1.msra.mxu0 0.0
    %2187 = vmatprep.subr.mxu0 0.0
    %2188 = vmatpush1.msra.mxu0 0.0
    %2189 = vmatprep.subr.mxu0 0.0
    %2190 = vmatpush1.msra.mxu0 0.0
    %2191 = vmatprep.subr.mxu0 0.0
    %2192 = vmatpush1.msra.mxu0 0.0
    %2193 = vmatprep.subr.mxu0 0.0
    %2194 = vmatpush1.msra.mxu0 0.0
    %2195 = vmatprep.subr.mxu0 0.0
    %2196 = vmatpush1.msra.mxu0 0.0
    %2197 = vmatprep.subr.mxu0 0.0
    %2198 = vmatpush1.msra.mxu0 0.0
    %2199 = vmatprep.subr.mxu0 0.0
    %2200 = vmatpush1.msra.mxu0 0.0
    %2201 = vmatprep.subr.mxu0 0.0
    %2202 = vmatpush1.msra.mxu0 0.0
    %2203 = vmatprep.subr.mxu0 0.0
    %2204 = vmatpush1.msra.mxu0 0.0
    %2205 = vmatprep.subr.mxu0 0.0
    %2206 = vmatpush1.msra.mxu0 0.0
    %2207 = vmatprep.subr.mxu0 0.0
    %2208 = vmatpush1.msra.mxu0 0.0
    %2209 = vmatprep.subr.mxu0 0.0
    %2210 = vmatpush1.msra.mxu0 0.0
    %2211 = vmatprep.subr.mxu0 0.0
    %2212 = vmatpush1.msra.mxu0 0.0
    %2213 = vmatprep.subr.mxu0 0.0
    %2214 = vmatpush1.msra.mxu0 0.0
    %2215 = vmatprep.subr.mxu0 0.0
    %2216 = vmatpush1.msra.mxu0 0.0
    %2217 = vmatprep.subr.mxu0 0.0
    %2218 = vmatpush1.msra.mxu0 0.0
    %2219 = vmatprep.subr.mxu0 0.0
    %2220 = vmatpush1.msra.mxu0 0.0
    %2221 = vmatprep.subr.mxu0 0.0
    %2222 = vmatpush1.msra.mxu0 0.0
    %2223 = vmatprep.subr.mxu0 0.0
    %2224 = vmatpush1.msra.mxu0 0.0
    %2225 = vmatprep.subr.mxu0 0.0
    %2226 = vmatpush1.msra.mxu0 0.0
    %2227 = vmatprep.subr.mxu0 0.0
    %2228 = vmatpush1.msra.mxu0 0.0
    %2229 = vmatprep.mubr.f32.mxu0 0.0
    %2230 = vmatmul.mubr.f32.gmra.mrb[0].mxu0 %v2142
    %v2231 = vpop.f32.mrb[0].mxu0
    %v2232 = vadd.f32 %v2139, %v2231
    %v2233 = vpop.f32.mrb[0].mxu0
    %2234 = vmatprep.mubr.f32.mxu0 0.0
    %2235 = vmatmul.mubr.f32.gmra.mrb[0].mxu0 %v2145
    %v2236 = vpop.f32.mrb[0].mxu0
    %v2237 = vadd.f32 %v2139, %v2236
    %v2238 = vpop.f32.mrb[0].mxu0
    %2239 = vmatprep.mubr.f32.mxu0 0.0
    %2240 = vmatmul.mubr.f32.gmra.mrb[0].mxu0 %v2148
    %v2241 = vpop.f32.mrb[0].mxu0
    %v2242 = vadd.f32 %v2139, %v2241
    %v2243 = vpop.f32.mrb[0].mxu0
    %2244 = vmatprep.mubr.f32.mxu0 0.0
    %2245 = vmatmul.mubr.f32.gmra.mrb[0].mxu0 %v2151
    %v2246 = vpop.f32.mrb[0].mxu0
    %v2247 = vadd.f32 %v2139, %v2246
    %v2248 = vpop.f32.mrb[0].mxu0
    %2249 = vmatprep.mubr.f32.mxu0 0.0
    %2250 = vmatmul.mubr.f32.gmra.mrb[0].mxu0 %v2154
    %v2251 = vpop.f32.mrb[0].mxu0
    %v2252 = vadd.f32 %v2139, %v2251
    %v2253 = vpop.f32.mrb[0].mxu0
    %2254 = vmatprep.mubr.f32.mxu0 0.0
    %2255 = vmatmul.mubr.f32.gmra.mrb[0].mxu0 %v2157
    %v2256 = vpop.f32.mrb[0].mxu0
    %v2257 = vadd.f32 %v2139, %v2256
    %v2258 = vpop.f32.mrb[0].mxu0
    %2259 = vmatprep.mubr.f32.mxu0 0.0
    %2260 = vmatmul.mubr.f32.gmra.mrb[0].mxu0 %v2160
    %v2261 = vpop.f32.mrb[0].mxu0
    %v2262 = vadd.f32 %v2139, %v2261
    %v2263 = vpop.f32.mrb[0].mxu0
    %2264 = vmatprep.mubr.f32.mxu0 0.0
    %2265 = vmatmul.mubr.f32.gmra.mrb[0].mxu0 %v2163
    %v2266 = vpop.f32.mrb[0].mxu0
    %v2267 = vadd.f32 %v2139, %v2266
    %v2268 = vpop.f32.mrb[0].mxu0
    %2269 = vdwg.mxu0
    %2270 = vst [vmem:[#allocation3] sm:$0xff] %v2232
    %2271 = vst [vmem:[#allocation3 + $0x8] sm:$0xff] %v2237
    %2272 = vst [vmem:[#allocation3 + $0x10] sm:$0xff] %v2242
    %2273 = vst [vmem:[#allocation3 + $0x18] sm:$0xff] %v2247
    %2274 = vst [vmem:[#allocation3 + $0x20] sm:$0xff] %v2252
    %2275 = vst [vmem:[#allocation3 + $0x28] sm:$0xff] %v2257
    %2276 = vst [vmem:[#allocation3 + $0x30] sm:$0xff] %v2262
    %2277 = vst [vmem:[#allocation3 + $0x38] sm:$0xff] %v2267
    %v2278 = vld [vmem:[#allocation3] sm:$0xff]
    %s2279 = scalar_lea.vmem [#allocation9], 16
    %v2280 = vld [vmem:[%s2279] sm:$0xff]
    %v2281 = vld [vmem:[%s2279 + $0x8] sm:$0xff]
    %2282 = vmatprep.subr.mxu0 0.0
    %2283 = vmatpush1.msra.mxu0 %v2280
    %2284 = vmatprep.subr.mxu0 0.0
    %2285 = vmatpush1.msra.mxu0 %v2281
    %2286 = vmatprep.subr.mxu0 0.0
    %2287 = vmatpush1.msra.mxu0 0.0
    %2288 = vmatprep.subr.mxu0 0.0
    %2289 = vmatpush1.msra.mxu0 0.0
    %2290 = vmatprep.subr.mxu0 0.0
    %2291 = vmatpush1.msra.mxu0 0.0
    %2292 = vmatprep.subr.mxu0 0.0
    %2293 = vmatpush1.msra.mxu0 0.0
    %2294 = vmatprep.subr.mxu0 0.0
    %2295 = vmatpush1.msra.mxu0 0.0
    %2296 = vmatprep.subr.mxu0 0.0
    %2297 = vmatpush1.msra.mxu0 0.0
    %2298 = vmatprep.subr.mxu0 0.0
    %2299 = vmatpush1.msra.mxu0 0.0
    %2300 = vmatprep.subr.mxu0 0.0
    %2301 = vmatpush1.msra.mxu0 0.0
    %2302 = vmatprep.subr.mxu0 0.0
    %2303 = vmatpush1.msra.mxu0 0.0
    %2304 = vmatprep.subr.mxu0 0.0
    %2305 = vmatpush1.msra.mxu0 0.0
    %2306 = vmatprep.subr.mxu0 0.0
    %2307 = vmatpush1.msra.mxu0 0.0
    %2308 = vmatprep.subr.mxu0 0.0
    %2309 = vmatpush1.msra.mxu0 0.0
    %2310 = vmatprep.subr.mxu0 0.0
    %2311 = vmatpush1.msra.mxu0 0.0
    %2312 = vmatprep.subr.mxu0 0.0
    %2313 = vmatpush1.msra.mxu0 0.0
    %2314 = vmatprep.subr.mxu0 0.0
    %2315 = vmatpush1.msra.mxu0 0.0
    %2316 = vmatprep.subr.mxu0 0.0
    %2317 = vmatpush1.msra.mxu0 0.0
    %2318 = vmatprep.subr.mxu0 0.0
    %2319 = vmatpush1.msra.mxu0 0.0
    %2320 = vmatprep.subr.mxu0 0.0
    %2321 = vmatpush1.msra.mxu0 0.0
    %2322 = vmatprep.subr.mxu0 0.0
    %2323 = vmatpush1.msra.mxu0 0.0
    %2324 = vmatprep.subr.mxu0 0.0
    %2325 = vmatpush1.msra.mxu0 0.0
    %2326 = vmatprep.subr.mxu0 0.0
    %2327 = vmatpush1.msra.mxu0 0.0
    %2328 = vmatprep.subr.mxu0 0.0
    %2329 = vmatpush1.msra.mxu0 0.0
    %2330 = vmatprep.subr.mxu0 0.0
    %2331 = vmatpush1.msra.mxu0 0.0
    %2332 = vmatprep.subr.mxu0 0.0
    %2333 = vmatpush1.msra.mxu0 0.0
    %2334 = vmatprep.subr.mxu0 0.0
    %2335 = vmatpush1.msra.mxu0 0.0
    %2336 = vmatprep.subr.mxu0 0.0
    %2337 = vmatpush1.msra.mxu0 0.0
    %2338 = vmatprep.subr.mxu0 0.0
    %2339 = vmatpush1.msra.mxu0 0.0
    %2340 = vmatprep.subr.mxu0 0.0
    %2341 = vmatpush1.msra.mxu0 0.0
    %2342 = vmatprep.subr.mxu0 0.0
    %2343 = vmatpush1.msra.mxu0 0.0
    %2344 = vmatprep.subr.mxu0 0.0
    %2345 = vmatpush1.msra.mxu0 0.0
    %2346 = vmatprep.mubr.f32.mxu0 0.0
    %2347 = vmatmul.mubr.f32.gmra.mrb[0].mxu0 %v246
    %v2348 = vpop.f32.mrb[0].mxu0
    %v2349 = vadd.f32 0.0, %v2348
    %v2350 = vpop.f32.mrb[0].mxu0
    %2351 = vdwg.mxu0
    %v2352 = vadd.f32 %v2278, %v2349
    %v2353 = vld [vmem:[%s319] sm:$0xff]
    %s2354 = scalar_lea.vmem [#allocation10], 16
    %v2355 = vld [vmem:[%s2354] sm:$0xff]
    %v2356 = vld [vmem:[%s2354 + $0x8] sm:$0xff]
    %2357 = vmatprep.subr.mxu0 0.0
    %2358 = vmatpush1.msra.mxu0 %v2355
    %2359 = vmatprep.subr.mxu0 0.0
    %2360 = vmatpush1.msra.mxu0 %v2356
    %2361 = vmatprep.subr.mxu0 0.0
    %2362 = vmatpush1.msra.mxu0 0.0
    %2363 = vmatprep.subr.mxu0 0.0
    %2364 = vmatpush1.msra.mxu0 0.0
    %2365 = vmatprep.subr.mxu0 0.0
    %2366 = vmatpush1.msra.mxu0 0.0
    %2367 = vmatprep.subr.mxu0 0.0
    %2368 = vmatpush1.msra.mxu0 0.0
    %2369 = vmatprep.subr.mxu0 0.0
    %2370 = vmatpush1.msra.mxu0 0.0
    %2371 = vmatprep.subr.mxu0 0.0
    %2372 = vmatpush1.msra.mxu0 0.0
    %2373 = vmatprep.subr.mxu0 0.0
    %2374 = vmatpush1.msra.mxu0 0.0
    %2375 = vmatprep.subr.mxu0 0.0
    %2376 = vmatpush1.msra.mxu0 0.0
    %2377 = vmatprep.subr.mxu0 0.0
    %2378 = vmatpush1.msra.mxu0 0.0
    %2379 = vmatprep.subr.mxu0 0.0
    %2380 = vmatpush1.msra.mxu0 0.0
    %2381 = vmatprep.subr.mxu0 0.0
    %2382 = vmatpush1.msra.mxu0 0.0
    %2383 = vmatprep.subr.mxu0 0.0
    %2384 = vmatpush1.msra.mxu0 0.0
    %2385 = vmatprep.subr.mxu0 0.0
    %2386 = vmatpush1.msra.mxu0 0.0
    %2387 = vmatprep.subr.mxu0 0.0
    %2388 = vmatpush1.msra.mxu0 0.0
    %2389 = vmatprep.subr.mxu0 0.0
    %2390 = vmatpush1.msra.mxu0 0.0
    %2391 = vmatprep.subr.mxu0 0.0
    %2392 = vmatpush1.msra.mxu0 0.0
    %2393 = vmatprep.subr.mxu0 0.0
    %2394 = vmatpush1.msra.mxu0 0.0
    %2395 = vmatprep.subr.mxu0 0.0
    %2396 = vmatpush1.msra.mxu0 0.0
    %2397 = vmatprep.subr.mxu0 0.0
    %2398 = vmatpush1.msra.mxu0 0.0
    %2399 = vmatprep.subr.mxu0 0.0
    %2400 = vmatpush1.msra.mxu0 0.0
    %2401 = vmatprep.subr.mxu0 0.0
    %2402 = vmatpush1.msra.mxu0 0.0
    %2403 = vmatprep.subr.mxu0 0.0
    %2404 = vmatpush1.msra.mxu0 0.0
    %2405 = vmatprep.subr.mxu0 0.0
    %2406 = vmatpush1.msra.mxu0 0.0
    %2407 = vmatprep.subr.mxu0 0.0
    %2408 = vmatpush1.msra.mxu0 0.0
    %2409 = vmatprep.subr.mxu0 0.0
    %2410 = vmatpush1.msra.mxu0 0.0
    %2411 = vmatprep.subr.mxu0 0.0
    %2412 = vmatpush1.msra.mxu0 0.0
    %2413 = vmatprep.subr.mxu0 0.0
    %2414 = vmatpush1.msra.mxu0 0.0
    %2415 = vmatprep.subr.mxu0 0.0
    %2416 = vmatpush1.msra.mxu0 0.0
    %2417 = vmatprep.subr.mxu0 0.0
    %2418 = vmatpush1.msra.mxu0 0.0
    %2419 = vmatprep.subr.mxu0 0.0
    %2420 = vmatpush1.msra.mxu0 0.0
    %2421 = vmatprep.mubr.f32.mxu0 0.0
    %2422 = vmatmul.mubr.f32.gmra.mrb[0].mxu0 %v246
    %v2423 = vpop.f32.mrb[0].mxu0
    %v2424 = vadd.f32 0.0, %v2423
    %v2425 = vpop.f32.mrb[0].mxu0
    %2426 = vdwg.mxu0
    %2428 = vrot.lane.b32.xlu0 %v2424, 64
    %v2429 = vpop.permute.xlu0 %2428
    %v2431 = vadd.f32 %v2353, %v2429
    %v2432 = vxor.u32 %v2352, 2147483648
    %v2433 = vmul.f32 %v2432, 1.442695
    %v2434 = vpow.pop %v2433
    %v2435 = vadd.f32 %v2434, 1.0
    %v2436 = vrcp.pop %v2435
    %v2437 = vmul.f32 1.0, %v2436
    %v2438 = vtanh.pop %v2352
    %v2439 = vxor.u32 %v2431, 2147483648
    %v2440 = vmul.f32 %v2439, 1.442695
    %v2441 = vpow.pop %v2440
    %v2442 = vadd.f32 %v2441, 1.0
    %v2443 = vrcp.pop %v2442
    %v2444 = vmul.f32 1.0, %v2443
    %v2445 = vtanh.pop %v2431
    %v2446 = vmul.f32 %v2437, 0.0
    %2448 = vrot.lane.b32.xlu0 %v2438, 96
    %v2449 = vpop.permute.xlu0 %2448
    %v2451 = vmul.f32 %v2437, %v2449
    %2453 = vrot.lane.b32.xlu0 %v2451, 16
    %v2454 = vpop.permute.xlu0 %2453
    %v2456 = vadd.f32 %v2446, %v2454
    %v2457 = vtanh.pop %v2456
    %2459 = vrot.lane.b32.xlu0 %v2457, 32
    %v2460 = vpop.permute.xlu0 %2459
    %v2462 = vmul.f32 %v2437, %v2460
    %v2463 = vmul.f32 %v2444, 0.0
    %2465 = vrot.lane.b32.xlu0 %v2445, 96
    %v2466 = vpop.permute.xlu0 %2465
    %v2468 = vmul.f32 %v2444, %v2466
    %2470 = vrot.lane.b32.xlu0 %v2468, 16
    %v2471 = vpop.permute.xlu0 %2470
    %v2473 = vadd.f32 %v2463, %v2471
    %v2474 = vtanh.pop %v2473
    %2476 = vrot.lane.b32.xlu0 %v2474, 32
    %v2477 = vpop.permute.xlu0 %2476
    %v2479 = vmul.f32 %v2444, %v2477
    %v2480 = vsel %vm452, %v2462, 0.0
    %2482 = vrot.lane.b32.xlu0 %v2480, 80
    %v2483 = vpop.permute.xlu0 %2482
    %2485 = vst.msk [vmem:[#allocation2] sm:$0xff] %vm244, %v2483
    %v2486 = vsel %vm463, %v2479, 0.0
    %2488 = vrot.lane.b32.xlu0 %v2486, 32
    %v2489 = vpop.permute.xlu0 %2488
    %2491 = vst.msk [vmem:[%s469] sm:$0xff] %vm470, %v2489
    %v2492 = vsel %vm452, %v2456, 0.0
    %v2493 = vsel %vm463, %v2473, 0.0
    %v2494 = vld [vmem:[%s474] sm:$0xff]
    %v2495 = vld [vmem:[%s2279] sm:$0xff]
    %v2496 = vld [vmem:[%s2279 + $0x8] sm:$0xff]
    %v2497 = vsel %vm244, %v2483, 0
    %2499 = vmatprep.subr.mxu0 0.0
    %2500 = vmatpush1.msra.mxu0 %v2495
    %2501 = vmatprep.subr.mxu0 0.0
    %2502 = vmatpush1.msra.mxu0 %v2496
    %2503 = vmatprep.subr.mxu0 0.0
    %2504 = vmatpush1.msra.mxu0 0.0
    %2505 = vmatprep.subr.mxu0 0.0
    %2506 = vmatpush1.msra.mxu0 0.0
    %2507 = vmatprep.subr.mxu0 0.0
    %2508 = vmatpush1.msra.mxu0 0.0
    %2509 = vmatprep.subr.mxu0 0.0
    %2510 = vmatpush1.msra.mxu0 0.0
    %2511 = vmatprep.subr.mxu0 0.0
    %2512 = vmatpush1.msra.mxu0 0.0
    %2513 = vmatprep.subr.mxu0 0.0
    %2514 = vmatpush1.msra.mxu0 0.0
    %2515 = vmatprep.subr.mxu0 0.0
    %2516 = vmatpush1.msra.mxu0 0.0
    %2517 = vmatprep.subr.mxu0 0.0
    %2518 = vmatpush1.msra.mxu0 0.0
    %2519 = vmatprep.subr.mxu0 0.0
    %2520 = vmatpush1.msra.mxu0 0.0
    %2521 = vmatprep.subr.mxu0 0.0
    %2522 = vmatpush1.msra.mxu0 0.0
    %2523 = vmatprep.subr.mxu0 0.0
    %2524 = vmatpush1.msra.mxu0 0.0
    %2525 = vmatprep.subr.mxu0 0.0
    %2526 = vmatpush1.msra.mxu0 0.0
    %2527 = vmatprep.subr.mxu0 0.0
    %2528 = vmatpush1.msra.mxu0 0.0
    %2529 = vmatprep.subr.mxu0 0.0
    %2530 = vmatpush1.msra.mxu0 0.0
    %2531 = vmatprep.subr.mxu0 0.0
    %2532 = vmatpush1.msra.mxu0 0.0
    %2533 = vmatprep.subr.mxu0 0.0
    %2534 = vmatpush1.msra.mxu0 0.0
    %2535 = vmatprep.subr.mxu0 0.0
    %2536 = vmatpush1.msra.mxu0 0.0
    %2537 = vmatprep.subr.mxu0 0.0
    %2538 = vmatpush1.msra.mxu0 0.0
    %2539 = vmatprep.subr.mxu0 0.0
    %2540 = vmatpush1.msra.mxu0 0.0
    %2541 = vmatprep.subr.mxu0 0.0
    %2542 = vmatpush1.msra.mxu0 0.0
    %2543 = vmatprep.subr.mxu0 0.0
    %2544 = vmatpush1.msra.mxu0 0.0
    %2545 = vmatprep.subr.mxu0 0.0
    %2546 = vmatpush1.msra.mxu0 0.0
    %2547 = vmatprep.subr.mxu0 0.0
    %2548 = vmatpush1.msra.mxu0 0.0
    %2549 = vmatprep.subr.mxu0 0.0
    %2550 = vmatpush1.msra.mxu0 0.0
    %2551 = vmatprep.subr.mxu0 0.0
    %2552 = vmatpush1.msra.mxu0 0.0
    %2553 = vmatprep.subr.mxu0 0.0
    %2554 = vmatpush1.msra.mxu0 0.0
    %2555 = vmatprep.subr.mxu0 0.0
    %2556 = vmatpush1.msra.mxu0 0.0
    %2557 = vmatprep.subr.mxu0 0.0
    %2558 = vmatpush1.msra.mxu0 0.0
    %2559 = vmatprep.subr.mxu0 0.0
    %2560 = vmatpush1.msra.mxu0 0.0
    %2561 = vmatprep.subr.mxu0 0.0
    %2562 = vmatpush1.msra.mxu0 0.0
    %2563 = vmatprep.mubr.f32.mxu0 0.0
    %2564 = vmatmul.mubr.f32.gmra.mrb[0].mxu0 %v2497
    %v2565 = vpop.f32.mrb[0].mxu0
    %v2566 = vadd.f32 0.0, %v2565
    %v2567 = vpop.f32.mrb[0].mxu0
    %2568 = vdwg.mxu0
    %v2569 = vadd.f32 %v2494, %v2566
    %v2570 = vld [vmem:[%s551] sm:$0xff]
    %v2571 = vld [vmem:[%s2354] sm:$0xff]
    %v2572 = vld [vmem:[%s2354 + $0x8] sm:$0xff]
    %2573 = vrot.lane.b32.xlu0 %v2486, 16
    %v2574 = vpop.permute.xlu0 %2573
    %v2575 = vsel %vm244, %v2574, 0
    %2577 = vmatprep.subr.mxu0 0.0
    %2578 = vmatpush1.msra.mxu0 %v2571
    %2579 = vmatprep.subr.mxu0 0.0
    %2580 = vmatpush1.msra.mxu0 %v2572
    %2581 = vmatprep.subr.mxu0 0.0
    %2582 = vmatpush1.msra.mxu0 0.0
    %2583 = vmatprep.subr.mxu0 0.0
    %2584 = vmatpush1.msra.mxu0 0.0
    %2585 = vmatprep.subr.mxu0 0.0
    %2586 = vmatpush1.msra.mxu0 0.0
    %2587 = vmatprep.subr.mxu0 0.0
    %2588 = vmatpush1.msra.mxu0 0.0
    %2589 = vmatprep.subr.mxu0 0.0
    %2590 = vmatpush1.msra.mxu0 0.0
    %2591 = vmatprep.subr.mxu0 0.0
    %2592 = vmatpush1.msra.mxu0 0.0
    %2593 = vmatprep.subr.mxu0 0.0
    %2594 = vmatpush1.msra.mxu0 0.0
    %2595 = vmatprep.subr.mxu0 0.0
    %2596 = vmatpush1.msra.mxu0 0.0
    %2597 = vmatprep.subr.mxu0 0.0
    %2598 = vmatpush1.msra.mxu0 0.0
    %2599 = vmatprep.subr.mxu0 0.0
    %2600 = vmatpush1.msra.mxu0 0.0
    %2601 = vmatprep.subr.mxu0 0.0
    %2602 = vmatpush1.msra.mxu0 0.0
    %2603 = vmatprep.subr.mxu0 0.0
    %2604 = vmatpush1.msra.mxu0 0.0
    %2605 = vmatprep.subr.mxu0 0.0
    %2606 = vmatpush1.msra.mxu0 0.0
    %2607 = vmatprep.subr.mxu0 0.0
    %2608 = vmatpush1.msra.mxu0 0.0
    %2609 = vmatprep.subr.mxu0 0.0
    %2610 = vmatpush1.msra.mxu0 0.0
    %2611 = vmatprep.subr.mxu0 0.0
    %2612 = vmatpush1.msra.mxu0 0.0
    %2613 = vmatprep.subr.mxu0 0.0
    %2614 = vmatpush1.msra.mxu0 0.0
    %2615 = vmatprep.subr.mxu0 0.0
    %2616 = vmatpush1.msra.mxu0 0.0
    %2617 = vmatprep.subr.mxu0 0.0
    %2618 = vmatpush1.msra.mxu0 0.0
    %2619 = vmatprep.subr.mxu0 0.0
    %2620 = vmatpush1.msra.mxu0 0.0
    %2621 = vmatprep.subr.mxu0 0.0
    %2622 = vmatpush1.msra.mxu0 0.0
    %2623 = vmatprep.subr.mxu0 0.0
    %2624 = vmatpush1.msra.mxu0 0.0
    %2625 = vmatprep.subr.mxu0 0.0
    %2626 = vmatpush1.msra.mxu0 0.0
    %2627 = vmatprep.subr.mxu0 0.0
    %2628 = vmatpush1.msra.mxu0 0.0
    %2629 = vmatprep.subr.mxu0 0.0
    %2630 = vmatpush1.msra.mxu0 0.0
    %2631 = vmatprep.subr.mxu0 0.0
    %2632 = vmatpush1.msra.mxu0 0.0
    %2633 = vmatprep.subr.mxu0 0.0
    %2634 = vmatpush1.msra.mxu0 0.0
    %2635 = vmatprep.subr.mxu0 0.0
    %2636 = vmatpush1.msra.mxu0 0.0
    %2637 = vmatprep.subr.mxu0 0.0
    %2638 = vmatpush1.msra.mxu0 0.0
    %2639 = vmatprep.subr.mxu0 0.0
    %2640 = vmatpush1.msra.mxu0 0.0
    %2641 = vmatprep.mubr.f32.mxu0 0.0
    %2642 = vmatmul.mubr.f32.gmra.mrb[0].mxu0 %v2575
    %v2643 = vpop.f32.mrb[0].mxu0
    %v2644 = vadd.f32 0.0, %v2643
    %v2645 = vpop.f32.mrb[0].mxu0
    %2646 = vdwg.mxu0
    %2648 = vrot.lane.b32.xlu0 %v2644, 64
    %v2649 = vpop.permute.xlu0 %2648
    %v2651 = vadd.f32 %v2570, %v2649
    %v2652 = vxor.u32 %v2569, 2147483648
    %v2653 = vmul.f32 %v2652, 1.442695
    %v2654 = vpow.pop %v2653
    %v2655 = vadd.f32 %v2654, 1.0
    %v2656 = vrcp.pop %v2655
    %v2657 = vmul.f32 1.0, %v2656
    %v2658 = vtanh.pop %v2569
    %v2659 = vxor.u32 %v2651, 2147483648
    %v2660 = vmul.f32 %v2659, 1.442695
    %v2661 = vpow.pop %v2660
    %v2662 = vadd.f32 %v2661, 1.0
    %v2663 = vrcp.pop %v2662
    %v2664 = vmul.f32 1.0, %v2663
    %v2665 = vtanh.pop %v2651
    %v2666 = vmul.f32 %v2657, %v2492
    %2668 = vrot.lane.b32.xlu0 %v2658, 96
    %v2669 = vpop.permute.xlu0 %2668
    %v2671 = vmul.f32 %v2657, %v2669
    %2673 = vrot.lane.b32.xlu0 %v2671, 16
    %v2674 = vpop.permute.xlu0 %2673
    %v2676 = vadd.f32 %v2666, %v2674
    %v2677 = vtanh.pop %v2676
    %2679 = vrot.lane.b32.xlu0 %v2677, 32
    %v2680 = vpop.permute.xlu0 %2679
    %v2682 = vmul.f32 %v2657, %v2680
    %v2683 = vmul.f32 %v2664, %v2493
    %2685 = vrot.lane.b32.xlu0 %v2665, 96
    %v2686 = vpop.permute.xlu0 %2685
    %v2688 = vmul.f32 %v2664, %v2686
    %2690 = vrot.lane.b32.xlu0 %v2688, 16
    %v2691 = vpop.permute.xlu0 %2690
    %v2693 = vadd.f32 %v2683, %v2691
    %v2694 = vtanh.pop %v2693
    %2696 = vrot.lane.b32.xlu0 %v2694, 32
    %v2697 = vpop.permute.xlu0 %2696
    %v2699 = vmul.f32 %v2664, %v2697
    %v2700 = vsel %vm688, %v2682, 0.0
    %2702 = vrot.lane.b32.xlu0 %v2700, 80
    %v2703 = vpop.permute.xlu0 %2702
    %2705 = vst.msk [vmem:[%s694] sm:$0xff] %vm244, %v2703
    %v2706 = vsel %vm700, %v2699, 0.0
    %2708 = vrot.lane.b32.xlu0 %v2706, 32
    %v2709 = vpop.permute.xlu0 %2708
    %2711 = vst.msk [vmem:[%s706] sm:$0xff] %vm470, %v2709
    %v2712 = vsel %vm688, %v2682, %v2480
    %v2713 = vsel %vm688, %v2676, %v2492
    %v2714 = vsel %vm700, %v2699, %v2486
    %v2715 = vsel %vm700, %v2693, %v2493
    %v2716 = vld [vmem:[%s712] sm:$0xff]
    %v2717 = vld [vmem:[%s2279] sm:$0xff]
    %v2718 = vld [vmem:[%s2279 + $0x8] sm:$0xff]
    %2720 = vrot.lane.b32.xlu0 %v2712, 80
    %v2721 = vpop.permute.xlu0 %2720
    %v2722 = vsel %vm244, %v2721, 0
    %2724 = vmatprep.subr.mxu0 0.0
    %2725 = vmatpush1.msra.mxu0 %v2717
    %2726 = vmatprep.subr.mxu0 0.0
    %2727 = vmatpush1.msra.mxu0 %v2718
    %2728 = vmatprep.subr.mxu0 0.0
    %2729 = vmatpush1.msra.mxu0 0.0
    %2730 = vmatprep.subr.mxu0 0.0
    %2731 = vmatpush1.msra.mxu0 0.0
    %2732 = vmatprep.subr.mxu0 0.0
    %2733 = vmatpush1.msra.mxu0 0.0
    %2734 = vmatprep.subr.mxu0 0.0
    %2735 = vmatpush1.msra.mxu0 0.0
    %2736 = vmatprep.subr.mxu0 0.0
    %2737 = vmatpush1.msra.mxu0 0.0
    %2738 = vmatprep.subr.mxu0 0.0
    %2739 = vmatpush1.msra.mxu0 0.0
    %2740 = vmatprep.subr.mxu0 0.0
    %2741 = vmatpush1.msra.mxu0 0.0
    %2742 = vmatprep.subr.mxu0 0.0
    %2743 = vmatpush1.msra.mxu0 0.0
    %2744 = vmatprep.subr.mxu0 0.0
    %2745 = vmatpush1.msra.mxu0 0.0
    %2746 = vmatprep.subr.mxu0 0.0
    %2747 = vmatpush1.msra.mxu0 0.0
    %2748 = vmatprep.subr.mxu0 0.0
    %2749 = vmatpush1.msra.mxu0 0.0
    %2750 = vmatprep.subr.mxu0 0.0
    %2751 = vmatpush1.msra.mxu0 0.0
    %2752 = vmatprep.subr.mxu0 0.0
    %2753 = vmatpush1.msra.mxu0 0.0
    %2754 = vmatprep.subr.mxu0 0.0
    %2755 = vmatpush1.msra.mxu0 0.0
    %2756 = vmatprep.subr.mxu0 0.0
    %2757 = vmatpush1.msra.mxu0 0.0
    %2758 = vmatprep.subr.mxu0 0.0
    %2759 = vmatpush1.msra.mxu0 0.0
    %2760 = vmatprep.subr.mxu0 0.0
    %2761 = vmatpush1.msra.mxu0 0.0
    %2762 = vmatprep.subr.mxu0 0.0
    %2763 = vmatpush1.msra.mxu0 0.0
    %2764 = vmatprep.subr.mxu0 0.0
    %2765 = vmatpush1.msra.mxu0 0.0
    %2766 = vmatprep.subr.mxu0 0.0
    %2767 = vmatpush1.msra.mxu0 0.0
    %2768 = vmatprep.subr.mxu0 0.0
    %2769 = vmatpush1.msra.mxu0 0.0
    %2770 = vmatprep.subr.mxu0 0.0
    %2771 = vmatpush1.msra.mxu0 0.0
    %2772 = vmatprep.subr.mxu0 0.0
    %2773 = vmatpush1.msra.mxu0 0.0
    %2774 = vmatprep.subr.mxu0 0.0
    %2775 = vmatpush1.msra.mxu0 0.0
    %2776 = vmatprep.subr.mxu0 0.0
    %2777 = vmatpush1.msra.mxu0 0.0
    %2778 = vmatprep.subr.mxu0 0.0
    %2779 = vmatpush1.msra.mxu0 0.0
    %2780 = vmatprep.subr.mxu0 0.0
    %2781 = vmatpush1.msra.mxu0 0.0
    %2782 = vmatprep.subr.mxu0 0.0
    %2783 = vmatpush1.msra.mxu0 0.0
    %2784 = vmatprep.subr.mxu0 0.0
    %2785 = vmatpush1.msra.mxu0 0.0
    %2786 = vmatprep.subr.mxu0 0.0
    %2787 = vmatpush1.msra.mxu0 0.0
    %2788 = vmatprep.mubr.f32.mxu0 0.0
    %2789 = vmatmul.mubr.f32.gmra.mrb[0].mxu0 %v2722
    %v2790 = vpop.f32.mrb[0].mxu0
    %v2791 = vadd.f32 0.0, %v2790
    %v2792 = vpop.f32.mrb[0].mxu0
    %2793 = vdwg.mxu0
    %v2794 = vadd.f32 %v2716, %v2791
    %v2795 = vld [vmem:[%s792] sm:$0xff]
    %v2796 = vld [vmem:[%s2354] sm:$0xff]
    %v2797 = vld [vmem:[%s2354 + $0x8] sm:$0xff]
    %2799 = vrot.lane.b32.xlu0 %v2714, 16
    %v2800 = vpop.permute.xlu0 %2799
    %v2801 = vsel %vm244, %v2800, 0
    %2803 = vmatprep.subr.mxu0 0.0
    %2804 = vmatpush1.msra.mxu0 %v2796
    %2805 = vmatprep.subr.mxu0 0.0
    %2806 = vmatpush1.msra.mxu0 %v2797
    %2807 = vmatprep.subr.mxu0 0.0
    %2808 = vmatpush1.msra.mxu0 0.0
    %2809 = vmatprep.subr.mxu0 0.0
    %2810 = vmatpush1.msra.mxu0 0.0
    %2811 = vmatprep.subr.mxu0 0.0
    %2812 = vmatpush1.msra.mxu0 0.0
    %2813 = vmatprep.subr.mxu0 0.0
    %2814 = vmatpush1.msra.mxu0 0.0
    %2815 = vmatprep.subr.mxu0 0.0
    %2816 = vmatpush1.msra.mxu0 0.0
    %2817 = vmatprep.subr.mxu0 0.0
    %2818 = vmatpush1.msra.mxu0 0.0
    %2819 = vmatprep.subr.mxu0 0.0
    %2820 = vmatpush1.msra.mxu0 0.0
    %2821 = vmatprep.subr.mxu0 0.0
    %2822 = vmatpush1.msra.mxu0 0.0
    %2823 = vmatprep.subr.mxu0 0.0
    %2824 = vmatpush1.msra.mxu0 0.0
    %2825 = vmatprep.subr.mxu0 0.0
    %2826 = vmatpush1.msra.mxu0 0.0
    %2827 = vmatprep.subr.mxu0 0.0
    %2828 = vmatpush1.msra.mxu0 0.0
    %2829 = vmatprep.subr.mxu0 0.0
    %2830 = vmatpush1.msra.mxu0 0.0
    %2831 = vmatprep.subr.mxu0 0.0
    %2832 = vmatpush1.msra.mxu0 0.0
    %2833 = vmatprep.subr.mxu0 0.0
    %2834 = vmatpush1.msra.mxu0 0.0
    %2835 = vmatprep.subr.mxu0 0.0
    %2836 = vmatpush1.msra.mxu0 0.0
    %2837 = vmatprep.subr.mxu0 0.0
    %2838 = vmatpush1.msra.mxu0 0.0
    %2839 = vmatprep.subr.mxu0 0.0
    %2840 = vmatpush1.msra.mxu0 0.0
    %2841 = vmatprep.subr.mxu0 0.0
    %2842 = vmatpush1.msra.mxu0 0.0
    %2843 = vmatprep.subr.mxu0 0.0
    %2844 = vmatpush1.msra.mxu0 0.0
    %2845 = vmatprep.subr.mxu0 0.0
    %2846 = vmatpush1.msra.mxu0 0.0
    %2847 = vmatprep.subr.mxu0 0.0
    %2848 = vmatpush1.msra.mxu0 0.0
    %2849 = vmatprep.subr.mxu0 0.0
    %2850 = vmatpush1.msra.mxu0 0.0
    %2851 = vmatprep.subr.mxu0 0.0
    %2852 = vmatpush1.msra.mxu0 0.0
    %2853 = vmatprep.subr.mxu0 0.0
    %2854 = vmatpush1.msra.mxu0 0.0
    %2855 = vmatprep.subr.mxu0 0.0
    %2856 = vmatpush1.msra.mxu0 0.0
    %2857 = vmatprep.subr.mxu0 0.0
    %2858 = vmatpush1.msra.mxu0 0.0
    %2859 = vmatprep.subr.mxu0 0.0
    %2860 = vmatpush1.msra.mxu0 0.0
    %2861 = vmatprep.subr.mxu0 0.0
    %2862 = vmatpush1.msra.mxu0 0.0
    %2863 = vmatprep.subr.mxu0 0.0
    %2864 = vmatpush1.msra.mxu0 0.0
    %2865 = vmatprep.subr.mxu0 0.0
    %2866 = vmatpush1.msra.mxu0 0.0
    %2867 = vmatprep.mubr.f32.mxu0 0.0
    %2868 = vmatmul.mubr.f32.gmra.mrb[0].mxu0 %v2801
    %v2869 = vpop.f32.mrb[0].mxu0
    %v2870 = vadd.f32 0.0, %v2869
    %v2871 = vpop.f32.mrb[0].mxu0
    %2872 = vdwg.mxu0
    %2874 = vrot.lane.b32.xlu0 %v2870, 64
    %v2875 = vpop.permute.xlu0 %2874
    %v2877 = vadd.f32 %v2795, %v2875
    %v2878 = vxor.u32 %v2794, 2147483648
    %v2879 = vmul.f32 %v2878, 1.442695
    %v2880 = vpow.pop %v2879
    %v2881 = vadd.f32 %v2880, 1.0
    %v2882 = vrcp.pop %v2881
    %v2883 = vmul.f32 1.0, %v2882
    %v2884 = vtanh.pop %v2794
    %v2885 = vxor.u32 %v2877, 2147483648
    %v2886 = vmul.f32 %v2885, 1.442695
    %v2887 = vpow.pop %v2886
    %v2888 = vadd.f32 %v2887, 1.0
    %v2889 = vrcp.pop %v2888
    %v2890 = vmul.f32 1.0, %v2889
    %v2891 = vtanh.pop %v2877
    %v2892 = vmul.f32 %v2883, %v2713
    %2894 = vrot.lane.b32.xlu0 %v2884, 96
    %v2895 = vpop.permute.xlu0 %2894
    %v2897 = vmul.f32 %v2883, %v2895
    %2899 = vrot.lane.b32.xlu0 %v2897, 16
    %v2900 = vpop.permute.xlu0 %2899
    %v2902 = vadd.f32 %v2892, %v2900
    %v2903 = vtanh.pop %v2902
    %2905 = vrot.lane.b32.xlu0 %v2903, 32
    %v2906 = vpop.permute.xlu0 %2905
    %v2908 = vmul.f32 %v2883, %v2906
    %v2909 = vmul.f32 %v2890, %v2715
    %2911 = vrot.lane.b32.xlu0 %v2891, 96
    %v2912 = vpop.permute.xlu0 %2911
    %v2914 = vmul.f32 %v2890, %v2912
    %2916 = vrot.lane.b32.xlu0 %v2914, 16
    %v2917 = vpop.permute.xlu0 %2916
    %v2919 = vadd.f32 %v2909, %v2917
    %v2920 = vtanh.pop %v2919
    %2922 = vrot.lane.b32.xlu0 %v2920, 32
    %v2923 = vpop.permute.xlu0 %2922
    %v2925 = vmul.f32 %v2890, %v2923
    %v2926 = vsel %vm930, %v2908, 0.0
    %2928 = vrot.lane.b32.xlu0 %v2926, 80
    %v2929 = vpop.permute.xlu0 %2928
    %2931 = vst.msk [vmem:[%s936] sm:$0xff] %vm244, %v2929
    %v2932 = vsel %vm942, %v2925, 0.0
    %2934 = vrot.lane.b32.xlu0 %v2932, 32
    %v2935 = vpop.permute.xlu0 %2934
    %2937 = vst.msk [vmem:[%s948] sm:$0xff] %vm470, %v2935
    %v2938 = vsel %vm930, %v2908, %v2712
    %v2939 = vsel %vm930, %v2902, %v2713
    %v2940 = vsel %vm942, %v2925, %v2714
    %v2941 = vsel %vm942, %v2919, %v2715
    %v2942 = vld [vmem:[%s954] sm:$0xff]
    %v2943 = vld [vmem:[%s2279] sm:$0xff]
    %v2944 = vld [vmem:[%s2279 + $0x8] sm:$0xff]
    %2946 = vrot.lane.b32.xlu0 %v2938, 80
    %v2947 = vpop.permute.xlu0 %2946
    %v2948 = vsel %vm244, %v2947, 0
    %2950 = vmatprep.subr.mxu0 0.0
    %2951 = vmatpush1.msra.mxu0 %v2943
    %2952 = vmatprep.subr.mxu0 0.0
    %2953 = vmatpush1.msra.mxu0 %v2944
    %2954 = vmatprep.subr.mxu0 0.0
    %2955 = vmatpush1.msra.mxu0 0.0
    %2956 = vmatprep.subr.mxu0 0.0
    %2957 = vmatpush1.msra.mxu0 0.0
    %2958 = vmatprep.subr.mxu0 0.0
    %2959 = vmatpush1.msra.mxu0 0.0
    %2960 = vmatprep.subr.mxu0 0.0
    %2961 = vmatpush1.msra.mxu0 0.0
    %2962 = vmatprep.subr.mxu0 0.0
    %2963 = vmatpush1.msra.mxu0 0.0
    %2964 = vmatprep.subr.mxu0 0.0
    %2965 = vmatpush1.msra.mxu0 0.0
    %2966 = vmatprep.subr.mxu0 0.0
    %2967 = vmatpush1.msra.mxu0 0.0
    %2968 = vmatprep.subr.mxu0 0.0
    %2969 = vmatpush1.msra.mxu0 0.0
    %2970 = vmatprep.subr.mxu0 0.0
    %2971 = vmatpush1.msra.mxu0 0.0
    %2972 = vmatprep.subr.mxu0 0.0
    %2973 = vmatpush1.msra.mxu0 0.0
    %2974 = vmatprep.subr.mxu0 0.0
    %2975 = vmatpush1.msra.mxu0 0.0
    %2976 = vmatprep.subr.mxu0 0.0
    %2977 = vmatpush1.msra.mxu0 0.0
    %2978 = vmatprep.subr.mxu0 0.0
    %2979 = vmatpush1.msra.mxu0 0.0
    %2980 = vmatprep.subr.mxu0 0.0
    %2981 = vmatpush1.msra.mxu0 0.0
    %2982 = vmatprep.subr.mxu0 0.0
    %2983 = vmatpush1.msra.mxu0 0.0
    %2984 = vmatprep.subr.mxu0 0.0
    %2985 = vmatpush1.msra.mxu0 0.0
    %2986 = vmatprep.subr.mxu0 0.0
    %2987 = vmatpush1.msra.mxu0 0.0
    %2988 = vmatprep.subr.mxu0 0.0
    %2989 = vmatpush1.msra.mxu0 0.0
    %2990 = vmatprep.subr.mxu0 0.0
    %2991 = vmatpush1.msra.mxu0 0.0
    %2992 = vmatprep.subr.mxu0 0.0
    %2993 = vmatpush1.msra.mxu0 0.0
    %2994 = vmatprep.subr.mxu0 0.0
    %2995 = vmatpush1.msra.mxu0 0.0
    %2996 = vmatprep.subr.mxu0 0.0
    %2997 = vmatpush1.msra.mxu0 0.0
    %2998 = vmatprep.subr.mxu0 0.0
    %2999 = vmatpush1.msra.mxu0 0.0
    %3000 = vmatprep.subr.mxu0 0.0
    %3001 = vmatpush1.msra.mxu0 0.0
    %3002 = vmatprep.subr.mxu0 0.0
    %3003 = vmatpush1.msra.mxu0 0.0
    %3004 = vmatprep.subr.mxu0 0.0
    %3005 = vmatpush1.msra.mxu0 0.0
    %3006 = vmatprep.subr.mxu0 0.0
    %3007 = vmatpush1.msra.mxu0 0.0
    %3008 = vmatprep.subr.mxu0 0.0
    %3009 = vmatpush1.msra.mxu0 0.0
    %3010 = vmatprep.subr.mxu0 0.0
    %3011 = vmatpush1.msra.mxu0 0.0
    %3012 = vmatprep.subr.mxu0 0.0
    %3013 = vmatpush1.msra.mxu0 0.0
    %3014 = vmatprep.mubr.f32.mxu0 0.0
    %3015 = vmatmul.mubr.f32.gmra.mrb[0].mxu0 %v2948
    %v3016 = vpop.f32.mrb[0].mxu0
    %v3017 = vadd.f32 0.0, %v3016
    %v3018 = vpop.f32.mrb[0].mxu0
    %3019 = vdwg.mxu0
    %v3020 = vadd.f32 %v2942, %v3017
    %v3021 = vld [vmem:[%s1034] sm:$0xff]
    %v3022 = vld [vmem:[%s2354] sm:$0xff]
    %v3023 = vld [vmem:[%s2354 + $0x8] sm:$0xff]
    %3025 = vrot.lane.b32.xlu0 %v2940, 16
    %v3026 = vpop.permute.xlu0 %3025
    %v3027 = vsel %vm244, %v3026, 0
    %3029 = vmatprep.subr.mxu0 0.0
    %3030 = vmatpush1.msra.mxu0 %v3022
    %3031 = vmatprep.subr.mxu0 0.0
    %3032 = vmatpush1.msra.mxu0 %v3023
    %3033 = vmatprep.subr.mxu0 0.0
    %3034 = vmatpush1.msra.mxu0 0.0
    %3035 = vmatprep.subr.mxu0 0.0
    %3036 = vmatpush1.msra.mxu0 0.0
    %3037 = vmatprep.subr.mxu0 0.0
    %3038 = vmatpush1.msra.mxu0 0.0
    %3039 = vmatprep.subr.mxu0 0.0
    %3040 = vmatpush1.msra.mxu0 0.0
    %3041 = vmatprep.subr.mxu0 0.0
    %3042 = vmatpush1.msra.mxu0 0.0
    %3043 = vmatprep.subr.mxu0 0.0
    %3044 = vmatpush1.msra.mxu0 0.0
    %3045 = vmatprep.subr.mxu0 0.0
    %3046 = vmatpush1.msra.mxu0 0.0
    %3047 = vmatprep.subr.mxu0 0.0
    %3048 = vmatpush1.msra.mxu0 0.0
    %3049 = vmatprep.subr.mxu0 0.0
    %3050 = vmatpush1.msra.mxu0 0.0
    %3051 = vmatprep.subr.mxu0 0.0
    %3052 = vmatpush1.msra.mxu0 0.0
    %3053 = vmatprep.subr.mxu0 0.0
    %3054 = vmatpush1.msra.mxu0 0.0
    %3055 = vmatprep.subr.mxu0 0.0
    %3056 = vmatpush1.msra.mxu0 0.0
    %3057 = vmatprep.subr.mxu0 0.0
    %3058 = vmatpush1.msra.mxu0 0.0
    %3059 = vmatprep.subr.mxu0 0.0
    %3060 = vmatpush1.msra.mxu0 0.0
    %3061 = vmatprep.subr.mxu0 0.0
    %3062 = vmatpush1.msra.mxu0 0.0
    %3063 = vmatprep.subr.mxu0 0.0
    %3064 = vmatpush1.msra.mxu0 0.0
    %3065 = vmatprep.subr.mxu0 0.0
    %3066 = vmatpush1.msra.mxu0 0.0
    %3067 = vmatprep.subr.mxu0 0.0
    %3068 = vmatpush1.msra.mxu0 0.0
    %3069 = vmatprep.subr.mxu0 0.0
    %3070 = vmatpush1.msra.mxu0 0.0
    %3071 = vmatprep.subr.mxu0 0.0
    %3072 = vmatpush1.msra.mxu0 0.0
    %3073 = vmatprep.subr.mxu0 0.0
    %3074 = vmatpush1.msra.mxu0 0.0
    %3075 = vmatprep.subr.mxu0 0.0
    %3076 = vmatpush1.msra.mxu0 0.0
    %3077 = vmatprep.subr.mxu0 0.0
    %3078 = vmatpush1.msra.mxu0 0.0
    %3079 = vmatprep.subr.mxu0 0.0
    %3080 = vmatpush1.msra.mxu0 0.0
    %3081 = vmatprep.subr.mxu0 0.0
    %3082 = vmatpush1.msra.mxu0 0.0
    %3083 = vmatprep.subr.mxu0 0.0
    %3084 = vmatpush1.msra.mxu0 0.0
    %3085 = vmatprep.subr.mxu0 0.0
    %3086 = vmatpush1.msra.mxu0 0.0
    %3087 = vmatprep.subr.mxu0 0.0
    %3088 = vmatpush1.msra.mxu0 0.0
    %3089 = vmatprep.subr.mxu0 0.0
    %3090 = vmatpush1.msra.mxu0 0.0
    %3091 = vmatprep.subr.mxu0 0.0
    %3092 = vmatpush1.msra.mxu0 0.0
    %3093 = vmatprep.mubr.f32.mxu0 0.0
    %3094 = vmatmul.mubr.f32.gmra.mrb[0].mxu0 %v3027
    %v3095 = vpop.f32.mrb[0].mxu0
    %v3096 = vadd.f32 0.0, %v3095
    %v3097 = vpop.f32.mrb[0].mxu0
    %3098 = vdwg.mxu0
    %3100 = vrot.lane.b32.xlu0 %v3096, 64
    %v3101 = vpop.permute.xlu0 %3100
    %v3103 = vadd.f32 %v3021, %v3101
    %v3104 = vxor.u32 %v3020, 2147483648
    %v3105 = vmul.f32 %v3104, 1.442695
    %v3106 = vpow.pop %v3105
    %v3107 = vadd.f32 %v3106, 1.0
    %v3108 = vrcp.pop %v3107
    %v3109 = vmul.f32 1.0, %v3108
    %v3110 = vtanh.pop %v3020
    %v3111 = vxor.u32 %v3103, 2147483648
    %v3112 = vmul.f32 %v3111, 1.442695
    %v3113 = vpow.pop %v3112
    %v3114 = vadd.f32 %v3113, 1.0
    %v3115 = vrcp.pop %v3114
    %v3116 = vmul.f32 1.0, %v3115
    %v3117 = vtanh.pop %v3103
    %v3118 = vmul.f32 %v3109, %v2939
    %3120 = vrot.lane.b32.xlu0 %v3110, 96
    %v3121 = vpop.permute.xlu0 %3120
    %v3123 = vmul.f32 %v3109, %v3121
    %3125 = vrot.lane.b32.xlu0 %v3123, 16
    %v3126 = vpop.permute.xlu0 %3125
    %v3128 = vadd.f32 %v3118, %v3126
    %v3129 = vtanh.pop %v3128
    %3131 = vrot.lane.b32.xlu0 %v3129, 32
    %v3132 = vpop.permute.xlu0 %3131
    %v3134 = vmul.f32 %v3109, %v3132
    %v3135 = vmul.f32 %v3116, %v2941
    %3137 = vrot.lane.b32.xlu0 %v3117, 96
    %v3138 = vpop.permute.xlu0 %3137
    %v3140 = vmul.f32 %v3116, %v3138
    %3142 = vrot.lane.b32.xlu0 %v3140, 16
    %v3143 = vpop.permute.xlu0 %3142
    %v3145 = vadd.f32 %v3135, %v3143
    %v3146 = vtanh.pop %v3145
    %3148 = vrot.lane.b32.xlu0 %v3146, 32
    %v3149 = vpop.permute.xlu0 %3148
    %v3151 = vmul.f32 %v3116, %v3149
    %v3152 = vsel %vm1172, %v3134, 0.0
    %3154 = vrot.lane.b32.xlu0 %v3152, 80
    %v3155 = vpop.permute.xlu0 %3154
    %3157 = vst.msk [vmem:[%s1178] sm:$0xff] %vm244, %v3155
    %v3158 = vsel %vm1184, %v3151, 0.0
    %3160 = vrot.lane.b32.xlu0 %v3158, 32
    %v3161 = vpop.permute.xlu0 %3160
    %3163 = vst.msk [vmem:[%s1190] sm:$0xff] %vm470, %v3161
    %v3164 = vsel %vm1172, %v3134, %v2938
    %v3165 = vsel %vm1172, %v3128, %v2939
    %v3166 = vsel %vm1184, %v3151, %v2940
    %v3167 = vsel %vm1184, %v3145, %v2941
    %v3168 = vld [vmem:[%s1034] sm:$0xff]
    %v3169 = vld [vmem:[%s2279] sm:$0xff]
    %v3170 = vld [vmem:[%s2279 + $0x8] sm:$0xff]
    %3172 = vrot.lane.b32.xlu0 %v3164, 80
    %v3173 = vpop.permute.xlu0 %3172
    %v3174 = vsel %vm244, %v3173, 0
    %3176 = vmatprep.subr.mxu0 0.0
    %3177 = vmatpush1.msra.mxu0 %v3169
    %3178 = vmatprep.subr.mxu0 0.0
    %3179 = vmatpush1.msra.mxu0 %v3170
    %3180 = vmatprep.subr.mxu0 0.0
    %3181 = vmatpush1.msra.mxu0 0.0
    %3182 = vmatprep.subr.mxu0 0.0
    %3183 = vmatpush1.msra.mxu0 0.0
    %3184 = vmatprep.subr.mxu0 0.0
    %3185 = vmatpush1.msra.mxu0 0.0
    %3186 = vmatprep.subr.mxu0 0.0
    %3187 = vmatpush1.msra.mxu0 0.0
    %3188 = vmatprep.subr.mxu0 0.0
    %3189 = vmatpush1.msra.mxu0 0.0
    %3190 = vmatprep.subr.mxu0 0.0
    %3191 = vmatpush1.msra.mxu0 0.0
    %3192 = vmatprep.subr.mxu0 0.0
    %3193 = vmatpush1.msra.mxu0 0.0
    %3194 = vmatprep.subr.mxu0 0.0
    %3195 = vmatpush1.msra.mxu0 0.0
    %3196 = vmatprep.subr.mxu0 0.0
    %3197 = vmatpush1.msra.mxu0 0.0
    %3198 = vmatprep.subr.mxu0 0.0
    %3199 = vmatpush1.msra.mxu0 0.0
    %3200 = vmatprep.subr.mxu0 0.0
    %3201 = vmatpush1.msra.mxu0 0.0
    %3202 = vmatprep.subr.mxu0 0.0
    %3203 = vmatpush1.msra.mxu0 0.0
    %3204 = vmatprep.subr.mxu0 0.0
    %3205 = vmatpush1.msra.mxu0 0.0
    %3206 = vmatprep.subr.mxu0 0.0
    %3207 = vmatpush1.msra.mxu0 0.0
    %3208 = vmatprep.subr.mxu0 0.0
    %3209 = vmatpush1.msra.mxu0 0.0
    %3210 = vmatprep.subr.mxu0 0.0
    %3211 = vmatpush1.msra.mxu0 0.0
    %3212 = vmatprep.subr.mxu0 0.0
    %3213 = vmatpush1.msra.mxu0 0.0
    %3214 = vmatprep.subr.mxu0 0.0
    %3215 = vmatpush1.msra.mxu0 0.0
    %3216 = vmatprep.subr.mxu0 0.0
    %3217 = vmatpush1.msra.mxu0 0.0
    %3218 = vmatprep.subr.mxu0 0.0
    %3219 = vmatpush1.msra.mxu0 0.0
    %3220 = vmatprep.subr.mxu0 0.0
    %3221 = vmatpush1.msra.mxu0 0.0
    %3222 = vmatprep.subr.mxu0 0.0
    %3223 = vmatpush1.msra.mxu0 0.0
    %3224 = vmatprep.subr.mxu0 0.0
    %3225 = vmatpush1.msra.mxu0 0.0
    %3226 = vmatprep.subr.mxu0 0.0
    %3227 = vmatpush1.msra.mxu0 0.0
    %3228 = vmatprep.subr.mxu0 0.0
    %3229 = vmatpush1.msra.mxu0 0.0
    %3230 = vmatprep.subr.mxu0 0.0
    %3231 = vmatpush1.msra.mxu0 0.0
    %3232 = vmatprep.subr.mxu0 0.0
    %3233 = vmatpush1.msra.mxu0 0.0
    %3234 = vmatprep.subr.mxu0 0.0
    %3235 = vmatpush1.msra.mxu0 0.0
    %3236 = vmatprep.subr.mxu0 0.0
    %3237 = vmatpush1.msra.mxu0 0.0
    %3238 = vmatprep.subr.mxu0 0.0
    %3239 = vmatpush1.msra.mxu0 0.0
    %3240 = vmatprep.mubr.f32.mxu0 0.0
    %3241 = vmatmul.mubr.f32.gmra.mrb[0].mxu0 %v3174
    %v3242 = vpop.f32.mrb[0].mxu0
    %v3243 = vadd.f32 0.0, %v3242
    %v3244 = vpop.f32.mrb[0].mxu0
    %3245 = vdwg.mxu0
    %v3246 = vadd.f32 %v3168, %v3243
    %v3247 = vld [vmem:[%s954] sm:$0xff]
    %v3248 = vld [vmem:[%s2354] sm:$0xff]
    %v3249 = vld [vmem:[%s2354 + $0x8] sm:$0xff]
    %3251 = vrot.lane.b32.xlu0 %v3166, 16
    %v3252 = vpop.permute.xlu0 %3251
    %v3253 = vsel %vm244, %v3252, 0
    %3255 = vmatprep.subr.mxu0 0.0
    %3256 = vmatpush1.msra.mxu0 %v3248
    %3257 = vmatprep.subr.mxu0 0.0
    %3258 = vmatpush1.msra.mxu0 %v3249
    %3259 = vmatprep.subr.mxu0 0.0
    %3260 = vmatpush1.msra.mxu0 0.0
    %3261 = vmatprep.subr.mxu0 0.0
    %3262 = vmatpush1.msra.mxu0 0.0
    %3263 = vmatprep.subr.mxu0 0.0
    %3264 = vmatpush1.msra.mxu0 0.0
    %3265 = vmatprep.subr.mxu0 0.0
    %3266 = vmatpush1.msra.mxu0 0.0
    %3267 = vmatprep.subr.mxu0 0.0
    %3268 = vmatpush1.msra.mxu0 0.0
    %3269 = vmatprep.subr.mxu0 0.0
    %3270 = vmatpush1.msra.mxu0 0.0
    %3271 = vmatprep.subr.mxu0 0.0
    %3272 = vmatpush1.msra.mxu0 0.0
    %3273 = vmatprep.subr.mxu0 0.0
    %3274 = vmatpush1.msra.mxu0 0.0
    %3275 = vmatprep.subr.mxu0 0.0
    %3276 = vmatpush1.msra.mxu0 0.0
    %3277 = vmatprep.subr.mxu0 0.0
    %3278 = vmatpush1.msra.mxu0 0.0
    %3279 = vmatprep.subr.mxu0 0.0
    %3280 = vmatpush1.msra.mxu0 0.0
    %3281 = vmatprep.subr.mxu0 0.0
    %3282 = vmatpush1.msra.mxu0 0.0
    %3283 = vmatprep.subr.mxu0 0.0
    %3284 = vmatpush1.msra.mxu0 0.0
    %3285 = vmatprep.subr.mxu0 0.0
    %3286 = vmatpush1.msra.mxu0 0.0
    %3287 = vmatprep.subr.mxu0 0.0
    %3288 = vmatpush1.msra.mxu0 0.0
    %3289 = vmatprep.subr.mxu0 0.0
    %3290 = vmatpush1.msra.mxu0 0.0
    %3291 = vmatprep.subr.mxu0 0.0
    %3292 = vmatpush1.msra.mxu0 0.0
    %3293 = vmatprep.subr.mxu0 0.0
    %3294 = vmatpush1.msra.mxu0 0.0
    %3295 = vmatprep.subr.mxu0 0.0
    %3296 = vmatpush1.msra.mxu0 0.0
    %3297 = vmatprep.subr.mxu0 0.0
    %3298 = vmatpush1.msra.mxu0 0.0
    %3299 = vmatprep.subr.mxu0 0.0
    %3300 = vmatpush1.msra.mxu0 0.0
    %3301 = vmatprep.subr.mxu0 0.0
    %3302 = vmatpush1.msra.mxu0 0.0
    %3303 = vmatprep.subr.mxu0 0.0
    %3304 = vmatpush1.msra.mxu0 0.0
    %3305 = vmatprep.subr.mxu0 0.0
    %3306 = vmatpush1.msra.mxu0 0.0
    %3307 = vmatprep.subr.mxu0 0.0
    %3308 = vmatpush1.msra.mxu0 0.0
    %3309 = vmatprep.subr.mxu0 0.0
    %3310 = vmatpush1.msra.mxu0 0.0
    %3311 = vmatprep.subr.mxu0 0.0
    %3312 = vmatpush1.msra.mxu0 0.0
    %3313 = vmatprep.subr.mxu0 0.0
    %3314 = vmatpush1.msra.mxu0 0.0
    %3315 = vmatprep.subr.mxu0 0.0
    %3316 = vmatpush1.msra.mxu0 0.0
    %3317 = vmatprep.subr.mxu0 0.0
    %3318 = vmatpush1.msra.mxu0 0.0
    %3319 = vmatprep.mubr.f32.mxu0 0.0
    %3320 = vmatmul.mubr.f32.gmra.mrb[0].mxu0 %v3253
    %v3321 = vpop.f32.mrb[0].mxu0
    %v3322 = vadd.f32 0.0, %v3321
    %v3323 = vpop.f32.mrb[0].mxu0
    %3324 = vdwg.mxu0
    %3326 = vrot.lane.b32.xlu0 %v3322, 64
    %v3327 = vpop.permute.xlu0 %3326
    %v3329 = vadd.f32 %v3247, %v3327
    %v3330 = vxor.u32 %v3246, 2147483648
    %v3331 = vmul.f32 %v3330, 1.442695
    %v3332 = vpow.pop %v3331
    %v3333 = vadd.f32 %v3332, 1.0
    %v3334 = vrcp.pop %v3333
    %v3335 = vmul.f32 1.0, %v3334
    %v3336 = vtanh.pop %v3246
    %v3337 = vxor.u32 %v3329, 2147483648
    %v3338 = vmul.f32 %v3337, 1.442695
    %v3339 = vpow.pop %v3338
    %v3340 = vadd.f32 %v3339, 1.0
    %v3341 = vrcp.pop %v3340
    %v3342 = vmul.f32 1.0, %v3341
    %v3343 = vtanh.pop %v3329
    %v3344 = vmul.f32 %v3335, %v3165
    %3346 = vrot.lane.b32.xlu0 %v3336, 96
    %v3347 = vpop.permute.xlu0 %3346
    %v3349 = vmul.f32 %v3335, %v3347
    %3351 = vrot.lane.b32.xlu0 %v3349, 16
    %v3352 = vpop.permute.xlu0 %3351
    %v3354 = vadd.f32 %v3344, %v3352
    %v3355 = vtanh.pop %v3354
    %3357 = vrot.lane.b32.xlu0 %v3355, 32
    %v3358 = vpop.permute.xlu0 %3357
    %v3360 = vmul.f32 %v3335, %v3358
    %v3361 = vmul.f32 %v3342, %v3167
    %3363 = vrot.lane.b32.xlu0 %v3343, 96
    %v3364 = vpop.permute.xlu0 %3363
    %v3366 = vmul.f32 %v3342, %v3364
    %3368 = vrot.lane.b32.xlu0 %v3366, 16
    %v3369 = vpop.permute.xlu0 %3368
    %v3371 = vadd.f32 %v3361, %v3369
    %v3372 = vtanh.pop %v3371
    %3374 = vrot.lane.b32.xlu0 %v3372, 32
    %v3375 = vpop.permute.xlu0 %3374
    %v3377 = vmul.f32 %v3342, %v3375
    %v3378 = vsel %vm1184, %v3360, 0.0
    %3380 = vrot.lane.b32.xlu0 %v3378, 80
    %v3381 = vpop.permute.xlu0 %3380
    %3383 = vst.msk [vmem:[%s1190] sm:$0xff] %vm244, %v3381
    %v3384 = vsel %vm1172, %v3377, 0.0
    %3386 = vrot.lane.b32.xlu0 %v3384, 32
    %v3387 = vpop.permute.xlu0 %3386
    %3389 = vst.msk [vmem:[%s1178] sm:$0xff] %vm470, %v3387
    %v3390 = vsel %vm1184, %v3360, %v3164
    %v3391 = vsel %vm1184, %v3354, %v3165
    %v3392 = vsel %vm1172, %v3377, %v3166
    %v3393 = vsel %vm1172, %v3371, %v3167
    %v3394 = vld [vmem:[%s792] sm:$0xff]
    %v3395 = vld [vmem:[%s2279] sm:$0xff]
    %v3396 = vld [vmem:[%s2279 + $0x8] sm:$0xff]
    %3398 = vrot.lane.b32.xlu0 %v3390, 80
    %v3399 = vpop.permute.xlu0 %3398
    %v3400 = vsel %vm244, %v3399, 0
    %3402 = vmatprep.subr.mxu0 0.0
    %3403 = vmatpush1.msra.mxu0 %v3395
    %3404 = vmatprep.subr.mxu0 0.0
    %3405 = vmatpush1.msra.mxu0 %v3396
    %3406 = vmatprep.subr.mxu0 0.0
    %3407 = vmatpush1.msra.mxu0 0.0
    %3408 = vmatprep.subr.mxu0 0.0
    %3409 = vmatpush1.msra.mxu0 0.0
    %3410 = vmatprep.subr.mxu0 0.0
    %3411 = vmatpush1.msra.mxu0 0.0
    %3412 = vmatprep.subr.mxu0 0.0
    %3413 = vmatpush1.msra.mxu0 0.0
    %3414 = vmatprep.subr.mxu0 0.0
    %3415 = vmatpush1.msra.mxu0 0.0
    %3416 = vmatprep.subr.mxu0 0.0
    %3417 = vmatpush1.msra.mxu0 0.0
    %3418 = vmatprep.subr.mxu0 0.0
    %3419 = vmatpush1.msra.mxu0 0.0
    %3420 = vmatprep.subr.mxu0 0.0
    %3421 = vmatpush1.msra.mxu0 0.0
    %3422 = vmatprep.subr.mxu0 0.0
    %3423 = vmatpush1.msra.mxu0 0.0
    %3424 = vmatprep.subr.mxu0 0.0
    %3425 = vmatpush1.msra.mxu0 0.0
    %3426 = vmatprep.subr.mxu0 0.0
    %3427 = vmatpush1.msra.mxu0 0.0
    %3428 = vmatprep.subr.mxu0 0.0
    %3429 = vmatpush1.msra.mxu0 0.0
    %3430 = vmatprep.subr.mxu0 0.0
    %3431 = vmatpush1.msra.mxu0 0.0
    %3432 = vmatprep.subr.mxu0 0.0
    %3433 = vmatpush1.msra.mxu0 0.0
    %3434 = vmatprep.subr.mxu0 0.0
    %3435 = vmatpush1.msra.mxu0 0.0
    %3436 = vmatprep.subr.mxu0 0.0
    %3437 = vmatpush1.msra.mxu0 0.0
    %3438 = vmatprep.subr.mxu0 0.0
    %3439 = vmatpush1.msra.mxu0 0.0
    %3440 = vmatprep.subr.mxu0 0.0
    %3441 = vmatpush1.msra.mxu0 0.0
    %3442 = vmatprep.subr.mxu0 0.0
    %3443 = vmatpush1.msra.mxu0 0.0
    %3444 = vmatprep.subr.mxu0 0.0
    %3445 = vmatpush1.msra.mxu0 0.0
    %3446 = vmatprep.subr.mxu0 0.0
    %3447 = vmatpush1.msra.mxu0 0.0
    %3448 = vmatprep.subr.mxu0 0.0
    %3449 = vmatpush1.msra.mxu0 0.0
    %3450 = vmatprep.subr.mxu0 0.0
    %3451 = vmatpush1.msra.mxu0 0.0
    %3452 = vmatprep.subr.mxu0 0.0
    %3453 = vmatpush1.msra.mxu0 0.0
    %3454 = vmatprep.subr.mxu0 0.0
    %3455 = vmatpush1.msra.mxu0 0.0
    %3456 = vmatprep.subr.mxu0 0.0
    %3457 = vmatpush1.msra.mxu0 0.0
    %3458 = vmatprep.subr.mxu0 0.0
    %3459 = vmatpush1.msra.mxu0 0.0
    %3460 = vmatprep.subr.mxu0 0.0
    %3461 = vmatpush1.msra.mxu0 0.0
    %3462 = vmatprep.subr.mxu0 0.0
    %3463 = vmatpush1.msra.mxu0 0.0
    %3464 = vmatprep.subr.mxu0 0.0
    %3465 = vmatpush1.msra.mxu0 0.0
    %3466 = vmatprep.mubr.f32.mxu0 0.0
    %3467 = vmatmul.mubr.f32.gmra.mrb[0].mxu0 %v3400
    %v3468 = vpop.f32.mrb[0].mxu0
    %v3469 = vadd.f32 0.0, %v3468
    %v3470 = vpop.f32.mrb[0].mxu0
    %3471 = vdwg.mxu0
    %v3472 = vadd.f32 %v3394, %v3469
    %v3473 = vld [vmem:[%s712] sm:$0xff]
    %v3474 = vld [vmem:[%s2354] sm:$0xff]
    %v3475 = vld [vmem:[%s2354 + $0x8] sm:$0xff]
    %3477 = vrot.lane.b32.xlu0 %v3392, 16
    %v3478 = vpop.permute.xlu0 %3477
    %v3479 = vsel %vm244, %v3478, 0
    %3481 = vmatprep.subr.mxu0 0.0
    %3482 = vmatpush1.msra.mxu0 %v3474
    %3483 = vmatprep.subr.mxu0 0.0
    %3484 = vmatpush1.msra.mxu0 %v3475
    %3485 = vmatprep.subr.mxu0 0.0
    %3486 = vmatpush1.msra.mxu0 0.0
    %3487 = vmatprep.subr.mxu0 0.0
    %3488 = vmatpush1.msra.mxu0 0.0
    %3489 = vmatprep.subr.mxu0 0.0
    %3490 = vmatpush1.msra.mxu0 0.0
    %3491 = vmatprep.subr.mxu0 0.0
    %3492 = vmatpush1.msra.mxu0 0.0
    %3493 = vmatprep.subr.mxu0 0.0
    %3494 = vmatpush1.msra.mxu0 0.0
    %3495 = vmatprep.subr.mxu0 0.0
    %3496 = vmatpush1.msra.mxu0 0.0
    %3497 = vmatprep.subr.mxu0 0.0
    %3498 = vmatpush1.msra.mxu0 0.0
    %3499 = vmatprep.subr.mxu0 0.0
    %3500 = vmatpush1.msra.mxu0 0.0
    %3501 = vmatprep.subr.mxu0 0.0
    %3502 = vmatpush1.msra.mxu0 0.0
    %3503 = vmatprep.subr.mxu0 0.0
    %3504 = vmatpush1.msra.mxu0 0.0
    %3505 = vmatprep.subr.mxu0 0.0
    %3506 = vmatpush1.msra.mxu0 0.0
    %3507 = vmatprep.subr.mxu0 0.0
    %3508 = vmatpush1.msra.mxu0 0.0
    %3509 = vmatprep.subr.mxu0 0.0
    %3510 = vmatpush1.msra.mxu0 0.0
    %3511 = vmatprep.subr.mxu0 0.0
    %3512 = vmatpush1.msra.mxu0 0.0
    %3513 = vmatprep.subr.mxu0 0.0
    %3514 = vmatpush1.msra.mxu0 0.0
    %3515 = vmatprep.subr.mxu0 0.0
    %3516 = vmatpush1.msra.mxu0 0.0
    %3517 = vmatprep.subr.mxu0 0.0
    %3518 = vmatpush1.msra.mxu0 0.0
    %3519 = vmatprep.subr.mxu0 0.0
    %3520 = vmatpush1.msra.mxu0 0.0
    %3521 = vmatprep.subr.mxu0 0.0
    %3522 = vmatpush1.msra.mxu0 0.0
    %3523 = vmatprep.subr.mxu0 0.0
    %3524 = vmatpush1.msra.mxu0 0.0
    %3525 = vmatprep.subr.mxu0 0.0
    %3526 = vmatpush1.msra.mxu0 0.0
    %3527 = vmatprep.subr.mxu0 0.0
    %3528 = vmatpush1.msra.mxu0 0.0
    %3529 = vmatprep.subr.mxu0 0.0
    %3530 = vmatpush1.msra.mxu0 0.0
    %3531 = vmatprep.subr.mxu0 0.0
    %3532 = vmatpush1.msra.mxu0 0.0
    %3533 = vmatprep.subr.mxu0 0.0
    %3534 = vmatpush1.msra.mxu0 0.0
    %3535 = vmatprep.subr.mxu0 0.0
    %3536 = vmatpush1.msra.mxu0 0.0
    %3537 = vmatprep.subr.mxu0 0.0
    %3538 = vmatpush1.msra.mxu0 0.0
    %3539 = vmatprep.subr.mxu0 0.0
    %3540 = vmatpush1.msra.mxu0 0.0
    %3541 = vmatprep.subr.mxu0 0.0
    %3542 = vmatpush1.msra.mxu0 0.0
    %3543 = vmatprep.subr.mxu0 0.0
    %3544 = vmatpush1.msra.mxu0 0.0
    %3545 = vmatprep.mubr.f32.mxu0 0.0
    %3546 = vmatmul.mubr.f32.gmra.mrb[0].mxu0 %v3479
    %v3547 = vpop.f32.mrb[0].mxu0
    %v3548 = vadd.f32 0.0, %v3547
    %v3549 = vpop.f32.mrb[0].mxu0
    %3550 = vdwg.mxu0
    %3552 = vrot.lane.b32.xlu0 %v3548, 64
    %v3553 = vpop.permute.xlu0 %3552
    %v3555 = vadd.f32 %v3473, %v3553
    %v3556 = vxor.u32 %v3472, 2147483648
    %v3557 = vmul.f32 %v3556, 1.442695
    %v3558 = vpow.pop %v3557
    %v3559 = vadd.f32 %v3558, 1.0
    %v3560 = vrcp.pop %v3559
    %v3561 = vmul.f32 1.0, %v3560
    %v3562 = vtanh.pop %v3472
    %v3563 = vxor.u32 %v3555, 2147483648
    %v3564 = vmul.f32 %v3563, 1.442695
    %v3565 = vpow.pop %v3564
    %v3566 = vadd.f32 %v3565, 1.0
    %v3567 = vrcp.pop %v3566
    %v3568 = vmul.f32 1.0, %v3567
    %v3569 = vtanh.pop %v3555
    %v3570 = vmul.f32 %v3561, %v3391
    %3572 = vrot.lane.b32.xlu0 %v3562, 96
    %v3573 = vpop.permute.xlu0 %3572
    %v3575 = vmul.f32 %v3561, %v3573
    %3577 = vrot.lane.b32.xlu0 %v3575, 16
    %v3578 = vpop.permute.xlu0 %3577
    %v3580 = vadd.f32 %v3570, %v3578
    %v3581 = vtanh.pop %v3580
    %3583 = vrot.lane.b32.xlu0 %v3581, 32
    %v3584 = vpop.permute.xlu0 %3583
    %v3586 = vmul.f32 %v3561, %v3584
    %v3587 = vmul.f32 %v3568, %v3393
    %3589 = vrot.lane.b32.xlu0 %v3569, 96
    %v3590 = vpop.permute.xlu0 %3589
    %v3592 = vmul.f32 %v3568, %v3590
    %3594 = vrot.lane.b32.xlu0 %v3592, 16
    %v3595 = vpop.permute.xlu0 %3594
    %v3597 = vadd.f32 %v3587, %v3595
    %v3598 = vtanh.pop %v3597
    %3600 = vrot.lane.b32.xlu0 %v3598, 32
    %v3601 = vpop.permute.xlu0 %3600
    %v3603 = vmul.f32 %v3568, %v3601
    %v3604 = vsel %vm942, %v3586, 0.0
    %3606 = vrot.lane.b32.xlu0 %v3604, 80
    %v3607 = vpop.permute.xlu0 %3606
    %3609 = vst.msk [vmem:[%s948] sm:$0xff] %vm244, %v3607
    %v3610 = vsel %vm930, %v3603, 0.0
    %3612 = vrot.lane.b32.xlu0 %v3610, 32
    %v3613 = vpop.permute.xlu0 %3612
    %3615 = vst.msk [vmem:[%s936] sm:$0xff] %vm470, %v3613
    %v3616 = vsel %vm942, %v3586, %v3390
    %v3617 = vsel %vm942, %v3580, %v3391
    %v3618 = vsel %vm930, %v3603, %v3392
    %v3619 = vsel %vm930, %v3597, %v3393
    %v3620 = vld [vmem:[%s551] sm:$0xff]
    %v3621 = vld [vmem:[%s2279] sm:$0xff]
    %v3622 = vld [vmem:[%s2279 + $0x8] sm:$0xff]
    %3624 = vrot.lane.b32.xlu0 %v3616, 80
    %v3625 = vpop.permute.xlu0 %3624
    %v3626 = vsel %vm244, %v3625, 0
    %3628 = vmatprep.subr.mxu0 0.0
    %3629 = vmatpush1.msra.mxu0 %v3621
    %3630 = vmatprep.subr.mxu0 0.0
    %3631 = vmatpush1.msra.mxu0 %v3622
    %3632 = vmatprep.subr.mxu0 0.0
    %3633 = vmatpush1.msra.mxu0 0.0
    %3634 = vmatprep.subr.mxu0 0.0
    %3635 = vmatpush1.msra.mxu0 0.0
    %3636 = vmatprep.subr.mxu0 0.0
    %3637 = vmatpush1.msra.mxu0 0.0
    %3638 = vmatprep.subr.mxu0 0.0
    %3639 = vmatpush1.msra.mxu0 0.0
    %3640 = vmatprep.subr.mxu0 0.0
    %3641 = vmatpush1.msra.mxu0 0.0
    %3642 = vmatprep.subr.mxu0 0.0
    %3643 = vmatpush1.msra.mxu0 0.0
    %3644 = vmatprep.subr.mxu0 0.0
    %3645 = vmatpush1.msra.mxu0 0.0
    %3646 = vmatprep.subr.mxu0 0.0
    %3647 = vmatpush1.msra.mxu0 0.0
    %3648 = vmatprep.subr.mxu0 0.0
    %3649 = vmatpush1.msra.mxu0 0.0
    %3650 = vmatprep.subr.mxu0 0.0
    %3651 = vmatpush1.msra.mxu0 0.0
    %3652 = vmatprep.subr.mxu0 0.0
    %3653 = vmatpush1.msra.mxu0 0.0
    %3654 = vmatprep.subr.mxu0 0.0
    %3655 = vmatpush1.msra.mxu0 0.0
    %3656 = vmatprep.subr.mxu0 0.0
    %3657 = vmatpush1.msra.mxu0 0.0
    %3658 = vmatprep.subr.mxu0 0.0
    %3659 = vmatpush1.msra.mxu0 0.0
    %3660 = vmatprep.subr.mxu0 0.0
    %3661 = vmatpush1.msra.mxu0 0.0
    %3662 = vmatprep.subr.mxu0 0.0
    %3663 = vmatpush1.msra.mxu0 0.0
    %3664 = vmatprep.subr.mxu0 0.0
    %3665 = vmatpush1.msra.mxu0 0.0
    %3666 = vmatprep.subr.mxu0 0.0
    %3667 = vmatpush1.msra.mxu0 0.0
    %3668 = vmatprep.subr.mxu0 0.0
    %3669 = vmatpush1.msra.mxu0 0.0
    %3670 = vmatprep.subr.mxu0 0.0
    %3671 = vmatpush1.msra.mxu0 0.0
    %3672 = vmatprep.subr.mxu0 0.0
    %3673 = vmatpush1.msra.mxu0 0.0
    %3674 = vmatprep.subr.mxu0 0.0
    %3675 = vmatpush1.msra.mxu0 0.0
    %3676 = vmatprep.subr.mxu0 0.0
    %3677 = vmatpush1.msra.mxu0 0.0
    %3678 = vmatprep.subr.mxu0 0.0
    %3679 = vmatpush1.msra.mxu0 0.0
    %3680 = vmatprep.subr.mxu0 0.0
    %3681 = vmatpush1.msra.mxu0 0.0
    %3682 = vmatprep.subr.mxu0 0.0
    %3683 = vmatpush1.msra.mxu0 0.0
    %3684 = vmatprep.subr.mxu0 0.0
    %3685 = vmatpush1.msra.mxu0 0.0
    %3686 = vmatprep.subr.mxu0 0.0
    %3687 = vmatpush1.msra.mxu0 0.0
    %3688 = vmatprep.subr.mxu0 0.0
    %3689 = vmatpush1.msra.mxu0 0.0
    %3690 = vmatprep.subr.mxu0 0.0
    %3691 = vmatpush1.msra.mxu0 0.0
    %3692 = vmatprep.mubr.f32.mxu0 0.0
    %3693 = vmatmul.mubr.f32.gmra.mrb[0].mxu0 %v3626
    %v3694 = vpop.f32.mrb[0].mxu0
    %v3695 = vadd.f32 0.0, %v3694
    %v3696 = vpop.f32.mrb[0].mxu0
    %3697 = vdwg.mxu0
    %v3698 = vadd.f32 %v3620, %v3695
    %v3699 = vld [vmem:[%s474] sm:$0xff]
    %v3700 = vld [vmem:[%s2354] sm:$0xff]
    %v3701 = vld [vmem:[%s2354 + $0x8] sm:$0xff]
    %3703 = vrot.lane.b32.xlu0 %v3618, 16
    %v3704 = vpop.permute.xlu0 %3703
    %v3705 = vsel %vm244, %v3704, 0
    %3707 = vmatprep.subr.mxu0 0.0
    %3708 = vmatpush1.msra.mxu0 %v3700
    %3709 = vmatprep.subr.mxu0 0.0
    %3710 = vmatpush1.msra.mxu0 %v3701
    %3711 = vmatprep.subr.mxu0 0.0
    %3712 = vmatpush1.msra.mxu0 0.0
    %3713 = vmatprep.subr.mxu0 0.0
    %3714 = vmatpush1.msra.mxu0 0.0
    %3715 = vmatprep.subr.mxu0 0.0
    %3716 = vmatpush1.msra.mxu0 0.0
    %3717 = vmatprep.subr.mxu0 0.0
    %3718 = vmatpush1.msra.mxu0 0.0
    %3719 = vmatprep.subr.mxu0 0.0
    %3720 = vmatpush1.msra.mxu0 0.0
    %3721 = vmatprep.subr.mxu0 0.0
    %3722 = vmatpush1.msra.mxu0 0.0
    %3723 = vmatprep.subr.mxu0 0.0
    %3724 = vmatpush1.msra.mxu0 0.0
    %3725 = vmatprep.subr.mxu0 0.0
    %3726 = vmatpush1.msra.mxu0 0.0
    %3727 = vmatprep.subr.mxu0 0.0
    %3728 = vmatpush1.msra.mxu0 0.0
    %3729 = vmatprep.subr.mxu0 0.0
    %3730 = vmatpush1.msra.mxu0 0.0
    %3731 = vmatprep.subr.mxu0 0.0
    %3732 = vmatpush1.msra.mxu0 0.0
    %3733 = vmatprep.subr.mxu0 0.0
    %3734 = vmatpush1.msra.mxu0 0.0
    %3735 = vmatprep.subr.mxu0 0.0
    %3736 = vmatpush1.msra.mxu0 0.0
    %3737 = vmatprep.subr.mxu0 0.0
    %3738 = vmatpush1.msra.mxu0 0.0
    %3739 = vmatprep.subr.mxu0 0.0
    %3740 = vmatpush1.msra.mxu0 0.0
    %3741 = vmatprep.subr.mxu0 0.0
    %3742 = vmatpush1.msra.mxu0 0.0
    %3743 = vmatprep.subr.mxu0 0.0
    %3744 = vmatpush1.msra.mxu0 0.0
    %3745 = vmatprep.subr.mxu0 0.0
    %3746 = vmatpush1.msra.mxu0 0.0
    %3747 = vmatprep.subr.mxu0 0.0
    %3748 = vmatpush1.msra.mxu0 0.0
    %3749 = vmatprep.subr.mxu0 0.0
    %3750 = vmatpush1.msra.mxu0 0.0
    %3751 = vmatprep.subr.mxu0 0.0
    %3752 = vmatpush1.msra.mxu0 0.0
    %3753 = vmatprep.subr.mxu0 0.0
    %3754 = vmatpush1.msra.mxu0 0.0
    %3755 = vmatprep.subr.mxu0 0.0
    %3756 = vmatpush1.msra.mxu0 0.0
    %3757 = vmatprep.subr.mxu0 0.0
    %3758 = vmatpush1.msra.mxu0 0.0
    %3759 = vmatprep.subr.mxu0 0.0
    %3760 = vmatpush1.msra.mxu0 0.0
    %3761 = vmatprep.subr.mxu0 0.0
    %3762 = vmatpush1.msra.mxu0 0.0
    %3763 = vmatprep.subr.mxu0 0.0
    %3764 = vmatpush1.msra.mxu0 0.0
    %3765 = vmatprep.subr.mxu0 0.0
    %3766 = vmatpush1.msra.mxu0 0.0
    %3767 = vmatprep.subr.mxu0 0.0
    %3768 = vmatpush1.msra.mxu0 0.0
    %3769 = vmatprep.subr.mxu0 0.0
    %3770 = vmatpush1.msra.mxu0 0.0
    %3771 = vmatprep.mubr.f32.mxu0 0.0
    %3772 = vmatmul.mubr.f32.gmra.mrb[0].mxu0 %v3705
    %v3773 = vpop.f32.mrb[0].mxu0
    %v3774 = vadd.f32 0.0, %v3773
    %v3775 = vpop.f32.mrb[0].mxu0
    %3776 = vdwg.mxu0
    %3778 = vrot.lane.b32.xlu0 %v3774, 64
    %v3779 = vpop.permute.xlu0 %3778
    %v3781 = vadd.f32 %v3699, %v3779
    %v3782 = vxor.u32 %v3698, 2147483648
    %v3783 = vmul.f32 %v3782, 1.442695
    %v3784 = vpow.pop %v3783
    %v3785 = vadd.f32 %v3784, 1.0
    %v3786 = vrcp.pop %v3785
    %v3787 = vmul.f32 1.0, %v3786
    %v3788 = vtanh.pop %v3698
    %v3789 = vxor.u32 %v3781, 2147483648
    %v3790 = vmul.f32 %v3789, 1.442695
    %v3791 = vpow.pop %v3790
    %v3792 = vadd.f32 %v3791, 1.0
    %v3793 = vrcp.pop %v3792
    %v3794 = vmul.f32 1.0, %v3793
    %v3795 = vtanh.pop %v3781
    %v3796 = vmul.f32 %v3787, %v3617
    %3798 = vrot.lane.b32.xlu0 %v3788, 96
    %v3799 = vpop.permute.xlu0 %3798
    %v3801 = vmul.f32 %v3787, %v3799
    %3803 = vrot.lane.b32.xlu0 %v3801, 16
    %v3804 = vpop.permute.xlu0 %3803
    %v3806 = vadd.f32 %v3796, %v3804
    %v3807 = vtanh.pop %v3806
    %3809 = vrot.lane.b32.xlu0 %v3807, 32
    %v3810 = vpop.permute.xlu0 %3809
    %v3812 = vmul.f32 %v3787, %v3810
    %v3813 = vmul.f32 %v3794, %v3619
    %3815 = vrot.lane.b32.xlu0 %v3795, 96
    %v3816 = vpop.permute.xlu0 %3815
    %v3818 = vmul.f32 %v3794, %v3816
    %3820 = vrot.lane.b32.xlu0 %v3818, 16
    %v3821 = vpop.permute.xlu0 %3820
    %v3823 = vadd.f32 %v3813, %v3821
    %v3824 = vtanh.pop %v3823
    %3826 = vrot.lane.b32.xlu0 %v3824, 32
    %v3827 = vpop.permute.xlu0 %3826
    %v3829 = vmul.f32 %v3794, %v3827
    %v3830 = vsel %vm700, %v3812, 0.0
    %3832 = vrot.lane.b32.xlu0 %v3830, 80
    %v3833 = vpop.permute.xlu0 %3832
    %3835 = vst.msk [vmem:[%s706] sm:$0xff] %vm244, %v3833
    %v3836 = vsel %vm688, %v3829, 0.0
    %3838 = vrot.lane.b32.xlu0 %v3836, 32
    %v3839 = vpop.permute.xlu0 %3838
    %3841 = vst.msk [vmem:[%s694] sm:$0xff] %vm470, %v3839
    %v3842 = vsel %vm700, %v3812, %v3616
    %v3843 = vsel %vm700, %v3806, %v3617
    %v3844 = vsel %vm688, %v3829, %v3618
    %v3845 = vsel %vm688, %v3823, %v3619
    %v3846 = vld [vmem:[%s319] sm:$0xff]
    %v3847 = vld [vmem:[%s2279] sm:$0xff]
    %v3848 = vld [vmem:[%s2279 + $0x8] sm:$0xff]
    %3850 = vrot.lane.b32.xlu0 %v3842, 80
    %v3851 = vpop.permute.xlu0 %3850
    %v3852 = vsel %vm244, %v3851, 0
    %3854 = vmatprep.subr.mxu0 0.0
    %3855 = vmatpush1.msra.mxu0 %v3847
    %3856 = vmatprep.subr.mxu0 0.0
    %3857 = vmatpush1.msra.mxu0 %v3848
    %3858 = vmatprep.subr.mxu0 0.0
    %3859 = vmatpush1.msra.mxu0 0.0
    %3860 = vmatprep.subr.mxu0 0.0
    %3861 = vmatpush1.msra.mxu0 0.0
    %3862 = vmatprep.subr.mxu0 0.0
    %3863 = vmatpush1.msra.mxu0 0.0
    %3864 = vmatprep.subr.mxu0 0.0
    %3865 = vmatpush1.msra.mxu0 0.0
    %3866 = vmatprep.subr.mxu0 0.0
    %3867 = vmatpush1.msra.mxu0 0.0
    %3868 = vmatprep.subr.mxu0 0.0
    %3869 = vmatpush1.msra.mxu0 0.0
    %3870 = vmatprep.subr.mxu0 0.0
    %3871 = vmatpush1.msra.mxu0 0.0
    %3872 = vmatprep.subr.mxu0 0.0
    %3873 = vmatpush1.msra.mxu0 0.0
    %3874 = vmatprep.subr.mxu0 0.0
    %3875 = vmatpush1.msra.mxu0 0.0
    %3876 = vmatprep.subr.mxu0 0.0
    %3877 = vmatpush1.msra.mxu0 0.0
    %3878 = vmatprep.subr.mxu0 0.0
    %3879 = vmatpush1.msra.mxu0 0.0
    %3880 = vmatprep.subr.mxu0 0.0
    %3881 = vmatpush1.msra.mxu0 0.0
    %3882 = vmatprep.subr.mxu0 0.0
    %3883 = vmatpush1.msra.mxu0 0.0
    %3884 = vmatprep.subr.mxu0 0.0
    %3885 = vmatpush1.msra.mxu0 0.0
    %3886 = vmatprep.subr.mxu0 0.0
    %3887 = vmatpush1.msra.mxu0 0.0
    %3888 = vmatprep.subr.mxu0 0.0
    %3889 = vmatpush1.msra.mxu0 0.0
    %3890 = vmatprep.subr.mxu0 0.0
    %3891 = vmatpush1.msra.mxu0 0.0
    %3892 = vmatprep.subr.mxu0 0.0
    %3893 = vmatpush1.msra.mxu0 0.0
    %3894 = vmatprep.subr.mxu0 0.0
    %3895 = vmatpush1.msra.mxu0 0.0
    %3896 = vmatprep.subr.mxu0 0.0
    %3897 = vmatpush1.msra.mxu0 0.0
    %3898 = vmatprep.subr.mxu0 0.0
    %3899 = vmatpush1.msra.mxu0 0.0
    %3900 = vmatprep.subr.mxu0 0.0
    %3901 = vmatpush1.msra.mxu0 0.0
    %3902 = vmatprep.subr.mxu0 0.0
    %3903 = vmatpush1.msra.mxu0 0.0
    %3904 = vmatprep.subr.mxu0 0.0
    %3905 = vmatpush1.msra.mxu0 0.0
    %3906 = vmatprep.subr.mxu0 0.0
    %3907 = vmatpush1.msra.mxu0 0.0
    %3908 = vmatprep.subr.mxu0 0.0
    %3909 = vmatpush1.msra.mxu0 0.0
    %3910 = vmatprep.subr.mxu0 0.0
    %3911 = vmatpush1.msra.mxu0 0.0
    %3912 = vmatprep.subr.mxu0 0.0
    %3913 = vmatpush1.msra.mxu0 0.0
    %3914 = vmatprep.subr.mxu0 0.0
    %3915 = vmatpush1.msra.mxu0 0.0
    %3916 = vmatprep.subr.mxu0 0.0
    %3917 = vmatpush1.msra.mxu0 0.0
    %3918 = vmatprep.mubr.f32.mxu0 0.0
    %3919 = vmatmul.mubr.f32.gmra.mrb[0].mxu0 %v3852
    %v3920 = vpop.f32.mrb[0].mxu0
    %v3921 = vadd.f32 0.0, %v3920
    %v3922 = vpop.f32.mrb[0].mxu0
    %3923 = vdwg.mxu0
    %v3924 = vadd.f32 %v3846, %v3921
    %v3925 = vld [vmem:[#allocation3] sm:$0xff]
    %v3926 = vld [vmem:[%s2354] sm:$0xff]
    %v3927 = vld [vmem:[%s2354 + $0x8] sm:$0xff]
    %3929 = vrot.lane.b32.xlu0 %v3844, 16
    %v3930 = vpop.permute.xlu0 %3929
    %v3931 = vsel %vm244, %v3930, 0
    %3933 = vmatprep.subr.mxu0 0.0
    %3934 = vmatpush1.msra.mxu0 %v3926
    %3935 = vmatprep.subr.mxu0 0.0
    %3936 = vmatpush1.msra.mxu0 %v3927
    %3937 = vmatprep.subr.mxu0 0.0
    %3938 = vmatpush1.msra.mxu0 0.0
    %3939 = vmatprep.subr.mxu0 0.0
    %3940 = vmatpush1.msra.mxu0 0.0
    %3941 = vmatprep.subr.mxu0 0.0
    %3942 = vmatpush1.msra.mxu0 0.0
    %3943 = vmatprep.subr.mxu0 0.0
    %3944 = vmatpush1.msra.mxu0 0.0
    %3945 = vmatprep.subr.mxu0 0.0
    %3946 = vmatpush1.msra.mxu0 0.0
    %3947 = vmatprep.subr.mxu0 0.0
    %3948 = vmatpush1.msra.mxu0 0.0
    %3949 = vmatprep.subr.mxu0 0.0
    %3950 = vmatpush1.msra.mxu0 0.0
    %3951 = vmatprep.subr.mxu0 0.0
    %3952 = vmatpush1.msra.mxu0 0.0
    %3953 = vmatprep.subr.mxu0 0.0
    %3954 = vmatpush1.msra.mxu0 0.0
    %3955 = vmatprep.subr.mxu0 0.0
    %3956 = vmatpush1.msra.mxu0 0.0
    %3957 = vmatprep.subr.mxu0 0.0
    %3958 = vmatpush1.msra.mxu0 0.0
    %3959 = vmatprep.subr.mxu0 0.0
    %3960 = vmatpush1.msra.mxu0 0.0
    %3961 = vmatprep.subr.mxu0 0.0
    %3962 = vmatpush1.msra.mxu0 0.0
    %3963 = vmatprep.subr.mxu0 0.0
    %3964 = vmatpush1.msra.mxu0 0.0
    %3965 = vmatprep.subr.mxu0 0.0
    %3966 = vmatpush1.msra.mxu0 0.0
    %3967 = vmatprep.subr.mxu0 0.0
    %3968 = vmatpush1.msra.mxu0 0.0
    %3969 = vmatprep.subr.mxu0 0.0
    %3970 = vmatpush1.msra.mxu0 0.0
    %3971 = vmatprep.subr.mxu0 0.0
    %3972 = vmatpush1.msra.mxu0 0.0
    %3973 = vmatprep.subr.mxu0 0.0
    %3974 = vmatpush1.msra.mxu0 0.0
    %3975 = vmatprep.subr.mxu0 0.0
    %3976 = vmatpush1.msra.mxu0 0.0
    %3977 = vmatprep.subr.mxu0 0.0
    %3978 = vmatpush1.msra.mxu0 0.0
    %3979 = vmatprep.subr.mxu0 0.0
    %3980 = vmatpush1.msra.mxu0 0.0
    %3981 = vmatprep.subr.mxu0 0.0
    %3982 = vmatpush1.msra.mxu0 0.0
    %3983 = vmatprep.subr.mxu0 0.0
    %3984 = vmatpush1.msra.mxu0 0.0
    %3985 = vmatprep.subr.mxu0 0.0
    %3986 = vmatpush1.msra.mxu0 0.0
    %3987 = vmatprep.subr.mxu0 0.0
    %3988 = vmatpush1.msra.mxu0 0.0
    %3989 = vmatprep.subr.mxu0 0.0
    %3990 = vmatpush1.msra.mxu0 0.0
    %3991 = vmatprep.subr.mxu0 0.0
    %3992 = vmatpush1.msra.mxu0 0.0
    %3993 = vmatprep.subr.mxu0 0.0
    %3994 = vmatpush1.msra.mxu0 0.0
    %3995 = vmatprep.subr.mxu0 0.0
    %3996 = vmatpush1.msra.mxu0 0.0
    %3997 = vmatprep.mubr.f32.mxu0 0.0
    %3998 = vmatmul.mubr.f32.gmra.mrb[0].mxu0 %v3931
    %v3999 = vpop.f32.mrb[0].mxu0
    %v4000 = vadd.f32 0.0, %v3999
    %v4001 = vpop.f32.mrb[0].mxu0
    %4002 = vdwg.mxu0
    %4004 = vrot.lane.b32.xlu0 %v4000, 64
    %v4005 = vpop.permute.xlu0 %4004
    %v4007 = vadd.f32 %v3925, %v4005
    %v4008 = vxor.u32 %v3924, 2147483648
    %v4009 = vmul.f32 %v4008, 1.442695
    %v4010 = vpow.pop %v4009
    %v4011 = vadd.f32 %v4010, 1.0
    %v4012 = vrcp.pop %v4011
    %v4013 = vmul.f32 1.0, %v4012
    %v4014 = vtanh.pop %v3924
    %v4015 = vxor.u32 %v4007, 2147483648
    %v4016 = vmul.f32 %v4015, 1.442695
    %v4017 = vpow.pop %v4016
    %v4018 = vadd.f32 %v4017, 1.0
    %v4019 = vrcp.pop %v4018
    %v4020 = vmul.f32 1.0, %v4019
    %v4021 = vtanh.pop %v4007
    %v4022 = vmul.f32 %v4013, %v3843
    %4024 = vrot.lane.b32.xlu0 %v4014, 96
    %v4025 = vpop.permute.xlu0 %4024
    %v4027 = vmul.f32 %v4013, %v4025
    %4029 = vrot.lane.b32.xlu0 %v4027, 16
    %v4030 = vpop.permute.xlu0 %4029
    %v4032 = vadd.f32 %v4022, %v4030
    %v4033 = vtanh.pop %v4032
    %4035 = vrot.lane.b32.xlu0 %v4033, 32
    %v4036 = vpop.permute.xlu0 %4035
    %v4038 = vmul.f32 %v4013, %v4036
    %v4039 = vmul.f32 %v4020, %v3845
    %4041 = vrot.lane.b32.xlu0 %v4021, 96
    %v4042 = vpop.permute.xlu0 %4041
    %v4044 = vmul.f32 %v4020, %v4042
    %4046 = vrot.lane.b32.xlu0 %v4044, 16
    %v4047 = vpop.permute.xlu0 %4046
    %v4049 = vadd.f32 %v4039, %v4047
    %v4050 = vtanh.pop %v4049
    %4052 = vrot.lane.b32.xlu0 %v4050, 32
    %v4053 = vpop.permute.xlu0 %4052
    %v4055 = vmul.f32 %v4020, %v4053
    %v4056 = vsel %vm463, %v4038, 0.0
    %4058 = vrot.lane.b32.xlu0 %v4056, 80
    %v4059 = vpop.permute.xlu0 %4058
    %4061 = vst.msk [vmem:[%s469] sm:$0xff] %vm244, %v4059
    %v4062 = vsel %vm452, %v4055, 0.0
    %4064 = vrot.lane.b32.xlu0 %v4062, 32
    %v4065 = vpop.permute.xlu0 %4064
    %4067 = vst.msk [vmem:[#allocation2] sm:$0xff] %vm470, %v4065
    %v4068 = vsel %vm463, %v4038, %v3842
    %v4069 = vsel %vm463, %v4032, %v3843
    %v4070 = vsel %vm452, %v4055, %v3844
    %v4071 = vsel %vm452, %v4049, %v3845
    %4073 = vrot.lane.b32.xlu0 %v4068, 80
    %v4074 = vpop.permute.xlu0 %4073
    %s4076 = scalar_lea.vmem [#allocation13], 8
    %4077 = vst.msk [vmem:[%s4076] sm:$0xff] %vm244, %v4074
    %4079 = vrot.lane.b32.xlu0 %v4070, 32
    %v4080 = vpop.permute.xlu0 %4079
    %4082 = vst.msk [vmem:[%s4076] sm:$0xff] %vm470, %v4080
    %4084 = vrot.lane.b32.xlu0 %v4069, 112
    %v4085 = vpop.permute.xlu0 %4084
    %s4087 = scalar_lea.vmem [#allocation15], 8
    %4088 = vst.msk [vmem:[%s4087] sm:$0xff] %vm244, %v4085
    %4090 = vrot.lane.b32.xlu0 %v4071, 64
    %v4091 = vpop.permute.xlu0 %4090
    %4093 = vst.msk [vmem:[%s4087] sm:$0xff] %vm470, %v4091
    %v4094 = vld [vmem:[#allocation2] sm:$0xff]
    %v4095 = vld [vmem:[#allocation2 + $0x8] sm:$0xff]
    %v4096 = vld [vmem:[#allocation2 + $0x10] sm:$0xff]
    %v4097 = vld [vmem:[#allocation2 + $0x18] sm:$0xff]
    %v4098 = vld [vmem:[#allocation2 + $0x20] sm:$0xff]
    %v4099 = vld [vmem:[#allocation2 + $0x28] sm:$0xff]
    %v4100 = vld [vmem:[#allocation2 + $0x30] sm:$0xff]
    %v4101 = vld [vmem:[#allocation2 + $0x38] sm:$0xff]
    %s4102 = scalar_lea.vmem [#allocation7], 64
    %v4103 = vld [vmem:[%s4102] sm:$0xff]
    %v4104 = vld [vmem:[%s4102 + $0x8] sm:$0xff]
    %v4105 = vld [vmem:[%s4102 + $0x10] sm:$0xff]
    %v4106 = vld [vmem:[%s4102 + $0x18] sm:$0xff]
    %s4107 = scalar_lea.vmem %s3, 2
    %v4108 = vld [vmem:[%s4107] sm:$0x1]
    %v4110 = vlaneseq
    %v4111 = vshrl.u32 %v4110, 7
    %v4112 = vsub.s32 0, %v4111
    %v4113 = vrot.slane %v4108, %v4112
    %v4116 = vsel %vm103, %v4094, 0
    %v4119 = vsel %vm103, %v4095, 0
    %v4122 = vsel %vm103, %v4096, 0
    %v4125 = vsel %vm103, %v4097, 0
    %v4128 = vsel %vm103, %v4098, 0
    %v4131 = vsel %vm103, %v4099, 0
    %v4134 = vsel %vm103, %v4100, 0
    %v4137 = vsel %vm103, %v4101, 0
    %4139 = vmatprep.subr.mxu0 0.0
    %4140 = vmatpush1.msra.mxu0 %v4103
    %4141 = vmatprep.subr.mxu0 0.0
    %4142 = vmatpush1.msra.mxu0 %v4104
    %4143 = vmatprep.subr.mxu0 0.0
    %4144 = vmatpush1.msra.mxu0 %v4105
    %4145 = vmatprep.subr.mxu0 0.0
    %4146 = vmatpush1.msra.mxu0 %v4106
    %4147 = vmatprep.subr.mxu0 0.0
    %4148 = vmatpush1.msra.mxu0 0.0
    %4149 = vmatprep.subr.mxu0 0.0
    %4150 = vmatpush1.msra.mxu0 0.0
    %4151 = vmatprep.subr.mxu0 0.0
    %4152 = vmatpush1.msra.mxu0 0.0
    %4153 = vmatprep.subr.mxu0 0.0
    %4154 = vmatpush1.msra.mxu0 0.0
    %4155 = vmatprep.subr.mxu0 0.0
    %4156 = vmatpush1.msra.mxu0 0.0
    %4157 = vmatprep.subr.mxu0 0.0
    %4158 = vmatpush1.msra.mxu0 0.0
    %4159 = vmatprep.subr.mxu0 0.0
    %4160 = vmatpush1.msra.mxu0 0.0
    %4161 = vmatprep.subr.mxu0 0.0
    %4162 = vmatpush1.msra.mxu0 0.0
    %4163 = vmatprep.subr.mxu0 0.0
    %4164 = vmatpush1.msra.mxu0 0.0
    %4165 = vmatprep.subr.mxu0 0.0
    %4166 = vmatpush1.msra.mxu0 0.0
    %4167 = vmatprep.subr.mxu0 0.0
    %4168 = vmatpush1.msra.mxu0 0.0
    %4169 = vmatprep.subr.mxu0 0.0
    %4170 = vmatpush1.msra.mxu0 0.0
    %4171 = vmatprep.subr.mxu0 0.0
    %4172 = vmatpush1.msra.mxu0 0.0
    %4173 = vmatprep.subr.mxu0 0.0
    %4174 = vmatpush1.msra.mxu0 0.0
    %4175 = vmatprep.subr.mxu0 0.0
    %4176 = vmatpush1.msra.mxu0 0.0
    %4177 = vmatprep.subr.mxu0 0.0
    %4178 = vmatpush1.msra.mxu0 0.0
    %4179 = vmatprep.subr.mxu0 0.0
    %4180 = vmatpush1.msra.mxu0 0.0
    %4181 = vmatprep.subr.mxu0 0.0
    %4182 = vmatpush1.msra.mxu0 0.0
    %4183 = vmatprep.subr.mxu0 0.0
    %4184 = vmatpush1.msra.mxu0 0.0
    %4185 = vmatprep.subr.mxu0 0.0
    %4186 = vmatpush1.msra.mxu0 0.0
    %4187 = vmatprep.subr.mxu0 0.0
    %4188 = vmatpush1.msra.mxu0 0.0
    %4189 = vmatprep.subr.mxu0 0.0
    %4190 = vmatpush1.msra.mxu0 0.0
    %4191 = vmatprep.subr.mxu0 0.0
    %4192 = vmatpush1.msra.mxu0 0.0
    %4193 = vmatprep.subr.mxu0 0.0
    %4194 = vmatpush1.msra.mxu0 0.0
    %4195 = vmatprep.subr.mxu0 0.0
    %4196 = vmatpush1.msra.mxu0 0.0
    %4197 = vmatprep.subr.mxu0 0.0
    %4198 = vmatpush1.msra.mxu0 0.0
    %4199 = vmatprep.subr.mxu0 0.0
    %4200 = vmatpush1.msra.mxu0 0.0
    %4201 = vmatprep.subr.mxu0 0.0
    %4202 = vmatpush1.msra.mxu0 0.0
    %4203 = vmatprep.mubr.f32.mxu0 0.0
    %4204 = vmatmul.mubr.f32.gmra.mrb[0].mxu0 %v4116
    %v4205 = vpop.f32.mrb[0].mxu0
    %v4206 = vadd.f32 %v4113, %v4205
    %v4207 = vpop.f32.mrb[0].mxu0
    %4208 = vmatprep.mubr.f32.mxu0 0.0
    %4209 = vmatmul.mubr.f32.gmra.mrb[0].mxu0 %v4119
    %v4210 = vpop.f32.mrb[0].mxu0
    %v4211 = vadd.f32 %v4113, %v4210
    %v4212 = vpop.f32.mrb[0].mxu0
    %4213 = vmatprep.mubr.f32.mxu0 0.0
    %4214 = vmatmul.mubr.f32.gmra.mrb[0].mxu0 %v4122
    %v4215 = vpop.f32.mrb[0].mxu0
    %v4216 = vadd.f32 %v4113, %v4215
    %v4217 = vpop.f32.mrb[0].mxu0
    %4218 = vmatprep.mubr.f32.mxu0 0.0
    %4219 = vmatmul.mubr.f32.gmra.mrb[0].mxu0 %v4125
    %v4220 = vpop.f32.mrb[0].mxu0
    %v4221 = vadd.f32 %v4113, %v4220
    %v4222 = vpop.f32.mrb[0].mxu0
    %4223 = vmatprep.mubr.f32.mxu0 0.0
    %4224 = vmatmul.mubr.f32.gmra.mrb[0].mxu0 %v4128
    %v4225 = vpop.f32.mrb[0].mxu0
    %v4226 = vadd.f32 %v4113, %v4225
    %v4227 = vpop.f32.mrb[0].mxu0
    %4228 = vmatprep.mubr.f32.mxu0 0.0
    %4229 = vmatmul.mubr.f32.gmra.mrb[0].mxu0 %v4131
    %v4230 = vpop.f32.mrb[0].mxu0
    %v4231 = vadd.f32 %v4113, %v4230
    %v4232 = vpop.f32.mrb[0].mxu0
    %4233 = vmatprep.mubr.f32.mxu0 0.0
    %4234 = vmatmul.mubr.f32.gmra.mrb[0].mxu0 %v4134
    %v4235 = vpop.f32.mrb[0].mxu0
    %v4236 = vadd.f32 %v4113, %v4235
    %v4237 = vpop.f32.mrb[0].mxu0
    %4238 = vmatprep.mubr.f32.mxu0 0.0
    %4239 = vmatmul.mubr.f32.gmra.mrb[0].mxu0 %v4137
    %v4240 = vpop.f32.mrb[0].mxu0
    %v4241 = vadd.f32 %v4113, %v4240
    %v4242 = vpop.f32.mrb[0].mxu0
    %4243 = vdwg.mxu0
    %4244 = vst [vmem:[#allocation3] sm:$0xff] %v4206
    %4245 = vst [vmem:[#allocation3 + $0x8] sm:$0xff] %v4211
    %4246 = vst [vmem:[#allocation3 + $0x10] sm:$0xff] %v4216
    %4247 = vst [vmem:[#allocation3 + $0x18] sm:$0xff] %v4221
    %4248 = vst [vmem:[#allocation3 + $0x20] sm:$0xff] %v4226
    %4249 = vst [vmem:[#allocation3 + $0x28] sm:$0xff] %v4231
    %4250 = vst [vmem:[#allocation3 + $0x30] sm:$0xff] %v4236
    %4251 = vst [vmem:[#allocation3 + $0x38] sm:$0xff] %v4241
    %v4252 = vld [vmem:[#allocation3] sm:$0xff]
    %s4253 = scalar_lea.vmem [#allocation9], 32
    %v4254 = vld [vmem:[%s4253] sm:$0xff]
    %v4255 = vld [vmem:[%s4253 + $0x8] sm:$0xff]
    %4256 = vmatprep.subr.mxu0 0.0
    %4257 = vmatpush1.msra.mxu0 %v4254
    %4258 = vmatprep.subr.mxu0 0.0
    %4259 = vmatpush1.msra.mxu0 %v4255
    %4260 = vmatprep.subr.mxu0 0.0
    %4261 = vmatpush1.msra.mxu0 0.0
    %4262 = vmatprep.subr.mxu0 0.0
    %4263 = vmatpush1.msra.mxu0 0.0
    %4264 = vmatprep.subr.mxu0 0.0
    %4265 = vmatpush1.msra.mxu0 0.0
    %4266 = vmatprep.subr.mxu0 0.0
    %4267 = vmatpush1.msra.mxu0 0.0
    %4268 = vmatprep.subr.mxu0 0.0
    %4269 = vmatpush1.msra.mxu0 0.0
    %4270 = vmatprep.subr.mxu0 0.0
    %4271 = vmatpush1.msra.mxu0 0.0
    %4272 = vmatprep.subr.mxu0 0.0
    %4273 = vmatpush1.msra.mxu0 0.0
    %4274 = vmatprep.subr.mxu0 0.0
    %4275 = vmatpush1.msra.mxu0 0.0
    %4276 = vmatprep.subr.mxu0 0.0
    %4277 = vmatpush1.msra.mxu0 0.0
    %4278 = vmatprep.subr.mxu0 0.0
    %4279 = vmatpush1.msra.mxu0 0.0
    %4280 = vmatprep.subr.mxu0 0.0
    %4281 = vmatpush1.msra.mxu0 0.0
    %4282 = vmatprep.subr.mxu0 0.0
    %4283 = vmatpush1.msra.mxu0 0.0
    %4284 = vmatprep.subr.mxu0 0.0
    %4285 = vmatpush1.msra.mxu0 0.0
    %4286 = vmatprep.subr.mxu0 0.0
    %4287 = vmatpush1.msra.mxu0 0.0
    %4288 = vmatprep.subr.mxu0 0.0
    %4289 = vmatpush1.msra.mxu0 0.0
    %4290 = vmatprep.subr.mxu0 0.0
    %4291 = vmatpush1.msra.mxu0 0.0
    %4292 = vmatprep.subr.mxu0 0.0
    %4293 = vmatpush1.msra.mxu0 0.0
    %4294 = vmatprep.subr.mxu0 0.0
    %4295 = vmatpush1.msra.mxu0 0.0
    %4296 = vmatprep.subr.mxu0 0.0
    %4297 = vmatpush1.msra.mxu0 0.0
    %4298 = vmatprep.subr.mxu0 0.0
    %4299 = vmatpush1.msra.mxu0 0.0
    %4300 = vmatprep.subr.mxu0 0.0
    %4301 = vmatpush1.msra.mxu0 0.0
    %4302 = vmatprep.subr.mxu0 0.0
    %4303 = vmatpush1.msra.mxu0 0.0
    %4304 = vmatprep.subr.mxu0 0.0
    %4305 = vmatpush1.msra.mxu0 0.0
    %4306 = vmatprep.subr.mxu0 0.0
    %4307 = vmatpush1.msra.mxu0 0.0
    %4308 = vmatprep.subr.mxu0 0.0
    %4309 = vmatpush1.msra.mxu0 0.0
    %4310 = vmatprep.subr.mxu0 0.0
    %4311 = vmatpush1.msra.mxu0 0.0
    %4312 = vmatprep.subr.mxu0 0.0
    %4313 = vmatpush1.msra.mxu0 0.0
    %4314 = vmatprep.subr.mxu0 0.0
    %4315 = vmatpush1.msra.mxu0 0.0
    %4316 = vmatprep.subr.mxu0 0.0
    %4317 = vmatpush1.msra.mxu0 0.0
    %4318 = vmatprep.subr.mxu0 0.0
    %4319 = vmatpush1.msra.mxu0 0.0
    %4320 = vmatprep.mubr.f32.mxu0 0.0
    %4321 = vmatmul.mubr.f32.gmra.mrb[0].mxu0 %v246
    %v4322 = vpop.f32.mrb[0].mxu0
    %v4323 = vadd.f32 0.0, %v4322
    %v4324 = vpop.f32.mrb[0].mxu0
    %4325 = vdwg.mxu0
    %v4326 = vadd.f32 %v4252, %v4323
    %v4327 = vld [vmem:[%s319] sm:$0xff]
    %s4328 = scalar_lea.vmem [#allocation10], 32
    %v4329 = vld [vmem:[%s4328] sm:$0xff]
    %v4330 = vld [vmem:[%s4328 + $0x8] sm:$0xff]
    %4331 = vmatprep.subr.mxu0 0.0
    %4332 = vmatpush1.msra.mxu0 %v4329
    %4333 = vmatprep.subr.mxu0 0.0
    %4334 = vmatpush1.msra.mxu0 %v4330
    %4335 = vmatprep.subr.mxu0 0.0
    %4336 = vmatpush1.msra.mxu0 0.0
    %4337 = vmatprep.subr.mxu0 0.0
    %4338 = vmatpush1.msra.mxu0 0.0
    %4339 = vmatprep.subr.mxu0 0.0
    %4340 = vmatpush1.msra.mxu0 0.0
    %4341 = vmatprep.subr.mxu0 0.0
    %4342 = vmatpush1.msra.mxu0 0.0
    %4343 = vmatprep.subr.mxu0 0.0
    %4344 = vmatpush1.msra.mxu0 0.0
    %4345 = vmatprep.subr.mxu0 0.0
    %4346 = vmatpush1.msra.mxu0 0.0
    %4347 = vmatprep.subr.mxu0 0.0
    %4348 = vmatpush1.msra.mxu0 0.0
    %4349 = vmatprep.subr.mxu0 0.0
    %4350 = vmatpush1.msra.mxu0 0.0
    %4351 = vmatprep.subr.mxu0 0.0
    %4352 = vmatpush1.msra.mxu0 0.0
    %4353 = vmatprep.subr.mxu0 0.0
    %4354 = vmatpush1.msra.mxu0 0.0
    %4355 = vmatprep.subr.mxu0 0.0
    %4356 = vmatpush1.msra.mxu0 0.0
    %4357 = vmatprep.subr.mxu0 0.0
    %4358 = vmatpush1.msra.mxu0 0.0
    %4359 = vmatprep.subr.mxu0 0.0
    %4360 = vmatpush1.msra.mxu0 0.0
    %4361 = vmatprep.subr.mxu0 0.0
    %4362 = vmatpush1.msra.mxu0 0.0
    %4363 = vmatprep.subr.mxu0 0.0
    %4364 = vmatpush1.msra.mxu0 0.0
    %4365 = vmatprep.subr.mxu0 0.0
    %4366 = vmatpush1.msra.mxu0 0.0
    %4367 = vmatprep.subr.mxu0 0.0
    %4368 = vmatpush1.msra.mxu0 0.0
    %4369 = vmatprep.subr.mxu0 0.0
    %4370 = vmatpush1.msra.mxu0 0.0
    %4371 = vmatprep.subr.mxu0 0.0
    %4372 = vmatpush1.msra.mxu0 0.0
    %4373 = vmatprep.subr.mxu0 0.0
    %4374 = vmatpush1.msra.mxu0 0.0
    %4375 = vmatprep.subr.mxu0 0.0
    %4376 = vmatpush1.msra.mxu0 0.0
    %4377 = vmatprep.subr.mxu0 0.0
    %4378 = vmatpush1.msra.mxu0 0.0
    %4379 = vmatprep.subr.mxu0 0.0
    %4380 = vmatpush1.msra.mxu0 0.0
    %4381 = vmatprep.subr.mxu0 0.0
    %4382 = vmatpush1.msra.mxu0 0.0
    %4383 = vmatprep.subr.mxu0 0.0
    %4384 = vmatpush1.msra.mxu0 0.0
    %4385 = vmatprep.subr.mxu0 0.0
    %4386 = vmatpush1.msra.mxu0 0.0
    %4387 = vmatprep.subr.mxu0 0.0
    %4388 = vmatpush1.msra.mxu0 0.0
    %4389 = vmatprep.subr.mxu0 0.0
    %4390 = vmatpush1.msra.mxu0 0.0
    %4391 = vmatprep.subr.mxu0 0.0
    %4392 = vmatpush1.msra.mxu0 0.0
    %4393 = vmatprep.subr.mxu0 0.0
    %4394 = vmatpush1.msra.mxu0 0.0
    %4395 = vmatprep.mubr.f32.mxu0 0.0
    %4396 = vmatmul.mubr.f32.gmra.mrb[0].mxu0 %v246
    %v4397 = vpop.f32.mrb[0].mxu0
    %v4398 = vadd.f32 0.0, %v4397
    %v4399 = vpop.f32.mrb[0].mxu0
    %4400 = vdwg.mxu0
    %4402 = vrot.lane.b32.xlu0 %v4398, 64
    %v4403 = vpop.permute.xlu0 %4402
    %v4405 = vadd.f32 %v4327, %v4403
    %v4406 = vxor.u32 %v4326, 2147483648
    %v4407 = vmul.f32 %v4406, 1.442695
    %v4408 = vpow.pop %v4407
    %v4409 = vadd.f32 %v4408, 1.0
    %v4410 = vrcp.pop %v4409
    %v4411 = vmul.f32 1.0, %v4410
    %v4412 = vtanh.pop %v4326
    %v4413 = vxor.u32 %v4405, 2147483648
    %v4414 = vmul.f32 %v4413, 1.442695
    %v4415 = vpow.pop %v4414
    %v4416 = vadd.f32 %v4415, 1.0
    %v4417 = vrcp.pop %v4416
    %v4418 = vmul.f32 1.0, %v4417
    %v4419 = vtanh.pop %v4405
    %v4420 = vmul.f32 %v4411, 0.0
    %4422 = vrot.lane.b32.xlu0 %v4412, 96
    %v4423 = vpop.permute.xlu0 %4422
    %v4425 = vmul.f32 %v4411, %v4423
    %4427 = vrot.lane.b32.xlu0 %v4425, 16
    %v4428 = vpop.permute.xlu0 %4427
    %v4430 = vadd.f32 %v4420, %v4428
    %v4431 = vtanh.pop %v4430
    %4433 = vrot.lane.b32.xlu0 %v4431, 32
    %v4434 = vpop.permute.xlu0 %4433
    %v4436 = vmul.f32 %v4411, %v4434
    %v4437 = vmul.f32 %v4418, 0.0
    %4439 = vrot.lane.b32.xlu0 %v4419, 96
    %v4440 = vpop.permute.xlu0 %4439
    %v4442 = vmul.f32 %v4418, %v4440
    %4444 = vrot.lane.b32.xlu0 %v4442, 16
    %v4445 = vpop.permute.xlu0 %4444
    %v4447 = vadd.f32 %v4437, %v4445
    %v4448 = vtanh.pop %v4447
    %4450 = vrot.lane.b32.xlu0 %v4448, 32
    %v4451 = vpop.permute.xlu0 %4450
    %v4453 = vmul.f32 %v4418, %v4451
    %v4454 = vsel %vm452, %v4436, 0.0
    %4456 = vrot.lane.b32.xlu0 %v4454, 80
    %v4457 = vpop.permute.xlu0 %4456
    %4459 = vst.msk [vmem:[#allocation12] sm:$0xff] %vm244, %v4457
    %v4460 = vsel %vm463, %v4453, 0.0
    %4462 = vrot.lane.b32.xlu0 %v4460, 32
    %v4463 = vpop.permute.xlu0 %4462
    %s4465 = scalar_lea.vmem [#allocation12], 56
    %4466 = vst.msk [vmem:[%s4465] sm:$0xff] %vm470, %v4463
    %v4467 = vsel %vm452, %v4430, 0.0
    %v4468 = vsel %vm463, %v4447, 0.0
    %v4469 = vld [vmem:[%s474] sm:$0xff]
    %v4470 = vld [vmem:[%s4253] sm:$0xff]
    %v4471 = vld [vmem:[%s4253 + $0x8] sm:$0xff]
    %v4472 = vsel %vm244, %v4457, 0
    %4474 = vmatprep.subr.mxu0 0.0
    %4475 = vmatpush1.msra.mxu0 %v4470
    %4476 = vmatprep.subr.mxu0 0.0
    %4477 = vmatpush1.msra.mxu0 %v4471
    %4478 = vmatprep.subr.mxu0 0.0
    %4479 = vmatpush1.msra.mxu0 0.0
    %4480 = vmatprep.subr.mxu0 0.0
    %4481 = vmatpush1.msra.mxu0 0.0
    %4482 = vmatprep.subr.mxu0 0.0
    %4483 = vmatpush1.msra.mxu0 0.0
    %4484 = vmatprep.subr.mxu0 0.0
    %4485 = vmatpush1.msra.mxu0 0.0
    %4486 = vmatprep.subr.mxu0 0.0
    %4487 = vmatpush1.msra.mxu0 0.0
    %4488 = vmatprep.subr.mxu0 0.0
    %4489 = vmatpush1.msra.mxu0 0.0
    %4490 = vmatprep.subr.mxu0 0.0
    %4491 = vmatpush1.msra.mxu0 0.0
    %4492 = vmatprep.subr.mxu0 0.0
    %4493 = vmatpush1.msra.mxu0 0.0
    %4494 = vmatprep.subr.mxu0 0.0
    %4495 = vmatpush1.msra.mxu0 0.0
    %4496 = vmatprep.subr.mxu0 0.0
    %4497 = vmatpush1.msra.mxu0 0.0
    %4498 = vmatprep.subr.mxu0 0.0
    %4499 = vmatpush1.msra.mxu0 0.0
    %4500 = vmatprep.subr.mxu0 0.0
    %4501 = vmatpush1.msra.mxu0 0.0
    %4502 = vmatprep.subr.mxu0 0.0
    %4503 = vmatpush1.msra.mxu0 0.0
    %4504 = vmatprep.subr.mxu0 0.0
    %4505 = vmatpush1.msra.mxu0 0.0
    %4506 = vmatprep.subr.mxu0 0.0
    %4507 = vmatpush1.msra.mxu0 0.0
    %4508 = vmatprep.subr.mxu0 0.0
    %4509 = vmatpush1.msra.mxu0 0.0
    %4510 = vmatprep.subr.mxu0 0.0
    %4511 = vmatpush1.msra.mxu0 0.0
    %4512 = vmatprep.subr.mxu0 0.0
    %4513 = vmatpush1.msra.mxu0 0.0
    %4514 = vmatprep.subr.mxu0 0.0
    %4515 = vmatpush1.msra.mxu0 0.0
    %4516 = vmatprep.subr.mxu0 0.0
    %4517 = vmatpush1.msra.mxu0 0.0
    %4518 = vmatprep.subr.mxu0 0.0
    %4519 = vmatpush1.msra.mxu0 0.0
    %4520 = vmatprep.subr.mxu0 0.0
    %4521 = vmatpush1.msra.mxu0 0.0
    %4522 = vmatprep.subr.mxu0 0.0
    %4523 = vmatpush1.msra.mxu0 0.0
    %4524 = vmatprep.subr.mxu0 0.0
    %4525 = vmatpush1.msra.mxu0 0.0
    %4526 = vmatprep.subr.mxu0 0.0
    %4527 = vmatpush1.msra.mxu0 0.0
    %4528 = vmatprep.subr.mxu0 0.0
    %4529 = vmatpush1.msra.mxu0 0.0
    %4530 = vmatprep.subr.mxu0 0.0
    %4531 = vmatpush1.msra.mxu0 0.0
    %4532 = vmatprep.subr.mxu0 0.0
    %4533 = vmatpush1.msra.mxu0 0.0
    %4534 = vmatprep.subr.mxu0 0.0
    %4535 = vmatpush1.msra.mxu0 0.0
    %4536 = vmatprep.subr.mxu0 0.0
    %4537 = vmatpush1.msra.mxu0 0.0
    %4538 = vmatprep.mubr.f32.mxu0 0.0
    %4539 = vmatmul.mubr.f32.gmra.mrb[0].mxu0 %v4472
    %v4540 = vpop.f32.mrb[0].mxu0
    %v4541 = vadd.f32 0.0, %v4540
    %v4542 = vpop.f32.mrb[0].mxu0
    %4543 = vdwg.mxu0
    %v4544 = vadd.f32 %v4469, %v4541
    %v4545 = vld [vmem:[%s551] sm:$0xff]
    %v4546 = vld [vmem:[%s4328] sm:$0xff]
    %v4547 = vld [vmem:[%s4328 + $0x8] sm:$0xff]
    %4548 = vrot.lane.b32.xlu0 %v4460, 16
    %v4549 = vpop.permute.xlu0 %4548
    %v4550 = vsel %vm244, %v4549, 0
    %4552 = vmatprep.subr.mxu0 0.0
    %4553 = vmatpush1.msra.mxu0 %v4546
    %4554 = vmatprep.subr.mxu0 0.0
    %4555 = vmatpush1.msra.mxu0 %v4547
    %4556 = vmatprep.subr.mxu0 0.0
    %4557 = vmatpush1.msra.mxu0 0.0
    %4558 = vmatprep.subr.mxu0 0.0
    %4559 = vmatpush1.msra.mxu0 0.0
    %4560 = vmatprep.subr.mxu0 0.0
    %4561 = vmatpush1.msra.mxu0 0.0
    %4562 = vmatprep.subr.mxu0 0.0
    %4563 = vmatpush1.msra.mxu0 0.0
    %4564 = vmatprep.subr.mxu0 0.0
    %4565 = vmatpush1.msra.mxu0 0.0
    %4566 = vmatprep.subr.mxu0 0.0
    %4567 = vmatpush1.msra.mxu0 0.0
    %4568 = vmatprep.subr.mxu0 0.0
    %4569 = vmatpush1.msra.mxu0 0.0
    %4570 = vmatprep.subr.mxu0 0.0
    %4571 = vmatpush1.msra.mxu0 0.0
    %4572 = vmatprep.subr.mxu0 0.0
    %4573 = vmatpush1.msra.mxu0 0.0
    %4574 = vmatprep.subr.mxu0 0.0
    %4575 = vmatpush1.msra.mxu0 0.0
    %4576 = vmatprep.subr.mxu0 0.0
    %4577 = vmatpush1.msra.mxu0 0.0
    %4578 = vmatprep.subr.mxu0 0.0
    %4579 = vmatpush1.msra.mxu0 0.0
    %4580 = vmatprep.subr.mxu0 0.0
    %4581 = vmatpush1.msra.mxu0 0.0
    %4582 = vmatprep.subr.mxu0 0.0
    %4583 = vmatpush1.msra.mxu0 0.0
    %4584 = vmatprep.subr.mxu0 0.0
    %4585 = vmatpush1.msra.mxu0 0.0
    %4586 = vmatprep.subr.mxu0 0.0
    %4587 = vmatpush1.msra.mxu0 0.0
    %4588 = vmatprep.subr.mxu0 0.0
    %4589 = vmatpush1.msra.mxu0 0.0
    %4590 = vmatprep.subr.mxu0 0.0
    %4591 = vmatpush1.msra.mxu0 0.0
    %4592 = vmatprep.subr.mxu0 0.0
    %4593 = vmatpush1.msra.mxu0 0.0
    %4594 = vmatprep.subr.mxu0 0.0
    %4595 = vmatpush1.msra.mxu0 0.0
    %4596 = vmatprep.subr.mxu0 0.0
    %4597 = vmatpush1.msra.mxu0 0.0
    %4598 = vmatprep.subr.mxu0 0.0
    %4599 = vmatpush1.msra.mxu0 0.0
    %4600 = vmatprep.subr.mxu0 0.0
    %4601 = vmatpush1.msra.mxu0 0.0
    %4602 = vmatprep.subr.mxu0 0.0
    %4603 = vmatpush1.msra.mxu0 0.0
    %4604 = vmatprep.subr.mxu0 0.0
    %4605 = vmatpush1.msra.mxu0 0.0
    %4606 = vmatprep.subr.mxu0 0.0
    %4607 = vmatpush1.msra.mxu0 0.0
    %4608 = vmatprep.subr.mxu0 0.0
    %4609 = vmatpush1.msra.mxu0 0.0
    %4610 = vmatprep.subr.mxu0 0.0
    %4611 = vmatpush1.msra.mxu0 0.0
    %4612 = vmatprep.subr.mxu0 0.0
    %4613 = vmatpush1.msra.mxu0 0.0
    %4614 = vmatprep.subr.mxu0 0.0
    %4615 = vmatpush1.msra.mxu0 0.0
    %4616 = vmatprep.mubr.f32.mxu0 0.0
    %4617 = vmatmul.mubr.f32.gmra.mrb[0].mxu0 %v4550
    %v4618 = vpop.f32.mrb[0].mxu0
    %v4619 = vadd.f32 0.0, %v4618
    %v4620 = vpop.f32.mrb[0].mxu0
    %4621 = vdwg.mxu0
    %4623 = vrot.lane.b32.xlu0 %v4619, 64
    %v4624 = vpop.permute.xlu0 %4623
    %v4626 = vadd.f32 %v4545, %v4624
    %v4627 = vxor.u32 %v4544, 2147483648
    %v4628 = vmul.f32 %v4627, 1.442695
    %v4629 = vpow.pop %v4628
    %v4630 = vadd.f32 %v4629, 1.0
    %v4631 = vrcp.pop %v4630
    %v4632 = vmul.f32 1.0, %v4631
    %v4633 = vtanh.pop %v4544
    %v4634 = vxor.u32 %v4626, 2147483648
    %v4635 = vmul.f32 %v4634, 1.442695
    %v4636 = vpow.pop %v4635
    %v4637 = vadd.f32 %v4636, 1.0
    %v4638 = vrcp.pop %v4637
    %v4639 = vmul.f32 1.0, %v4638
    %v4640 = vtanh.pop %v4626
    %v4641 = vmul.f32 %v4632, %v4467
    %4643 = vrot.lane.b32.xlu0 %v4633, 96
    %v4644 = vpop.permute.xlu0 %4643
    %v4646 = vmul.f32 %v4632, %v4644
    %4648 = vrot.lane.b32.xlu0 %v4646, 16
    %v4649 = vpop.permute.xlu0 %4648
    %v4651 = vadd.f32 %v4641, %v4649
    %v4652 = vtanh.pop %v4651
    %4654 = vrot.lane.b32.xlu0 %v4652, 32
    %v4655 = vpop.permute.xlu0 %4654
    %v4657 = vmul.f32 %v4632, %v4655
    %v4658 = vmul.f32 %v4639, %v4468
    %4660 = vrot.lane.b32.xlu0 %v4640, 96
    %v4661 = vpop.permute.xlu0 %4660
    %v4663 = vmul.f32 %v4639, %v4661
    %4665 = vrot.lane.b32.xlu0 %v4663, 16
    %v4666 = vpop.permute.xlu0 %4665
    %v4668 = vadd.f32 %v4658, %v4666
    %v4669 = vtanh.pop %v4668
    %4671 = vrot.lane.b32.xlu0 %v4669, 32
    %v4672 = vpop.permute.xlu0 %4671
    %v4674 = vmul.f32 %v4639, %v4672
    %v4675 = vsel %vm688, %v4657, 0.0
    %4677 = vrot.lane.b32.xlu0 %v4675, 80
    %v4678 = vpop.permute.xlu0 %4677
    %s4680 = scalar_lea.vmem [#allocation12], 8
    %4681 = vst.msk [vmem:[%s4680] sm:$0xff] %vm244, %v4678
    %v4682 = vsel %vm700, %v4674, 0.0
    %4684 = vrot.lane.b32.xlu0 %v4682, 32
    %v4685 = vpop.permute.xlu0 %4684
    %s4687 = scalar_lea.vmem [#allocation12], 48
    %4688 = vst.msk [vmem:[%s4687] sm:$0xff] %vm470, %v4685
    %v4689 = vsel %vm688, %v4657, %v4454
    %v4690 = vsel %vm688, %v4651, %v4467
    %v4691 = vsel %vm700, %v4674, %v4460
    %v4692 = vsel %vm700, %v4668, %v4468
    %v4693 = vld [vmem:[%s712] sm:$0xff]
    %v4694 = vld [vmem:[%s4253] sm:$0xff]
    %v4695 = vld [vmem:[%s4253 + $0x8] sm:$0xff]
    %4697 = vrot.lane.b32.xlu0 %v4689, 80
    %v4698 = vpop.permute.xlu0 %4697
    %v4699 = vsel %vm244, %v4698, 0
    %4701 = vmatprep.subr.mxu0 0.0
    %4702 = vmatpush1.msra.mxu0 %v4694
    %4703 = vmatprep.subr.mxu0 0.0
    %4704 = vmatpush1.msra.mxu0 %v4695
    %4705 = vmatprep.subr.mxu0 0.0
    %4706 = vmatpush1.msra.mxu0 0.0
    %4707 = vmatprep.subr.mxu0 0.0
    %4708 = vmatpush1.msra.mxu0 0.0
    %4709 = vmatprep.subr.mxu0 0.0
    %4710 = vmatpush1.msra.mxu0 0.0
    %4711 = vmatprep.subr.mxu0 0.0
    %4712 = vmatpush1.msra.mxu0 0.0
    %4713 = vmatprep.subr.mxu0 0.0
    %4714 = vmatpush1.msra.mxu0 0.0
    %4715 = vmatprep.subr.mxu0 0.0
    %4716 = vmatpush1.msra.mxu0 0.0
    %4717 = vmatprep.subr.mxu0 0.0
    %4718 = vmatpush1.msra.mxu0 0.0
    %4719 = vmatprep.subr.mxu0 0.0
    %4720 = vmatpush1.msra.mxu0 0.0
    %4721 = vmatprep.subr.mxu0 0.0
    %4722 = vmatpush1.msra.mxu0 0.0
    %4723 = vmatprep.subr.mxu0 0.0
    %4724 = vmatpush1.msra.mxu0 0.0
    %4725 = vmatprep.subr.mxu0 0.0
    %4726 = vmatpush1.msra.mxu0 0.0
    %4727 = vmatprep.subr.mxu0 0.0
    %4728 = vmatpush1.msra.mxu0 0.0
    %4729 = vmatprep.subr.mxu0 0.0
    %4730 = vmatpush1.msra.mxu0 0.0
    %4731 = vmatprep.subr.mxu0 0.0
    %4732 = vmatpush1.msra.mxu0 0.0
    %4733 = vmatprep.subr.mxu0 0.0
    %4734 = vmatpush1.msra.mxu0 0.0
    %4735 = vmatprep.subr.mxu0 0.0
    %4736 = vmatpush1.msra.mxu0 0.0
    %4737 = vmatprep.subr.mxu0 0.0
    %4738 = vmatpush1.msra.mxu0 0.0
    %4739 = vmatprep.subr.mxu0 0.0
    %4740 = vmatpush1.msra.mxu0 0.0
    %4741 = vmatprep.subr.mxu0 0.0
    %4742 = vmatpush1.msra.mxu0 0.0
    %4743 = vmatprep.subr.mxu0 0.0
    %4744 = vmatpush1.msra.mxu0 0.0
    %4745 = vmatprep.subr.mxu0 0.0
    %4746 = vmatpush1.msra.mxu0 0.0
    %4747 = vmatprep.subr.mxu0 0.0
    %4748 = vmatpush1.msra.mxu0 0.0
    %4749 = vmatprep.subr.mxu0 0.0
    %4750 = vmatpush1.msra.mxu0 0.0
    %4751 = vmatprep.subr.mxu0 0.0
    %4752 = vmatpush1.msra.mxu0 0.0
    %4753 = vmatprep.subr.mxu0 0.0
    %4754 = vmatpush1.msra.mxu0 0.0
    %4755 = vmatprep.subr.mxu0 0.0
    %4756 = vmatpush1.msra.mxu0 0.0
    %4757 = vmatprep.subr.mxu0 0.0
    %4758 = vmatpush1.msra.mxu0 0.0
    %4759 = vmatprep.subr.mxu0 0.0
    %4760 = vmatpush1.msra.mxu0 0.0
    %4761 = vmatprep.subr.mxu0 0.0
    %4762 = vmatpush1.msra.mxu0 0.0
    %4763 = vmatprep.subr.mxu0 0.0
    %4764 = vmatpush1.msra.mxu0 0.0
    %4765 = vmatprep.mubr.f32.mxu0 0.0
    %4766 = vmatmul.mubr.f32.gmra.mrb[0].mxu0 %v4699
    %v4767 = vpop.f32.mrb[0].mxu0
    %v4768 = vadd.f32 0.0, %v4767
    %v4769 = vpop.f32.mrb[0].mxu0
    %4770 = vdwg.mxu0
    %v4771 = vadd.f32 %v4693, %v4768
    %v4772 = vld [vmem:[%s792] sm:$0xff]
    %v4773 = vld [vmem:[%s4328] sm:$0xff]
    %v4774 = vld [vmem:[%s4328 + $0x8] sm:$0xff]
    %4776 = vrot.lane.b32.xlu0 %v4691, 16
    %v4777 = vpop.permute.xlu0 %4776
    %v4778 = vsel %vm244, %v4777, 0
    %4780 = vmatprep.subr.mxu0 0.0
    %4781 = vmatpush1.msra.mxu0 %v4773
    %4782 = vmatprep.subr.mxu0 0.0
    %4783 = vmatpush1.msra.mxu0 %v4774
    %4784 = vmatprep.subr.mxu0 0.0
    %4785 = vmatpush1.msra.mxu0 0.0
    %4786 = vmatprep.subr.mxu0 0.0
    %4787 = vmatpush1.msra.mxu0 0.0
    %4788 = vmatprep.subr.mxu0 0.0
    %4789 = vmatpush1.msra.mxu0 0.0
    %4790 = vmatprep.subr.mxu0 0.0
    %4791 = vmatpush1.msra.mxu0 0.0
    %4792 = vmatprep.subr.mxu0 0.0
    %4793 = vmatpush1.msra.mxu0 0.0
    %4794 = vmatprep.subr.mxu0 0.0
    %4795 = vmatpush1.msra.mxu0 0.0
    %4796 = vmatprep.subr.mxu0 0.0
    %4797 = vmatpush1.msra.mxu0 0.0
    %4798 = vmatprep.subr.mxu0 0.0
    %4799 = vmatpush1.msra.mxu0 0.0
    %4800 = vmatprep.subr.mxu0 0.0
    %4801 = vmatpush1.msra.mxu0 0.0
    %4802 = vmatprep.subr.mxu0 0.0
    %4803 = vmatpush1.msra.mxu0 0.0
    %4804 = vmatprep.subr.mxu0 0.0
    %4805 = vmatpush1.msra.mxu0 0.0
    %4806 = vmatprep.subr.mxu0 0.0
    %4807 = vmatpush1.msra.mxu0 0.0
    %4808 = vmatprep.subr.mxu0 0.0
    %4809 = vmatpush1.msra.mxu0 0.0
    %4810 = vmatprep.subr.mxu0 0.0
    %4811 = vmatpush1.msra.mxu0 0.0
    %4812 = vmatprep.subr.mxu0 0.0
    %4813 = vmatpush1.msra.mxu0 0.0
    %4814 = vmatprep.subr.mxu0 0.0
    %4815 = vmatpush1.msra.mxu0 0.0
    %4816 = vmatprep.subr.mxu0 0.0
    %4817 = vmatpush1.msra.mxu0 0.0
    %4818 = vmatprep.subr.mxu0 0.0
    %4819 = vmatpush1.msra.mxu0 0.0
    %4820 = vmatprep.subr.mxu0 0.0
    %4821 = vmatpush1.msra.mxu0 0.0
    %4822 = vmatprep.subr.mxu0 0.0
    %4823 = vmatpush1.msra.mxu0 0.0
    %4824 = vmatprep.subr.mxu0 0.0
    %4825 = vmatpush1.msra.mxu0 0.0
    %4826 = vmatprep.subr.mxu0 0.0
    %4827 = vmatpush1.msra.mxu0 0.0
    %4828 = vmatprep.subr.mxu0 0.0
    %4829 = vmatpush1.msra.mxu0 0.0
    %4830 = vmatprep.subr.mxu0 0.0
    %4831 = vmatpush1.msra.mxu0 0.0
    %4832 = vmatprep.subr.mxu0 0.0
    %4833 = vmatpush1.msra.mxu0 0.0
    %4834 = vmatprep.subr.mxu0 0.0
    %4835 = vmatpush1.msra.mxu0 0.0
    %4836 = vmatprep.subr.mxu0 0.0
    %4837 = vmatpush1.msra.mxu0 0.0
    %4838 = vmatprep.subr.mxu0 0.0
    %4839 = vmatpush1.msra.mxu0 0.0
    %4840 = vmatprep.subr.mxu0 0.0
    %4841 = vmatpush1.msra.mxu0 0.0
    %4842 = vmatprep.subr.mxu0 0.0
    %4843 = vmatpush1.msra.mxu0 0.0
    %4844 = vmatprep.mubr.f32.mxu0 0.0
    %4845 = vmatmul.mubr.f32.gmra.mrb[0].mxu0 %v4778
    %v4846 = vpop.f32.mrb[0].mxu0
    %v4847 = vadd.f32 0.0, %v4846
    %v4848 = vpop.f32.mrb[0].mxu0
    %4849 = vdwg.mxu0
    %4851 = vrot.lane.b32.xlu0 %v4847, 64
    %v4852 = vpop.permute.xlu0 %4851
    %v4854 = vadd.f32 %v4772, %v4852
    %v4855 = vxor.u32 %v4771, 2147483648
    %v4856 = vmul.f32 %v4855, 1.442695
    %v4857 = vpow.pop %v4856
    %v4858 = vadd.f32 %v4857, 1.0
    %v4859 = vrcp.pop %v4858
    %v4860 = vmul.f32 1.0, %v4859
    %v4861 = vtanh.pop %v4771
    %v4862 = vxor.u32 %v4854, 2147483648
    %v4863 = vmul.f32 %v4862, 1.442695
    %v4864 = vpow.pop %v4863
    %v4865 = vadd.f32 %v4864, 1.0
    %v4866 = vrcp.pop %v4865
    %v4867 = vmul.f32 1.0, %v4866
    %v4868 = vtanh.pop %v4854
    %v4869 = vmul.f32 %v4860, %v4690
    %4871 = vrot.lane.b32.xlu0 %v4861, 96
    %v4872 = vpop.permute.xlu0 %4871
    %v4874 = vmul.f32 %v4860, %v4872
    %4876 = vrot.lane.b32.xlu0 %v4874, 16
    %v4877 = vpop.permute.xlu0 %4876
    %v4879 = vadd.f32 %v4869, %v4877
    %v4880 = vtanh.pop %v4879
    %4882 = vrot.lane.b32.xlu0 %v4880, 32
    %v4883 = vpop.permute.xlu0 %4882
    %v4885 = vmul.f32 %v4860, %v4883
    %v4886 = vmul.f32 %v4867, %v4692
    %4888 = vrot.lane.b32.xlu0 %v4868, 96
    %v4889 = vpop.permute.xlu0 %4888
    %v4891 = vmul.f32 %v4867, %v4889
    %4893 = vrot.lane.b32.xlu0 %v4891, 16
    %v4894 = vpop.permute.xlu0 %4893
    %v4896 = vadd.f32 %v4886, %v4894
    %v4897 = vtanh.pop %v4896
    %4899 = vrot.lane.b32.xlu0 %v4897, 32
    %v4900 = vpop.permute.xlu0 %4899
    %v4902 = vmul.f32 %v4867, %v4900
    %v4903 = vsel %vm930, %v4885, 0.0
    %4905 = vrot.lane.b32.xlu0 %v4903, 80
    %v4906 = vpop.permute.xlu0 %4905
    %s4908 = scalar_lea.vmem [#allocation12], 16
    %4909 = vst.msk [vmem:[%s4908] sm:$0xff] %vm244, %v4906
    %v4910 = vsel %vm942, %v4902, 0.0
    %4912 = vrot.lane.b32.xlu0 %v4910, 32
    %v4913 = vpop.permute.xlu0 %4912
    %s4915 = scalar_lea.vmem [#allocation12], 40
    %4916 = vst.msk [vmem:[%s4915] sm:$0xff] %vm470, %v4913
    %v4917 = vsel %vm930, %v4885, %v4689
    %v4918 = vsel %vm930, %v4879, %v4690
    %v4919 = vsel %vm942, %v4902, %v4691
    %v4920 = vsel %vm942, %v4896, %v4692
    %v4921 = vld [vmem:[%s954] sm:$0xff]
    %v4922 = vld [vmem:[%s4253] sm:$0xff]
    %v4923 = vld [vmem:[%s4253 + $0x8] sm:$0xff]
    %4925 = vrot.lane.b32.xlu0 %v4917, 80
    %v4926 = vpop.permute.xlu0 %4925
    %v4927 = vsel %vm244, %v4926, 0
    %4929 = vmatprep.subr.mxu0 0.0
    %4930 = vmatpush1.msra.mxu0 %v4922
    %4931 = vmatprep.subr.mxu0 0.0
    %4932 = vmatpush1.msra.mxu0 %v4923
    %4933 = vmatprep.subr.mxu0 0.0
    %4934 = vmatpush1.msra.mxu0 0.0
    %4935 = vmatprep.subr.mxu0 0.0
    %4936 = vmatpush1.msra.mxu0 0.0
    %4937 = vmatprep.subr.mxu0 0.0
    %4938 = vmatpush1.msra.mxu0 0.0
    %4939 = vmatprep.subr.mxu0 0.0
    %4940 = vmatpush1.msra.mxu0 0.0
    %4941 = vmatprep.subr.mxu0 0.0
    %4942 = vmatpush1.msra.mxu0 0.0
    %4943 = vmatprep.subr.mxu0 0.0
    %4944 = vmatpush1.msra.mxu0 0.0
    %4945 = vmatprep.subr.mxu0 0.0
    %4946 = vmatpush1.msra.mxu0 0.0
    %4947 = vmatprep.subr.mxu0 0.0
    %4948 = vmatpush1.msra.mxu0 0.0
    %4949 = vmatprep.subr.mxu0 0.0
    %4950 = vmatpush1.msra.mxu0 0.0
    %4951 = vmatprep.subr.mxu0 0.0
    %4952 = vmatpush1.msra.mxu0 0.0
    %4953 = vmatprep.subr.mxu0 0.0
    %4954 = vmatpush1.msra.mxu0 0.0
    %4955 = vmatprep.subr.mxu0 0.0
    %4956 = vmatpush1.msra.mxu0 0.0
    %4957 = vmatprep.subr.mxu0 0.0
    %4958 = vmatpush1.msra.mxu0 0.0
    %4959 = vmatprep.subr.mxu0 0.0
    %4960 = vmatpush1.msra.mxu0 0.0
    %4961 = vmatprep.subr.mxu0 0.0
    %4962 = vmatpush1.msra.mxu0 0.0
    %4963 = vmatprep.subr.mxu0 0.0
    %4964 = vmatpush1.msra.mxu0 0.0
    %4965 = vmatprep.subr.mxu0 0.0
    %4966 = vmatpush1.msra.mxu0 0.0
    %4967 = vmatprep.subr.mxu0 0.0
    %4968 = vmatpush1.msra.mxu0 0.0
    %4969 = vmatprep.subr.mxu0 0.0
    %4970 = vmatpush1.msra.mxu0 0.0
    %4971 = vmatprep.subr.mxu0 0.0
    %4972 = vmatpush1.msra.mxu0 0.0
    %4973 = vmatprep.subr.mxu0 0.0
    %4974 = vmatpush1.msra.mxu0 0.0
    %4975 = vmatprep.subr.mxu0 0.0
    %4976 = vmatpush1.msra.mxu0 0.0
    %4977 = vmatprep.subr.mxu0 0.0
    %4978 = vmatpush1.msra.mxu0 0.0
    %4979 = vmatprep.subr.mxu0 0.0
    %4980 = vmatpush1.msra.mxu0 0.0
    %4981 = vmatprep.subr.mxu0 0.0
    %4982 = vmatpush1.msra.mxu0 0.0
    %4983 = vmatprep.subr.mxu0 0.0
    %4984 = vmatpush1.msra.mxu0 0.0
    %4985 = vmatprep.subr.mxu0 0.0
    %4986 = vmatpush1.msra.mxu0 0.0
    %4987 = vmatprep.subr.mxu0 0.0
    %4988 = vmatpush1.msra.mxu0 0.0
    %4989 = vmatprep.subr.mxu0 0.0
    %4990 = vmatpush1.msra.mxu0 0.0
    %4991 = vmatprep.subr.mxu0 0.0
    %4992 = vmatpush1.msra.mxu0 0.0
    %4993 = vmatprep.mubr.f32.mxu0 0.0
    %4994 = vmatmul.mubr.f32.gmra.mrb[0].mxu0 %v4927
    %v4995 = vpop.f32.mrb[0].mxu0
    %v4996 = vadd.f32 0.0, %v4995
    %v4997 = vpop.f32.mrb[0].mxu0
    %4998 = vdwg.mxu0
    %v4999 = vadd.f32 %v4921, %v4996
    %v5000 = vld [vmem:[%s1034] sm:$0xff]
    %v5001 = vld [vmem:[%s4328] sm:$0xff]
    %v5002 = vld [vmem:[%s4328 + $0x8] sm:$0xff]
    %5004 = vrot.lane.b32.xlu0 %v4919, 16
    %v5005 = vpop.permute.xlu0 %5004
    %v5006 = vsel %vm244, %v5005, 0
    %5008 = vmatprep.subr.mxu0 0.0
    %5009 = vmatpush1.msra.mxu0 %v5001
    %5010 = vmatprep.subr.mxu0 0.0
    %5011 = vmatpush1.msra.mxu0 %v5002
    %5012 = vmatprep.subr.mxu0 0.0
    %5013 = vmatpush1.msra.mxu0 0.0
    %5014 = vmatprep.subr.mxu0 0.0
    %5015 = vmatpush1.msra.mxu0 0.0
    %5016 = vmatprep.subr.mxu0 0.0
    %5017 = vmatpush1.msra.mxu0 0.0
    %5018 = vmatprep.subr.mxu0 0.0
    %5019 = vmatpush1.msra.mxu0 0.0
    %5020 = vmatprep.subr.mxu0 0.0
    %5021 = vmatpush1.msra.mxu0 0.0
    %5022 = vmatprep.subr.mxu0 0.0
    %5023 = vmatpush1.msra.mxu0 0.0
    %5024 = vmatprep.subr.mxu0 0.0
    %5025 = vmatpush1.msra.mxu0 0.0
    %5026 = vmatprep.subr.mxu0 0.0
    %5027 = vmatpush1.msra.mxu0 0.0
    %5028 = vmatprep.subr.mxu0 0.0
    %5029 = vmatpush1.msra.mxu0 0.0
    %5030 = vmatprep.subr.mxu0 0.0
    %5031 = vmatpush1.msra.mxu0 0.0
    %5032 = vmatprep.subr.mxu0 0.0
    %5033 = vmatpush1.msra.mxu0 0.0
    %5034 = vmatprep.subr.mxu0 0.0
    %5035 = vmatpush1.msra.mxu0 0.0
    %5036 = vmatprep.subr.mxu0 0.0
    %5037 = vmatpush1.msra.mxu0 0.0
    %5038 = vmatprep.subr.mxu0 0.0
    %5039 = vmatpush1.msra.mxu0 0.0
    %5040 = vmatprep.subr.mxu0 0.0
    %5041 = vmatpush1.msra.mxu0 0.0
    %5042 = vmatprep.subr.mxu0 0.0
    %5043 = vmatpush1.msra.mxu0 0.0
    %5044 = vmatprep.subr.mxu0 0.0
    %5045 = vmatpush1.msra.mxu0 0.0
    %5046 = vmatprep.subr.mxu0 0.0
    %5047 = vmatpush1.msra.mxu0 0.0
    %5048 = vmatprep.subr.mxu0 0.0
    %5049 = vmatpush1.msra.mxu0 0.0
    %5050 = vmatprep.subr.mxu0 0.0
    %5051 = vmatpush1.msra.mxu0 0.0
    %5052 = vmatprep.subr.mxu0 0.0
    %5053 = vmatpush1.msra.mxu0 0.0
    %5054 = vmatprep.subr.mxu0 0.0
    %5055 = vmatpush1.msra.mxu0 0.0
    %5056 = vmatprep.subr.mxu0 0.0
    %5057 = vmatpush1.msra.mxu0 0.0
    %5058 = vmatprep.subr.mxu0 0.0
    %5059 = vmatpush1.msra.mxu0 0.0
    %5060 = vmatprep.subr.mxu0 0.0
    %5061 = vmatpush1.msra.mxu0 0.0
    %5062 = vmatprep.subr.mxu0 0.0
    %5063 = vmatpush1.msra.mxu0 0.0
    %5064 = vmatprep.subr.mxu0 0.0
    %5065 = vmatpush1.msra.mxu0 0.0
    %5066 = vmatprep.subr.mxu0 0.0
    %5067 = vmatpush1.msra.mxu0 0.0
    %5068 = vmatprep.subr.mxu0 0.0
    %5069 = vmatpush1.msra.mxu0 0.0
    %5070 = vmatprep.subr.mxu0 0.0
    %5071 = vmatpush1.msra.mxu0 0.0
    %5072 = vmatprep.mubr.f32.mxu0 0.0
    %5073 = vmatmul.mubr.f32.gmra.mrb[0].mxu0 %v5006
    %v5074 = vpop.f32.mrb[0].mxu0
    %v5075 = vadd.f32 0.0, %v5074
    %v5076 = vpop.f32.mrb[0].mxu0
    %5077 = vdwg.mxu0
    %5079 = vrot.lane.b32.xlu0 %v5075, 64
    %v5080 = vpop.permute.xlu0 %5079
    %v5082 = vadd.f32 %v5000, %v5080
    %v5083 = vxor.u32 %v4999, 2147483648
    %v5084 = vmul.f32 %v5083, 1.442695
    %v5085 = vpow.pop %v5084
    %v5086 = vadd.f32 %v5085, 1.0
    %v5087 = vrcp.pop %v5086
    %v5088 = vmul.f32 1.0, %v5087
    %v5089 = vtanh.pop %v4999
    %v5090 = vxor.u32 %v5082, 2147483648
    %v5091 = vmul.f32 %v5090, 1.442695
    %v5092 = vpow.pop %v5091
    %v5093 = vadd.f32 %v5092, 1.0
    %v5094 = vrcp.pop %v5093
    %v5095 = vmul.f32 1.0, %v5094
    %v5096 = vtanh.pop %v5082
    %v5097 = vmul.f32 %v5088, %v4918
    %5099 = vrot.lane.b32.xlu0 %v5089, 96
    %v5100 = vpop.permute.xlu0 %5099
    %v5102 = vmul.f32 %v5088, %v5100
    %5104 = vrot.lane.b32.xlu0 %v5102, 16
    %v5105 = vpop.permute.xlu0 %5104
    %v5107 = vadd.f32 %v5097, %v5105
    %v5108 = vtanh.pop %v5107
    %5110 = vrot.lane.b32.xlu0 %v5108, 32
    %v5111 = vpop.permute.xlu0 %5110
    %v5113 = vmul.f32 %v5088, %v5111
    %v5114 = vmul.f32 %v5095, %v4920
    %5116 = vrot.lane.b32.xlu0 %v5096, 96
    %v5117 = vpop.permute.xlu0 %5116
    %v5119 = vmul.f32 %v5095, %v5117
    %5121 = vrot.lane.b32.xlu0 %v5119, 16
    %v5122 = vpop.permute.xlu0 %5121
    %v5124 = vadd.f32 %v5114, %v5122
    %v5125 = vtanh.pop %v5124
    %5127 = vrot.lane.b32.xlu0 %v5125, 32
    %v5128 = vpop.permute.xlu0 %5127
    %v5130 = vmul.f32 %v5095, %v5128
    %v5131 = vsel %vm1172, %v5113, 0.0
    %5133 = vrot.lane.b32.xlu0 %v5131, 80
    %v5134 = vpop.permute.xlu0 %5133
    %s5136 = scalar_lea.vmem [#allocation12], 24
    %5137 = vst.msk [vmem:[%s5136] sm:$0xff] %vm244, %v5134
    %v5138 = vsel %vm1184, %v5130, 0.0
    %5140 = vrot.lane.b32.xlu0 %v5138, 32
    %v5141 = vpop.permute.xlu0 %5140
    %s5143 = scalar_lea.vmem [#allocation12], 32
    %5144 = vst.msk [vmem:[%s5143] sm:$0xff] %vm470, %v5141
    %v5145 = vsel %vm1172, %v5113, %v4917
    %v5146 = vsel %vm1172, %v5107, %v4918
    %v5147 = vsel %vm1184, %v5130, %v4919
    %v5148 = vsel %vm1184, %v5124, %v4920
    %v5149 = vld [vmem:[%s1034] sm:$0xff]
    %v5150 = vld [vmem:[%s4253] sm:$0xff]
    %v5151 = vld [vmem:[%s4253 + $0x8] sm:$0xff]
    %5153 = vrot.lane.b32.xlu0 %v5145, 80
    %v5154 = vpop.permute.xlu0 %5153
    %v5155 = vsel %vm244, %v5154, 0
    %5157 = vmatprep.subr.mxu0 0.0
    %5158 = vmatpush1.msra.mxu0 %v5150
    %5159 = vmatprep.subr.mxu0 0.0
    %5160 = vmatpush1.msra.mxu0 %v5151
    %5161 = vmatprep.subr.mxu0 0.0
    %5162 = vmatpush1.msra.mxu0 0.0
    %5163 = vmatprep.subr.mxu0 0.0
    %5164 = vmatpush1.msra.mxu0 0.0
    %5165 = vmatprep.subr.mxu0 0.0
    %5166 = vmatpush1.msra.mxu0 0.0
    %5167 = vmatprep.subr.mxu0 0.0
    %5168 = vmatpush1.msra.mxu0 0.0
    %5169 = vmatprep.subr.mxu0 0.0
    %5170 = vmatpush1.msra.mxu0 0.0
    %5171 = vmatprep.subr.mxu0 0.0
    %5172 = vmatpush1.msra.mxu0 0.0
    %5173 = vmatprep.subr.mxu0 0.0
    %5174 = vmatpush1.msra.mxu0 0.0
    %5175 = vmatprep.subr.mxu0 0.0
    %5176 = vmatpush1.msra.mxu0 0.0
    %5177 = vmatprep.subr.mxu0 0.0
    %5178 = vmatpush1.msra.mxu0 0.0
    %5179 = vmatprep.subr.mxu0 0.0
    %5180 = vmatpush1.msra.mxu0 0.0
    %5181 = vmatprep.subr.mxu0 0.0
    %5182 = vmatpush1.msra.mxu0 0.0
    %5183 = vmatprep.subr.mxu0 0.0
    %5184 = vmatpush1.msra.mxu0 0.0
    %5185 = vmatprep.subr.mxu0 0.0
    %5186 = vmatpush1.msra.mxu0 0.0
    %5187 = vmatprep.subr.mxu0 0.0
    %5188 = vmatpush1.msra.mxu0 0.0
    %5189 = vmatprep.subr.mxu0 0.0
    %5190 = vmatpush1.msra.mxu0 0.0
    %5191 = vmatprep.subr.mxu0 0.0
    %5192 = vmatpush1.msra.mxu0 0.0
    %5193 = vmatprep.subr.mxu0 0.0
    %5194 = vmatpush1.msra.mxu0 0.0
    %5195 = vmatprep.subr.mxu0 0.0
    %5196 = vmatpush1.msra.mxu0 0.0
    %5197 = vmatprep.subr.mxu0 0.0
    %5198 = vmatpush1.msra.mxu0 0.0
    %5199 = vmatprep.subr.mxu0 0.0
    %5200 = vmatpush1.msra.mxu0 0.0
    %5201 = vmatprep.subr.mxu0 0.0
    %5202 = vmatpush1.msra.mxu0 0.0
    %5203 = vmatprep.subr.mxu0 0.0
    %5204 = vmatpush1.msra.mxu0 0.0
    %5205 = vmatprep.subr.mxu0 0.0
    %5206 = vmatpush1.msra.mxu0 0.0
    %5207 = vmatprep.subr.mxu0 0.0
    %5208 = vmatpush1.msra.mxu0 0.0
    %5209 = vmatprep.subr.mxu0 0.0
    %5210 = vmatpush1.msra.mxu0 0.0
    %5211 = vmatprep.subr.mxu0 0.0
    %5212 = vmatpush1.msra.mxu0 0.0
    %5213 = vmatprep.subr.mxu0 0.0
    %5214 = vmatpush1.msra.mxu0 0.0
    %5215 = vmatprep.subr.mxu0 0.0
    %5216 = vmatpush1.msra.mxu0 0.0
    %5217 = vmatprep.subr.mxu0 0.0
    %5218 = vmatpush1.msra.mxu0 0.0
    %5219 = vmatprep.subr.mxu0 0.0
    %5220 = vmatpush1.msra.mxu0 0.0
    %5221 = vmatprep.mubr.f32.mxu0 0.0
    %5222 = vmatmul.mubr.f32.gmra.mrb[0].mxu0 %v5155
    %v5223 = vpop.f32.mrb[0].mxu0
    %v5224 = vadd.f32 0.0, %v5223
    %v5225 = vpop.f32.mrb[0].mxu0
    %5226 = vdwg.mxu0
    %v5227 = vadd.f32 %v5149, %v5224
    %v5228 = vld [vmem:[%s954] sm:$0xff]
    %v5229 = vld [vmem:[%s4328] sm:$0xff]
    %v5230 = vld [vmem:[%s4328 + $0x8] sm:$0xff]
    %5232 = vrot.lane.b32.xlu0 %v5147, 16
    %v5233 = vpop.permute.xlu0 %5232
    %v5234 = vsel %vm244, %v5233, 0
    %5236 = vmatprep.subr.mxu0 0.0
    %5237 = vmatpush1.msra.mxu0 %v5229
    %5238 = vmatprep.subr.mxu0 0.0
    %5239 = vmatpush1.msra.mxu0 %v5230
    %5240 = vmatprep.subr.mxu0 0.0
    %5241 = vmatpush1.msra.mxu0 0.0
    %5242 = vmatprep.subr.mxu0 0.0
    %5243 = vmatpush1.msra.mxu0 0.0
    %5244 = vmatprep.subr.mxu0 0.0
    %5245 = vmatpush1.msra.mxu0 0.0
    %5246 = vmatprep.subr.mxu0 0.0
    %5247 = vmatpush1.msra.mxu0 0.0
    %5248 = vmatprep.subr.mxu0 0.0
    %5249 = vmatpush1.msra.mxu0 0.0
    %5250 = vmatprep.subr.mxu0 0.0
    %5251 = vmatpush1.msra.mxu0 0.0
    %5252 = vmatprep.subr.mxu0 0.0
    %5253 = vmatpush1.msra.mxu0 0.0
    %5254 = vmatprep.subr.mxu0 0.0
    %5255 = vmatpush1.msra.mxu0 0.0
    %5256 = vmatprep.subr.mxu0 0.0
    %5257 = vmatpush1.msra.mxu0 0.0
    %5258 = vmatprep.subr.mxu0 0.0
    %5259 = vmatpush1.msra.mxu0 0.0
    %5260 = vmatprep.subr.mxu0 0.0
    %5261 = vmatpush1.msra.mxu0 0.0
    %5262 = vmatprep.subr.mxu0 0.0
    %5263 = vmatpush1.msra.mxu0 0.0
    %5264 = vmatprep.subr.mxu0 0.0
    %5265 = vmatpush1.msra.mxu0 0.0
    %5266 = vmatprep.subr.mxu0 0.0
    %5267 = vmatpush1.msra.mxu0 0.0
    %5268 = vmatprep.subr.mxu0 0.0
    %5269 = vmatpush1.msra.mxu0 0.0
    %5270 = vmatprep.subr.mxu0 0.0
    %5271 = vmatpush1.msra.mxu0 0.0
    %5272 = vmatprep.subr.mxu0 0.0
    %5273 = vmatpush1.msra.mxu0 0.0
    %5274 = vmatprep.subr.mxu0 0.0
    %5275 = vmatpush1.msra.mxu0 0.0
    %5276 = vmatprep.subr.mxu0 0.0
    %5277 = vmatpush1.msra.mxu0 0.0
    %5278 = vmatprep.subr.mxu0 0.0
    %5279 = vmatpush1.msra.mxu0 0.0
    %5280 = vmatprep.subr.mxu0 0.0
    %5281 = vmatpush1.msra.mxu0 0.0
    %5282 = vmatprep.subr.mxu0 0.0
    %5283 = vmatpush1.msra.mxu0 0.0
    %5284 = vmatprep.subr.mxu0 0.0
    %5285 = vmatpush1.msra.mxu0 0.0
    %5286 = vmatprep.subr.mxu0 0.0
    %5287 = vmatpush1.msra.mxu0 0.0
    %5288 = vmatprep.subr.mxu0 0.0
    %5289 = vmatpush1.msra.mxu0 0.0
    %5290 = vmatprep.subr.mxu0 0.0
    %5291 = vmatpush1.msra.mxu0 0.0
    %5292 = vmatprep.subr.mxu0 0.0
    %5293 = vmatpush1.msra.mxu0 0.0
    %5294 = vmatprep.subr.mxu0 0.0
    %5295 = vmatpush1.msra.mxu0 0.0
    %5296 = vmatprep.subr.mxu0 0.0
    %5297 = vmatpush1.msra.mxu0 0.0
    %5298 = vmatprep.subr.mxu0 0.0
    %5299 = vmatpush1.msra.mxu0 0.0
    %5300 = vmatprep.mubr.f32.mxu0 0.0
    %5301 = vmatmul.mubr.f32.gmra.mrb[0].mxu0 %v5234
    %v5302 = vpop.f32.mrb[0].mxu0
    %v5303 = vadd.f32 0.0, %v5302
    %v5304 = vpop.f32.mrb[0].mxu0
    %5305 = vdwg.mxu0
    %5307 = vrot.lane.b32.xlu0 %v5303, 64
    %v5308 = vpop.permute.xlu0 %5307
    %v5310 = vadd.f32 %v5228, %v5308
    %v5311 = vxor.u32 %v5227, 2147483648
    %v5312 = vmul.f32 %v5311, 1.442695
    %v5313 = vpow.pop %v5312
    %v5314 = vadd.f32 %v5313, 1.0
    %v5315 = vrcp.pop %v5314
    %v5316 = vmul.f32 1.0, %v5315
    %v5317 = vtanh.pop %v5227
    %v5318 = vxor.u32 %v5310, 2147483648
    %v5319 = vmul.f32 %v5318, 1.442695
    %v5320 = vpow.pop %v5319
    %v5321 = vadd.f32 %v5320, 1.0
    %v5322 = vrcp.pop %v5321
    %v5323 = vmul.f32 1.0, %v5322
    %v5324 = vtanh.pop %v5310
    %v5325 = vmul.f32 %v5316, %v5146
    %5327 = vrot.lane.b32.xlu0 %v5317, 96
    %v5328 = vpop.permute.xlu0 %5327
    %v5330 = vmul.f32 %v5316, %v5328
    %5332 = vrot.lane.b32.xlu0 %v5330, 16
    %v5333 = vpop.permute.xlu0 %5332
    %v5335 = vadd.f32 %v5325, %v5333
    %v5336 = vtanh.pop %v5335
    %5338 = vrot.lane.b32.xlu0 %v5336, 32
    %v5339 = vpop.permute.xlu0 %5338
    %v5341 = vmul.f32 %v5316, %v5339
    %v5342 = vmul.f32 %v5323, %v5148
    %5344 = vrot.lane.b32.xlu0 %v5324, 96
    %v5345 = vpop.permute.xlu0 %5344
    %v5347 = vmul.f32 %v5323, %v5345
    %5349 = vrot.lane.b32.xlu0 %v5347, 16
    %v5350 = vpop.permute.xlu0 %5349
    %v5352 = vadd.f32 %v5342, %v5350
    %v5353 = vtanh.pop %v5352
    %5355 = vrot.lane.b32.xlu0 %v5353, 32
    %v5356 = vpop.permute.xlu0 %5355
    %v5358 = vmul.f32 %v5323, %v5356
    %v5359 = vsel %vm1184, %v5341, 0.0
    %5361 = vrot.lane.b32.xlu0 %v5359, 80
    %v5362 = vpop.permute.xlu0 %5361
    %5364 = vst.msk [vmem:[%s5143] sm:$0xff] %vm244, %v5362
    %v5365 = vsel %vm1172, %v5358, 0.0
    %5367 = vrot.lane.b32.xlu0 %v5365, 32
    %v5368 = vpop.permute.xlu0 %5367
    %5370 = vst.msk [vmem:[%s5136] sm:$0xff] %vm470, %v5368
    %v5371 = vsel %vm1184, %v5341, %v5145
    %v5372 = vsel %vm1184, %v5335, %v5146
    %v5373 = vsel %vm1172, %v5358, %v5147
    %v5374 = vsel %vm1172, %v5352, %v5148
    %v5375 = vld [vmem:[%s792] sm:$0xff]
    %v5376 = vld [vmem:[%s4253] sm:$0xff]
    %v5377 = vld [vmem:[%s4253 + $0x8] sm:$0xff]
    %5379 = vrot.lane.b32.xlu0 %v5371, 80
    %v5380 = vpop.permute.xlu0 %5379
    %v5381 = vsel %vm244, %v5380, 0
    %5383 = vmatprep.subr.mxu0 0.0
    %5384 = vmatpush1.msra.mxu0 %v5376
    %5385 = vmatprep.subr.mxu0 0.0
    %5386 = vmatpush1.msra.mxu0 %v5377
    %5387 = vmatprep.subr.mxu0 0.0
    %5388 = vmatpush1.msra.mxu0 0.0
    %5389 = vmatprep.subr.mxu0 0.0
    %5390 = vmatpush1.msra.mxu0 0.0
    %5391 = vmatprep.subr.mxu0 0.0
    %5392 = vmatpush1.msra.mxu0 0.0
    %5393 = vmatprep.subr.mxu0 0.0
    %5394 = vmatpush1.msra.mxu0 0.0
    %5395 = vmatprep.subr.mxu0 0.0
    %5396 = vmatpush1.msra.mxu0 0.0
    %5397 = vmatprep.subr.mxu0 0.0
    %5398 = vmatpush1.msra.mxu0 0.0
    %5399 = vmatprep.subr.mxu0 0.0
    %5400 = vmatpush1.msra.mxu0 0.0
    %5401 = vmatprep.subr.mxu0 0.0
    %5402 = vmatpush1.msra.mxu0 0.0
    %5403 = vmatprep.subr.mxu0 0.0
    %5404 = vmatpush1.msra.mxu0 0.0
    %5405 = vmatprep.subr.mxu0 0.0
    %5406 = vmatpush1.msra.mxu0 0.0
    %5407 = vmatprep.subr.mxu0 0.0
    %5408 = vmatpush1.msra.mxu0 0.0
    %5409 = vmatprep.subr.mxu0 0.0
    %5410 = vmatpush1.msra.mxu0 0.0
    %5411 = vmatprep.subr.mxu0 0.0
    %5412 = vmatpush1.msra.mxu0 0.0
    %5413 = vmatprep.subr.mxu0 0.0
    %5414 = vmatpush1.msra.mxu0 0.0
    %5415 = vmatprep.subr.mxu0 0.0
    %5416 = vmatpush1.msra.mxu0 0.0
    %5417 = vmatprep.subr.mxu0 0.0
    %5418 = vmatpush1.msra.mxu0 0.0
    %5419 = vmatprep.subr.mxu0 0.0
    %5420 = vmatpush1.msra.mxu0 0.0
    %5421 = vmatprep.subr.mxu0 0.0
    %5422 = vmatpush1.msra.mxu0 0.0
    %5423 = vmatprep.subr.mxu0 0.0
    %5424 = vmatpush1.msra.mxu0 0.0
    %5425 = vmatprep.subr.mxu0 0.0
    %5426 = vmatpush1.msra.mxu0 0.0
    %5427 = vmatprep.subr.mxu0 0.0
    %5428 = vmatpush1.msra.mxu0 0.0
    %5429 = vmatprep.subr.mxu0 0.0
    %5430 = vmatpush1.msra.mxu0 0.0
    %5431 = vmatprep.subr.mxu0 0.0
    %5432 = vmatpush1.msra.mxu0 0.0
    %5433 = vmatprep.subr.mxu0 0.0
    %5434 = vmatpush1.msra.mxu0 0.0
    %5435 = vmatprep.subr.mxu0 0.0
    %5436 = vmatpush1.msra.mxu0 0.0
    %5437 = vmatprep.subr.mxu0 0.0
    %5438 = vmatpush1.msra.mxu0 0.0
    %5439 = vmatprep.subr.mxu0 0.0
    %5440 = vmatpush1.msra.mxu0 0.0
    %5441 = vmatprep.subr.mxu0 0.0
    %5442 = vmatpush1.msra.mxu0 0.0
    %5443 = vmatprep.subr.mxu0 0.0
    %5444 = vmatpush1.msra.mxu0 0.0
    %5445 = vmatprep.subr.mxu0 0.0
    %5446 = vmatpush1.msra.mxu0 0.0
    %5447 = vmatprep.mubr.f32.mxu0 0.0
    %5448 = vmatmul.mubr.f32.gmra.mrb[0].mxu0 %v5381
    %v5449 = vpop.f32.mrb[0].mxu0
    %v5450 = vadd.f32 0.0, %v5449
    %v5451 = vpop.f32.mrb[0].mxu0
    %5452 = vdwg.mxu0
    %v5453 = vadd.f32 %v5375, %v5450
    %v5454 = vld [vmem:[%s712] sm:$0xff]
    %v5455 = vld [vmem:[%s4328] sm:$0xff]
    %v5456 = vld [vmem:[%s4328 + $0x8] sm:$0xff]
    %5458 = vrot.lane.b32.xlu0 %v5373, 16
    %v5459 = vpop.permute.xlu0 %5458
    %v5460 = vsel %vm244, %v5459, 0
    %5462 = vmatprep.subr.mxu0 0.0
    %5463 = vmatpush1.msra.mxu0 %v5455
    %5464 = vmatprep.subr.mxu0 0.0
    %5465 = vmatpush1.msra.mxu0 %v5456
    %5466 = vmatprep.subr.mxu0 0.0
    %5467 = vmatpush1.msra.mxu0 0.0
    %5468 = vmatprep.subr.mxu0 0.0
    %5469 = vmatpush1.msra.mxu0 0.0
    %5470 = vmatprep.subr.mxu0 0.0
    %5471 = vmatpush1.msra.mxu0 0.0
    %5472 = vmatprep.subr.mxu0 0.0
    %5473 = vmatpush1.msra.mxu0 0.0
    %5474 = vmatprep.subr.mxu0 0.0
    %5475 = vmatpush1.msra.mxu0 0.0
    %5476 = vmatprep.subr.mxu0 0.0
    %5477 = vmatpush1.msra.mxu0 0.0
    %5478 = vmatprep.subr.mxu0 0.0
    %5479 = vmatpush1.msra.mxu0 0.0
    %5480 = vmatprep.subr.mxu0 0.0
    %5481 = vmatpush1.msra.mxu0 0.0
    %5482 = vmatprep.subr.mxu0 0.0
    %5483 = vmatpush1.msra.mxu0 0.0
    %5484 = vmatprep.subr.mxu0 0.0
    %5485 = vmatpush1.msra.mxu0 0.0
    %5486 = vmatprep.subr.mxu0 0.0
    %5487 = vmatpush1.msra.mxu0 0.0
    %5488 = vmatprep.subr.mxu0 0.0
    %5489 = vmatpush1.msra.mxu0 0.0
    %5490 = vmatprep.subr.mxu0 0.0
    %5491 = vmatpush1.msra.mxu0 0.0
    %5492 = vmatprep.subr.mxu0 0.0
    %5493 = vmatpush1.msra.mxu0 0.0
    %5494 = vmatprep.subr.mxu0 0.0
    %5495 = vmatpush1.msra.mxu0 0.0
    %5496 = vmatprep.subr.mxu0 0.0
    %5497 = vmatpush1.msra.mxu0 0.0
    %5498 = vmatprep.subr.mxu0 0.0
    %5499 = vmatpush1.msra.mxu0 0.0
    %5500 = vmatprep.subr.mxu0 0.0
    %5501 = vmatpush1.msra.mxu0 0.0
    %5502 = vmatprep.subr.mxu0 0.0
    %5503 = vmatpush1.msra.mxu0 0.0
    %5504 = vmatprep.subr.mxu0 0.0
    %5505 = vmatpush1.msra.mxu0 0.0
    %5506 = vmatprep.subr.mxu0 0.0
    %5507 = vmatpush1.msra.mxu0 0.0
    %5508 = vmatprep.subr.mxu0 0.0
    %5509 = vmatpush1.msra.mxu0 0.0
    %5510 = vmatprep.subr.mxu0 0.0
    %5511 = vmatpush1.msra.mxu0 0.0
    %5512 = vmatprep.subr.mxu0 0.0
    %5513 = vmatpush1.msra.mxu0 0.0
    %5514 = vmatprep.subr.mxu0 0.0
    %5515 = vmatpush1.msra.mxu0 0.0
    %5516 = vmatprep.subr.mxu0 0.0
    %5517 = vmatpush1.msra.mxu0 0.0
    %5518 = vmatprep.subr.mxu0 0.0
    %5519 = vmatpush1.msra.mxu0 0.0
    %5520 = vmatprep.subr.mxu0 0.0
    %5521 = vmatpush1.msra.mxu0 0.0
    %5522 = vmatprep.subr.mxu0 0.0
    %5523 = vmatpush1.msra.mxu0 0.0
    %5524 = vmatprep.subr.mxu0 0.0
    %5525 = vmatpush1.msra.mxu0 0.0
    %5526 = vmatprep.mubr.f32.mxu0 0.0
    %5527 = vmatmul.mubr.f32.gmra.mrb[0].mxu0 %v5460
    %v5528 = vpop.f32.mrb[0].mxu0
    %v5529 = vadd.f32 0.0, %v5528
    %v5530 = vpop.f32.mrb[0].mxu0
    %5531 = vdwg.mxu0
    %5533 = vrot.lane.b32.xlu0 %v5529, 64
    %v5534 = vpop.permute.xlu0 %5533
    %v5536 = vadd.f32 %v5454, %v5534
    %v5537 = vxor.u32 %v5453, 2147483648
    %v5538 = vmul.f32 %v5537, 1.442695
    %v5539 = vpow.pop %v5538
    %v5540 = vadd.f32 %v5539, 1.0
    %v5541 = vrcp.pop %v5540
    %v5542 = vmul.f32 1.0, %v5541
    %v5543 = vtanh.pop %v5453
    %v5544 = vxor.u32 %v5536, 2147483648
    %v5545 = vmul.f32 %v5544, 1.442695
    %v5546 = vpow.pop %v5545
    %v5547 = vadd.f32 %v5546, 1.0
    %v5548 = vrcp.pop %v5547
    %v5549 = vmul.f32 1.0, %v5548
    %v5550 = vtanh.pop %v5536
    %v5551 = vmul.f32 %v5542, %v5372
    %5553 = vrot.lane.b32.xlu0 %v5543, 96
    %v5554 = vpop.permute.xlu0 %5553
    %v5556 = vmul.f32 %v5542, %v5554
    %5558 = vrot.lane.b32.xlu0 %v5556, 16
    %v5559 = vpop.permute.xlu0 %5558
    %v5561 = vadd.f32 %v5551, %v5559
    %v5562 = vtanh.pop %v5561
    %5564 = vrot.lane.b32.xlu0 %v5562, 32
    %v5565 = vpop.permute.xlu0 %5564
    %v5567 = vmul.f32 %v5542, %v5565
    %v5568 = vmul.f32 %v5549, %v5374
    %5570 = vrot.lane.b32.xlu0 %v5550, 96
    %v5571 = vpop.permute.xlu0 %5570
    %v5573 = vmul.f32 %v5549, %v5571
    %5575 = vrot.lane.b32.xlu0 %v5573, 16
    %v5576 = vpop.permute.xlu0 %5575
    %v5578 = vadd.f32 %v5568, %v5576
    %v5579 = vtanh.pop %v5578
    %5581 = vrot.lane.b32.xlu0 %v5579, 32
    %v5582 = vpop.permute.xlu0 %5581
    %v5584 = vmul.f32 %v5549, %v5582
    %v5585 = vsel %vm942, %v5567, 0.0
    %5587 = vrot.lane.b32.xlu0 %v5585, 80
    %v5588 = vpop.permute.xlu0 %5587
    %5590 = vst.msk [vmem:[%s4915] sm:$0xff] %vm244, %v5588
    %v5591 = vsel %vm930, %v5584, 0.0
    %5593 = vrot.lane.b32.xlu0 %v5591, 32
    %v5594 = vpop.permute.xlu0 %5593
    %5596 = vst.msk [vmem:[%s4908] sm:$0xff] %vm470, %v5594
    %v5597 = vsel %vm942, %v5567, %v5371
    %v5598 = vsel %vm942, %v5561, %v5372
    %v5599 = vsel %vm930, %v5584, %v5373
    %v5600 = vsel %vm930, %v5578, %v5374
    %v5601 = vld [vmem:[%s551] sm:$0xff]
    %v5602 = vld [vmem:[%s4253] sm:$0xff]
    %v5603 = vld [vmem:[%s4253 + $0x8] sm:$0xff]
    %5605 = vrot.lane.b32.xlu0 %v5597, 80
    %v5606 = vpop.permute.xlu0 %5605
    %v5607 = vsel %vm244, %v5606, 0
    %5609 = vmatprep.subr.mxu0 0.0
    %5610 = vmatpush1.msra.mxu0 %v5602
    %5611 = vmatprep.subr.mxu0 0.0
    %5612 = vmatpush1.msra.mxu0 %v5603
    %5613 = vmatprep.subr.mxu0 0.0
    %5614 = vmatpush1.msra.mxu0 0.0
    %5615 = vmatprep.subr.mxu0 0.0
    %5616 = vmatpush1.msra.mxu0 0.0
    %5617 = vmatprep.subr.mxu0 0.0
    %5618 = vmatpush1.msra.mxu0 0.0
    %5619 = vmatprep.subr.mxu0 0.0
    %5620 = vmatpush1.msra.mxu0 0.0
    %5621 = vmatprep.subr.mxu0 0.0
    %5622 = vmatpush1.msra.mxu0 0.0
    %5623 = vmatprep.subr.mxu0 0.0
    %5624 = vmatpush1.msra.mxu0 0.0
    %5625 = vmatprep.subr.mxu0 0.0
    %5626 = vmatpush1.msra.mxu0 0.0
    %5627 = vmatprep.subr.mxu0 0.0
    %5628 = vmatpush1.msra.mxu0 0.0
    %5629 = vmatprep.subr.mxu0 0.0
    %5630 = vmatpush1.msra.mxu0 0.0
    %5631 = vmatprep.subr.mxu0 0.0
    %5632 = vmatpush1.msra.mxu0 0.0
    %5633 = vmatprep.subr.mxu0 0.0
    %5634 = vmatpush1.msra.mxu0 0.0
    %5635 = vmatprep.subr.mxu0 0.0
    %5636 = vmatpush1.msra.mxu0 0.0
    %5637 = vmatprep.subr.mxu0 0.0
    %5638 = vmatpush1.msra.mxu0 0.0
    %5639 = vmatprep.subr.mxu0 0.0
    %5640 = vmatpush1.msra.mxu0 0.0
    %5641 = vmatprep.subr.mxu0 0.0
    %5642 = vmatpush1.msra.mxu0 0.0
    %5643 = vmatprep.subr.mxu0 0.0
    %5644 = vmatpush1.msra.mxu0 0.0
    %5645 = vmatprep.subr.mxu0 0.0
    %5646 = vmatpush1.msra.mxu0 0.0
    %5647 = vmatprep.subr.mxu0 0.0
    %5648 = vmatpush1.msra.mxu0 0.0
    %5649 = vmatprep.subr.mxu0 0.0
    %5650 = vmatpush1.msra.mxu0 0.0
    %5651 = vmatprep.subr.mxu0 0.0
    %5652 = vmatpush1.msra.mxu0 0.0
    %5653 = vmatprep.subr.mxu0 0.0
    %5654 = vmatpush1.msra.mxu0 0.0
    %5655 = vmatprep.subr.mxu0 0.0
    %5656 = vmatpush1.msra.mxu0 0.0
    %5657 = vmatprep.subr.mxu0 0.0
    %5658 = vmatpush1.msra.mxu0 0.0
    %5659 = vmatprep.subr.mxu0 0.0
    %5660 = vmatpush1.msra.mxu0 0.0
    %5661 = vmatprep.subr.mxu0 0.0
    %5662 = vmatpush1.msra.mxu0 0.0
    %5663 = vmatprep.subr.mxu0 0.0
    %5664 = vmatpush1.msra.mxu0 0.0
    %5665 = vmatprep.subr.mxu0 0.0
    %5666 = vmatpush1.msra.mxu0 0.0
    %5667 = vmatprep.subr.mxu0 0.0
    %5668 = vmatpush1.msra.mxu0 0.0
    %5669 = vmatprep.subr.mxu0 0.0
    %5670 = vmatpush1.msra.mxu0 0.0
    %5671 = vmatprep.subr.mxu0 0.0
    %5672 = vmatpush1.msra.mxu0 0.0
    %5673 = vmatprep.mubr.f32.mxu0 0.0
    %5674 = vmatmul.mubr.f32.gmra.mrb[0].mxu0 %v5607
    %v5675 = vpop.f32.mrb[0].mxu0
    %v5676 = vadd.f32 0.0, %v5675
    %v5677 = vpop.f32.mrb[0].mxu0
    %5678 = vdwg.mxu0
    %v5679 = vadd.f32 %v5601, %v5676
    %v5680 = vld [vmem:[%s474] sm:$0xff]
    %v5681 = vld [vmem:[%s4328] sm:$0xff]
    %v5682 = vld [vmem:[%s4328 + $0x8] sm:$0xff]
    %5684 = vrot.lane.b32.xlu0 %v5599, 16
    %v5685 = vpop.permute.xlu0 %5684
    %v5686 = vsel %vm244, %v5685, 0
    %5688 = vmatprep.subr.mxu0 0.0
    %5689 = vmatpush1.msra.mxu0 %v5681
    %5690 = vmatprep.subr.mxu0 0.0
    %5691 = vmatpush1.msra.mxu0 %v5682
    %5692 = vmatprep.subr.mxu0 0.0
    %5693 = vmatpush1.msra.mxu0 0.0
    %5694 = vmatprep.subr.mxu0 0.0
    %5695 = vmatpush1.msra.mxu0 0.0
    %5696 = vmatprep.subr.mxu0 0.0
    %5697 = vmatpush1.msra.mxu0 0.0
    %5698 = vmatprep.subr.mxu0 0.0
    %5699 = vmatpush1.msra.mxu0 0.0
    %5700 = vmatprep.subr.mxu0 0.0
    %5701 = vmatpush1.msra.mxu0 0.0
    %5702 = vmatprep.subr.mxu0 0.0
    %5703 = vmatpush1.msra.mxu0 0.0
    %5704 = vmatprep.subr.mxu0 0.0
    %5705 = vmatpush1.msra.mxu0 0.0
    %5706 = vmatprep.subr.mxu0 0.0
    %5707 = vmatpush1.msra.mxu0 0.0
    %5708 = vmatprep.subr.mxu0 0.0
    %5709 = vmatpush1.msra.mxu0 0.0
    %5710 = vmatprep.subr.mxu0 0.0
    %5711 = vmatpush1.msra.mxu0 0.0
    %5712 = vmatprep.subr.mxu0 0.0
    %5713 = vmatpush1.msra.mxu0 0.0
    %5714 = vmatprep.subr.mxu0 0.0
    %5715 = vmatpush1.msra.mxu0 0.0
    %5716 = vmatprep.subr.mxu0 0.0
    %5717 = vmatpush1.msra.mxu0 0.0
    %5718 = vmatprep.subr.mxu0 0.0
    %5719 = vmatpush1.msra.mxu0 0.0
    %5720 = vmatprep.subr.mxu0 0.0
    %5721 = vmatpush1.msra.mxu0 0.0
    %5722 = vmatprep.subr.mxu0 0.0
    %5723 = vmatpush1.msra.mxu0 0.0
    %5724 = vmatprep.subr.mxu0 0.0
    %5725 = vmatpush1.msra.mxu0 0.0
    %5726 = vmatprep.subr.mxu0 0.0
    %5727 = vmatpush1.msra.mxu0 0.0
    %5728 = vmatprep.subr.mxu0 0.0
    %5729 = vmatpush1.msra.mxu0 0.0
    %5730 = vmatprep.subr.mxu0 0.0
    %5731 = vmatpush1.msra.mxu0 0.0
    %5732 = vmatprep.subr.mxu0 0.0
    %5733 = vmatpush1.msra.mxu0 0.0
    %5734 = vmatprep.subr.mxu0 0.0
    %5735 = vmatpush1.msra.mxu0 0.0
    %5736 = vmatprep.subr.mxu0 0.0
    %5737 = vmatpush1.msra.mxu0 0.0
    %5738 = vmatprep.subr.mxu0 0.0
    %5739 = vmatpush1.msra.mxu0 0.0
    %5740 = vmatprep.subr.mxu0 0.0
    %5741 = vmatpush1.msra.mxu0 0.0
    %5742 = vmatprep.subr.mxu0 0.0
    %5743 = vmatpush1.msra.mxu0 0.0
    %5744 = vmatprep.subr.mxu0 0.0
    %5745 = vmatpush1.msra.mxu0 0.0
    %5746 = vmatprep.subr.mxu0 0.0
    %5747 = vmatpush1.msra.mxu0 0.0
    %5748 = vmatprep.subr.mxu0 0.0
    %5749 = vmatpush1.msra.mxu0 0.0
    %5750 = vmatprep.subr.mxu0 0.0
    %5751 = vmatpush1.msra.mxu0 0.0
    %5752 = vmatprep.mubr.f32.mxu0 0.0
    %5753 = vmatmul.mubr.f32.gmra.mrb[0].mxu0 %v5686
    %v5754 = vpop.f32.mrb[0].mxu0
    %v5755 = vadd.f32 0.0, %v5754
    %v5756 = vpop.f32.mrb[0].mxu0
    %5757 = vdwg.mxu0
    %5759 = vrot.lane.b32.xlu0 %v5755, 64
    %v5760 = vpop.permute.xlu0 %5759
    %v5762 = vadd.f32 %v5680, %v5760
    %v5763 = vxor.u32 %v5679, 2147483648
    %v5764 = vmul.f32 %v5763, 1.442695
    %v5765 = vpow.pop %v5764
    %v5766 = vadd.f32 %v5765, 1.0
    %v5767 = vrcp.pop %v5766
    %v5768 = vmul.f32 1.0, %v5767
    %v5769 = vtanh.pop %v5679
    %v5770 = vxor.u32 %v5762, 2147483648
    %v5771 = vmul.f32 %v5770, 1.442695
    %v5772 = vpow.pop %v5771
    %v5773 = vadd.f32 %v5772, 1.0
    %v5774 = vrcp.pop %v5773
    %v5775 = vmul.f32 1.0, %v5774
    %v5776 = vtanh.pop %v5762
    %v5777 = vmul.f32 %v5768, %v5598
    %5779 = vrot.lane.b32.xlu0 %v5769, 96
    %v5780 = vpop.permute.xlu0 %5779
    %v5782 = vmul.f32 %v5768, %v5780
    %5784 = vrot.lane.b32.xlu0 %v5782, 16
    %v5785 = vpop.permute.xlu0 %5784
    %v5787 = vadd.f32 %v5777, %v5785
    %v5788 = vtanh.pop %v5787
    %5790 = vrot.lane.b32.xlu0 %v5788, 32
    %v5791 = vpop.permute.xlu0 %5790
    %v5793 = vmul.f32 %v5768, %v5791
    %v5794 = vmul.f32 %v5775, %v5600
    %5796 = vrot.lane.b32.xlu0 %v5776, 96
    %v5797 = vpop.permute.xlu0 %5796
    %v5799 = vmul.f32 %v5775, %v5797
    %5801 = vrot.lane.b32.xlu0 %v5799, 16
    %v5802 = vpop.permute.xlu0 %5801
    %v5804 = vadd.f32 %v5794, %v5802
    %v5805 = vtanh.pop %v5804
    %5807 = vrot.lane.b32.xlu0 %v5805, 32
    %v5808 = vpop.permute.xlu0 %5807
    %v5810 = vmul.f32 %v5775, %v5808
    %v5811 = vsel %vm700, %v5793, 0.0
    %5813 = vrot.lane.b32.xlu0 %v5811, 80
    %v5814 = vpop.permute.xlu0 %5813
    %5816 = vst.msk [vmem:[%s4687] sm:$0xff] %vm244, %v5814
    %v5817 = vsel %vm688, %v5810, 0.0
    %5819 = vrot.lane.b32.xlu0 %v5817, 32
    %v5820 = vpop.permute.xlu0 %5819
    %5822 = vst.msk [vmem:[%s4680] sm:$0xff] %vm470, %v5820
    %v5823 = vsel %vm700, %v5793, %v5597
    %v5824 = vsel %vm700, %v5787, %v5598
    %v5825 = vsel %vm688, %v5810, %v5599
    %v5826 = vsel %vm688, %v5804, %v5600
    %v5827 = vld [vmem:[%s319] sm:$0xff]
    %v5828 = vld [vmem:[%s4253] sm:$0xff]
    %v5829 = vld [vmem:[%s4253 + $0x8] sm:$0xff]
    %5831 = vrot.lane.b32.xlu0 %v5823, 80
    %v5832 = vpop.permute.xlu0 %5831
    %v5833 = vsel %vm244, %v5832, 0
    %5835 = vmatprep.subr.mxu0 0.0
    %5836 = vmatpush1.msra.mxu0 %v5828
    %5837 = vmatprep.subr.mxu0 0.0
    %5838 = vmatpush1.msra.mxu0 %v5829
    %5839 = vmatprep.subr.mxu0 0.0
    %5840 = vmatpush1.msra.mxu0 0.0
    %5841 = vmatprep.subr.mxu0 0.0
    %5842 = vmatpush1.msra.mxu0 0.0
    %5843 = vmatprep.subr.mxu0 0.0
    %5844 = vmatpush1.msra.mxu0 0.0
    %5845 = vmatprep.subr.mxu0 0.0
    %5846 = vmatpush1.msra.mxu0 0.0
    %5847 = vmatprep.subr.mxu0 0.0
    %5848 = vmatpush1.msra.mxu0 0.0
    %5849 = vmatprep.subr.mxu0 0.0
    %5850 = vmatpush1.msra.mxu0 0.0
    %5851 = vmatprep.subr.mxu0 0.0
    %5852 = vmatpush1.msra.mxu0 0.0
    %5853 = vmatprep.subr.mxu0 0.0
    %5854 = vmatpush1.msra.mxu0 0.0
    %5855 = vmatprep.subr.mxu0 0.0
    %5856 = vmatpush1.msra.mxu0 0.0
    %5857 = vmatprep.subr.mxu0 0.0
    %5858 = vmatpush1.msra.mxu0 0.0
    %5859 = vmatprep.subr.mxu0 0.0
    %5860 = vmatpush1.msra.mxu0 0.0
    %5861 = vmatprep.subr.mxu0 0.0
    %5862 = vmatpush1.msra.mxu0 0.0
    %5863 = vmatprep.subr.mxu0 0.0
    %5864 = vmatpush1.msra.mxu0 0.0
    %5865 = vmatprep.subr.mxu0 0.0
    %5866 = vmatpush1.msra.mxu0 0.0
    %5867 = vmatprep.subr.mxu0 0.0
    %5868 = vmatpush1.msra.mxu0 0.0
    %5869 = vmatprep.subr.mxu0 0.0
    %5870 = vmatpush1.msra.mxu0 0.0
    %5871 = vmatprep.subr.mxu0 0.0
    %5872 = vmatpush1.msra.mxu0 0.0
    %5873 = vmatprep.subr.mxu0 0.0
    %5874 = vmatpush1.msra.mxu0 0.0
    %5875 = vmatprep.subr.mxu0 0.0
    %5876 = vmatpush1.msra.mxu0 0.0
    %5877 = vmatprep.subr.mxu0 0.0
    %5878 = vmatpush1.msra.mxu0 0.0
    %5879 = vmatprep.subr.mxu0 0.0
    %5880 = vmatpush1.msra.mxu0 0.0
    %5881 = vmatprep.subr.mxu0 0.0
    %5882 = vmatpush1.msra.mxu0 0.0
    %5883 = vmatprep.subr.mxu0 0.0
    %5884 = vmatpush1.msra.mxu0 0.0
    %5885 = vmatprep.subr.mxu0 0.0
    %5886 = vmatpush1.msra.mxu0 0.0
    %5887 = vmatprep.subr.mxu0 0.0
    %5888 = vmatpush1.msra.mxu0 0.0
    %5889 = vmatprep.subr.mxu0 0.0
    %5890 = vmatpush1.msra.mxu0 0.0
    %5891 = vmatprep.subr.mxu0 0.0
    %5892 = vmatpush1.msra.mxu0 0.0
    %5893 = vmatprep.subr.mxu0 0.0
    %5894 = vmatpush1.msra.mxu0 0.0
    %5895 = vmatprep.subr.mxu0 0.0
    %5896 = vmatpush1.msra.mxu0 0.0
    %5897 = vmatprep.subr.mxu0 0.0
    %5898 = vmatpush1.msra.mxu0 0.0
    %5899 = vmatprep.mubr.f32.mxu0 0.0
    %5900 = vmatmul.mubr.f32.gmra.mrb[0].mxu0 %v5833
    %v5901 = vpop.f32.mrb[0].mxu0
    %v5902 = vadd.f32 0.0, %v5901
    %v5903 = vpop.f32.mrb[0].mxu0
    %5904 = vdwg.mxu0
    %v5905 = vadd.f32 %v5827, %v5902
    %v5906 = vld [vmem:[#allocation3] sm:$0xff]
    %v5907 = vld [vmem:[%s4328] sm:$0xff]
    %v5908 = vld [vmem:[%s4328 + $0x8] sm:$0xff]
    %5910 = vrot.lane.b32.xlu0 %v5825, 16
    %v5911 = vpop.permute.xlu0 %5910
    %v5912 = vsel %vm244, %v5911, 0
    %5914 = vmatprep.subr.mxu0 0.0
    %5915 = vmatpush1.msra.mxu0 %v5907
    %5916 = vmatprep.subr.mxu0 0.0
    %5917 = vmatpush1.msra.mxu0 %v5908
    %5918 = vmatprep.subr.mxu0 0.0
    %5919 = vmatpush1.msra.mxu0 0.0
    %5920 = vmatprep.subr.mxu0 0.0
    %5921 = vmatpush1.msra.mxu0 0.0
    %5922 = vmatprep.subr.mxu0 0.0
    %5923 = vmatpush1.msra.mxu0 0.0
    %5924 = vmatprep.subr.mxu0 0.0
    %5925 = vmatpush1.msra.mxu0 0.0
    %5926 = vmatprep.subr.mxu0 0.0
    %5927 = vmatpush1.msra.mxu0 0.0
    %5928 = vmatprep.subr.mxu0 0.0
    %5929 = vmatpush1.msra.mxu0 0.0
    %5930 = vmatprep.subr.mxu0 0.0
    %5931 = vmatpush1.msra.mxu0 0.0
    %5932 = vmatprep.subr.mxu0 0.0
    %5933 = vmatpush1.msra.mxu0 0.0
    %5934 = vmatprep.subr.mxu0 0.0
    %5935 = vmatpush1.msra.mxu0 0.0
    %5936 = vmatprep.subr.mxu0 0.0
    %5937 = vmatpush1.msra.mxu0 0.0
    %5938 = vmatprep.subr.mxu0 0.0
    %5939 = vmatpush1.msra.mxu0 0.0
    %5940 = vmatprep.subr.mxu0 0.0
    %5941 = vmatpush1.msra.mxu0 0.0
    %5942 = vmatprep.subr.mxu0 0.0
    %5943 = vmatpush1.msra.mxu0 0.0
    %5944 = vmatprep.subr.mxu0 0.0
    %5945 = vmatpush1.msra.mxu0 0.0
    %5946 = vmatprep.subr.mxu0 0.0
    %5947 = vmatpush1.msra.mxu0 0.0
    %5948 = vmatprep.subr.mxu0 0.0
    %5949 = vmatpush1.msra.mxu0 0.0
    %5950 = vmatprep.subr.mxu0 0.0
    %5951 = vmatpush1.msra.mxu0 0.0
    %5952 = vmatprep.subr.mxu0 0.0
    %5953 = vmatpush1.msra.mxu0 0.0
    %5954 = vmatprep.subr.mxu0 0.0
    %5955 = vmatpush1.msra.mxu0 0.0
    %5956 = vmatprep.subr.mxu0 0.0
    %5957 = vmatpush1.msra.mxu0 0.0
    %5958 = vmatprep.subr.mxu0 0.0
    %5959 = vmatpush1.msra.mxu0 0.0
    %5960 = vmatprep.subr.mxu0 0.0
    %5961 = vmatpush1.msra.mxu0 0.0
    %5962 = vmatprep.subr.mxu0 0.0
    %5963 = vmatpush1.msra.mxu0 0.0
    %5964 = vmatprep.subr.mxu0 0.0
    %5965 = vmatpush1.msra.mxu0 0.0
    %5966 = vmatprep.subr.mxu0 0.0
    %5967 = vmatpush1.msra.mxu0 0.0
    %5968 = vmatprep.subr.mxu0 0.0
    %5969 = vmatpush1.msra.mxu0 0.0
    %5970 = vmatprep.subr.mxu0 0.0
    %5971 = vmatpush1.msra.mxu0 0.0
    %5972 = vmatprep.subr.mxu0 0.0
    %5973 = vmatpush1.msra.mxu0 0.0
    %5974 = vmatprep.subr.mxu0 0.0
    %5975 = vmatpush1.msra.mxu0 0.0
    %5976 = vmatprep.subr.mxu0 0.0
    %5977 = vmatpush1.msra.mxu0 0.0
    %5978 = vmatprep.mubr.f32.mxu0 0.0
    %5979 = vmatmul.mubr.f32.gmra.mrb[0].mxu0 %v5912
    %v5980 = vpop.f32.mrb[0].mxu0
    %v5981 = vadd.f32 0.0, %v5980
    %v5982 = vpop.f32.mrb[0].mxu0
    %5983 = vdwg.mxu0
    %5985 = vrot.lane.b32.xlu0 %v5981, 64
    %v5986 = vpop.permute.xlu0 %5985
    %v5988 = vadd.f32 %v5906, %v5986
    %v5989 = vxor.u32 %v5905, 2147483648
    %v5990 = vmul.f32 %v5989, 1.442695
    %v5991 = vpow.pop %v5990
    %v5992 = vadd.f32 %v5991, 1.0
    %v5993 = vrcp.pop %v5992
    %v5994 = vmul.f32 1.0, %v5993
    %v5995 = vtanh.pop %v5905
    %v5996 = vxor.u32 %v5988, 2147483648
    %v5997 = vmul.f32 %v5996, 1.442695
    %v5998 = vpow.pop %v5997
    %v5999 = vadd.f32 %v5998, 1.0
    %v6000 = vrcp.pop %v5999
    %v6001 = vmul.f32 1.0, %v6000
    %v6002 = vtanh.pop %v5988
    %v6003 = vmul.f32 %v5994, %v5824
    %6005 = vrot.lane.b32.xlu0 %v5995, 96
    %v6006 = vpop.permute.xlu0 %6005
    %v6008 = vmul.f32 %v5994, %v6006
    %6010 = vrot.lane.b32.xlu0 %v6008, 16
    %v6011 = vpop.permute.xlu0 %6010
    %v6013 = vadd.f32 %v6003, %v6011
    %v6014 = vtanh.pop %v6013
    %6016 = vrot.lane.b32.xlu0 %v6014, 32
    %v6017 = vpop.permute.xlu0 %6016
    %v6019 = vmul.f32 %v5994, %v6017
    %v6020 = vmul.f32 %v6001, %v5826
    %6022 = vrot.lane.b32.xlu0 %v6002, 96
    %v6023 = vpop.permute.xlu0 %6022
    %v6025 = vmul.f32 %v6001, %v6023
    %6027 = vrot.lane.b32.xlu0 %v6025, 16
    %v6028 = vpop.permute.xlu0 %6027
    %v6030 = vadd.f32 %v6020, %v6028
    %v6031 = vtanh.pop %v6030
    %6033 = vrot.lane.b32.xlu0 %v6031, 32
    %v6034 = vpop.permute.xlu0 %6033
    %v6036 = vmul.f32 %v6001, %v6034
    %v6037 = vsel %vm463, %v6019, 0.0
    %6039 = vrot.lane.b32.xlu0 %v6037, 80
    %v6040 = vpop.permute.xlu0 %6039
    %6042 = vst.msk [vmem:[%s4465] sm:$0xff] %vm244, %v6040
    %v6043 = vsel %vm452, %v6036, 0.0
    %6045 = vrot.lane.b32.xlu0 %v6043, 32
    %v6046 = vpop.permute.xlu0 %6045
    %6048 = vst.msk [vmem:[#allocation12] sm:$0xff] %vm470, %v6046
    %v6049 = vsel %vm463, %v6019, %v5823
    %v6050 = vsel %vm463, %v6013, %v5824
    %v6051 = vsel %vm452, %v6036, %v5825
    %v6052 = vsel %vm452, %v6030, %v5826
    %6054 = vrot.lane.b32.xlu0 %v6049, 80
    %v6055 = vpop.permute.xlu0 %6054
    %s6057 = scalar_lea.vmem [#allocation13], 16
    %6058 = vst.msk [vmem:[%s6057] sm:$0xff] %vm244, %v6055
    %6060 = vrot.lane.b32.xlu0 %v6051, 32
    %v6061 = vpop.permute.xlu0 %6060
    %6063 = vst.msk [vmem:[%s6057] sm:$0xff] %vm470, %v6061
    %6065 = vrot.lane.b32.xlu0 %v6050, 112
    %v6066 = vpop.permute.xlu0 %6065
    %s6068 = scalar_lea.vmem [#allocation15], 16
    %6069 = vst.msk [vmem:[%s6068] sm:$0xff] %vm244, %v6066
    %6071 = vrot.lane.b32.xlu0 %v6052, 64
    %v6072 = vpop.permute.xlu0 %6071
    %6074 = vst.msk [vmem:[%s6068] sm:$0xff] %vm470, %v6072
    // Predicated region
    $region42: #{tpu_custom_call.1} parent=1 // pred_check
      _
    $region43: #{tpu_custom_call.1} parent=1 // pred_check_branch
      %6076 = sbr.rel (0) target = $region45
    $region44: #{tpu_custom_call.1} parent=1 // pred_region
      %s6078 = ssub.s32 1024, 1024
      %6079 = vsyncadd [#allocation6], %s6078
      %s6080 = sshll.u32 [#allocation12], 4
      %s6081 = int_to_ptr.vmem [resolvable:$true] %s6080
      %6086 = dma.vmem_to_hbm [thread:$0]  %s6081, 1024, %s6, [#allocation6], 128, 128, 8
    $region45: #{tpu_custom_call.1} parent=1 // pred_fallthru
      _
    // Predicated region
    $region46: #{tpu_custom_call.1} parent=1 // pred_check
      _
    $region47: #{tpu_custom_call.1} parent=1 // pred_check_branch
      %6088 = sbr.rel (0) target = $region49
    $region48: #{tpu_custom_call.1} parent=1 // pred_region
      %s6090 = ssub.s32 384, 384
      %6091 = vsyncadd [#allocation14], %s6090
      %s6092 = sshll.u32 [#allocation13], 4
      %s6093 = int_to_ptr.vmem [resolvable:$true] %s6092
      %6098 = dma.vmem_to_hbm [thread:$0]  %s6093, 384, %s7, [#allocation14], 128, 128, 8
    $region49: #{tpu_custom_call.1} parent=1 // pred_fallthru
      _
    // Predicated region
    $region50: #{tpu_custom_call.1} parent=1 // pred_check
      _
    $region51: #{tpu_custom_call.1} parent=1 // pred_check_branch
      %6100 = sbr.rel (0) target = $region53
    $region52: #{tpu_custom_call.1} parent=1 // pred_region
      %s6102 = ssub.s32 384, 384
      %6103 = vsyncadd [#allocation14], %s6102
      %s6104 = sshll.u32 [#allocation15], 4
      %s6105 = int_to_ptr.vmem [resolvable:$true] %s6104
      %6110 = dma.vmem_to_hbm [thread:$0]  %s6105, 384, %s8, [#allocation14], 128, 128, 8
    $region53: #{tpu_custom_call.1} parent=1 // pred_fallthru
      _
    // Predicated region
    $region54: #{tpu_custom_call.1} parent=1 // pred_check
      _
    $region55: #{tpu_custom_call.1} parent=1 // pred_check_branch
      %6112 = sbr.rel (0) target = $region57
    $region56: #{tpu_custom_call.1} parent=1 // pred_region
      %6113 = dma.done [#allocation6], 1024
    $region57: #{tpu_custom_call.1} parent=1 // pred_fallthru
      _
    // Predicated region
    $region58: #{tpu_custom_call.1} parent=1 // pred_check
      _
    $region59: #{tpu_custom_call.1} parent=1 // pred_check_branch
      %6115 = sbr.rel (0) target = $region61
    $region60: #{tpu_custom_call.1} parent=1 // pred_region
      %6116 = dma.done [#allocation14], 384
    $region61: #{tpu_custom_call.1} parent=1 // pred_fallthru
      _
    // Predicated region
    $region62: #{tpu_custom_call.1} parent=1 // pred_check
      _
    $region63: #{tpu_custom_call.1} parent=1 // pred_check_branch
      %6118 = sbr.rel (0) target = $region65
    $region64: #{tpu_custom_call.1} parent=1 // pred_region
      %6119 = dma.done [#allocation14], 384
    $region65: #{tpu_custom_call.1} parent=1 // pred_fallthru
      _
    %6120 = vsyncpa [#allocation5], 1
    %6121 = vsyncpa [#allocation8], 1
    %6122 = vsyncpa [#allocation11], 1
    %6123 = vsyncpa [#allocation6], 1
    %6124 = vsyncpa [#allocation14], 1

</llo_original>
